<compile_context>
chip_gen: v7x
topology: tpu7x:2x2x1
jax: 0.10.0
libtpu: 0.0.40
codegen_flags: <defaults>
</compile_context>

<pallas_src>
import jax
import jax.numpy as jnp
import numpy as np
from jax import lax
from jax.experimental import pallas as pl
from jax.experimental.pallas import tpu as pltpu

EPS = 1e-5
NEG_SLOPE = 0.2
CP = 128     # lane width of VMEM-resident activations / weights (all C <= 128)
_LPAD = 8    # left halo pad on the W (sublane) axis -> interior is 8-aligned


def _round_up(x, m):
    return ((x + m - 1) // m) * m


def _generator_kernel(x_ref, w_ref, b_ref, g_ref, beta_ref, o_ref, buf, acc_ref):
    """One grid step == one layer of [Conv3x3 (+BN+LeakyReLU | +bias+Tanh)].

    x_ref    : (N, H, W, Cin)        compact NHWC input (resident across grid)
    w_ref    : (1, 9, CP, CP) bf16   this layer's per-tap weights
    b_ref    : (1, 1, CP) f32        conv bias (only used on the final layer)
    g_ref    : (1, 1, CP) f32        BN gamma (zero in padded lanes)
    beta_ref : (1, 1, CP) f32        BN beta  (zero in padded lanes)
    o_ref    : (N, H, W, CO) f32     narrow output (CO = cout rounded up to 8)
    buf      : (N, H+2, Wb, CP) f32  in-place halo'd activation buffer (scratch)
    acc_ref  : (N, H, W, CP)  f32    conv accumulator (scratch)
    """
    N, H, W, cin = x_ref.shape
    cp = acc_ref.shape[-1]
    co = o_ref.shape[-1]
    wb = buf.shape[2]
    nhw = N * H * W
    inv_n = 1.0 / float(nhw)

    l = pl.program_id(0)
    n_layers = pl.num_programs(0)

    # Epilogue chunk size over H: keep each (N, CH, W, CP) f32 chunk ~<=16 vregs.
    tgt = max(1, 128 // max(1, N * W))
    ch = next(c for c in range(min(tgt, H), 0, -1) if H % c == 0)
    nchunks = H // ch

    # ---- layer 0 only: single zero-fill (halo ring + padded lanes), then drop
    # the compact input into the interior real lanes.  The halo ring and padded
    # lanes are never written again; the interior real lanes are overwritten by
    # every layer's epilogue, so no further zeroing is ever needed.
    @pl.when(l == 0)
    def _():
        buf[...] = jnp.zeros(buf.shape, buf.dtype)
        buf[:, 1:H + 1, _LPAD:_LPAD + W, :cin] = x_ref[...]

    # ---- 3x3 conv as 9 per-tap MXU matmuls accumulated in VMEM (no im2col
    # patch matrix).  The W-shifted windows come from pltpu.roll (XLU) on an
    # aligned full-width slab; wrap-around columns are halo zeros and never
    # land inside the interior read window.  Operands are cast to bf16, the
    # accumulation stays f32.
    for di in range(3):
        slab = buf[:, di:di + H, :, :]                 # aligned full-width load
        for dj in range(3):
            t = di * 3 + dj
            shift = (1 - dj) % wb                      # +1, 0, wb-1 (== -1)
            win = slab if shift == 0 else pltpu.roll(slab, shift=shift, axis=2)
            win = win[:, :, _LPAD:_LPAD + W, :]        # 8-aligned interior slice
            a2 = win.reshape(nhw, cp).astype(jnp.bfloat16)
            d = jnp.dot(a2, w_ref[0, t], preferred_element_type=jnp.float32)
            if t == 0:
                acc_ref[...] = d.reshape(N, H, W, cp)
            else:
                acc_ref[...] += d.reshape(N, H, W, cp)

    # ---- hidden layers: BatchNorm2d (training-mode batch stats, biased var,
    # eps=1e-5) + LeakyReLU(0.2).  Two-pass (mean, then centered variance)
    # statistics and the apply pass are all chunked over H so each pass touches
    # ~16 vregs at a time, and the result is stored straight back into the
    # in-place halo buffer interior (8-aligned, lane-dense, unmasked stores).
    # The conv bias is skipped here: a per-channel constant is exactly
    # cancelled by the batch-mean subtraction.
    @pl.when(l < n_layers - 1)
    def _():
        s1 = jnp.zeros((1, cp), jnp.float32)
        for c in range(nchunks):
            blk = acc_ref[:, c * ch:(c + 1) * ch, :, :].reshape(-1, cp)
            s1 = s1 + jnp.sum(blk, axis=0, keepdims=True)
        mean = s1 * inv_n

        s2 = jnp.zeros((1, cp), jnp.float32)
        for c in range(nchunks):
            blk = acc_ref[:, c * ch:(c + 1) * ch, :, :].reshape(-1, cp)
            dev = blk - mean
            s2 = s2 + jnp.sum(dev * dev, axis=0, keepdims=True)
        var = s2 * inv_n

        scale = g_ref[0] * lax.rsqrt(var + EPS)
        shift_ = beta_ref[0] - mean * scale
        sc4 = scale.reshape(1, 1, 1, cp)
        sh4 = shift_.reshape(1, 1, 1, cp)
        for c in range(nchunks):
            y = acc_ref[:, c * ch:(c + 1) * ch, :, :] * sc4 + sh4
            y = jnp.where(y >= 0, y, NEG_SLOPE * y)
            buf[:, 1 + c * ch:1 + (c + 1) * ch, _LPAD:_LPAD + W, :] = y

    # ---- final layer: conv bias + tanh, chunked, stored to the narrow output.
    @pl.when(l == n_layers - 1)
    def _():
        bias4 = b_ref[0].reshape(1, 1, 1, cp)
        for c in range(nchunks):
            y = jnp.tanh(acc_ref[:, c * ch:(c + 1) * ch, :, :] + bias4)
            o_ref[:, c * ch:(c + 1) * ch, :, :] = y[..., :co]

    # TODO(synk): BatchNorm running_mean/running_var (training-time module state)
    #   are not tracked; only the forward output is reproduced.
    # TODO(synk): tap-pack the contraction (9*cin <= 72 real K values into one
    #   128-lane K, weight (128, CP)) to cut the remaining zero-multiplies and
    #   weight DMA ~9x (follow-up structural change).
    # TODO(synk): at real SinGAN scales, tile H into halo'd row blocks on a
    #   'parallel' grid axis with a two-phase (cross-tile) BN reduction -- needed
    #   both for v7x's 64 MiB VMEM and to use its 2nd TensorCore; size the tile
    #   per chip via pltpu.CompilerParams(vmem_limit_bytes=...).


def _pack_params(params, cp):
    """Pack per-layer (HWIO weight, bias, gamma, beta) into per-tap, lane-padded
    stacks.  Weights are stored in bf16 (MXU-native); bias/BN params stay f32."""
    L = len(params)
    w_all = np.zeros((L, 9, cp, cp), np.float32)
    b_all = np.zeros((L, 1, cp), np.float32)
    g_all = np.zeros((L, 1, cp), np.float32)
    beta_all = np.zeros((L, 1, cp), np.float32)
    for l, (w, b, g, beta) in enumerate(params):
        w_np = np.asarray(w, np.float32)
        cin, cout = w_np.shape[2], w_np.shape[3]
        for di in range(3):
            for dj in range(3):
                w_all[l, di * 3 + dj, :cin, :cout] = w_np[di, dj]
        b_all[l, 0, :cout] = np.asarray(b, np.float32).reshape(-1)
        g_all[l, 0, :cout] = np.asarray(g, np.float32).reshape(-1)
        beta_all[l, 0, :cout] = np.asarray(beta, np.float32).reshape(-1)
    return (jnp.asarray(w_all, dtype=jnp.bfloat16),
            jnp.asarray(b_all, dtype=jnp.float32),
            jnp.asarray(g_all, dtype=jnp.float32),
            jnp.asarray(beta_all, dtype=jnp.float32))


def init_params(key, channels):
    """Deterministic parameter init (shapes match the PyTorch module)."""
    params = []
    for cin, cout in zip(channels[:-1], channels[1:]):
        key, kw, kb = jax.random.split(key, 3)
        scale = 1.0 / np.sqrt(9.0 * cin)
        w = jax.random.normal(kw, (3, 3, cin, cout), jnp.float32) * scale
        b = jax.random.normal(kb, (1, cout), jnp.float32) * scale
        gamma = jnp.ones((1, cout), jnp.float32)   # BatchNorm2d default init
        beta = jnp.zeros((1, cout), jnp.float32)
        params.append((w, b, gamma, beta))
    return params


def generator_forward(x, params):
    """x: NCHW (or CHW) float32, PyTorch convention."""
    if x.ndim == 3:
        return generator_forward(x[None, :, :, :], params)[0]
    N, Cin, H, W = x.shape
    cout_final = params[-1][0].shape[-1]
    L = len(params)
    cp = CP
    co = max(8, _round_up(cout_final, 8))          # narrow lane-count output
    wb = _LPAD + _round_up(W + 1, 8)               # halo'd, sublane-aligned width

    w_all, b_all, g_all, beta_all = _pack_params(params, cp)
    x_nhwc = jnp.transpose(x, (0, 2, 3, 1)).astype(jnp.float32)  # compact, no pad

    out = pl.pallas_call(
        _generator_kernel,
        out_shape=jax.ShapeDtypeStruct((N, H, W, co), jnp.float32),
        grid=(L,),
        in_specs=[
            pl.BlockSpec((N, H, W, Cin), lambda l: (0, 0, 0, 0)),   # resident
            pl.BlockSpec((1, 9, cp, cp), lambda l: (l, 0, 0, 0)),   # per-layer
            pl.BlockSpec((1, 1, cp), lambda l: (l, 0, 0)),
            pl.BlockSpec((1, 1, cp), lambda l: (l, 0, 0)),
            pl.BlockSpec((1, 1, cp), lambda l: (l, 0, 0)),
        ],
        out_specs=pl.BlockSpec((N, H, W, co), lambda l: (0, 0, 0, 0)),
        scratch_shapes=[
            pltpu.VMEM((N, H + 2, wb, cp), jnp.float32),   # in-place halo buffer
            pltpu.VMEM((N, H, W, cp), jnp.float32),        # conv accumulator
        ],
        compiler_params=pltpu.CompilerParams(
            dimension_semantics=("arbitrary",)),   # layers are sequential
    )(x_nhwc, w_all, b_all, g_all, beta_all)

    out = out[..., :cout_final]                 # drop the few padded lanes
    return jnp.transpose(out, (0, 3, 1, 2))     # NHWC -> NCHW


def reference_forward(x, params):
    """Pure-JAX reference of the PyTorch module (training-mode BN)."""
    y = x
    n = len(params)
    for i, (w, b, g, beta) in enumerate(params):
        y = jax.lax.conv_general_dilated(
            y, w, window_strides=(1, 1), padding="SAME",
            dimension_numbers=("NCHW", "HWIO", "NCHW"),
            precision=jax.lax.Precision.HIGHEST,
        ) + b.reshape(1, -1, 1, 1)
        if i < n - 1:
            mean = jnp.mean(y, axis=(0, 2, 3), keepdims=True)
            var = jnp.mean((y - mean) ** 2, axis=(0, 2, 3), keepdims=True)
            y = (y - mean) * jax.lax.rsqrt(var + EPS)
            y = y * g.reshape(1, -1, 1, 1) + beta.reshape(1, -1, 1, 1)
            y = jnp.where(y >= 0, y, NEG_SLOPE * y)
        else:
            y = jnp.tanh(y)
    return y


if __name__ == "__main__":
    key = jax.random.PRNGKey(0)
    k_params, k_x = jax.random.split(key)

    channels = [4, 8, 8, 3]          # Generator(channels)
    params = init_params(k_params, channels)

    x = jax.random.normal(k_x, (2, 4, 16, 16), jnp.float32)  # NCHW

    out = jax.block_until_ready(generator_forward(x, params))
    assert out.shape == (2, 3, 16, 16), out.shape

    ref = jax.block_until_ready(reference_forward(x, params))
    max_err = float(jnp.max(jnp.abs(out - ref)))
    # Tolerance 1e-1 on a tanh-bounded output: kernel deliberately uses bf16 MXU
    # operands (per perf review) vs. a HIGHEST-precision f32 reference conv.
    if not np.isfinite(max_err) or max_err > 1e-1:
        raise AssertionError(f"mismatch vs reference, max abs err = {max_err}")

    print("KERNEL_OK")
</pallas_src>

<mosaic_0001>
module attributes {stable_mosaic.version = 11 : i64} {
  func.func @_generator_kernel(%arg0: i32, %arg1: memref<2x16x16x4xf32, #tpu.memory_space<vmem>>, %arg2: memref<1x9x128x128xbf16, #tpu.memory_space<vmem>>, %arg3: memref<1x1x128xf32, #tpu.memory_space<vmem>>, %arg4: memref<1x1x128xf32, #tpu.memory_space<vmem>>, %arg5: memref<1x1x128xf32, #tpu.memory_space<vmem>>, %arg6: memref<2x16x16x8xf32, #tpu.memory_space<vmem>>, %arg7: memref<2x18x32x128xf32, #tpu.memory_space<vmem>>, %arg8: memref<2x16x16x128xf32, #tpu.memory_space<vmem>>) attributes {dimension_semantics = [#tpu.dimension_semantics<arbitrary>], iteration_bounds = array<i64: 3>, scalar_prefetch = 0 : i64, scratch_operands = 2 : i64, tpu.core_type = #tpu.core_type<tc>, window_params = [{pipeline_mode = #tpu.pipeline_mode<synchronous>, transform_indices = @transform_0, window_bounds = array<i64: 2, 16, 16, 4>}, {transform_indices = @transform_1, window_bounds = array<i64: 1, 9, 128, 128>}, {transform_indices = @transform_2, window_bounds = array<i64: 1, 1, 128>}, {transform_indices = @transform_3, window_bounds = array<i64: 1, 1, 128>}, {transform_indices = @transform_4, window_bounds = array<i64: 1, 1, 128>}, {pipeline_mode = #tpu.pipeline_mode<synchronous>, transform_indices = @transform_5, window_bounds = array<i64: 2, 16, 16, 8>}]} {
    %c0_i32 = arith.constant 0 : i32
    %0 = arith.cmpi eq, %arg0, %c0_i32 : i32
    %1 = arith.extui %0 : i1 to i32
    %c0_i32_0 = arith.constant 0 : i32
    %2 = arith.cmpi ne, %1, %c0_i32_0 : i32
    scf.if %2 {
      %cst_123 = arith.constant 0.000000e+00 : f32
      %106 = vector.broadcast %cst_123 : f32 to vector<2x18x32x128xf32>
      %c0_124 = arith.constant 0 : index
      %c0_125 = arith.constant 0 : index
      %c0_126 = arith.constant 0 : index
      %c0_127 = arith.constant 0 : index
      %107 = vector.load %arg7[%c0_124, %c0_125, %c0_126, %c0_127] : memref<2x18x32x128xf32, #tpu.memory_space<vmem>>, vector<2x18x32x128xf32>
      tpu.vector_store %arg7[%c0_124, %c0_125, %c0_126, %c0_127], %106 {strides = array<i32>} : memref<2x18x32x128xf32, #tpu.memory_space<vmem>>, vector<2x18x32x128xf32>,
      %c0_128 = arith.constant 0 : index
      %c0_129 = arith.constant 0 : index
      %c0_130 = arith.constant 0 : index
      %c0_131 = arith.constant 0 : index
      %108 = vector.load %arg1[%c0_128, %c0_129, %c0_130, %c0_131] : memref<2x16x16x4xf32, #tpu.memory_space<vmem>>, vector<2x16x16x4xf32>
      %c0_132 = arith.constant 0 : index
      %c1_133 = arith.constant 1 : index
      %c8_134 = arith.constant 8 : index
      %c0_135 = arith.constant 0 : index
      %109 = vector.load %arg7[%c0_132, %c1_133, %c8_134, %c0_135] : memref<2x18x32x128xf32, #tpu.memory_space<vmem>>, vector<2x16x16x4xf32>
      tpu.vector_store %arg7[%c0_132, %c1_133, %c8_134, %c0_135], %108 {strides = array<i32>} : memref<2x18x32x128xf32, #tpu.memory_space<vmem>>, vector<2x16x16x4xf32>,
    } else {
    }
    %c0 = arith.constant 0 : index
    %c0_1 = arith.constant 0 : index
    %c0_2 = arith.constant 0 : index
    %c0_3 = arith.constant 0 : index
    %3 = vector.load %arg7[%c0, %c0_1, %c0_2, %c0_3] : memref<2x18x32x128xf32, #tpu.memory_space<vmem>>, vector<2x16x32x128xf32>
    %c1_i32 = arith.constant 1 : i32
    %4 = tpu.dynamic_rotate %3 by %c1_i32 dim 2 : vector<2x16x32x128xf32>, i32 -> vector<2x16x32x128xf32>
    %5 = vector.extract_strided_slice %4 {offsets = [0, 0, 8, 0], sizes = [2, 16, 16, 128], strides = [1, 1, 1, 1]} : vector<2x16x32x128xf32> to vector<2x16x16x128xf32>
    %6 = vector.shape_cast %5 : vector<2x16x16x128xf32> to vector<512x128xf32>
    %7 = arith.truncf %6 : vector<512x128xf32> to vector<512x128xbf16>
    %c0_4 = arith.constant 0 : index
    %c0_5 = arith.constant 0 : index
    %c0_6 = arith.constant 0 : index
    %c0_7 = arith.constant 0 : index
    %8 = vector.load %arg2[%c0_4, %c0_5, %c0_6, %c0_7] : memref<1x9x128x128xbf16, #tpu.memory_space<vmem>>, vector<1x1x128x128xbf16>
    %9 = vector.shape_cast %8 : vector<1x1x128x128xbf16> to vector<128x128xbf16>
    %cst = arith.constant dense<0.000000e+00> : vector<512x128xf32>
    %10 = tpu.matmul %7, %9, %cst {dimension_numbers = #tpu.dot_dimension_numbers<[1], [0], [0], [1], [0, 0, 1, 1], [], []>} : vector<512x128xbf16>, vector<128x128xbf16>, vector<512x128xf32> -> vector<512x128xf32>
    %11 = vector.shape_cast %10 : vector<512x128xf32> to vector<2x16x16x128xf32>
    %c0_8 = arith.constant 0 : index
    %c0_9 = arith.constant 0 : index
    %c0_10 = arith.constant 0 : index
    %c0_11 = arith.constant 0 : index
    %12 = vector.load %arg8[%c0_8, %c0_9, %c0_10, %c0_11] : memref<2x16x16x128xf32, #tpu.memory_space<vmem>>, vector<2x16x16x128xf32>
    tpu.vector_store %arg8[%c0_8, %c0_9, %c0_10, %c0_11], %11 {strides = array<i32>} : memref<2x16x16x128xf32, #tpu.memory_space<vmem>>, vector<2x16x16x128xf32>,
    %13 = vector.extract_strided_slice %3 {offsets = [0, 0, 8, 0], sizes = [2, 16, 16, 128], strides = [1, 1, 1, 1]} : vector<2x16x32x128xf32> to vector<2x16x16x128xf32>
    %14 = vector.shape_cast %13 : vector<2x16x16x128xf32> to vector<512x128xf32>
    %15 = arith.truncf %14 : vector<512x128xf32> to vector<512x128xbf16>
    %c0_12 = arith.constant 0 : index
    %c1 = arith.constant 1 : index
    %c0_13 = arith.constant 0 : index
    %c0_14 = arith.constant 0 : index
    %16 = vector.load %arg2[%c0_12, %c1, %c0_13, %c0_14] : memref<1x9x128x128xbf16, #tpu.memory_space<vmem>>, vector<1x1x128x128xbf16>
    %17 = vector.shape_cast %16 : vector<1x1x128x128xbf16> to vector<128x128xbf16>
    %cst_15 = arith.constant dense<0.000000e+00> : vector<512x128xf32>
    %18 = tpu.matmul %15, %17, %cst_15 {dimension_numbers = #tpu.dot_dimension_numbers<[1], [0], [0], [1], [0, 0, 1, 1], [], []>} : vector<512x128xbf16>, vector<128x128xbf16>, vector<512x128xf32> -> vector<512x128xf32>
    %c0_16 = arith.constant 0 : index
    %c0_17 = arith.constant 0 : index
    %c0_18 = arith.constant 0 : index
    %c0_19 = arith.constant 0 : index
    %19 = vector.load %arg8[%c0_16, %c0_17, %c0_18, %c0_19] : memref<2x16x16x128xf32, #tpu.memory_space<vmem>>, vector<2x16x16x128xf32>
    %20 = vector.shape_cast %18 : vector<512x128xf32> to vector<2x16x16x128xf32>
    %21 = arith.addf %19, %20 : vector<2x16x16x128xf32>
    %c0_20 = arith.constant 0 : index
    %c0_21 = arith.constant 0 : index
    %c0_22 = arith.constant 0 : index
    %c0_23 = arith.constant 0 : index
    %22 = vector.load %arg8[%c0_20, %c0_21, %c0_22, %c0_23] : memref<2x16x16x128xf32, #tpu.memory_space<vmem>>, vector<2x16x16x128xf32>
    tpu.vector_store %arg8[%c0_20, %c0_21, %c0_22, %c0_23], %21 {strides = array<i32>} : memref<2x16x16x128xf32, #tpu.memory_space<vmem>>, vector<2x16x16x128xf32>,
    %c31_i32 = arith.constant 31 : i32
    %23 = tpu.dynamic_rotate %3 by %c31_i32 dim 2 : vector<2x16x32x128xf32>, i32 -> vector<2x16x32x128xf32>
    %24 = vector.extract_strided_slice %23 {offsets = [0, 0, 8, 0], sizes = [2, 16, 16, 128], strides = [1, 1, 1, 1]} : vector<2x16x32x128xf32> to vector<2x16x16x128xf32>
    %25 = vector.shape_cast %24 : vector<2x16x16x128xf32> to vector<512x128xf32>
    %26 = arith.truncf %25 : vector<512x128xf32> to vector<512x128xbf16>
    %c0_24 = arith.constant 0 : index
    %c2 = arith.constant 2 : index
    %c0_25 = arith.constant 0 : index
    %c0_26 = arith.constant 0 : index
    %27 = vector.load %arg2[%c0_24, %c2, %c0_25, %c0_26] : memref<1x9x128x128xbf16, #tpu.memory_space<vmem>>, vector<1x1x128x128xbf16>
    %28 = vector.shape_cast %27 : vector<1x1x128x128xbf16> to vector<128x128xbf16>
    %cst_27 = arith.constant dense<0.000000e+00> : vector<512x128xf32>
    %29 = tpu.matmul %26, %28, %cst_27 {dimension_numbers = #tpu.dot_dimension_numbers<[1], [0], [0], [1], [0, 0, 1, 1], [], []>} : vector<512x128xbf16>, vector<128x128xbf16>, vector<512x128xf32> -> vector<512x128xf32>
    %c0_28 = arith.constant 0 : index
    %c0_29 = arith.constant 0 : index
    %c0_30 = arith.constant 0 : index
    %c0_31 = arith.constant 0 : index
    %30 = vector.load %arg8[%c0_28, %c0_29, %c0_30, %c0_31] : memref<2x16x16x128xf32, #tpu.memory_space<vmem>>, vector<2x16x16x128xf32>
    %31 = vector.shape_cast %29 : vector<512x128xf32> to vector<2x16x16x128xf32>
    %32 = arith.addf %30, %31 : vector<2x16x16x128xf32>
    %c0_32 = arith.constant 0 : index
    %c0_33 = arith.constant 0 : index
    %c0_34 = arith.constant 0 : index
    %c0_35 = arith.constant 0 : index
    %33 = vector.load %arg8[%c0_32, %c0_33, %c0_34, %c0_35] : memref<2x16x16x128xf32, #tpu.memory_space<vmem>>, vector<2x16x16x128xf32>
    tpu.vector_store %arg8[%c0_32, %c0_33, %c0_34, %c0_35], %32 {strides = array<i32>} : memref<2x16x16x128xf32, #tpu.memory_space<vmem>>, vector<2x16x16x128xf32>,
    %c0_36 = arith.constant 0 : index
    %c1_37 = arith.constant 1 : index
    %c0_38 = arith.constant 0 : index
    %c0_39 = arith.constant 0 : index
    %34 = vector.load %arg7[%c0_36, %c1_37, %c0_38, %c0_39] : memref<2x18x32x128xf32, #tpu.memory_space<vmem>>, vector<2x16x32x128xf32>
    %c1_i32_40 = arith.constant 1 : i32
    %35 = tpu.dynamic_rotate %34 by %c1_i32_40 dim 2 : vector<2x16x32x128xf32>, i32 -> vector<2x16x32x128xf32>
    %36 = vector.extract_strided_slice %35 {offsets = [0, 0, 8, 0], sizes = [2, 16, 16, 128], strides = [1, 1, 1, 1]} : vector<2x16x32x128xf32> to vector<2x16x16x128xf32>
    %37 = vector.shape_cast %36 : vector<2x16x16x128xf32> to vector<512x128xf32>
    %38 = arith.truncf %37 : vector<512x128xf32> to vector<512x128xbf16>
    %c0_41 = arith.constant 0 : index
    %c3 = arith.constant 3 : index
    %c0_42 = arith.constant 0 : index
    %c0_43 = arith.constant 0 : index
    %39 = vector.load %arg2[%c0_41, %c3, %c0_42, %c0_43] : memref<1x9x128x128xbf16, #tpu.memory_space<vmem>>, vector<1x1x128x128xbf16>
    %40 = vector.shape_cast %39 : vector<1x1x128x128xbf16> to vector<128x128xbf16>
    %cst_44 = arith.constant dense<0.000000e+00> : vector<512x128xf32>
    %41 = tpu.matmul %38, %40, %cst_44 {dimension_numbers = #tpu.dot_dimension_numbers<[1], [0], [0], [1], [0, 0, 1, 1], [], []>} : vector<512x128xbf16>, vector<128x128xbf16>, vector<512x128xf32> -> vector<512x128xf32>
    %c0_45 = arith.constant 0 : index
    %c0_46 = arith.constant 0 : index
    %c0_47 = arith.constant 0 : index
    %c0_48 = arith.constant 0 : index
    %42 = vector.load %arg8[%c0_45, %c0_46, %c0_47, %c0_48] : memref<2x16x16x128xf32, #tpu.memory_space<vmem>>, vector<2x16x16x128xf32>
    %43 = vector.shape_cast %41 : vector<512x128xf32> to vector<2x16x16x128xf32>
    %44 = arith.addf %42, %43 : vector<2x16x16x128xf32>
    %c0_49 = arith.constant 0 : index
    %c0_50 = arith.constant 0 : index
    %c0_51 = arith.constant 0 : index
    %c0_52 = arith.constant 0 : index
    %45 = vector.load %arg8[%c0_49, %c0_50, %c0_51, %c0_52] : memref<2x16x16x128xf32, #tpu.memory_space<vmem>>, vector<2x16x16x128xf32>
    tpu.vector_store %arg8[%c0_49, %c0_50, %c0_51, %c0_52], %44 {strides = array<i32>} : memref<2x16x16x128xf32, #tpu.memory_space<vmem>>, vector<2x16x16x128xf32>,
    %46 = vector.extract_strided_slice %34 {offsets = [0, 0, 8, 0], sizes = [2, 16, 16, 128], strides = [1, 1, 1, 1]} : vector<2x16x32x128xf32> to vector<2x16x16x128xf32>
    %47 = vector.shape_cast %46 : vector<2x16x16x128xf32> to vector<512x128xf32>
    %48 = arith.truncf %47 : vector<512x128xf32> to vector<512x128xbf16>
    %c0_53 = arith.constant 0 : index
    %c4 = arith.constant 4 : index
    %c0_54 = arith.constant 0 : index
    %c0_55 = arith.constant 0 : index
    %49 = vector.load %arg2[%c0_53, %c4, %c0_54, %c0_55] : memref<1x9x128x128xbf16, #tpu.memory_space<vmem>>, vector<1x1x128x128xbf16>
    %50 = vector.shape_cast %49 : vector<1x1x128x128xbf16> to vector<128x128xbf16>
    %cst_56 = arith.constant dense<0.000000e+00> : vector<512x128xf32>
    %51 = tpu.matmul %48, %50, %cst_56 {dimension_numbers = #tpu.dot_dimension_numbers<[1], [0], [0], [1], [0, 0, 1, 1], [], []>} : vector<512x128xbf16>, vector<128x128xbf16>, vector<512x128xf32> -> vector<512x128xf32>
    %c0_57 = arith.constant 0 : index
    %c0_58 = arith.constant 0 : index
    %c0_59 = arith.constant 0 : index
    %c0_60 = arith.constant 0 : index
    %52 = vector.load %arg8[%c0_57, %c0_58, %c0_59, %c0_60] : memref<2x16x16x128xf32, #tpu.memory_space<vmem>>, vector<2x16x16x128xf32>
    %53 = vector.shape_cast %51 : vector<512x128xf32> to vector<2x16x16x128xf32>
    %54 = arith.addf %52, %53 : vector<2x16x16x128xf32>
    %c0_61 = arith.constant 0 : index
    %c0_62 = arith.constant 0 : index
    %c0_63 = arith.constant 0 : index
    %c0_64 = arith.constant 0 : index
    %55 = vector.load %arg8[%c0_61, %c0_62, %c0_63, %c0_64] : memref<2x16x16x128xf32, #tpu.memory_space<vmem>>, vector<2x16x16x128xf32>
    tpu.vector_store %arg8[%c0_61, %c0_62, %c0_63, %c0_64], %54 {strides = array<i32>} : memref<2x16x16x128xf32, #tpu.memory_space<vmem>>, vector<2x16x16x128xf32>,
    %c31_i32_65 = arith.constant 31 : i32
    %56 = tpu.dynamic_rotate %34 by %c31_i32_65 dim 2 : vector<2x16x32x128xf32>, i32 -> vector<2x16x32x128xf32>
    %57 = vector.extract_strided_slice %56 {offsets = [0, 0, 8, 0], sizes = [2, 16, 16, 128], strides = [1, 1, 1, 1]} : vector<2x16x32x128xf32> to vector<2x16x16x128xf32>
    %58 = vector.shape_cast %57 : vector<2x16x16x128xf32> to vector<512x128xf32>
    %59 = arith.truncf %58 : vector<512x128xf32> to vector<512x128xbf16>
    %c0_66 = arith.constant 0 : index
    %c5 = arith.constant 5 : index
    %c0_67 = arith.constant 0 : index
    %c0_68 = arith.constant 0 : index
    %60 = vector.load %arg2[%c0_66, %c5, %c0_67, %c0_68] : memref<1x9x128x128xbf16, #tpu.memory_space<vmem>>, vector<1x1x128x128xbf16>
    %61 = vector.shape_cast %60 : vector<1x1x128x128xbf16> to vector<128x128xbf16>
    %cst_69 = arith.constant dense<0.000000e+00> : vector<512x128xf32>
    %62 = tpu.matmul %59, %61, %cst_69 {dimension_numbers = #tpu.dot_dimension_numbers<[1], [0], [0], [1], [0, 0, 1, 1], [], []>} : vector<512x128xbf16>, vector<128x128xbf16>, vector<512x128xf32> -> vector<512x128xf32>
    %c0_70 = arith.constant 0 : index
    %c0_71 = arith.constant 0 : index
    %c0_72 = arith.constant 0 : index
    %c0_73 = arith.constant 0 : index
    %63 = vector.load %arg8[%c0_70, %c0_71, %c0_72, %c0_73] : memref<2x16x16x128xf32, #tpu.memory_space<vmem>>, vector<2x16x16x128xf32>
    %64 = vector.shape_cast %62 : vector<512x128xf32> to vector<2x16x16x128xf32>
    %65 = arith.addf %63, %64 : vector<2x16x16x128xf32>
    %c0_74 = arith.constant 0 : index
    %c0_75 = arith.constant 0 : index
    %c0_76 = arith.constant 0 : index
    %c0_77 = arith.constant 0 : index
    %66 = vector.load %arg8[%c0_74, %c0_75, %c0_76, %c0_77] : memref<2x16x16x128xf32, #tpu.memory_space<vmem>>, vector<2x16x16x128xf32>
    tpu.vector_store %arg8[%c0_74, %c0_75, %c0_76, %c0_77], %65 {strides = array<i32>} : memref<2x16x16x128xf32, #tpu.memory_space<vmem>>, vector<2x16x16x128xf32>,
    %c0_78 = arith.constant 0 : index
    %c2_79 = arith.constant 2 : index
    %c0_80 = arith.constant 0 : index
    %c0_81 = arith.constant 0 : index
    %67 = vector.load %arg7[%c0_78, %c2_79, %c0_80, %c0_81] : memref<2x18x32x128xf32, #tpu.memory_space<vmem>>, vector<2x16x32x128xf32>
    %c1_i32_82 = arith.constant 1 : i32
    %68 = tpu.dynamic_rotate %67 by %c1_i32_82 dim 2 : vector<2x16x32x128xf32>, i32 -> vector<2x16x32x128xf32>
    %69 = vector.extract_strided_slice %68 {offsets = [0, 0, 8, 0], sizes = [2, 16, 16, 128], strides = [1, 1, 1, 1]} : vector<2x16x32x128xf32> to vector<2x16x16x128xf32>
    %70 = vector.shape_cast %69 : vector<2x16x16x128xf32> to vector<512x128xf32>
    %71 = arith.truncf %70 : vector<512x128xf32> to vector<512x128xbf16>
    %c0_83 = arith.constant 0 : index
    %c6 = arith.constant 6 : index
    %c0_84 = arith.constant 0 : index
    %c0_85 = arith.constant 0 : index
    %72 = vector.load %arg2[%c0_83, %c6, %c0_84, %c0_85] : memref<1x9x128x128xbf16, #tpu.memory_space<vmem>>, vector<1x1x128x128xbf16>
    %73 = vector.shape_cast %72 : vector<1x1x128x128xbf16> to vector<128x128xbf16>
    %cst_86 = arith.constant dense<0.000000e+00> : vector<512x128xf32>
    %74 = tpu.matmul %71, %73, %cst_86 {dimension_numbers = #tpu.dot_dimension_numbers<[1], [0], [0], [1], [0, 0, 1, 1], [], []>} : vector<512x128xbf16>, vector<128x128xbf16>, vector<512x128xf32> -> vector<512x128xf32>
    %c0_87 = arith.constant 0 : index
    %c0_88 = arith.constant 0 : index
    %c0_89 = arith.constant 0 : index
    %c0_90 = arith.constant 0 : index
    %75 = vector.load %arg8[%c0_87, %c0_88, %c0_89, %c0_90] : memref<2x16x16x128xf32, #tpu.memory_space<vmem>>, vector<2x16x16x128xf32>
    %76 = vector.shape_cast %74 : vector<512x128xf32> to vector<2x16x16x128xf32>
    %77 = arith.addf %75, %76 : vector<2x16x16x128xf32>
    %c0_91 = arith.constant 0 : index
    %c0_92 = arith.constant 0 : index
    %c0_93 = arith.constant 0 : index
    %c0_94 = arith.constant 0 : index
    %78 = vector.load %arg8[%c0_91, %c0_92, %c0_93, %c0_94] : memref<2x16x16x128xf32, #tpu.memory_space<vmem>>, vector<2x16x16x128xf32>
    tpu.vector_store %arg8[%c0_91, %c0_92, %c0_93, %c0_94], %77 {strides = array<i32>} : memref<2x16x16x128xf32, #tpu.memory_space<vmem>>, vector<2x16x16x128xf32>,
    %79 = vector.extract_strided_slice %67 {offsets = [0, 0, 8, 0], sizes = [2, 16, 16, 128], strides = [1, 1, 1, 1]} : vector<2x16x32x128xf32> to vector<2x16x16x128xf32>
    %80 = vector.shape_cast %79 : vector<2x16x16x128xf32> to vector<512x128xf32>
    %81 = arith.truncf %80 : vector<512x128xf32> to vector<512x128xbf16>
    %c0_95 = arith.constant 0 : index
    %c7 = arith.constant 7 : index
    %c0_96 = arith.constant 0 : index
    %c0_97 = arith.constant 0 : index
    %82 = vector.load %arg2[%c0_95, %c7, %c0_96, %c0_97] : memref<1x9x128x128xbf16, #tpu.memory_space<vmem>>, vector<1x1x128x128xbf16>
    %83 = vector.shape_cast %82 : vector<1x1x128x128xbf16> to vector<128x128xbf16>
    %cst_98 = arith.constant dense<0.000000e+00> : vector<512x128xf32>
    %84 = tpu.matmul %81, %83, %cst_98 {dimension_numbers = #tpu.dot_dimension_numbers<[1], [0], [0], [1], [0, 0, 1, 1], [], []>} : vector<512x128xbf16>, vector<128x128xbf16>, vector<512x128xf32> -> vector<512x128xf32>
    %c0_99 = arith.constant 0 : index
    %c0_100 = arith.constant 0 : index
    %c0_101 = arith.constant 0 : index
    %c0_102 = arith.constant 0 : index
    %85 = vector.load %arg8[%c0_99, %c0_100, %c0_101, %c0_102] : memref<2x16x16x128xf32, #tpu.memory_space<vmem>>, vector<2x16x16x128xf32>
    %86 = vector.shape_cast %84 : vector<512x128xf32> to vector<2x16x16x128xf32>
    %87 = arith.addf %85, %86 : vector<2x16x16x128xf32>
    %c0_103 = arith.constant 0 : index
    %c0_104 = arith.constant 0 : index
    %c0_105 = arith.constant 0 : index
    %c0_106 = arith.constant 0 : index
    %88 = vector.load %arg8[%c0_103, %c0_104, %c0_105, %c0_106] : memref<2x16x16x128xf32, #tpu.memory_space<vmem>>, vector<2x16x16x128xf32>
    tpu.vector_store %arg8[%c0_103, %c0_104, %c0_105, %c0_106], %87 {strides = array<i32>} : memref<2x16x16x128xf32, #tpu.memory_space<vmem>>, vector<2x16x16x128xf32>,
    %c31_i32_107 = arith.constant 31 : i32
    %89 = tpu.dynamic_rotate %67 by %c31_i32_107 dim 2 : vector<2x16x32x128xf32>, i32 -> vector<2x16x32x128xf32>
    %90 = vector.extract_strided_slice %89 {offsets = [0, 0, 8, 0], sizes = [2, 16, 16, 128], strides = [1, 1, 1, 1]} : vector<2x16x32x128xf32> to vector<2x16x16x128xf32>
    %91 = vector.shape_cast %90 : vector<2x16x16x128xf32> to vector<512x128xf32>
    %92 = arith.truncf %91 : vector<512x128xf32> to vector<512x128xbf16>
    %c0_108 = arith.constant 0 : index
    %c8 = arith.constant 8 : index
    %c0_109 = arith.constant 0 : index
    %c0_110 = arith.constant 0 : index
    %93 = vector.load %arg2[%c0_108, %c8, %c0_109, %c0_110] : memref<1x9x128x128xbf16, #tpu.memory_space<vmem>>, vector<1x1x128x128xbf16>
    %94 = vector.shape_cast %93 : vector<1x1x128x128xbf16> to vector<128x128xbf16>
    %cst_111 = arith.constant dense<0.000000e+00> : vector<512x128xf32>
    %95 = tpu.matmul %92, %94, %cst_111 {dimension_numbers = #tpu.dot_dimension_numbers<[1], [0], [0], [1], [0, 0, 1, 1], [], []>} : vector<512x128xbf16>, vector<128x128xbf16>, vector<512x128xf32> -> vector<512x128xf32>
    %c0_112 = arith.constant 0 : index
    %c0_113 = arith.constant 0 : index
    %c0_114 = arith.constant 0 : index
    %c0_115 = arith.constant 0 : index
    %96 = vector.load %arg8[%c0_112, %c0_113, %c0_114, %c0_115] : memref<2x16x16x128xf32, #tpu.memory_space<vmem>>, vector<2x16x16x128xf32>
    %97 = vector.shape_cast %95 : vector<512x128xf32> to vector<2x16x16x128xf32>
    %98 = arith.addf %96, %97 : vector<2x16x16x128xf32>
    %c0_116 = arith.constant 0 : index
    %c0_117 = arith.constant 0 : index
    %c0_118 = arith.constant 0 : index
    %c0_119 = arith.constant 0 : index
    %99 = vector.load %arg8[%c0_116, %c0_117, %c0_118, %c0_119] : memref<2x16x16x128xf32, #tpu.memory_space<vmem>>, vector<2x16x16x128xf32>
    tpu.vector_store %arg8[%c0_116, %c0_117, %c0_118, %c0_119], %98 {strides = array<i32>} : memref<2x16x16x128xf32, #tpu.memory_space<vmem>>, vector<2x16x16x128xf32>,
    %c2_i32 = arith.constant 2 : i32
    %100 = arith.cmpi slt, %arg0, %c2_i32 : i32
    %101 = arith.extui %100 : i1 to i32
    %c0_i32_120 = arith.constant 0 : i32
    %102 = arith.cmpi ne, %101, %c0_i32_120 : i32
    scf.if %102 {
      %cst_123 = arith.constant 0.000000e+00 : f32
      %106 = vector.broadcast %cst_123 : f32 to vector<1x128xf32>
      %c0_124 = arith.constant 0 : index
      %c0_125 = arith.constant 0 : index
      %c0_126 = arith.constant 0 : index
      %c0_127 = arith.constant 0 : index
      %107 = vector.load %arg8[%c0_124, %c0_125, %c0_126, %c0_127] : memref<2x16x16x128xf32, #tpu.memory_space<vmem>>, vector<2x4x16x128xf32>
      %108 = vector.shape_cast %107 : vector<2x4x16x128xf32> to vector<128x128xf32>
      %cst_128 = arith.constant dense<0.000000e+00> : vector<128xf32>
      %109 = vector.multi_reduction <add>, %108, %cst_128 [0] : vector<128x128xf32> to vector<128xf32>
      %110 = vector.shape_cast %109 : vector<128xf32> to vector<1x128xf32>
      %111 = arith.addf %106, %110 : vector<1x128xf32>
      %c0_129 = arith.constant 0 : index
      %c4_130 = arith.constant 4 : index
      %c0_131 = arith.constant 0 : index
      %c0_132 = arith.constant 0 : index
      %112 = vector.load %arg8[%c0_129, %c4_130, %c0_131, %c0_132] : memref<2x16x16x128xf32, #tpu.memory_space<vmem>>, vector<2x4x16x128xf32>
      %113 = vector.shape_cast %112 : vector<2x4x16x128xf32> to vector<128x128xf32>
      %cst_133 = arith.constant dense<0.000000e+00> : vector<128xf32>
      %114 = vector.multi_reduction <add>, %113, %cst_133 [0] : vector<128x128xf32> to vector<128xf32>
      %115 = vector.shape_cast %114 : vector<128xf32> to vector<1x128xf32>
      %116 = arith.addf %111, %115 : vector<1x128xf32>
      %c0_134 = arith.constant 0 : index
      %c8_135 = arith.constant 8 : index
      %c0_136 = arith.constant 0 : index
      %c0_137 = arith.constant 0 : index
      %117 = vector.load %arg8[%c0_134, %c8_135, %c0_136, %c0_137] : memref<2x16x16x128xf32, #tpu.memory_space<vmem>>, vector<2x4x16x128xf32>
      %118 = vector.shape_cast %117 : vector<2x4x16x128xf32> to vector<128x128xf32>
      %cst_138 = arith.constant dense<0.000000e+00> : vector<128xf32>
      %119 = vector.multi_reduction <add>, %118, %cst_138 [0] : vector<128x128xf32> to vector<128xf32>
      %120 = vector.shape_cast %119 : vector<128xf32> to vector<1x128xf32>
      %121 = arith.addf %116, %120 : vector<1x128xf32>
      %c0_139 = arith.constant 0 : index
      %c12 = arith.constant 12 : index
      %c0_140 = arith.constant 0 : index
      %c0_141 = arith.constant 0 : index
      %122 = vector.load %arg8[%c0_139, %c12, %c0_140, %c0_141] : memref<2x16x16x128xf32, #tpu.memory_space<vmem>>, vector<2x4x16x128xf32>
      %123 = vector.shape_cast %122 : vector<2x4x16x128xf32> to vector<128x128xf32>
      %cst_142 = arith.constant dense<0.000000e+00> : vector<128xf32>
      %124 = vector.multi_reduction <add>, %123, %cst_142 [0] : vector<128x128xf32> to vector<128xf32>
      %125 = vector.shape_cast %124 : vector<128xf32> to vector<1x128xf32>
      %126 = arith.addf %121, %125 : vector<1x128xf32>
      %cst_143 = arith.constant 0.001953125 : f32
      %127 = vector.broadcast %cst_143 : f32 to vector<1x128xf32>
      %128 = arith.mulf %126, %127 : vector<1x128xf32>
      %cst_144 = arith.constant 0.000000e+00 : f32
      %129 = vector.broadcast %cst_144 : f32 to vector<1x128xf32>
      %c0_145 = arith.constant 0 : index
      %c0_146 = arith.constant 0 : index
      %c0_147 = arith.constant 0 : index
      %c0_148 = arith.constant 0 : index
      %130 = vector.load %arg8[%c0_145, %c0_146, %c0_147, %c0_148] : memref<2x16x16x128xf32, #tpu.memory_space<vmem>>, vector<2x4x16x128xf32>
      %131 = vector.shape_cast %130 : vector<2x4x16x128xf32> to vector<128x128xf32>
      %132 = vector.broadcast %128 : vector<1x128xf32> to vector<128x128xf32>
      %133 = arith.subf %131, %132 : vector<128x128xf32>
      %134 = arith.mulf %133, %133 : vector<128x128xf32>
      %cst_149 = arith.constant dense<0.000000e+00> : vector<128xf32>
      %135 = vector.multi_reduction <add>, %134, %cst_149 [0] : vector<128x128xf32> to vector<128xf32>
      %136 = vector.shape_cast %135 : vector<128xf32> to vector<1x128xf32>
      %137 = arith.addf %129, %136 : vector<1x128xf32>
      %c0_150 = arith.constant 0 : index
      %c4_151 = arith.constant 4 : index
      %c0_152 = arith.constant 0 : index
      %c0_153 = arith.constant 0 : index
      %138 = vector.load %arg8[%c0_150, %c4_151, %c0_152, %c0_153] : memref<2x16x16x128xf32, #tpu.memory_space<vmem>>, vector<2x4x16x128xf32>
      %139 = vector.shape_cast %138 : vector<2x4x16x128xf32> to vector<128x128xf32>
      %140 = vector.broadcast %128 : vector<1x128xf32> to vector<128x128xf32>
      %141 = arith.subf %139, %140 : vector<128x128xf32>
      %142 = arith.mulf %141, %141 : vector<128x128xf32>
      %cst_154 = arith.constant dense<0.000000e+00> : vector<128xf32>
      %143 = vector.multi_reduction <add>, %142, %cst_154 [0] : vector<128x128xf32> to vector<128xf32>
      %144 = vector.shape_cast %143 : vector<128xf32> to vector<1x128xf32>
      %145 = arith.addf %137, %144 : vector<1x128xf32>
      %c0_155 = arith.constant 0 : index
      %c8_156 = arith.constant 8 : index
      %c0_157 = arith.constant 0 : index
      %c0_158 = arith.constant 0 : index
      %146 = vector.load %arg8[%c0_155, %c8_156, %c0_157, %c0_158] : memref<2x16x16x128xf32, #tpu.memory_space<vmem>>, vector<2x4x16x128xf32>
      %147 = vector.shape_cast %146 : vector<2x4x16x128xf32> to vector<128x128xf32>
      %148 = vector.broadcast %128 : vector<1x128xf32> to vector<128x128xf32>
      %149 = arith.subf %147, %148 : vector<128x128xf32>
      %150 = arith.mulf %149, %149 : vector<128x128xf32>
      %cst_159 = arith.constant dense<0.000000e+00> : vector<128xf32>
      %151 = vector.multi_reduction <add>, %150, %cst_159 [0] : vector<128x128xf32> to vector<128xf32>
      %152 = vector.shape_cast %151 : vector<128xf32> to vector<1x128xf32>
      %153 = arith.addf %145, %152 : vector<1x128xf32>
      %c0_160 = arith.constant 0 : index
      %c12_161 = arith.constant 12 : index
      %c0_162 = arith.constant 0 : index
      %c0_163 = arith.constant 0 : index
      %154 = vector.load %arg8[%c0_160, %c12_161, %c0_162, %c0_163] : memref<2x16x16x128xf32, #tpu.memory_space<vmem>>, vector<2x4x16x128xf32>
      %155 = vector.shape_cast %154 : vector<2x4x16x128xf32> to vector<128x128xf32>
      %156 = vector.broadcast %128 : vector<1x128xf32> to vector<128x128xf32>
      %157 = arith.subf %155, %156 : vector<128x128xf32>
      %158 = arith.mulf %157, %157 : vector<128x128xf32>
      %cst_164 = arith.constant dense<0.000000e+00> : vector<128xf32>
      %159 = vector.multi_reduction <add>, %158, %cst_164 [0] : vector<128x128xf32> to vector<128xf32>
      %160 = vector.shape_cast %159 : vector<128xf32> to vector<1x128xf32>
      %161 = arith.addf %153, %160 : vector<1x128xf32>
      %cst_165 = arith.constant 0.001953125 : f32
      %162 = vector.broadcast %cst_165 : f32 to vector<1x128xf32>
      %163 = arith.mulf %161, %162 : vector<1x128xf32>
      %c0_166 = arith.constant 0 : index
      %c0_167 = arith.constant 0 : index
      %c0_168 = arith.constant 0 : index
      %164 = vector.load %arg4[%c0_166, %c0_167, %c0_168] : memref<1x1x128xf32, #tpu.memory_space<vmem>>, vector<1x1x128xf32>
      %165 = vector.shape_cast %164 : vector<1x1x128xf32> to vector<1x128xf32>
      %cst_169 = arith.constant 9.99999974E-6 : f32
      %166 = vector.broadcast %cst_169 : f32 to vector<1x128xf32>
      %167 = arith.addf %163, %166 : vector<1x128xf32>
      %168 = math.rsqrt %167 : vector<1x128xf32>
      %169 = arith.mulf %165, %168 : vector<1x128xf32>
      %c0_170 = arith.constant 0 : index
      %c0_171 = arith.constant 0 : index
      %c0_172 = arith.constant 0 : index
      %170 = vector.load %arg5[%c0_170, %c0_171, %c0_172] : memref<1x1x128xf32, #tpu.memory_space<vmem>>, vector<1x1x128xf32>
      %171 = vector.shape_cast %170 : vector<1x1x128xf32> to vector<1x128xf32>
      %172 = arith.mulf %128, %169 : vector<1x128xf32>
      %173 = arith.subf %171, %172 : vector<1x128xf32>
      %174 = vector.shape_cast %169 : vector<1x128xf32> to vector<1x1x1x128xf32>
      %175 = vector.shape_cast %173 : vector<1x128xf32> to vector<1x1x1x128xf32>
      %c0_173 = arith.constant 0 : index
      %c0_174 = arith.constant 0 : index
      %c0_175 = arith.constant 0 : index
      %c0_176 = arith.constant 0 : index
      %176 = vector.load %arg8[%c0_173, %c0_174, %c0_175, %c0_176] : memref<2x16x16x128xf32, #tpu.memory_space<vmem>>, vector<2x4x16x128xf32>
      %177 = vector.broadcast %174 : vector<1x1x1x128xf32> to vector<2x4x16x128xf32>
      %178 = arith.mulf %176, %177 : vector<2x4x16x128xf32>
      %179 = vector.broadcast %175 : vector<1x1x1x128xf32> to vector<2x4x16x128xf32>
      %180 = arith.addf %178, %179 : vector<2x4x16x128xf32>
      %cst_177 = arith.constant 0.000000e+00 : f32
      %181 = vector.broadcast %cst_177 : f32 to vector<2x4x16x128xf32>
      %182 = arith.cmpf oge, %180, %181 : vector<2x4x16x128xf32>
      %cst_178 = arith.constant 2.000000e-01 : f32
      %183 = vector.broadcast %cst_178 : f32 to vector<2x4x16x128xf32>
      %184 = arith.mulf %183, %180 : vector<2x4x16x128xf32>
      %185 = arith.select %182, %180, %184 : vector<2x4x16x128xi1>, vector<2x4x16x128xf32>
      %c0_179 = arith.constant 0 : index
      %c1_180 = arith.constant 1 : index
      %c8_181 = arith.constant 8 : index
      %c0_182 = arith.constant 0 : index
      %186 = vector.load %arg7[%c0_179, %c1_180, %c8_181, %c0_182] : memref<2x18x32x128xf32, #tpu.memory_space<vmem>>, vector<2x4x16x128xf32>
      tpu.vector_store %arg7[%c0_179, %c1_180, %c8_181, %c0_182], %185 {strides = array<i32>} : memref<2x18x32x128xf32, #tpu.memory_space<vmem>>, vector<2x4x16x128xf32>,
      %c0_183 = arith.constant 0 : index
      %c4_184 = arith.constant 4 : index
      %c0_185 = arith.constant 0 : index
      %c0_186 = arith.constant 0 : index
      %187 = vector.load %arg8[%c0_183, %c4_184, %c0_185, %c0_186] : memref<2x16x16x128xf32, #tpu.memory_space<vmem>>, vector<2x4x16x128xf32>
      %188 = vector.broadcast %174 : vector<1x1x1x128xf32> to vector<2x4x16x128xf32>
      %189 = arith.mulf %187, %188 : vector<2x4x16x128xf32>
      %190 = vector.broadcast %175 : vector<1x1x1x128xf32> to vector<2x4x16x128xf32>
      %191 = arith.addf %189, %190 : vector<2x4x16x128xf32>
      %cst_187 = arith.constant 0.000000e+00 : f32
      %192 = vector.broadcast %cst_187 : f32 to vector<2x4x16x128xf32>
      %193 = arith.cmpf oge, %191, %192 : vector<2x4x16x128xf32>
      %cst_188 = arith.constant 2.000000e-01 : f32
      %194 = vector.broadcast %cst_188 : f32 to vector<2x4x16x128xf32>
      %195 = arith.mulf %194, %191 : vector<2x4x16x128xf32>
      %196 = arith.select %193, %191, %195 : vector<2x4x16x128xi1>, vector<2x4x16x128xf32>
      %c0_189 = arith.constant 0 : index
      %c5_190 = arith.constant 5 : index
      %c8_191 = arith.constant 8 : index
      %c0_192 = arith.constant 0 : index
      %197 = vector.load %arg7[%c0_189, %c5_190, %c8_191, %c0_192] : memref<2x18x32x128xf32, #tpu.memory_space<vmem>>, vector<2x4x16x128xf32>
      tpu.vector_store %arg7[%c0_189, %c5_190, %c8_191, %c0_192], %196 {strides = array<i32>} : memref<2x18x32x128xf32, #tpu.memory_space<vmem>>, vector<2x4x16x128xf32>,
      %c0_193 = arith.constant 0 : index
      %c8_194 = arith.constant 8 : index
      %c0_195 = arith.constant 0 : index
      %c0_196 = arith.constant 0 : index
      %198 = vector.load %arg8[%c0_193, %c8_194, %c0_195, %c0_196] : memref<2x16x16x128xf32, #tpu.memory_space<vmem>>, vector<2x4x16x128xf32>
      %199 = vector.broadcast %174 : vector<1x1x1x128xf32> to vector<2x4x16x128xf32>
      %200 = arith.mulf %198, %199 : vector<2x4x16x128xf32>
      %201 = vector.broadcast %175 : vector<1x1x1x128xf32> to vector<2x4x16x128xf32>
      %202 = arith.addf %200, %201 : vector<2x4x16x128xf32>
      %cst_197 = arith.constant 0.000000e+00 : f32
      %203 = vector.broadcast %cst_197 : f32 to vector<2x4x16x128xf32>
      %204 = arith.cmpf oge, %202, %203 : vector<2x4x16x128xf32>
      %cst_198 = arith.constant 2.000000e-01 : f32
      %205 = vector.broadcast %cst_198 : f32 to vector<2x4x16x128xf32>
      %206 = arith.mulf %205, %202 : vector<2x4x16x128xf32>
      %207 = arith.select %204, %202, %206 : vector<2x4x16x128xi1>, vector<2x4x16x128xf32>
      %c0_199 = arith.constant 0 : index
      %c9 = arith.constant 9 : index
      %c8_200 = arith.constant 8 : index
      %c0_201 = arith.constant 0 : index
      %208 = vector.load %arg7[%c0_199, %c9, %c8_200, %c0_201] : memref<2x18x32x128xf32, #tpu.memory_space<vmem>>, vector<2x4x16x128xf32>
      tpu.vector_store %arg7[%c0_199, %c9, %c8_200, %c0_201], %207 {strides = array<i32>} : memref<2x18x32x128xf32, #tpu.memory_space<vmem>>, vector<2x4x16x128xf32>,
      %c0_202 = arith.constant 0 : index
      %c12_203 = arith.constant 12 : index
      %c0_204 = arith.constant 0 : index
      %c0_205 = arith.constant 0 : index
      %209 = vector.load %arg8[%c0_202, %c12_203, %c0_204, %c0_205] : memref<2x16x16x128xf32, #tpu.memory_space<vmem>>, vector<2x4x16x128xf32>
      %210 = vector.broadcast %174 : vector<1x1x1x128xf32> to vector<2x4x16x128xf32>
      %211 = arith.mulf %209, %210 : vector<2x4x16x128xf32>
      %212 = vector.broadcast %175 : vector<1x1x1x128xf32> to vector<2x4x16x128xf32>
      %213 = arith.addf %211, %212 : vector<2x4x16x128xf32>
      %cst_206 = arith.constant 0.000000e+00 : f32
      %214 = vector.broadcast %cst_206 : f32 to vector<2x4x16x128xf32>
      %215 = arith.cmpf oge, %213, %214 : vector<2x4x16x128xf32>
      %cst_207 = arith.constant 2.000000e-01 : f32
      %216 = vector.broadcast %cst_207 : f32 to vector<2x4x16x128xf32>
      %217 = arith.mulf %216, %213 : vector<2x4x16x128xf32>
      %218 = arith.select %215, %213, %217 : vector<2x4x16x128xi1>, vector<2x4x16x128xf32>
      %c0_208 = arith.constant 0 : index
      %c13 = arith.constant 13 : index
      %c8_209 = arith.constant 8 : index
      %c0_210 = arith.constant 0 : index
      %219 = vector.load %arg7[%c0_208, %c13, %c8_209, %c0_210] : memref<2x18x32x128xf32, #tpu.memory_space<vmem>>, vector<2x4x16x128xf32>
      tpu.vector_store %arg7[%c0_208, %c13, %c8_209, %c0_210], %218 {strides = array<i32>} : memref<2x18x32x128xf32, #tpu.memory_space<vmem>>, vector<2x4x16x128xf32>,
    } else {
    }
    %c2_i32_121 = arith.constant 2 : i32
    %103 = arith.cmpi eq, %arg0, %c2_i32_121 : i32
    %104 = arith.extui %103 : i1 to i32
    %c0_i32_122 = arith.constant 0 : i32
    %105 = arith.cmpi ne, %104, %c0_i32_122 : i32
    scf.if %105 {
      %c0_123 = arith.constant 0 : index
      %c0_124 = arith.constant 0 : index
      %c0_125 = arith.constant 0 : index
      %106 = vector.load %arg3[%c0_123, %c0_124, %c0_125] : memref<1x1x128xf32, #tpu.memory_space<vmem>>, vector<1x1x128xf32>
      %107 = vector.shape_cast %106 : vector<1x1x128xf32> to vector<1x128xf32>
      %108 = vector.shape_cast %107 : vector<1x128xf32> to vector<1x1x1x128xf32>
      %c0_126 = arith.constant 0 : index
      %c0_127 = arith.constant 0 : index
      %c0_128 = arith.constant 0 : index
      %c0_129 = arith.constant 0 : index
      %109 = vector.load %arg8[%c0_126, %c0_127, %c0_128, %c0_129] : memref<2x16x16x128xf32, #tpu.memory_space<vmem>>, vector<2x4x16x128xf32>
      %110 = vector.broadcast %108 : vector<1x1x1x128xf32> to vector<2x4x16x128xf32>
      %111 = arith.addf %109, %110 : vector<2x4x16x128xf32>
      %112 = math.tanh %111 : vector<2x4x16x128xf32>
      %113 = vector.extract_strided_slice %112 {offsets = [0, 0, 0, 0], sizes = [2, 4, 16, 8], strides = [1, 1, 1, 1]} : vector<2x4x16x128xf32> to vector<2x4x16x8xf32>
      %c0_130 = arith.constant 0 : index
      %c0_131 = arith.constant 0 : index
      %c0_132 = arith.constant 0 : index
      %c0_133 = arith.constant 0 : index
      %114 = vector.load %arg6[%c0_130, %c0_131, %c0_132, %c0_133] : memref<2x16x16x8xf32, #tpu.memory_space<vmem>>, vector<2x4x16x8xf32>
      tpu.vector_store %arg6[%c0_130, %c0_131, %c0_132, %c0_133], %113 {strides = array<i32>} : memref<2x16x16x8xf32, #tpu.memory_space<vmem>>, vector<2x4x16x8xf32>,
      %c0_134 = arith.constant 0 : index
      %c4_135 = arith.constant 4 : index
      %c0_136 = arith.constant 0 : index
      %c0_137 = arith.constant 0 : index
      %115 = vector.load %arg8[%c0_134, %c4_135, %c0_136, %c0_137] : memref<2x16x16x128xf32, #tpu.memory_space<vmem>>, vector<2x4x16x128xf32>
      %116 = vector.broadcast %108 : vector<1x1x1x128xf32> to vector<2x4x16x128xf32>
      %117 = arith.addf %115, %116 : vector<2x4x16x128xf32>
      %118 = math.tanh %117 : vector<2x4x16x128xf32>
      %119 = vector.extract_strided_slice %118 {offsets = [0, 0, 0, 0], sizes = [2, 4, 16, 8], strides = [1, 1, 1, 1]} : vector<2x4x16x128xf32> to vector<2x4x16x8xf32>
      %c0_138 = arith.constant 0 : index
      %c4_139 = arith.constant 4 : index
      %c0_140 = arith.constant 0 : index
      %c0_141 = arith.constant 0 : index
      %120 = vector.load %arg6[%c0_138, %c4_139, %c0_140, %c0_141] : memref<2x16x16x8xf32, #tpu.memory_space<vmem>>, vector<2x4x16x8xf32>
      tpu.vector_store %arg6[%c0_138, %c4_139, %c0_140, %c0_141], %119 {strides = array<i32>} : memref<2x16x16x8xf32, #tpu.memory_space<vmem>>, vector<2x4x16x8xf32>,
      %c0_142 = arith.constant 0 : index
      %c8_143 = arith.constant 8 : index
      %c0_144 = arith.constant 0 : index
      %c0_145 = arith.constant 0 : index
      %121 = vector.load %arg8[%c0_142, %c8_143, %c0_144, %c0_145] : memref<2x16x16x128xf32, #tpu.memory_space<vmem>>, vector<2x4x16x128xf32>
      %122 = vector.broadcast %108 : vector<1x1x1x128xf32> to vector<2x4x16x128xf32>
      %123 = arith.addf %121, %122 : vector<2x4x16x128xf32>
      %124 = math.tanh %123 : vector<2x4x16x128xf32>
      %125 = vector.extract_strided_slice %124 {offsets = [0, 0, 0, 0], sizes = [2, 4, 16, 8], strides = [1, 1, 1, 1]} : vector<2x4x16x128xf32> to vector<2x4x16x8xf32>
      %c0_146 = arith.constant 0 : index
      %c8_147 = arith.constant 8 : index
      %c0_148 = arith.constant 0 : index
      %c0_149 = arith.constant 0 : index
      %126 = vector.load %arg6[%c0_146, %c8_147, %c0_148, %c0_149] : memref<2x16x16x8xf32, #tpu.memory_space<vmem>>, vector<2x4x16x8xf32>
      tpu.vector_store %arg6[%c0_146, %c8_147, %c0_148, %c0_149], %125 {strides = array<i32>} : memref<2x16x16x8xf32, #tpu.memory_space<vmem>>, vector<2x4x16x8xf32>,
      %c0_150 = arith.constant 0 : index
      %c12 = arith.constant 12 : index
      %c0_151 = arith.constant 0 : index
      %c0_152 = arith.constant 0 : index
      %127 = vector.load %arg8[%c0_150, %c12, %c0_151, %c0_152] : memref<2x16x16x128xf32, #tpu.memory_space<vmem>>, vector<2x4x16x128xf32>
      %128 = vector.broadcast %108 : vector<1x1x1x128xf32> to vector<2x4x16x128xf32>
      %129 = arith.addf %127, %128 : vector<2x4x16x128xf32>
      %130 = math.tanh %129 : vector<2x4x16x128xf32>
      %131 = vector.extract_strided_slice %130 {offsets = [0, 0, 0, 0], sizes = [2, 4, 16, 8], strides = [1, 1, 1, 1]} : vector<2x4x16x128xf32> to vector<2x4x16x8xf32>
      %c0_153 = arith.constant 0 : index
      %c12_154 = arith.constant 12 : index
      %c0_155 = arith.constant 0 : index
      %c0_156 = arith.constant 0 : index
      %132 = vector.load %arg6[%c0_153, %c12_154, %c0_155, %c0_156] : memref<2x16x16x8xf32, #tpu.memory_space<vmem>>, vector<2x4x16x8xf32>
      tpu.vector_store %arg6[%c0_153, %c12_154, %c0_155, %c0_156], %131 {strides = array<i32>} : memref<2x16x16x8xf32, #tpu.memory_space<vmem>>, vector<2x4x16x8xf32>,
    } else {
    }
    return
  }
  func.func @transform_0(%arg0: i32) -> (i32, i32, i32, i32) {
    %c0_i32 = arith.constant 0 : i32
    %c0_i32_0 = arith.constant 0 : i32
    %c0_i32_1 = arith.constant 0 : i32
    %c0_i32_2 = arith.constant 0 : i32
    %c0_i32_3 = arith.constant 0 : i32
    return %c0_i32, %c0_i32_0, %c0_i32_1, %c0_i32_2 : i32, i32, i32, i32
  }
  func.func @transform_1(%arg0: i32) -> (i32, i32, i32, i32) {
    %c0_i32 = arith.constant 0 : i32
    %c0_i32_0 = arith.constant 0 : i32
    %c0_i32_1 = arith.constant 0 : i32
    %c0_i32_2 = arith.constant 0 : i32
    return %arg0, %c0_i32, %c0_i32_0, %c0_i32_1 : i32, i32, i32, i32
  }
  func.func @transform_2(%arg0: i32) -> (i32, i32, i32) {
    %c0_i32 = arith.constant 0 : i32
    %c0_i32_0 = arith.constant 0 : i32
    %c0_i32_1 = arith.constant 0 : i32
    return %arg0, %c0_i32, %c0_i32_0 : i32, i32, i32
  }
  func.func @transform_3(%arg0: i32) -> (i32, i32, i32) {
    %c0_i32 = arith.constant 0 : i32
    %c0_i32_0 = arith.constant 0 : i32
    %c0_i32_1 = arith.constant 0 : i32
    return %arg0, %c0_i32, %c0_i32_0 : i32, i32, i32
  }
  func.func @transform_4(%arg0: i32) -> (i32, i32, i32) {
    %c0_i32 = arith.constant 0 : i32
    %c0_i32_0 = arith.constant 0 : i32
    %c0_i32_1 = arith.constant 0 : i32
    return %arg0, %c0_i32, %c0_i32_0 : i32, i32, i32
  }
  func.func @transform_5(%arg0: i32) -> (i32, i32, i32, i32) {
    %c0_i32 = arith.constant 0 : i32
    %c0_i32_0 = arith.constant 0 : i32
    %c0_i32_1 = arith.constant 0 : i32
    %c0_i32_2 = arith.constant 0 : i32
    %c0_i32_3 = arith.constant 0 : i32
    return %c0_i32, %c0_i32_0, %c0_i32_1, %c0_i32_2 : i32, i32, i32, i32
  }
}

</mosaic_0001>

<llo_original>
// kernel: tpu_custom_call.1
$region0: #{tpu_custom_call.1}
  #allocation0 [shape = 'u32[]', space=smem, size = 0x4, offset = 0x4, fixed_abs, tag = 'smem constant byte address 0x4 - core index']
  #allocation1 [shape = 'u32[144,128]{1,0:T(1,128)}', space=vmem, size = 0x12000, scoped, tag = 'internal scratch']
  #allocation2 [shape = 'f32[2,18,32,128]{3,2,1,0:T(8,128)}', space=vmem, size = 0x90000, scoped, tag = 'scratch operand']
  #allocation3 [shape = 'f32[2,16,16,128]{3,2,1,0:T(8,128)}', space=vmem, size = 0x40000, scoped, tag = 'scratch operand']
  %s0 = inlined_call_operand.vmem [shape: f32[2,16,16,4], index: 0, kind: input, shape index: {}]
  %s1 = inlined_call_operand.hbm [shape: bf16[3,9,128,128], index: 1, kind: input, shape index: {}]
  %s2 = inlined_call_operand.vmem [shape: f32[3,1,128], index: 2, kind: input, shape index: {}]
  %s3 = inlined_call_operand.vmem [shape: f32[3,1,128], index: 3, kind: input, shape index: {}]
  %s4 = inlined_call_operand.vmem [shape: f32[3,1,128], index: 4, kind: input, shape index: {}]
  %s5 = inlined_call_operand.vmem [shape: f32[2,16,16,8], index: 5, kind: output, shape index: {}]
  %s6 = sld [smem:[#allocation0]]
  $region69: #{tpu_custom_call.1} parent=0
    _
  %s8 = ssub.s32 1, %s6
  %s9 = scalar_select 0, %s8, %s6
  $region1: #{tpu_custom_call.1} parent=0
    #allocation4 [shape = 'u8[589824]{0}', space=vmem, size = 0x90000, scoped, tag = 'input window, operand 1']
    #allocation5 [shape = 's32[2]{0}', space=sflag, size = 0x8, scoped, tag = 'scoped memory for tpu_custom_call.1']
    %10 = vsyncpa [#allocation5], 0
    %s11 = scalar_lea.sflag [#allocation5], 1
    %12 = vsyncpa %s11, 0
    loop: start=0, step=1, limit=5
    $region2: #{tpu_custom_call.1} parent=1 // loop_pre_header
      _
    $region3: #{tpu_custom_call.1} parent=1 // loop_header
      %s14 = sphi 0, %s18
      %p15 = scmp.ge.s32.totalorder %s14, 5
      %s22 = sphi 0, %s22
      %s24 = sphi 0, %s22
      %s25 = sphi 0, %s24
      %s39 = sphi 0, %s25
      %s45 = sphi 0, %s47
      %s48 = sphi 0, %s45
      %s49 = sphi 0, %s48
      %s65 = sphi 0, %s49
      %s71 = sphi 0, %s73
      %s74 = sphi 0, %s71
      %s75 = sphi 0, %s74
      %s91 = sphi 0, %s75
      %s97 = sphi 0, %s99
      %s100 = sphi 0, %s97
      %s101 = sphi 0, %s100
      %s117 = sphi 0, %s101
      %s123 = sphi 0, %s125
      %s126 = sphi 0, %s123
      %s127 = sphi 0, %s126
      %s143 = sphi 0, %s127
      %s147 = sphi 0, %s147
      %s149 = sphi 0, %s147
      %s150 = sphi 0, %s149
      %s164 = sphi 0, %s150
    $region4: #{tpu_custom_call.1} parent=1 // loop_header_branch
      %17 = sbr.rel (%p15) target = $region8
    $region5: #{tpu_custom_call.1} parent=1 // loop_body
      %s19 = ssub.s32 %s14, 1
      %s20 = ssub.s32 %s14, 2
      %s21 = sadd.s32 %s14, 1
      %s23 = sadd.s32 %s22, 1
      %p26 = scmp.eq.s32.totalorder %s14, 2
      %p27 = scmp.ne.s32.totalorder %s22, %s24
      %p28 = scmp.eq.s32.totalorder %s14, 0
      %p29 = por %p27, %p28
      %p30 = scmp.ne.s32.totalorder %s22, %s24
      %p31 = scmp.eq.s32.totalorder %s19, 2
      %p32 = por %p30, %p31
      %p33 = scmp.ne.s32.totalorder %s24, %s25
      %p34 = scmp.eq.s32.totalorder %s19, 0
      %p35 = por %p33, %p34
      %p36 = scmp.ne.s32.totalorder %s24, %s25
      %p37 = scmp.eq.s32.totalorder %s20, 2
      %p38 = por %p36, %p37
      %p40 = scmp.ne.s32.totalorder %s25, %s39
      %p41 = scmp.eq.s32.totalorder %s20, 0
      %p42 = por %p40, %p41
      %s43 = ssub.s32 %s14, %s21
      %p44 = scmp.eq.s32.totalorder %s43, 0
      %s46 = sadd.s32 %s45, 1
      %s47 = scalar_select %p44, %s45, %s46
      %p50 = pneg %p44
      %p51 = scmp.eq.s32.totalorder %s14, 2
      %p52 = por %p50, %p51
      %p53 = scmp.ne.s32.totalorder %s45, %s48
      %p54 = scmp.eq.s32.totalorder %s14, 0
      %p55 = por %p53, %p54
      %p56 = scmp.ne.s32.totalorder %s45, %s48
      %p57 = scmp.eq.s32.totalorder %s19, 2
      %p58 = por %p56, %p57
      %p59 = scmp.ne.s32.totalorder %s48, %s49
      %p60 = scmp.eq.s32.totalorder %s19, 0
      %p61 = por %p59, %p60
      %p62 = scmp.ne.s32.totalorder %s48, %s49
      %p63 = scmp.eq.s32.totalorder %s20, 2
      %p64 = por %p62, %p63
      %p66 = scmp.ne.s32.totalorder %s49, %s65
      %p67 = scmp.eq.s32.totalorder %s20, 0
      %p68 = por %p66, %p67
      %s69 = ssub.s32 %s14, %s21
      %p70 = scmp.eq.s32.totalorder %s69, 0
      %s72 = sadd.s32 %s71, 1
      %s73 = scalar_select %p70, %s71, %s72
      %p76 = pneg %p70
      %p77 = scmp.eq.s32.totalorder %s14, 2
      %p78 = por %p76, %p77
      %p79 = scmp.ne.s32.totalorder %s71, %s74
      %p80 = scmp.eq.s32.totalorder %s14, 0
      %p81 = por %p79, %p80
      %p82 = scmp.ne.s32.totalorder %s71, %s74
      %p83 = scmp.eq.s32.totalorder %s19, 2
      %p84 = por %p82, %p83
      %p85 = scmp.ne.s32.totalorder %s74, %s75
      %p86 = scmp.eq.s32.totalorder %s19, 0
      %p87 = por %p85, %p86
      %p88 = scmp.ne.s32.totalorder %s74, %s75
      %p89 = scmp.eq.s32.totalorder %s20, 2
      %p90 = por %p88, %p89
      %p92 = scmp.ne.s32.totalorder %s75, %s91
      %p93 = scmp.eq.s32.totalorder %s20, 0
      %p94 = por %p92, %p93
      %s95 = ssub.s32 %s14, %s21
      %p96 = scmp.eq.s32.totalorder %s95, 0
      %s98 = sadd.s32 %s97, 1
      %s99 = scalar_select %p96, %s97, %s98
      %p102 = pneg %p96
      %p103 = scmp.eq.s32.totalorder %s14, 2
      %p104 = por %p102, %p103
      %p105 = scmp.ne.s32.totalorder %s97, %s100
      %p106 = scmp.eq.s32.totalorder %s14, 0
      %p107 = por %p105, %p106
      %p108 = scmp.ne.s32.totalorder %s97, %s100
      %p109 = scmp.eq.s32.totalorder %s19, 2
      %p110 = por %p108, %p109
      %p111 = scmp.ne.s32.totalorder %s100, %s101
      %p112 = scmp.eq.s32.totalorder %s19, 0
      %p113 = por %p111, %p112
      %p114 = scmp.ne.s32.totalorder %s100, %s101
      %p115 = scmp.eq.s32.totalorder %s20, 2
      %p116 = por %p114, %p115
      %p118 = scmp.ne.s32.totalorder %s101, %s117
      %p119 = scmp.eq.s32.totalorder %s20, 0
      %p120 = por %p118, %p119
      %s121 = ssub.s32 %s14, %s21
      %p122 = scmp.eq.s32.totalorder %s121, 0
      %s124 = sadd.s32 %s123, 1
      %s125 = scalar_select %p122, %s123, %s124
      %p128 = pneg %p122
      %p129 = scmp.eq.s32.totalorder %s14, 2
      %p130 = por %p128, %p129
      %p131 = scmp.ne.s32.totalorder %s123, %s126
      %p132 = scmp.eq.s32.totalorder %s14, 0
      %p133 = por %p131, %p132
      %p134 = scmp.ne.s32.totalorder %s123, %s126
      %p135 = scmp.eq.s32.totalorder %s19, 2
      %p136 = por %p134, %p135
      %p137 = scmp.ne.s32.totalorder %s126, %s127
      %p138 = scmp.eq.s32.totalorder %s19, 0
      %p139 = por %p137, %p138
      %p140 = scmp.ne.s32.totalorder %s126, %s127
      %p141 = scmp.eq.s32.totalorder %s20, 2
      %p142 = por %p140, %p141
      %p144 = scmp.ne.s32.totalorder %s127, %s143
      %p145 = scmp.eq.s32.totalorder %s20, 0
      %p146 = por %p144, %p145
      %s148 = sadd.s32 %s147, 1
      %p151 = scmp.eq.s32.totalorder %s14, 2
      %p152 = scmp.ne.s32.totalorder %s147, %s149
      %p153 = scmp.eq.s32.totalorder %s14, 0
      %p154 = por %p152, %p153
      %p155 = scmp.ne.s32.totalorder %s147, %s149
      %p156 = scmp.eq.s32.totalorder %s19, 2
      %p157 = por %p155, %p156
      %p158 = scmp.ne.s32.totalorder %s149, %s150
      %p159 = scmp.eq.s32.totalorder %s19, 0
      %p160 = por %p158, %p159
      %p161 = scmp.ne.s32.totalorder %s149, %s150
      %p162 = scmp.eq.s32.totalorder %s20, 2
      %p163 = por %p161, %p162
      %p165 = scmp.ne.s32.totalorder %s150, %s164
      %p166 = scmp.eq.s32.totalorder %s20, 0
      %p167 = por %p165, %p166
      %p168 = scmp.le.s32.totalorder 1, %s14
      %p169 = scmp.lt.s32.totalorder %s14, 4
      %p170 = pnand %p168, %p169
      %p171 = pneg %p170
      // Predicated region
      $region9: #{tpu_custom_call.1} parent=5 // pred_check
        _
      $region10: #{tpu_custom_call.1} parent=5 // pred_check_branch
        %173 = sbr.rel (%p170) target = $region12
      $region11: #{tpu_custom_call.1} parent=5 // pred_region
        %s174 = ssub.s32 %s14, 1
        // Predicated region
        $region13: #{tpu_custom_call.1} parent=11 // pred_check
          %p175 = pneg %p35
        $region14: #{tpu_custom_call.1} parent=11 // pred_check_branch
          %177 = sbr.rel (%p175) target = $region16
        $region15: #{tpu_custom_call.1} parent=11 // pred_region
          _
        $region16: #{tpu_custom_call.1} parent=11 // pred_fallthru
          _
      $region12: #{tpu_custom_call.1} parent=5 // pred_fallthru
        _
      %p178 = scmp.lt.s32.totalorder %s14, 3
      // Predicated region
      $region17: #{tpu_custom_call.1} parent=5 // pred_check
        %p179 = pneg %p178
      $region18: #{tpu_custom_call.1} parent=5 // pred_check_branch
        %181 = sbr.rel (%p179) target = $region20
      $region19: #{tpu_custom_call.1} parent=5 // pred_region
        // Predicated region
        $region21: #{tpu_custom_call.1} parent=19 // pred_check
          %p182 = pneg %p55
        $region22: #{tpu_custom_call.1} parent=19 // pred_check_branch
          %184 = sbr.rel (%p182) target = $region24
        $region23: #{tpu_custom_call.1} parent=19 // pred_region
          %s185 = sand.u32 %s45, 1
          %s186 = scalar_lea.sflag [#allocation5], %s185
          %s187 = sand.u32 %s45, 1
          %s188 = smul.addr %s187, 576
          %s189 = scalar_lea.vmem [#allocation4], %s188
          %s191 = ssub.s32 9216, 9216
          %192 = vsyncadd %s186, %s191
          %s193 = smul.addr %s14, 144
          %s194 = smul.addr %s193, 64
          %s195 = scalar_lea.hbm %s1, %s194
          %s196 = sshll.u32 %s189, 4
          %s197 = int_to_ptr.vmem [resolvable:$true] %s196
          %202 = dma.hbm_to_vmem [thread:$0]  %s195, 9216, %s197, %s186, 64, 64, 4
        $region24: #{tpu_custom_call.1} parent=19 // pred_fallthru
          _
        // Predicated region
        $region25: #{tpu_custom_call.1} parent=19 // pred_check
          %p203 = pneg %p81
        $region26: #{tpu_custom_call.1} parent=19 // pred_check_branch
          %205 = sbr.rel (%p203) target = $region28
        $region27: #{tpu_custom_call.1} parent=19 // pred_region
          %p206 = scmp.lt.s32.totalorder %s14, 2
          %s207 = scalar_select %p206, %s14, 2
          %s208 = scalar_lea.vmem %s2, %s207
        $region28: #{tpu_custom_call.1} parent=19 // pred_fallthru
          _
        // Predicated region
        $region29: #{tpu_custom_call.1} parent=19 // pred_check
          %p209 = pneg %p107
        $region30: #{tpu_custom_call.1} parent=19 // pred_check_branch
          %211 = sbr.rel (%p209) target = $region32
        $region31: #{tpu_custom_call.1} parent=19 // pred_region
          %p212 = scmp.lt.s32.totalorder %s14, 2
          %s213 = scalar_select %p212, %s14, 2
          %s214 = scalar_lea.vmem %s3, %s213
        $region32: #{tpu_custom_call.1} parent=19 // pred_fallthru
          _
        // Predicated region
        $region33: #{tpu_custom_call.1} parent=19 // pred_check
          %p215 = pneg %p133
        $region34: #{tpu_custom_call.1} parent=19 // pred_check_branch
          %217 = sbr.rel (%p215) target = $region36
        $region35: #{tpu_custom_call.1} parent=19 // pred_region
          %p218 = scmp.lt.s32.totalorder %s14, 2
          %s219 = scalar_select %p218, %s14, 2
          %s220 = scalar_lea.vmem %s4, %s219
        $region36: #{tpu_custom_call.1} parent=19 // pred_fallthru
          _
      $region20: #{tpu_custom_call.1} parent=5 // pred_fallthru
        _
      %p221 = scmp.le.s32.totalorder 1, %s14
      %p222 = scmp.lt.s32.totalorder %s14, 4
      %p223 = pnand %p221, %p222
      %p224 = pneg %p223
      // Predicated region
      $region37: #{tpu_custom_call.1} parent=5 // pred_check
        _
      $region38: #{tpu_custom_call.1} parent=5 // pred_check_branch
        %226 = sbr.rel (%p223) target = $region40
      $region39: #{tpu_custom_call.1} parent=5 // pred_region
        %s227 = ssub.s32 %s14, 1
        %s228 = sand.u32 %s48, 1
        %s229 = scalar_lea.sflag [#allocation5], %s228
        %s230 = sand.u32 %s48, 1
        %s231 = smul.addr %s230, 576
        %s232 = scalar_lea.vmem [#allocation4], %s231
        // Predicated region
        $region41: #{tpu_custom_call.1} parent=39 // pred_check
          %p233 = pneg %p61
        $region42: #{tpu_custom_call.1} parent=39 // pred_check_branch
          %235 = sbr.rel (%p233) target = $region44
        $region43: #{tpu_custom_call.1} parent=39 // pred_region
          %236 = dma.done %s229, 9216
        $region44: #{tpu_custom_call.1} parent=39 // pred_fallthru
          _
        %p237 = pneg %p35
        %p238 = pneg %p32
        %s239 = sand.u32 %s48, 1
        %s240 = scalar_lea.sflag [#allocation5], %s239
        %s241 = sand.u32 %s48, 1
        %s242 = smul.addr %s241, 576
        %s243 = scalar_lea.vmem [#allocation4], %s242
        %p244 = pneg %p61
        %p245 = pneg %p58
        %p246 = scmp.lt.s32.totalorder %s19, 2
        %s247 = scalar_select %p246, %s19, 2
        %s248 = scalar_lea.vmem %s2, %s247
        %p249 = pneg %p87
        %p250 = pneg %p84
        %p251 = scmp.lt.s32.totalorder %s19, 2
        %s252 = scalar_select %p251, %s19, 2
        %s253 = scalar_lea.vmem %s3, %s252
        %p254 = pneg %p113
        %p255 = pneg %p110
        %p256 = scmp.lt.s32.totalorder %s19, 2
        %s257 = scalar_select %p256, %s19, 2
        %s258 = scalar_lea.vmem %s4, %s257
        %p259 = pneg %p139
        %p260 = pneg %p136
        %p261 = pneg %p160
        %p262 = pneg %p157
        %p263 = scmp.lt.s32.totalorder %s19, 2
        %s264 = scalar_select %p263, %s19, 2
        %s265 = scalar_lea.vmem %s2, %s264
        %p266 = scmp.lt.s32.totalorder %s19, 2
        %s267 = scalar_select %p266, %s19, 2
        %s268 = scalar_lea.vmem %s3, %s267
        %p269 = scmp.lt.s32.totalorder %s19, 2
        %s270 = scalar_select %p269, %s19, 2
        %s271 = scalar_lea.vmem %s4, %s270
        %p273 = scmp.eq.s32.totalorder %s19, 0
        // Predicated region
        $region45: #{tpu_custom_call.1} parent=39 // pred_check
          %p274 = pneg %p273
        $region46: #{tpu_custom_call.1} parent=39 // pred_check_branch
          %276 = sbr.rel (%p274) target = $region48
        $region47: #{tpu_custom_call.1} parent=39 // pred_region
          %277 = vst [vmem:[#allocation2] sm:$0xff] 0.0
          %278 = vst [vmem:[#allocation2 + $0x8] sm:$0xff] 0.0
          %279 = vst [vmem:[#allocation2 + $0x10] sm:$0xff] 0.0
          %280 = vst [vmem:[#allocation2 + $0x18] sm:$0xff] 0.0
          %281 = vst [vmem:[#allocation2 + $0x20] sm:$0xff] 0.0
          %282 = vst [vmem:[#allocation2 + $0x28] sm:$0xff] 0.0
          %283 = vst [vmem:[#allocation2 + $0x30] sm:$0xff] 0.0
          %284 = vst [vmem:[#allocation2 + $0x38] sm:$0xff] 0.0
          %285 = vst [vmem:[#allocation2 + $0x40] sm:$0xff] 0.0
          %286 = vst [vmem:[#allocation2 + $0x48] sm:$0xff] 0.0
          %287 = vst [vmem:[#allocation2 + $0x50] sm:$0xff] 0.0
          %288 = vst [vmem:[#allocation2 + $0x58] sm:$0xff] 0.0
          %289 = vst [vmem:[#allocation2 + $0x60] sm:$0xff] 0.0
          %290 = vst [vmem:[#allocation2 + $0x68] sm:$0xff] 0.0
          %291 = vst [vmem:[#allocation2 + $0x70] sm:$0xff] 0.0
          %292 = vst [vmem:[#allocation2 + $0x78] sm:$0xff] 0.0
          %293 = vst [vmem:[#allocation2 + $0x80] sm:$0xff] 0.0
          %294 = vst [vmem:[#allocation2 + $0x88] sm:$0xff] 0.0
          %295 = vst [vmem:[#allocation2 + $0x90] sm:$0xff] 0.0
          %296 = vst [vmem:[#allocation2 + $0x98] sm:$0xff] 0.0
          %297 = vst [vmem:[#allocation2 + $0xa0] sm:$0xff] 0.0
          %298 = vst [vmem:[#allocation2 + $0xa8] sm:$0xff] 0.0
          %299 = vst [vmem:[#allocation2 + $0xb0] sm:$0xff] 0.0
          %300 = vst [vmem:[#allocation2 + $0xb8] sm:$0xff] 0.0
          %301 = vst [vmem:[#allocation2 + $0xc0] sm:$0xff] 0.0
          %302 = vst [vmem:[#allocation2 + $0xc8] sm:$0xff] 0.0
          %303 = vst [vmem:[#allocation2 + $0xd0] sm:$0xff] 0.0
          %304 = vst [vmem:[#allocation2 + $0xd8] sm:$0xff] 0.0
          %305 = vst [vmem:[#allocation2 + $0xe0] sm:$0xff] 0.0
          %306 = vst [vmem:[#allocation2 + $0xe8] sm:$0xff] 0.0
          %307 = vst [vmem:[#allocation2 + $0xf0] sm:$0xff] 0.0
          %308 = vst [vmem:[#allocation2 + $0xf8] sm:$0xff] 0.0
          %309 = vst [vmem:[#allocation2 + $0x100] sm:$0xff] 0.0
          %310 = vst [vmem:[#allocation2 + $0x108] sm:$0xff] 0.0
          %311 = vst [vmem:[#allocation2 + $0x110] sm:$0xff] 0.0
          %312 = vst [vmem:[#allocation2 + $0x118] sm:$0xff] 0.0
          %313 = vst [vmem:[#allocation2 + $0x120] sm:$0xff] 0.0
          %314 = vst [vmem:[#allocation2 + $0x128] sm:$0xff] 0.0
          %315 = vst [vmem:[#allocation2 + $0x130] sm:$0xff] 0.0
          %316 = vst [vmem:[#allocation2 + $0x138] sm:$0xff] 0.0
          %317 = vst [vmem:[#allocation2 + $0x140] sm:$0xff] 0.0
          %318 = vst [vmem:[#allocation2 + $0x148] sm:$0xff] 0.0
          %319 = vst [vmem:[#allocation2 + $0x150] sm:$0xff] 0.0
          %320 = vst [vmem:[#allocation2 + $0x158] sm:$0xff] 0.0
          %321 = vst [vmem:[#allocation2 + $0x160] sm:$0xff] 0.0
          %322 = vst [vmem:[#allocation2 + $0x168] sm:$0xff] 0.0
          %323 = vst [vmem:[#allocation2 + $0x170] sm:$0xff] 0.0
          %324 = vst [vmem:[#allocation2 + $0x178] sm:$0xff] 0.0
          %325 = vst [vmem:[#allocation2 + $0x180] sm:$0xff] 0.0
          %326 = vst [vmem:[#allocation2 + $0x188] sm:$0xff] 0.0
          %327 = vst [vmem:[#allocation2 + $0x190] sm:$0xff] 0.0
          %328 = vst [vmem:[#allocation2 + $0x198] sm:$0xff] 0.0
          %329 = vst [vmem:[#allocation2 + $0x1a0] sm:$0xff] 0.0
          %330 = vst [vmem:[#allocation2 + $0x1a8] sm:$0xff] 0.0
          %331 = vst [vmem:[#allocation2 + $0x1b0] sm:$0xff] 0.0
          %332 = vst [vmem:[#allocation2 + $0x1b8] sm:$0xff] 0.0
          %333 = vst [vmem:[#allocation2 + $0x1c0] sm:$0xff] 0.0
          %334 = vst [vmem:[#allocation2 + $0x1c8] sm:$0xff] 0.0
          %335 = vst [vmem:[#allocation2 + $0x1d0] sm:$0xff] 0.0
          %336 = vst [vmem:[#allocation2 + $0x1d8] sm:$0xff] 0.0
          %337 = vst [vmem:[#allocation2 + $0x1e0] sm:$0xff] 0.0
          %338 = vst [vmem:[#allocation2 + $0x1e8] sm:$0xff] 0.0
          %339 = vst [vmem:[#allocation2 + $0x1f0] sm:$0xff] 0.0
          %340 = vst [vmem:[#allocation2 + $0x1f8] sm:$0xff] 0.0
          %341 = vst [vmem:[#allocation2 + $0x200] sm:$0xff] 0.0
          %342 = vst [vmem:[#allocation2 + $0x208] sm:$0xff] 0.0
          %343 = vst [vmem:[#allocation2 + $0x210] sm:$0xff] 0.0
          %344 = vst [vmem:[#allocation2 + $0x218] sm:$0xff] 0.0
          %345 = vst [vmem:[#allocation2 + $0x220] sm:$0xff] 0.0
          %346 = vst [vmem:[#allocation2 + $0x228] sm:$0xff] 0.0
          %347 = vst [vmem:[#allocation2 + $0x230] sm:$0xff] 0.0
          %348 = vst [vmem:[#allocation2 + $0x238] sm:$0xff] 0.0
          %349 = vst [vmem:[#allocation2 + $0x240] sm:$0xff] 0.0
          %350 = vst [vmem:[#allocation2 + $0x248] sm:$0xff] 0.0
          %351 = vst [vmem:[#allocation2 + $0x250] sm:$0xff] 0.0
          %352 = vst [vmem:[#allocation2 + $0x258] sm:$0xff] 0.0
          %353 = vst [vmem:[#allocation2 + $0x260] sm:$0xff] 0.0
          %354 = vst [vmem:[#allocation2 + $0x268] sm:$0xff] 0.0
          %355 = vst [vmem:[#allocation2 + $0x270] sm:$0xff] 0.0
          %356 = vst [vmem:[#allocation2 + $0x278] sm:$0xff] 0.0
          %357 = vst [vmem:[#allocation2 + $0x280] sm:$0xff] 0.0
          %358 = vst [vmem:[#allocation2 + $0x288] sm:$0xff] 0.0
          %359 = vst [vmem:[#allocation2 + $0x290] sm:$0xff] 0.0
          %360 = vst [vmem:[#allocation2 + $0x298] sm:$0xff] 0.0
          %361 = vst [vmem:[#allocation2 + $0x2a0] sm:$0xff] 0.0
          %362 = vst [vmem:[#allocation2 + $0x2a8] sm:$0xff] 0.0
          %363 = vst [vmem:[#allocation2 + $0x2b0] sm:$0xff] 0.0
          %364 = vst [vmem:[#allocation2 + $0x2b8] sm:$0xff] 0.0
          %365 = vst [vmem:[#allocation2 + $0x2c0] sm:$0xff] 0.0
          %366 = vst [vmem:[#allocation2 + $0x2c8] sm:$0xff] 0.0
          %367 = vst [vmem:[#allocation2 + $0x2d0] sm:$0xff] 0.0
          %368 = vst [vmem:[#allocation2 + $0x2d8] sm:$0xff] 0.0
          %369 = vst [vmem:[#allocation2 + $0x2e0] sm:$0xff] 0.0
          %370 = vst [vmem:[#allocation2 + $0x2e8] sm:$0xff] 0.0
          %371 = vst [vmem:[#allocation2 + $0x2f0] sm:$0xff] 0.0
          %372 = vst [vmem:[#allocation2 + $0x2f8] sm:$0xff] 0.0
          %373 = vst [vmem:[#allocation2 + $0x300] sm:$0xff] 0.0
          %374 = vst [vmem:[#allocation2 + $0x308] sm:$0xff] 0.0
          %375 = vst [vmem:[#allocation2 + $0x310] sm:$0xff] 0.0
          %376 = vst [vmem:[#allocation2 + $0x318] sm:$0xff] 0.0
          %377 = vst [vmem:[#allocation2 + $0x320] sm:$0xff] 0.0
          %378 = vst [vmem:[#allocation2 + $0x328] sm:$0xff] 0.0
          %379 = vst [vmem:[#allocation2 + $0x330] sm:$0xff] 0.0
          %380 = vst [vmem:[#allocation2 + $0x338] sm:$0xff] 0.0
          %381 = vst [vmem:[#allocation2 + $0x340] sm:$0xff] 0.0
          %382 = vst [vmem:[#allocation2 + $0x348] sm:$0xff] 0.0
          %383 = vst [vmem:[#allocation2 + $0x350] sm:$0xff] 0.0
          %384 = vst [vmem:[#allocation2 + $0x358] sm:$0xff] 0.0
          %385 = vst [vmem:[#allocation2 + $0x360] sm:$0xff] 0.0
          %386 = vst [vmem:[#allocation2 + $0x368] sm:$0xff] 0.0
          %387 = vst [vmem:[#allocation2 + $0x370] sm:$0xff] 0.0
          %388 = vst [vmem:[#allocation2 + $0x378] sm:$0xff] 0.0
          %389 = vst [vmem:[#allocation2 + $0x380] sm:$0xff] 0.0
          %390 = vst [vmem:[#allocation2 + $0x388] sm:$0xff] 0.0
          %391 = vst [vmem:[#allocation2 + $0x390] sm:$0xff] 0.0
          %392 = vst [vmem:[#allocation2 + $0x398] sm:$0xff] 0.0
          %393 = vst [vmem:[#allocation2 + $0x3a0] sm:$0xff] 0.0
          %394 = vst [vmem:[#allocation2 + $0x3a8] sm:$0xff] 0.0
          %395 = vst [vmem:[#allocation2 + $0x3b0] sm:$0xff] 0.0
          %396 = vst [vmem:[#allocation2 + $0x3b8] sm:$0xff] 0.0
          %397 = vst [vmem:[#allocation2 + $0x3c0] sm:$0xff] 0.0
          %398 = vst [vmem:[#allocation2 + $0x3c8] sm:$0xff] 0.0
          %399 = vst [vmem:[#allocation2 + $0x3d0] sm:$0xff] 0.0
          %400 = vst [vmem:[#allocation2 + $0x3d8] sm:$0xff] 0.0
          %401 = vst [vmem:[#allocation2 + $0x3e0] sm:$0xff] 0.0
          %402 = vst [vmem:[#allocation2 + $0x3e8] sm:$0xff] 0.0
          %403 = vst [vmem:[#allocation2 + $0x3f0] sm:$0xff] 0.0
          %404 = vst [vmem:[#allocation2 + $0x3f8] sm:$0xff] 0.0
          %405 = vst [vmem:[#allocation2 + $0x400] sm:$0xff] 0.0
          %406 = vst [vmem:[#allocation2 + $0x408] sm:$0xff] 0.0
          %407 = vst [vmem:[#allocation2 + $0x410] sm:$0xff] 0.0
          %408 = vst [vmem:[#allocation2 + $0x418] sm:$0xff] 0.0
          %409 = vst [vmem:[#allocation2 + $0x420] sm:$0xff] 0.0
          %410 = vst [vmem:[#allocation2 + $0x428] sm:$0xff] 0.0
          %411 = vst [vmem:[#allocation2 + $0x430] sm:$0xff] 0.0
          %412 = vst [vmem:[#allocation2 + $0x438] sm:$0xff] 0.0
          %413 = vst [vmem:[#allocation2 + $0x440] sm:$0xff] 0.0
          %414 = vst [vmem:[#allocation2 + $0x448] sm:$0xff] 0.0
          %415 = vst [vmem:[#allocation2 + $0x450] sm:$0xff] 0.0
          %416 = vst [vmem:[#allocation2 + $0x458] sm:$0xff] 0.0
          %417 = vst [vmem:[#allocation2 + $0x460] sm:$0xff] 0.0
          %418 = vst [vmem:[#allocation2 + $0x468] sm:$0xff] 0.0
          %419 = vst [vmem:[#allocation2 + $0x470] sm:$0xff] 0.0
          %420 = vst [vmem:[#allocation2 + $0x478] sm:$0xff] 0.0
          %v421 = vld [vmem:[%s0] sm:$0xff]
          %v422 = vld [vmem:[%s0 + $0x8] sm:$0xff]
          %v423 = vld [vmem:[%s0 + $0x10] sm:$0xff]
          %v424 = vld [vmem:[%s0 + $0x18] sm:$0xff]
          %v425 = vld [vmem:[%s0 + $0x20] sm:$0xff]
          %v426 = vld [vmem:[%s0 + $0x28] sm:$0xff]
          %v427 = vld [vmem:[%s0 + $0x30] sm:$0xff]
          %v428 = vld [vmem:[%s0 + $0x38] sm:$0xff]
          %v429 = vld [vmem:[%s0 + $0x40] sm:$0xff]
          %v430 = vld [vmem:[%s0 + $0x48] sm:$0xff]
          %v431 = vld [vmem:[%s0 + $0x50] sm:$0xff]
          %v432 = vld [vmem:[%s0 + $0x58] sm:$0xff]
          %v433 = vld [vmem:[%s0 + $0x60] sm:$0xff]
          %v434 = vld [vmem:[%s0 + $0x68] sm:$0xff]
          %v435 = vld [vmem:[%s0 + $0x70] sm:$0xff]
          %v436 = vld [vmem:[%s0 + $0x78] sm:$0xff]
          %v437 = vld [vmem:[%s0 + $0x80] sm:$0xff]
          %v438 = vld [vmem:[%s0 + $0x88] sm:$0xff]
          %v439 = vld [vmem:[%s0 + $0x90] sm:$0xff]
          %v440 = vld [vmem:[%s0 + $0x98] sm:$0xff]
          %v441 = vld [vmem:[%s0 + $0xa0] sm:$0xff]
          %v442 = vld [vmem:[%s0 + $0xa8] sm:$0xff]
          %v443 = vld [vmem:[%s0 + $0xb0] sm:$0xff]
          %v444 = vld [vmem:[%s0 + $0xb8] sm:$0xff]
          %v445 = vld [vmem:[%s0 + $0xc0] sm:$0xff]
          %v446 = vld [vmem:[%s0 + $0xc8] sm:$0xff]
          %v447 = vld [vmem:[%s0 + $0xd0] sm:$0xff]
          %v448 = vld [vmem:[%s0 + $0xd8] sm:$0xff]
          %v449 = vld [vmem:[%s0 + $0xe0] sm:$0xff]
          %v450 = vld [vmem:[%s0 + $0xe8] sm:$0xff]
          %v451 = vld [vmem:[%s0 + $0xf0] sm:$0xff]
          %v452 = vld [vmem:[%s0 + $0xf8] sm:$0xff]
          %v453 = vld [vmem:[%s0 + $0x100] sm:$0xff]
          %v454 = vld [vmem:[%s0 + $0x108] sm:$0xff]
          %v455 = vld [vmem:[%s0 + $0x110] sm:$0xff]
          %v456 = vld [vmem:[%s0 + $0x118] sm:$0xff]
          %v457 = vld [vmem:[%s0 + $0x120] sm:$0xff]
          %v458 = vld [vmem:[%s0 + $0x128] sm:$0xff]
          %v459 = vld [vmem:[%s0 + $0x130] sm:$0xff]
          %v460 = vld [vmem:[%s0 + $0x138] sm:$0xff]
          %v461 = vld [vmem:[%s0 + $0x140] sm:$0xff]
          %v462 = vld [vmem:[%s0 + $0x148] sm:$0xff]
          %v463 = vld [vmem:[%s0 + $0x150] sm:$0xff]
          %v464 = vld [vmem:[%s0 + $0x158] sm:$0xff]
          %v465 = vld [vmem:[%s0 + $0x160] sm:$0xff]
          %v466 = vld [vmem:[%s0 + $0x168] sm:$0xff]
          %v467 = vld [vmem:[%s0 + $0x170] sm:$0xff]
          %v468 = vld [vmem:[%s0 + $0x178] sm:$0xff]
          %v469 = vld [vmem:[%s0 + $0x180] sm:$0xff]
          %v470 = vld [vmem:[%s0 + $0x188] sm:$0xff]
          %v471 = vld [vmem:[%s0 + $0x190] sm:$0xff]
          %v472 = vld [vmem:[%s0 + $0x198] sm:$0xff]
          %v473 = vld [vmem:[%s0 + $0x1a0] sm:$0xff]
          %v474 = vld [vmem:[%s0 + $0x1a8] sm:$0xff]
          %v475 = vld [vmem:[%s0 + $0x1b0] sm:$0xff]
          %v476 = vld [vmem:[%s0 + $0x1b8] sm:$0xff]
          %v477 = vld [vmem:[%s0 + $0x1c0] sm:$0xff]
          %v478 = vld [vmem:[%s0 + $0x1c8] sm:$0xff]
          %v479 = vld [vmem:[%s0 + $0x1d0] sm:$0xff]
          %v480 = vld [vmem:[%s0 + $0x1d8] sm:$0xff]
          %v481 = vld [vmem:[%s0 + $0x1e0] sm:$0xff]
          %v482 = vld [vmem:[%s0 + $0x1e8] sm:$0xff]
          %v483 = vld [vmem:[%s0 + $0x1f0] sm:$0xff]
          %v484 = vld [vmem:[%s0 + $0x1f8] sm:$0xff]
          %s485 = scalar_lea.vmem [#allocation2], 32
          %vm486 = vcmask 31744
          %487 = vst.msk [vmem:[%s485 + $0x8] sm:$0xff] %vm486, %v421
          %488 = vst.msk [vmem:[%s485 + $0x10] sm:$0xff] %vm486, %v422
          %489 = vst.msk [vmem:[%s485 + $0x28] sm:$0xff] %vm486, %v423
          %490 = vst.msk [vmem:[%s485 + $0x30] sm:$0xff] %vm486, %v424
          %491 = vst.msk [vmem:[%s485 + $0x48] sm:$0xff] %vm486, %v425
          %492 = vst.msk [vmem:[%s485 + $0x50] sm:$0xff] %vm486, %v426
          %493 = vst.msk [vmem:[%s485 + $0x68] sm:$0xff] %vm486, %v427
          %494 = vst.msk [vmem:[%s485 + $0x70] sm:$0xff] %vm486, %v428
          %495 = vst.msk [vmem:[%s485 + $0x88] sm:$0xff] %vm486, %v429
          %496 = vst.msk [vmem:[%s485 + $0x90] sm:$0xff] %vm486, %v430
          %497 = vst.msk [vmem:[%s485 + $0xa8] sm:$0xff] %vm486, %v431
          %498 = vst.msk [vmem:[%s485 + $0xb0] sm:$0xff] %vm486, %v432
          %499 = vst.msk [vmem:[%s485 + $0xc8] sm:$0xff] %vm486, %v433
          %500 = vst.msk [vmem:[%s485 + $0xd0] sm:$0xff] %vm486, %v434
          %501 = vst.msk [vmem:[%s485 + $0xe8] sm:$0xff] %vm486, %v435
          %502 = vst.msk [vmem:[%s485 + $0xf0] sm:$0xff] %vm486, %v436
          %503 = vst.msk [vmem:[%s485 + $0x108] sm:$0xff] %vm486, %v437
          %504 = vst.msk [vmem:[%s485 + $0x110] sm:$0xff] %vm486, %v438
          %505 = vst.msk [vmem:[%s485 + $0x128] sm:$0xff] %vm486, %v439
          %506 = vst.msk [vmem:[%s485 + $0x130] sm:$0xff] %vm486, %v440
          %507 = vst.msk [vmem:[%s485 + $0x148] sm:$0xff] %vm486, %v441
          %508 = vst.msk [vmem:[%s485 + $0x150] sm:$0xff] %vm486, %v442
          %509 = vst.msk [vmem:[%s485 + $0x168] sm:$0xff] %vm486, %v443
          %510 = vst.msk [vmem:[%s485 + $0x170] sm:$0xff] %vm486, %v444
          %511 = vst.msk [vmem:[%s485 + $0x188] sm:$0xff] %vm486, %v445
          %512 = vst.msk [vmem:[%s485 + $0x190] sm:$0xff] %vm486, %v446
          %513 = vst.msk [vmem:[%s485 + $0x1a8] sm:$0xff] %vm486, %v447
          %514 = vst.msk [vmem:[%s485 + $0x1b0] sm:$0xff] %vm486, %v448
          %515 = vst.msk [vmem:[%s485 + $0x1c8] sm:$0xff] %vm486, %v449
          %516 = vst.msk [vmem:[%s485 + $0x1d0] sm:$0xff] %vm486, %v450
          %517 = vst.msk [vmem:[%s485 + $0x1e8] sm:$0xff] %vm486, %v451
          %518 = vst.msk [vmem:[%s485 + $0x1f0] sm:$0xff] %vm486, %v452
          %519 = vst.msk [vmem:[%s485 + $0x248] sm:$0xff] %vm486, %v453
          %520 = vst.msk [vmem:[%s485 + $0x250] sm:$0xff] %vm486, %v454
          %521 = vst.msk [vmem:[%s485 + $0x268] sm:$0xff] %vm486, %v455
          %522 = vst.msk [vmem:[%s485 + $0x270] sm:$0xff] %vm486, %v456
          %523 = vst.msk [vmem:[%s485 + $0x288] sm:$0xff] %vm486, %v457
          %524 = vst.msk [vmem:[%s485 + $0x290] sm:$0xff] %vm486, %v458
          %525 = vst.msk [vmem:[%s485 + $0x2a8] sm:$0xff] %vm486, %v459
          %526 = vst.msk [vmem:[%s485 + $0x2b0] sm:$0xff] %vm486, %v460
          %527 = vst.msk [vmem:[%s485 + $0x2c8] sm:$0xff] %vm486, %v461
          %528 = vst.msk [vmem:[%s485 + $0x2d0] sm:$0xff] %vm486, %v462
          %529 = vst.msk [vmem:[%s485 + $0x2e8] sm:$0xff] %vm486, %v463
          %530 = vst.msk [vmem:[%s485 + $0x2f0] sm:$0xff] %vm486, %v464
          %531 = vst.msk [vmem:[%s485 + $0x308] sm:$0xff] %vm486, %v465
          %532 = vst.msk [vmem:[%s485 + $0x310] sm:$0xff] %vm486, %v466
          %533 = vst.msk [vmem:[%s485 + $0x328] sm:$0xff] %vm486, %v467
          %534 = vst.msk [vmem:[%s485 + $0x330] sm:$0xff] %vm486, %v468
          %535 = vst.msk [vmem:[%s485 + $0x348] sm:$0xff] %vm486, %v469
          %536 = vst.msk [vmem:[%s485 + $0x350] sm:$0xff] %vm486, %v470
          %537 = vst.msk [vmem:[%s485 + $0x368] sm:$0xff] %vm486, %v471
          %538 = vst.msk [vmem:[%s485 + $0x370] sm:$0xff] %vm486, %v472
          %539 = vst.msk [vmem:[%s485 + $0x388] sm:$0xff] %vm486, %v473
          %540 = vst.msk [vmem:[%s485 + $0x390] sm:$0xff] %vm486, %v474
          %541 = vst.msk [vmem:[%s485 + $0x3a8] sm:$0xff] %vm486, %v475
          %542 = vst.msk [vmem:[%s485 + $0x3b0] sm:$0xff] %vm486, %v476
          %543 = vst.msk [vmem:[%s485 + $0x3c8] sm:$0xff] %vm486, %v477
          %544 = vst.msk [vmem:[%s485 + $0x3d0] sm:$0xff] %vm486, %v478
          %545 = vst.msk [vmem:[%s485 + $0x3e8] sm:$0xff] %vm486, %v479
          %546 = vst.msk [vmem:[%s485 + $0x3f0] sm:$0xff] %vm486, %v480
          %547 = vst.msk [vmem:[%s485 + $0x408] sm:$0xff] %vm486, %v481
          %548 = vst.msk [vmem:[%s485 + $0x410] sm:$0xff] %vm486, %v482
          %549 = vst.msk [vmem:[%s485 + $0x428] sm:$0xff] %vm486, %v483
          %550 = vst.msk [vmem:[%s485 + $0x430] sm:$0xff] %vm486, %v484
        $region48: #{tpu_custom_call.1} parent=39 // pred_fallthru
          _
        %v551 = vld [vmem:[#allocation2] sm:$0xff]
        %v552 = vld [vmem:[#allocation2 + $0x8] sm:$0xff]
        %v553 = vld [vmem:[#allocation2 + $0x10] sm:$0xff]
        %v554 = vld [vmem:[#allocation2 + $0x18] sm:$0xff]
        %v555 = vld [vmem:[#allocation2 + $0x20] sm:$0xff]
        %v556 = vld [vmem:[#allocation2 + $0x28] sm:$0xff]
        %v557 = vld [vmem:[#allocation2 + $0x30] sm:$0xff]
        %v558 = vld [vmem:[#allocation2 + $0x38] sm:$0xff]
        %v559 = vld [vmem:[#allocation2 + $0x40] sm:$0xff]
        %v560 = vld [vmem:[#allocation2 + $0x48] sm:$0xff]
        %v561 = vld [vmem:[#allocation2 + $0x50] sm:$0xff]
        %v562 = vld [vmem:[#allocation2 + $0x58] sm:$0xff]
        %v563 = vld [vmem:[#allocation2 + $0x60] sm:$0xff]
        %v564 = vld [vmem:[#allocation2 + $0x68] sm:$0xff]
        %v565 = vld [vmem:[#allocation2 + $0x70] sm:$0xff]
        %v566 = vld [vmem:[#allocation2 + $0x78] sm:$0xff]
        %v567 = vld [vmem:[#allocation2 + $0x80] sm:$0xff]
        %v568 = vld [vmem:[#allocation2 + $0x88] sm:$0xff]
        %v569 = vld [vmem:[#allocation2 + $0x90] sm:$0xff]
        %v570 = vld [vmem:[#allocation2 + $0x98] sm:$0xff]
        %v571 = vld [vmem:[#allocation2 + $0xa0] sm:$0xff]
        %v572 = vld [vmem:[#allocation2 + $0xa8] sm:$0xff]
        %v573 = vld [vmem:[#allocation2 + $0xb0] sm:$0xff]
        %v574 = vld [vmem:[#allocation2 + $0xb8] sm:$0xff]
        %v575 = vld [vmem:[#allocation2 + $0xc0] sm:$0xff]
        %v576 = vld [vmem:[#allocation2 + $0xc8] sm:$0xff]
        %v577 = vld [vmem:[#allocation2 + $0xd0] sm:$0xff]
        %v578 = vld [vmem:[#allocation2 + $0xd8] sm:$0xff]
        %v579 = vld [vmem:[#allocation2 + $0xe0] sm:$0xff]
        %v580 = vld [vmem:[#allocation2 + $0xe8] sm:$0xff]
        %v581 = vld [vmem:[#allocation2 + $0xf0] sm:$0xff]
        %v582 = vld [vmem:[#allocation2 + $0xf8] sm:$0xff]
        %v583 = vld [vmem:[#allocation2 + $0x100] sm:$0xff]
        %v584 = vld [vmem:[#allocation2 + $0x108] sm:$0xff]
        %v585 = vld [vmem:[#allocation2 + $0x110] sm:$0xff]
        %v586 = vld [vmem:[#allocation2 + $0x118] sm:$0xff]
        %v587 = vld [vmem:[#allocation2 + $0x120] sm:$0xff]
        %v588 = vld [vmem:[#allocation2 + $0x128] sm:$0xff]
        %v589 = vld [vmem:[#allocation2 + $0x130] sm:$0xff]
        %v590 = vld [vmem:[#allocation2 + $0x138] sm:$0xff]
        %v591 = vld [vmem:[#allocation2 + $0x140] sm:$0xff]
        %v592 = vld [vmem:[#allocation2 + $0x148] sm:$0xff]
        %v593 = vld [vmem:[#allocation2 + $0x150] sm:$0xff]
        %v594 = vld [vmem:[#allocation2 + $0x158] sm:$0xff]
        %v595 = vld [vmem:[#allocation2 + $0x160] sm:$0xff]
        %v596 = vld [vmem:[#allocation2 + $0x168] sm:$0xff]
        %v597 = vld [vmem:[#allocation2 + $0x170] sm:$0xff]
        %v598 = vld [vmem:[#allocation2 + $0x178] sm:$0xff]
        %v599 = vld [vmem:[#allocation2 + $0x180] sm:$0xff]
        %v600 = vld [vmem:[#allocation2 + $0x188] sm:$0xff]
        %v601 = vld [vmem:[#allocation2 + $0x190] sm:$0xff]
        %v602 = vld [vmem:[#allocation2 + $0x198] sm:$0xff]
        %v603 = vld [vmem:[#allocation2 + $0x1a0] sm:$0xff]
        %v604 = vld [vmem:[#allocation2 + $0x1a8] sm:$0xff]
        %v605 = vld [vmem:[#allocation2 + $0x1b0] sm:$0xff]
        %v606 = vld [vmem:[#allocation2 + $0x1b8] sm:$0xff]
        %v607 = vld [vmem:[#allocation2 + $0x1c0] sm:$0xff]
        %v608 = vld [vmem:[#allocation2 + $0x1c8] sm:$0xff]
        %v609 = vld [vmem:[#allocation2 + $0x1d0] sm:$0xff]
        %v610 = vld [vmem:[#allocation2 + $0x1d8] sm:$0xff]
        %v611 = vld [vmem:[#allocation2 + $0x1e0] sm:$0xff]
        %v612 = vld [vmem:[#allocation2 + $0x1e8] sm:$0xff]
        %v613 = vld [vmem:[#allocation2 + $0x1f0] sm:$0xff]
        %v614 = vld [vmem:[#allocation2 + $0x1f8] sm:$0xff]
        %v615 = vld [vmem:[#allocation2 + $0x240] sm:$0xff]
        %v616 = vld [vmem:[#allocation2 + $0x248] sm:$0xff]
        %v617 = vld [vmem:[#allocation2 + $0x250] sm:$0xff]
        %v618 = vld [vmem:[#allocation2 + $0x258] sm:$0xff]
        %v619 = vld [vmem:[#allocation2 + $0x260] sm:$0xff]
        %v620 = vld [vmem:[#allocation2 + $0x268] sm:$0xff]
        %v621 = vld [vmem:[#allocation2 + $0x270] sm:$0xff]
        %v622 = vld [vmem:[#allocation2 + $0x278] sm:$0xff]
        %v623 = vld [vmem:[#allocation2 + $0x280] sm:$0xff]
        %v624 = vld [vmem:[#allocation2 + $0x288] sm:$0xff]
        %v625 = vld [vmem:[#allocation2 + $0x290] sm:$0xff]
        %v626 = vld [vmem:[#allocation2 + $0x298] sm:$0xff]
        %v627 = vld [vmem:[#allocation2 + $0x2a0] sm:$0xff]
        %v628 = vld [vmem:[#allocation2 + $0x2a8] sm:$0xff]
        %v629 = vld [vmem:[#allocation2 + $0x2b0] sm:$0xff]
        %v630 = vld [vmem:[#allocation2 + $0x2b8] sm:$0xff]
        %v631 = vld [vmem:[#allocation2 + $0x2c0] sm:$0xff]
        %v632 = vld [vmem:[#allocation2 + $0x2c8] sm:$0xff]
        %v633 = vld [vmem:[#allocation2 + $0x2d0] sm:$0xff]
        %v634 = vld [vmem:[#allocation2 + $0x2d8] sm:$0xff]
        %v635 = vld [vmem:[#allocation2 + $0x2e0] sm:$0xff]
        %v636 = vld [vmem:[#allocation2 + $0x2e8] sm:$0xff]
        %v637 = vld [vmem:[#allocation2 + $0x2f0] sm:$0xff]
        %v638 = vld [vmem:[#allocation2 + $0x2f8] sm:$0xff]
        %v639 = vld [vmem:[#allocation2 + $0x300] sm:$0xff]
        %v640 = vld [vmem:[#allocation2 + $0x308] sm:$0xff]
        %v641 = vld [vmem:[#allocation2 + $0x310] sm:$0xff]
        %v642 = vld [vmem:[#allocation2 + $0x318] sm:$0xff]
        %v643 = vld [vmem:[#allocation2 + $0x320] sm:$0xff]
        %v644 = vld [vmem:[#allocation2 + $0x328] sm:$0xff]
        %v645 = vld [vmem:[#allocation2 + $0x330] sm:$0xff]
        %v646 = vld [vmem:[#allocation2 + $0x338] sm:$0xff]
        %v647 = vld [vmem:[#allocation2 + $0x340] sm:$0xff]
        %v648 = vld [vmem:[#allocation2 + $0x348] sm:$0xff]
        %v649 = vld [vmem:[#allocation2 + $0x350] sm:$0xff]
        %v650 = vld [vmem:[#allocation2 + $0x358] sm:$0xff]
        %v651 = vld [vmem:[#allocation2 + $0x360] sm:$0xff]
        %v652 = vld [vmem:[#allocation2 + $0x368] sm:$0xff]
        %v653 = vld [vmem:[#allocation2 + $0x370] sm:$0xff]
        %v654 = vld [vmem:[#allocation2 + $0x378] sm:$0xff]
        %v655 = vld [vmem:[#allocation2 + $0x380] sm:$0xff]
        %v656 = vld [vmem:[#allocation2 + $0x388] sm:$0xff]
        %v657 = vld [vmem:[#allocation2 + $0x390] sm:$0xff]
        %v658 = vld [vmem:[#allocation2 + $0x398] sm:$0xff]
        %v659 = vld [vmem:[#allocation2 + $0x3a0] sm:$0xff]
        %v660 = vld [vmem:[#allocation2 + $0x3a8] sm:$0xff]
        %v661 = vld [vmem:[#allocation2 + $0x3b0] sm:$0xff]
        %v662 = vld [vmem:[#allocation2 + $0x3b8] sm:$0xff]
        %v663 = vld [vmem:[#allocation2 + $0x3c0] sm:$0xff]
        %v664 = vld [vmem:[#allocation2 + $0x3c8] sm:$0xff]
        %v665 = vld [vmem:[#allocation2 + $0x3d0] sm:$0xff]
        %v666 = vld [vmem:[#allocation2 + $0x3d8] sm:$0xff]
        %v667 = vld [vmem:[#allocation2 + $0x3e0] sm:$0xff]
        %v668 = vld [vmem:[#allocation2 + $0x3e8] sm:$0xff]
        %v669 = vld [vmem:[#allocation2 + $0x3f0] sm:$0xff]
        %v670 = vld [vmem:[#allocation2 + $0x3f8] sm:$0xff]
        %v671 = vld [vmem:[#allocation2 + $0x400] sm:$0xff]
        %v672 = vld [vmem:[#allocation2 + $0x408] sm:$0xff]
        %v673 = vld [vmem:[#allocation2 + $0x410] sm:$0xff]
        %v674 = vld [vmem:[#allocation2 + $0x418] sm:$0xff]
        %v675 = vld [vmem:[#allocation2 + $0x420] sm:$0xff]
        %v676 = vld [vmem:[#allocation2 + $0x428] sm:$0xff]
        %v677 = vld [vmem:[#allocation2 + $0x430] sm:$0xff]
        %v678 = vld [vmem:[#allocation2 + $0x438] sm:$0xff]
        %v679 = vrot.slane %v551, 7
        %v680 = vrot.slane %v555, 7
        %v681 = vrot.slane %v559, 7
        %v682 = vrot.slane %v563, 7
        %v683 = vrot.slane %v567, 7
        %v684 = vrot.slane %v571, 7
        %v685 = vrot.slane %v575, 7
        %v686 = vrot.slane %v579, 7
        %v687 = vrot.slane %v583, 7
        %v688 = vrot.slane %v587, 7
        %v689 = vrot.slane %v591, 7
        %v690 = vrot.slane %v595, 7
        %v691 = vrot.slane %v599, 7
        %v692 = vrot.slane %v603, 7
        %v693 = vrot.slane %v607, 7
        %v694 = vrot.slane %v611, 7
        %v695 = vrot.slane %v615, 7
        %v696 = vrot.slane %v619, 7
        %v697 = vrot.slane %v623, 7
        %v698 = vrot.slane %v627, 7
        %v699 = vrot.slane %v631, 7
        %v700 = vrot.slane %v635, 7
        %v701 = vrot.slane %v639, 7
        %v702 = vrot.slane %v643, 7
        %v703 = vrot.slane %v647, 7
        %v704 = vrot.slane %v651, 7
        %v705 = vrot.slane %v655, 7
        %v706 = vrot.slane %v659, 7
        %v707 = vrot.slane %v663, 7
        %v708 = vrot.slane %v667, 7
        %v709 = vrot.slane %v671, 7
        %v710 = vrot.slane %v675, 7
        %v711 = vrot.slane %v552, 7
        %v712 = vrot.slane %v556, 7
        %v713 = vrot.slane %v560, 7
        %v714 = vrot.slane %v564, 7
        %v715 = vrot.slane %v568, 7
        %v716 = vrot.slane %v572, 7
        %v717 = vrot.slane %v576, 7
        %v718 = vrot.slane %v580, 7
        %v719 = vrot.slane %v584, 7
        %v720 = vrot.slane %v588, 7
        %v721 = vrot.slane %v592, 7
        %v722 = vrot.slane %v596, 7
        %v723 = vrot.slane %v600, 7
        %v724 = vrot.slane %v604, 7
        %v725 = vrot.slane %v608, 7
        %v726 = vrot.slane %v612, 7
        %v727 = vrot.slane %v616, 7
        %v728 = vrot.slane %v620, 7
        %v729 = vrot.slane %v624, 7
        %v730 = vrot.slane %v628, 7
        %v731 = vrot.slane %v632, 7
        %v732 = vrot.slane %v636, 7
        %v733 = vrot.slane %v640, 7
        %v734 = vrot.slane %v644, 7
        %v735 = vrot.slane %v648, 7
        %v736 = vrot.slane %v652, 7
        %v737 = vrot.slane %v656, 7
        %v738 = vrot.slane %v660, 7
        %v739 = vrot.slane %v664, 7
        %v740 = vrot.slane %v668, 7
        %v741 = vrot.slane %v672, 7
        %v742 = vrot.slane %v676, 7
        %v743 = vrot.slane %v553, 7
        %v744 = vrot.slane %v557, 7
        %v745 = vrot.slane %v561, 7
        %v746 = vrot.slane %v565, 7
        %v747 = vrot.slane %v569, 7
        %v748 = vrot.slane %v573, 7
        %v749 = vrot.slane %v577, 7
        %v750 = vrot.slane %v581, 7
        %v751 = vrot.slane %v585, 7
        %v752 = vrot.slane %v589, 7
        %v753 = vrot.slane %v593, 7
        %v754 = vrot.slane %v597, 7
        %v755 = vrot.slane %v601, 7
        %v756 = vrot.slane %v605, 7
        %v757 = vrot.slane %v609, 7
        %v758 = vrot.slane %v613, 7
        %v759 = vrot.slane %v617, 7
        %v760 = vrot.slane %v621, 7
        %v761 = vrot.slane %v625, 7
        %v762 = vrot.slane %v629, 7
        %v763 = vrot.slane %v633, 7
        %v764 = vrot.slane %v637, 7
        %v765 = vrot.slane %v641, 7
        %v766 = vrot.slane %v645, 7
        %v767 = vrot.slane %v649, 7
        %v768 = vrot.slane %v653, 7
        %v769 = vrot.slane %v657, 7
        %v770 = vrot.slane %v661, 7
        %v771 = vrot.slane %v665, 7
        %v772 = vrot.slane %v669, 7
        %v773 = vrot.slane %v673, 7
        %v774 = vrot.slane %v677, 7
        %v775 = vlaneseq
        %v776 = vshrl.u32 %v775, 7
        %vm777 = vcmp.lt.s32.totalorder %v776, 1
        %v778 = vsel %vm777, %v711, %v743
        %v779 = vsel %vm777, %v712, %v744
        %v780 = vsel %vm777, %v713, %v745
        %v781 = vsel %vm777, %v714, %v746
        %v782 = vsel %vm777, %v715, %v747
        %v783 = vsel %vm777, %v716, %v748
        %v784 = vsel %vm777, %v717, %v749
        %v785 = vsel %vm777, %v718, %v750
        %v786 = vsel %vm777, %v719, %v751
        %v787 = vsel %vm777, %v720, %v752
        %v788 = vsel %vm777, %v721, %v753
        %v789 = vsel %vm777, %v722, %v754
        %v790 = vsel %vm777, %v723, %v755
        %v791 = vsel %vm777, %v724, %v756
        %v792 = vsel %vm777, %v725, %v757
        %v793 = vsel %vm777, %v726, %v758
        %v794 = vsel %vm777, %v727, %v759
        %v795 = vsel %vm777, %v728, %v760
        %v796 = vsel %vm777, %v729, %v761
        %v797 = vsel %vm777, %v730, %v762
        %v798 = vsel %vm777, %v731, %v763
        %v799 = vsel %vm777, %v732, %v764
        %v800 = vsel %vm777, %v733, %v765
        %v801 = vsel %vm777, %v734, %v766
        %v802 = vsel %vm777, %v735, %v767
        %v803 = vsel %vm777, %v736, %v768
        %v804 = vsel %vm777, %v737, %v769
        %v805 = vsel %vm777, %v738, %v770
        %v806 = vsel %vm777, %v739, %v771
        %v807 = vsel %vm777, %v740, %v772
        %v808 = vsel %vm777, %v741, %v773
        %v809 = vsel %vm777, %v742, %v774
        %v810 = vsel %vm777, %v679, %v711
        %v811 = vsel %vm777, %v680, %v712
        %v812 = vsel %vm777, %v681, %v713
        %v813 = vsel %vm777, %v682, %v714
        %v814 = vsel %vm777, %v683, %v715
        %v815 = vsel %vm777, %v684, %v716
        %v816 = vsel %vm777, %v685, %v717
        %v817 = vsel %vm777, %v686, %v718
        %v818 = vsel %vm777, %v687, %v719
        %v819 = vsel %vm777, %v688, %v720
        %v820 = vsel %vm777, %v689, %v721
        %v821 = vsel %vm777, %v690, %v722
        %v822 = vsel %vm777, %v691, %v723
        %v823 = vsel %vm777, %v692, %v724
        %v824 = vsel %vm777, %v693, %v725
        %v825 = vsel %vm777, %v694, %v726
        %v826 = vsel %vm777, %v695, %v727
        %v827 = vsel %vm777, %v696, %v728
        %v828 = vsel %vm777, %v697, %v729
        %v829 = vsel %vm777, %v698, %v730
        %v830 = vsel %vm777, %v699, %v731
        %v831 = vsel %vm777, %v700, %v732
        %v832 = vsel %vm777, %v701, %v733
        %v833 = vsel %vm777, %v702, %v734
        %v834 = vsel %vm777, %v703, %v735
        %v835 = vsel %vm777, %v704, %v736
        %v836 = vsel %vm777, %v705, %v737
        %v837 = vsel %vm777, %v706, %v738
        %v838 = vsel %vm777, %v707, %v739
        %v839 = vsel %vm777, %v708, %v740
        %v840 = vsel %vm777, %v709, %v741
        %v841 = vsel %vm777, %v710, %v742
        %v842 = vpack.c.bf16 %v778, %v810
        %v843 = vpack.c.bf16 %v779, %v811
        %v844 = vpack.c.bf16 %v780, %v812
        %v845 = vpack.c.bf16 %v781, %v813
        %v846 = vpack.c.bf16 %v782, %v814
        %v847 = vpack.c.bf16 %v783, %v815
        %v848 = vpack.c.bf16 %v784, %v816
        %v849 = vpack.c.bf16 %v785, %v817
        %v850 = vpack.c.bf16 %v786, %v818
        %v851 = vpack.c.bf16 %v787, %v819
        %v852 = vpack.c.bf16 %v788, %v820
        %v853 = vpack.c.bf16 %v789, %v821
        %v854 = vpack.c.bf16 %v790, %v822
        %v855 = vpack.c.bf16 %v791, %v823
        %v856 = vpack.c.bf16 %v792, %v824
        %v857 = vpack.c.bf16 %v793, %v825
        %v858 = vpack.c.bf16 %v794, %v826
        %v859 = vpack.c.bf16 %v795, %v827
        %v860 = vpack.c.bf16 %v796, %v828
        %v861 = vpack.c.bf16 %v797, %v829
        %v862 = vpack.c.bf16 %v798, %v830
        %v863 = vpack.c.bf16 %v799, %v831
        %v864 = vpack.c.bf16 %v800, %v832
        %v865 = vpack.c.bf16 %v801, %v833
        %v866 = vpack.c.bf16 %v802, %v834
        %v867 = vpack.c.bf16 %v803, %v835
        %v868 = vpack.c.bf16 %v804, %v836
        %v869 = vpack.c.bf16 %v805, %v837
        %v870 = vpack.c.bf16 %v806, %v838
        %v871 = vpack.c.bf16 %v807, %v839
        %v872 = vpack.c.bf16 %v808, %v840
        %v873 = vpack.c.bf16 %v809, %v841
        %v874 = vld [vmem:[%s232] sm:$0xf]
        %v875 = vld [vmem:[%s232 + $0x4] sm:$0xf]
        %v876 = vld [vmem:[%s232 + $0x8] sm:$0xf]
        %v877 = vld [vmem:[%s232 + $0xc] sm:$0xf]
        %v878 = vld [vmem:[%s232 + $0x10] sm:$0xf]
        %v879 = vld [vmem:[%s232 + $0x14] sm:$0xf]
        %v880 = vld [vmem:[%s232 + $0x18] sm:$0xf]
        %v881 = vld [vmem:[%s232 + $0x1c] sm:$0xf]
        %v882 = vld [vmem:[%s232 + $0x20] sm:$0xf]
        %v883 = vld [vmem:[%s232 + $0x24] sm:$0xf]
        %v884 = vld [vmem:[%s232 + $0x28] sm:$0xf]
        %v885 = vld [vmem:[%s232 + $0x2c] sm:$0xf]
        %v886 = vld [vmem:[%s232 + $0x30] sm:$0xf]
        %v887 = vld [vmem:[%s232 + $0x34] sm:$0xf]
        %v888 = vld [vmem:[%s232 + $0x38] sm:$0xf]
        %v889 = vld [vmem:[%s232 + $0x3c] sm:$0xf]
        %v906 = vunpack.c.l.b16 %v874
        %v907 = vunpack.c.l.b16 %v875
        %v908 = vunpack.c.l.b16 %v876
        %v909 = vunpack.c.l.b16 %v877
        %v910 = vunpack.c.l.b16 %v878
        %v911 = vunpack.c.l.b16 %v879
        %v912 = vunpack.c.l.b16 %v880
        %v913 = vunpack.c.l.b16 %v881
        %v914 = vunpack.c.l.b16 %v882
        %v915 = vunpack.c.l.b16 %v883
        %v916 = vunpack.c.l.b16 %v884
        %v917 = vunpack.c.l.b16 %v885
        %v918 = vunpack.c.l.b16 %v886
        %v919 = vunpack.c.l.b16 %v887
        %v920 = vunpack.c.l.b16 %v888
        %v921 = vunpack.c.l.b16 %v889
        %v922 = vpack.c.b16 %v907, %v906
        %v923 = vpack.c.b16 %v909, %v908
        %v924 = vpack.c.b16 %v911, %v910
        %v925 = vpack.c.b16 %v913, %v912
        %v926 = vpack.c.b16 %v915, %v914
        %v927 = vpack.c.b16 %v917, %v916
        %v928 = vpack.c.b16 %v919, %v918
        %v929 = vpack.c.b16 %v921, %v920
        %938 = vmatprep.subr.bf16.mxu0 0
        %939 = vmatpush1.bf16.msra.mxu0 %v922
        %940 = vmatprep.subr.bf16.mxu0 0
        %941 = vmatpush1.bf16.msra.mxu0 %v923
        %942 = vmatprep.subr.bf16.mxu0 0
        %943 = vmatpush1.bf16.msra.mxu0 %v924
        %944 = vmatprep.subr.bf16.mxu0 0
        %945 = vmatpush1.bf16.msra.mxu0 %v925
        %946 = vmatprep.subr.bf16.mxu0 0
        %947 = vmatpush1.bf16.msra.mxu0 %v926
        %948 = vmatprep.subr.bf16.mxu0 0
        %949 = vmatpush1.bf16.msra.mxu0 %v927
        %950 = vmatprep.subr.bf16.mxu0 0
        %951 = vmatpush1.bf16.msra.mxu0 %v928
        %952 = vmatprep.subr.bf16.mxu0 0
        %953 = vmatpush1.bf16.msra.mxu0 %v929
        %954 = vmatprep.subr.bf16.mxu0 0
        %955 = vmatpush1.bf16.msra.mxu0 0
        %956 = vmatprep.subr.bf16.mxu0 0
        %957 = vmatpush1.bf16.msra.mxu0 0
        %958 = vmatprep.subr.bf16.mxu0 0
        %959 = vmatpush1.bf16.msra.mxu0 0
        %960 = vmatprep.subr.bf16.mxu0 0
        %961 = vmatpush1.bf16.msra.mxu0 0
        %962 = vmatprep.subr.bf16.mxu0 0
        %963 = vmatpush1.bf16.msra.mxu0 0
        %964 = vmatprep.subr.bf16.mxu0 0
        %965 = vmatpush1.bf16.msra.mxu0 0
        %966 = vmatprep.subr.bf16.mxu0 0
        %967 = vmatpush1.bf16.msra.mxu0 0
        %968 = vmatprep.subr.bf16.mxu0 0
        %969 = vmatpush1.bf16.msra.mxu0 0
        %970 = vmatprep.mubr.bf16.mxu0 0
        %971 = vmatmul.mubr.bf16.gmra.mrb[0].mxu0 %v842
        %v972 = vpop.f32.mrb[0].mxu0
        %v973 = vadd.f32 0.0, %v972
        %v974 = vpop.f32.mrb[0].mxu0
        %v975 = vpop.f32.mrb[0].mxu0
        %v976 = vadd.f32 0.0, %v975
        %v977 = vpop.f32.mrb[0].mxu0
        %978 = vmatprep.mubr.bf16.mxu0 0
        %979 = vmatmul.mubr.bf16.gmra.mrb[0].mxu0 %v843
        %v980 = vpop.f32.mrb[0].mxu0
        %v981 = vadd.f32 0.0, %v980
        %v982 = vpop.f32.mrb[0].mxu0
        %v983 = vpop.f32.mrb[0].mxu0
        %v984 = vadd.f32 0.0, %v983
        %v985 = vpop.f32.mrb[0].mxu0
        %986 = vmatprep.mubr.bf16.mxu0 0
        %987 = vmatmul.mubr.bf16.gmra.mrb[0].mxu0 %v844
        %v988 = vpop.f32.mrb[0].mxu0
        %v989 = vadd.f32 0.0, %v988
        %v990 = vpop.f32.mrb[0].mxu0
        %v991 = vpop.f32.mrb[0].mxu0
        %v992 = vadd.f32 0.0, %v991
        %v993 = vpop.f32.mrb[0].mxu0
        %994 = vmatprep.mubr.bf16.mxu0 0
        %995 = vmatmul.mubr.bf16.gmra.mrb[0].mxu0 %v845
        %v996 = vpop.f32.mrb[0].mxu0
        %v997 = vadd.f32 0.0, %v996
        %v998 = vpop.f32.mrb[0].mxu0
        %v999 = vpop.f32.mrb[0].mxu0
        %v1000 = vadd.f32 0.0, %v999
        %v1001 = vpop.f32.mrb[0].mxu0
        %1002 = vmatprep.mubr.bf16.mxu0 0
        %1003 = vmatmul.mubr.bf16.gmra.mrb[0].mxu0 %v846
        %v1004 = vpop.f32.mrb[0].mxu0
        %v1005 = vadd.f32 0.0, %v1004
        %v1006 = vpop.f32.mrb[0].mxu0
        %v1007 = vpop.f32.mrb[0].mxu0
        %v1008 = vadd.f32 0.0, %v1007
        %v1009 = vpop.f32.mrb[0].mxu0
        %1010 = vmatprep.mubr.bf16.mxu0 0
        %1011 = vmatmul.mubr.bf16.gmra.mrb[0].mxu0 %v847
        %v1012 = vpop.f32.mrb[0].mxu0
        %v1013 = vadd.f32 0.0, %v1012
        %v1014 = vpop.f32.mrb[0].mxu0
        %v1015 = vpop.f32.mrb[0].mxu0
        %v1016 = vadd.f32 0.0, %v1015
        %v1017 = vpop.f32.mrb[0].mxu0
        %1018 = vmatprep.mubr.bf16.mxu0 0
        %1019 = vmatmul.mubr.bf16.gmra.mrb[0].mxu0 %v848
        %v1020 = vpop.f32.mrb[0].mxu0
        %v1021 = vadd.f32 0.0, %v1020
        %v1022 = vpop.f32.mrb[0].mxu0
        %v1023 = vpop.f32.mrb[0].mxu0
        %v1024 = vadd.f32 0.0, %v1023
        %v1025 = vpop.f32.mrb[0].mxu0
        %1026 = vmatprep.mubr.bf16.mxu0 0
        %1027 = vmatmul.mubr.bf16.gmra.mrb[0].mxu0 %v849
        %v1028 = vpop.f32.mrb[0].mxu0
        %v1029 = vadd.f32 0.0, %v1028
        %v1030 = vpop.f32.mrb[0].mxu0
        %v1031 = vpop.f32.mrb[0].mxu0
        %v1032 = vadd.f32 0.0, %v1031
        %v1033 = vpop.f32.mrb[0].mxu0
        %1034 = vmatprep.mubr.bf16.mxu0 0
        %1035 = vmatmul.mubr.bf16.gmra.mrb[0].mxu0 %v850
        %v1036 = vpop.f32.mrb[0].mxu0
        %v1037 = vadd.f32 0.0, %v1036
        %v1038 = vpop.f32.mrb[0].mxu0
        %v1039 = vpop.f32.mrb[0].mxu0
        %v1040 = vadd.f32 0.0, %v1039
        %v1041 = vpop.f32.mrb[0].mxu0
        %1042 = vmatprep.mubr.bf16.mxu0 0
        %1043 = vmatmul.mubr.bf16.gmra.mrb[0].mxu0 %v851
        %v1044 = vpop.f32.mrb[0].mxu0
        %v1045 = vadd.f32 0.0, %v1044
        %v1046 = vpop.f32.mrb[0].mxu0
        %v1047 = vpop.f32.mrb[0].mxu0
        %v1048 = vadd.f32 0.0, %v1047
        %v1049 = vpop.f32.mrb[0].mxu0
        %1050 = vmatprep.mubr.bf16.mxu0 0
        %1051 = vmatmul.mubr.bf16.gmra.mrb[0].mxu0 %v852
        %v1052 = vpop.f32.mrb[0].mxu0
        %v1053 = vadd.f32 0.0, %v1052
        %v1054 = vpop.f32.mrb[0].mxu0
        %v1055 = vpop.f32.mrb[0].mxu0
        %v1056 = vadd.f32 0.0, %v1055
        %v1057 = vpop.f32.mrb[0].mxu0
        %1058 = vmatprep.mubr.bf16.mxu0 0
        %1059 = vmatmul.mubr.bf16.gmra.mrb[0].mxu0 %v853
        %v1060 = vpop.f32.mrb[0].mxu0
        %v1061 = vadd.f32 0.0, %v1060
        %v1062 = vpop.f32.mrb[0].mxu0
        %v1063 = vpop.f32.mrb[0].mxu0
        %v1064 = vadd.f32 0.0, %v1063
        %v1065 = vpop.f32.mrb[0].mxu0
        %1066 = vmatprep.mubr.bf16.mxu0 0
        %1067 = vmatmul.mubr.bf16.gmra.mrb[0].mxu0 %v854
        %v1068 = vpop.f32.mrb[0].mxu0
        %v1069 = vadd.f32 0.0, %v1068
        %v1070 = vpop.f32.mrb[0].mxu0
        %v1071 = vpop.f32.mrb[0].mxu0
        %v1072 = vadd.f32 0.0, %v1071
        %v1073 = vpop.f32.mrb[0].mxu0
        %1074 = vmatprep.mubr.bf16.mxu0 0
        %1075 = vmatmul.mubr.bf16.gmra.mrb[0].mxu0 %v855
        %v1076 = vpop.f32.mrb[0].mxu0
        %v1077 = vadd.f32 0.0, %v1076
        %v1078 = vpop.f32.mrb[0].mxu0
        %v1079 = vpop.f32.mrb[0].mxu0
        %v1080 = vadd.f32 0.0, %v1079
        %v1081 = vpop.f32.mrb[0].mxu0
        %1082 = vmatprep.mubr.bf16.mxu0 0
        %1083 = vmatmul.mubr.bf16.gmra.mrb[0].mxu0 %v856
        %v1084 = vpop.f32.mrb[0].mxu0
        %v1085 = vadd.f32 0.0, %v1084
        %v1086 = vpop.f32.mrb[0].mxu0
        %v1087 = vpop.f32.mrb[0].mxu0
        %v1088 = vadd.f32 0.0, %v1087
        %v1089 = vpop.f32.mrb[0].mxu0
        %1090 = vmatprep.mubr.bf16.mxu0 0
        %1091 = vmatmul.mubr.bf16.gmra.mrb[0].mxu0 %v857
        %v1092 = vpop.f32.mrb[0].mxu0
        %v1093 = vadd.f32 0.0, %v1092
        %v1094 = vpop.f32.mrb[0].mxu0
        %v1095 = vpop.f32.mrb[0].mxu0
        %v1096 = vadd.f32 0.0, %v1095
        %v1097 = vpop.f32.mrb[0].mxu0
        %1098 = vmatprep.mubr.bf16.mxu0 0
        %1099 = vmatmul.mubr.bf16.gmra.mrb[0].mxu0 %v858
        %v1100 = vpop.f32.mrb[0].mxu0
        %v1101 = vadd.f32 0.0, %v1100
        %v1102 = vpop.f32.mrb[0].mxu0
        %v1103 = vpop.f32.mrb[0].mxu0
        %v1104 = vadd.f32 0.0, %v1103
        %v1105 = vpop.f32.mrb[0].mxu0
        %1106 = vmatprep.mubr.bf16.mxu0 0
        %1107 = vmatmul.mubr.bf16.gmra.mrb[0].mxu0 %v859
        %v1108 = vpop.f32.mrb[0].mxu0
        %v1109 = vadd.f32 0.0, %v1108
        %v1110 = vpop.f32.mrb[0].mxu0
        %v1111 = vpop.f32.mrb[0].mxu0
        %v1112 = vadd.f32 0.0, %v1111
        %v1113 = vpop.f32.mrb[0].mxu0
        %1114 = vmatprep.mubr.bf16.mxu0 0
        %1115 = vmatmul.mubr.bf16.gmra.mrb[0].mxu0 %v860
        %v1116 = vpop.f32.mrb[0].mxu0
        %v1117 = vadd.f32 0.0, %v1116
        %v1118 = vpop.f32.mrb[0].mxu0
        %v1119 = vpop.f32.mrb[0].mxu0
        %v1120 = vadd.f32 0.0, %v1119
        %v1121 = vpop.f32.mrb[0].mxu0
        %1122 = vmatprep.mubr.bf16.mxu0 0
        %1123 = vmatmul.mubr.bf16.gmra.mrb[0].mxu0 %v861
        %v1124 = vpop.f32.mrb[0].mxu0
        %v1125 = vadd.f32 0.0, %v1124
        %v1126 = vpop.f32.mrb[0].mxu0
        %v1127 = vpop.f32.mrb[0].mxu0
        %v1128 = vadd.f32 0.0, %v1127
        %v1129 = vpop.f32.mrb[0].mxu0
        %1130 = vmatprep.mubr.bf16.mxu0 0
        %1131 = vmatmul.mubr.bf16.gmra.mrb[0].mxu0 %v862
        %v1132 = vpop.f32.mrb[0].mxu0
        %v1133 = vadd.f32 0.0, %v1132
        %v1134 = vpop.f32.mrb[0].mxu0
        %v1135 = vpop.f32.mrb[0].mxu0
        %v1136 = vadd.f32 0.0, %v1135
        %v1137 = vpop.f32.mrb[0].mxu0
        %1138 = vmatprep.mubr.bf16.mxu0 0
        %1139 = vmatmul.mubr.bf16.gmra.mrb[0].mxu0 %v863
        %v1140 = vpop.f32.mrb[0].mxu0
        %v1141 = vadd.f32 0.0, %v1140
        %v1142 = vpop.f32.mrb[0].mxu0
        %v1143 = vpop.f32.mrb[0].mxu0
        %v1144 = vadd.f32 0.0, %v1143
        %v1145 = vpop.f32.mrb[0].mxu0
        %1146 = vmatprep.mubr.bf16.mxu0 0
        %1147 = vmatmul.mubr.bf16.gmra.mrb[0].mxu0 %v864
        %v1148 = vpop.f32.mrb[0].mxu0
        %v1149 = vadd.f32 0.0, %v1148
        %v1150 = vpop.f32.mrb[0].mxu0
        %v1151 = vpop.f32.mrb[0].mxu0
        %v1152 = vadd.f32 0.0, %v1151
        %v1153 = vpop.f32.mrb[0].mxu0
        %1154 = vmatprep.mubr.bf16.mxu0 0
        %1155 = vmatmul.mubr.bf16.gmra.mrb[0].mxu0 %v865
        %v1156 = vpop.f32.mrb[0].mxu0
        %v1157 = vadd.f32 0.0, %v1156
        %v1158 = vpop.f32.mrb[0].mxu0
        %v1159 = vpop.f32.mrb[0].mxu0
        %v1160 = vadd.f32 0.0, %v1159
        %v1161 = vpop.f32.mrb[0].mxu0
        %1162 = vmatprep.mubr.bf16.mxu0 0
        %1163 = vmatmul.mubr.bf16.gmra.mrb[0].mxu0 %v866
        %v1164 = vpop.f32.mrb[0].mxu0
        %v1165 = vadd.f32 0.0, %v1164
        %v1166 = vpop.f32.mrb[0].mxu0
        %v1167 = vpop.f32.mrb[0].mxu0
        %v1168 = vadd.f32 0.0, %v1167
        %v1169 = vpop.f32.mrb[0].mxu0
        %1170 = vmatprep.mubr.bf16.mxu0 0
        %1171 = vmatmul.mubr.bf16.gmra.mrb[0].mxu0 %v867
        %v1172 = vpop.f32.mrb[0].mxu0
        %v1173 = vadd.f32 0.0, %v1172
        %v1174 = vpop.f32.mrb[0].mxu0
        %v1175 = vpop.f32.mrb[0].mxu0
        %v1176 = vadd.f32 0.0, %v1175
        %v1177 = vpop.f32.mrb[0].mxu0
        %1178 = vmatprep.mubr.bf16.mxu0 0
        %1179 = vmatmul.mubr.bf16.gmra.mrb[0].mxu0 %v868
        %v1180 = vpop.f32.mrb[0].mxu0
        %v1181 = vadd.f32 0.0, %v1180
        %v1182 = vpop.f32.mrb[0].mxu0
        %v1183 = vpop.f32.mrb[0].mxu0
        %v1184 = vadd.f32 0.0, %v1183
        %v1185 = vpop.f32.mrb[0].mxu0
        %1186 = vmatprep.mubr.bf16.mxu0 0
        %1187 = vmatmul.mubr.bf16.gmra.mrb[0].mxu0 %v869
        %v1188 = vpop.f32.mrb[0].mxu0
        %v1189 = vadd.f32 0.0, %v1188
        %v1190 = vpop.f32.mrb[0].mxu0
        %v1191 = vpop.f32.mrb[0].mxu0
        %v1192 = vadd.f32 0.0, %v1191
        %v1193 = vpop.f32.mrb[0].mxu0
        %1194 = vmatprep.mubr.bf16.mxu0 0
        %1195 = vmatmul.mubr.bf16.gmra.mrb[0].mxu0 %v870
        %v1196 = vpop.f32.mrb[0].mxu0
        %v1197 = vadd.f32 0.0, %v1196
        %v1198 = vpop.f32.mrb[0].mxu0
        %v1199 = vpop.f32.mrb[0].mxu0
        %v1200 = vadd.f32 0.0, %v1199
        %v1201 = vpop.f32.mrb[0].mxu0
        %1202 = vmatprep.mubr.bf16.mxu0 0
        %1203 = vmatmul.mubr.bf16.gmra.mrb[0].mxu0 %v871
        %v1204 = vpop.f32.mrb[0].mxu0
        %v1205 = vadd.f32 0.0, %v1204
        %v1206 = vpop.f32.mrb[0].mxu0
        %v1207 = vpop.f32.mrb[0].mxu0
        %v1208 = vadd.f32 0.0, %v1207
        %v1209 = vpop.f32.mrb[0].mxu0
        %1210 = vmatprep.mubr.bf16.mxu0 0
        %1211 = vmatmul.mubr.bf16.gmra.mrb[0].mxu0 %v872
        %v1212 = vpop.f32.mrb[0].mxu0
        %v1213 = vadd.f32 0.0, %v1212
        %v1214 = vpop.f32.mrb[0].mxu0
        %v1215 = vpop.f32.mrb[0].mxu0
        %v1216 = vadd.f32 0.0, %v1215
        %v1217 = vpop.f32.mrb[0].mxu0
        %1218 = vmatprep.mubr.bf16.mxu0 0
        %1219 = vmatmul.mubr.bf16.gmra.mrb[0].mxu0 %v873
        %v1220 = vpop.f32.mrb[0].mxu0
        %v1221 = vadd.f32 0.0, %v1220
        %v1222 = vpop.f32.mrb[0].mxu0
        %v1223 = vpop.f32.mrb[0].mxu0
        %v1224 = vadd.f32 0.0, %v1223
        %v1225 = vpop.f32.mrb[0].mxu0
        %1226 = vdwg.mxu0
        %1227 = vst [vmem:[#allocation3] sm:$0xff] %v973
        %1228 = vst [vmem:[#allocation3 + $0x8] sm:$0xff] %v976
        %1229 = vst [vmem:[#allocation3 + $0x10] sm:$0xff] %v981
        %1230 = vst [vmem:[#allocation3 + $0x18] sm:$0xff] %v984
        %1231 = vst [vmem:[#allocation3 + $0x20] sm:$0xff] %v989
        %1232 = vst [vmem:[#allocation3 + $0x28] sm:$0xff] %v992
        %1233 = vst [vmem:[#allocation3 + $0x30] sm:$0xff] %v997
        %1234 = vst [vmem:[#allocation3 + $0x38] sm:$0xff] %v1000
        %1235 = vst [vmem:[#allocation3 + $0x40] sm:$0xff] %v1005
        %1236 = vst [vmem:[#allocation3 + $0x48] sm:$0xff] %v1008
        %1237 = vst [vmem:[#allocation3 + $0x50] sm:$0xff] %v1013
        %1238 = vst [vmem:[#allocation3 + $0x58] sm:$0xff] %v1016
        %1239 = vst [vmem:[#allocation3 + $0x60] sm:$0xff] %v1021
        %1240 = vst [vmem:[#allocation3 + $0x68] sm:$0xff] %v1024
        %1241 = vst [vmem:[#allocation3 + $0x70] sm:$0xff] %v1029
        %1242 = vst [vmem:[#allocation3 + $0x78] sm:$0xff] %v1032
        %1243 = vst [vmem:[#allocation3 + $0x80] sm:$0xff] %v1037
        %1244 = vst [vmem:[#allocation3 + $0x88] sm:$0xff] %v1040
        %1245 = vst [vmem:[#allocation3 + $0x90] sm:$0xff] %v1045
        %1246 = vst [vmem:[#allocation3 + $0x98] sm:$0xff] %v1048
        %1247 = vst [vmem:[#allocation3 + $0xa0] sm:$0xff] %v1053
        %1248 = vst [vmem:[#allocation3 + $0xa8] sm:$0xff] %v1056
        %1249 = vst [vmem:[#allocation3 + $0xb0] sm:$0xff] %v1061
        %1250 = vst [vmem:[#allocation3 + $0xb8] sm:$0xff] %v1064
        %1251 = vst [vmem:[#allocation3 + $0xc0] sm:$0xff] %v1069
        %1252 = vst [vmem:[#allocation3 + $0xc8] sm:$0xff] %v1072
        %1253 = vst [vmem:[#allocation3 + $0xd0] sm:$0xff] %v1077
        %1254 = vst [vmem:[#allocation3 + $0xd8] sm:$0xff] %v1080
        %1255 = vst [vmem:[#allocation3 + $0xe0] sm:$0xff] %v1085
        %1256 = vst [vmem:[#allocation3 + $0xe8] sm:$0xff] %v1088
        %1257 = vst [vmem:[#allocation3 + $0xf0] sm:$0xff] %v1093
        %1258 = vst [vmem:[#allocation3 + $0xf8] sm:$0xff] %v1096
        %1259 = vst [vmem:[#allocation3 + $0x100] sm:$0xff] %v1101
        %1260 = vst [vmem:[#allocation3 + $0x108] sm:$0xff] %v1104
        %1261 = vst [vmem:[#allocation3 + $0x110] sm:$0xff] %v1109
        %1262 = vst [vmem:[#allocation3 + $0x118] sm:$0xff] %v1112
        %1263 = vst [vmem:[#allocation3 + $0x120] sm:$0xff] %v1117
        %1264 = vst [vmem:[#allocation3 + $0x128] sm:$0xff] %v1120
        %1265 = vst [vmem:[#allocation3 + $0x130] sm:$0xff] %v1125
        %1266 = vst [vmem:[#allocation3 + $0x138] sm:$0xff] %v1128
        %1267 = vst [vmem:[#allocation3 + $0x140] sm:$0xff] %v1133
        %1268 = vst [vmem:[#allocation3 + $0x148] sm:$0xff] %v1136
        %1269 = vst [vmem:[#allocation3 + $0x150] sm:$0xff] %v1141
        %1270 = vst [vmem:[#allocation3 + $0x158] sm:$0xff] %v1144
        %1271 = vst [vmem:[#allocation3 + $0x160] sm:$0xff] %v1149
        %1272 = vst [vmem:[#allocation3 + $0x168] sm:$0xff] %v1152
        %1273 = vst [vmem:[#allocation3 + $0x170] sm:$0xff] %v1157
        %1274 = vst [vmem:[#allocation3 + $0x178] sm:$0xff] %v1160
        %1275 = vst [vmem:[#allocation3 + $0x180] sm:$0xff] %v1165
        %1276 = vst [vmem:[#allocation3 + $0x188] sm:$0xff] %v1168
        %1277 = vst [vmem:[#allocation3 + $0x190] sm:$0xff] %v1173
        %1278 = vst [vmem:[#allocation3 + $0x198] sm:$0xff] %v1176
        %1279 = vst [vmem:[#allocation3 + $0x1a0] sm:$0xff] %v1181
        %1280 = vst [vmem:[#allocation3 + $0x1a8] sm:$0xff] %v1184
        %1281 = vst [vmem:[#allocation3 + $0x1b0] sm:$0xff] %v1189
        %1282 = vst [vmem:[#allocation3 + $0x1b8] sm:$0xff] %v1192
        %1283 = vst [vmem:[#allocation3 + $0x1c0] sm:$0xff] %v1197
        %1284 = vst [vmem:[#allocation3 + $0x1c8] sm:$0xff] %v1200
        %1285 = vst [vmem:[#allocation3 + $0x1d0] sm:$0xff] %v1205
        %1286 = vst [vmem:[#allocation3 + $0x1d8] sm:$0xff] %v1208
        %1287 = vst [vmem:[#allocation3 + $0x1e0] sm:$0xff] %v1213
        %1288 = vst [vmem:[#allocation3 + $0x1e8] sm:$0xff] %v1216
        %1289 = vst [vmem:[#allocation3 + $0x1f0] sm:$0xff] %v1221
        %1290 = vst [vmem:[#allocation3 + $0x1f8] sm:$0xff] %v1224
        %v1291 = vpack.c.bf16 %v553, %v552
        %v1292 = vpack.c.bf16 %v557, %v556
        %v1293 = vpack.c.bf16 %v561, %v560
        %v1294 = vpack.c.bf16 %v565, %v564
        %v1295 = vpack.c.bf16 %v569, %v568
        %v1296 = vpack.c.bf16 %v573, %v572
        %v1297 = vpack.c.bf16 %v577, %v576
        %v1298 = vpack.c.bf16 %v581, %v580
        %v1299 = vpack.c.bf16 %v585, %v584
        %v1300 = vpack.c.bf16 %v589, %v588
        %v1301 = vpack.c.bf16 %v593, %v592
        %v1302 = vpack.c.bf16 %v597, %v596
        %v1303 = vpack.c.bf16 %v601, %v600
        %v1304 = vpack.c.bf16 %v605, %v604
        %v1305 = vpack.c.bf16 %v609, %v608
        %v1306 = vpack.c.bf16 %v613, %v612
        %v1307 = vpack.c.bf16 %v617, %v616
        %v1308 = vpack.c.bf16 %v621, %v620
        %v1309 = vpack.c.bf16 %v625, %v624
        %v1310 = vpack.c.bf16 %v629, %v628
        %v1311 = vpack.c.bf16 %v633, %v632
        %v1312 = vpack.c.bf16 %v637, %v636
        %v1313 = vpack.c.bf16 %v641, %v640
        %v1314 = vpack.c.bf16 %v645, %v644
        %v1315 = vpack.c.bf16 %v649, %v648
        %v1316 = vpack.c.bf16 %v653, %v652
        %v1317 = vpack.c.bf16 %v657, %v656
        %v1318 = vpack.c.bf16 %v661, %v660
        %v1319 = vpack.c.bf16 %v665, %v664
        %v1320 = vpack.c.bf16 %v669, %v668
        %v1321 = vpack.c.bf16 %v673, %v672
        %v1322 = vpack.c.bf16 %v677, %v676
        %s1323 = scalar_lea.vmem %s232, 64 [#allocation4]
        %v1324 = vld [vmem:[%s1323] sm:$0xf]
        %v1325 = vld [vmem:[%s1323 + $0x4] sm:$0xf]
        %v1326 = vld [vmem:[%s1323 + $0x8] sm:$0xf]
        %v1327 = vld [vmem:[%s1323 + $0xc] sm:$0xf]
        %v1328 = vld [vmem:[%s1323 + $0x10] sm:$0xf]
        %v1329 = vld [vmem:[%s1323 + $0x14] sm:$0xf]
        %v1330 = vld [vmem:[%s1323 + $0x18] sm:$0xf]
        %v1331 = vld [vmem:[%s1323 + $0x1c] sm:$0xf]
        %v1332 = vld [vmem:[%s1323 + $0x20] sm:$0xf]
        %v1333 = vld [vmem:[%s1323 + $0x24] sm:$0xf]
        %v1334 = vld [vmem:[%s1323 + $0x28] sm:$0xf]
        %v1335 = vld [vmem:[%s1323 + $0x2c] sm:$0xf]
        %v1336 = vld [vmem:[%s1323 + $0x30] sm:$0xf]
        %v1337 = vld [vmem:[%s1323 + $0x34] sm:$0xf]
        %v1338 = vld [vmem:[%s1323 + $0x38] sm:$0xf]
        %v1339 = vld [vmem:[%s1323 + $0x3c] sm:$0xf]
        %v1356 = vunpack.c.l.b16 %v1324
        %v1357 = vunpack.c.l.b16 %v1325
        %v1358 = vunpack.c.l.b16 %v1326
        %v1359 = vunpack.c.l.b16 %v1327
        %v1360 = vunpack.c.l.b16 %v1328
        %v1361 = vunpack.c.l.b16 %v1329
        %v1362 = vunpack.c.l.b16 %v1330
        %v1363 = vunpack.c.l.b16 %v1331
        %v1364 = vunpack.c.l.b16 %v1332
        %v1365 = vunpack.c.l.b16 %v1333
        %v1366 = vunpack.c.l.b16 %v1334
        %v1367 = vunpack.c.l.b16 %v1335
        %v1368 = vunpack.c.l.b16 %v1336
        %v1369 = vunpack.c.l.b16 %v1337
        %v1370 = vunpack.c.l.b16 %v1338
        %v1371 = vunpack.c.l.b16 %v1339
        %v1372 = vpack.c.b16 %v1357, %v1356
        %v1373 = vpack.c.b16 %v1359, %v1358
        %v1374 = vpack.c.b16 %v1361, %v1360
        %v1375 = vpack.c.b16 %v1363, %v1362
        %v1376 = vpack.c.b16 %v1365, %v1364
        %v1377 = vpack.c.b16 %v1367, %v1366
        %v1378 = vpack.c.b16 %v1369, %v1368
        %v1379 = vpack.c.b16 %v1371, %v1370
        %1388 = vmatprep.subr.bf16.mxu0 0
        %1389 = vmatpush1.bf16.msra.mxu0 %v1372
        %1390 = vmatprep.subr.bf16.mxu0 0
        %1391 = vmatpush1.bf16.msra.mxu0 %v1373
        %1392 = vmatprep.subr.bf16.mxu0 0
        %1393 = vmatpush1.bf16.msra.mxu0 %v1374
        %1394 = vmatprep.subr.bf16.mxu0 0
        %1395 = vmatpush1.bf16.msra.mxu0 %v1375
        %1396 = vmatprep.subr.bf16.mxu0 0
        %1397 = vmatpush1.bf16.msra.mxu0 %v1376
        %1398 = vmatprep.subr.bf16.mxu0 0
        %1399 = vmatpush1.bf16.msra.mxu0 %v1377
        %1400 = vmatprep.subr.bf16.mxu0 0
        %1401 = vmatpush1.bf16.msra.mxu0 %v1378
        %1402 = vmatprep.subr.bf16.mxu0 0
        %1403 = vmatpush1.bf16.msra.mxu0 %v1379
        %1404 = vmatprep.subr.bf16.mxu0 0
        %1405 = vmatpush1.bf16.msra.mxu0 0
        %1406 = vmatprep.subr.bf16.mxu0 0
        %1407 = vmatpush1.bf16.msra.mxu0 0
        %1408 = vmatprep.subr.bf16.mxu0 0
        %1409 = vmatpush1.bf16.msra.mxu0 0
        %1410 = vmatprep.subr.bf16.mxu0 0
        %1411 = vmatpush1.bf16.msra.mxu0 0
        %1412 = vmatprep.subr.bf16.mxu0 0
        %1413 = vmatpush1.bf16.msra.mxu0 0
        %1414 = vmatprep.subr.bf16.mxu0 0
        %1415 = vmatpush1.bf16.msra.mxu0 0
        %1416 = vmatprep.subr.bf16.mxu0 0
        %1417 = vmatpush1.bf16.msra.mxu0 0
        %1418 = vmatprep.subr.bf16.mxu0 0
        %1419 = vmatpush1.bf16.msra.mxu0 0
        %1420 = vmatprep.mubr.bf16.mxu0 0
        %1421 = vmatmul.mubr.bf16.gmra.mrb[0].mxu0 %v1291
        %v1422 = vpop.f32.mrb[0].mxu0
        %v1423 = vadd.f32 0.0, %v1422
        %v1424 = vpop.f32.mrb[0].mxu0
        %v1425 = vpop.f32.mrb[0].mxu0
        %v1426 = vadd.f32 0.0, %v1425
        %v1427 = vpop.f32.mrb[0].mxu0
        %1428 = vmatprep.mubr.bf16.mxu0 0
        %1429 = vmatmul.mubr.bf16.gmra.mrb[0].mxu0 %v1292
        %v1430 = vpop.f32.mrb[0].mxu0
        %v1431 = vadd.f32 0.0, %v1430
        %v1432 = vpop.f32.mrb[0].mxu0
        %v1433 = vpop.f32.mrb[0].mxu0
        %v1434 = vadd.f32 0.0, %v1433
        %v1435 = vpop.f32.mrb[0].mxu0
        %1436 = vmatprep.mubr.bf16.mxu0 0
        %1437 = vmatmul.mubr.bf16.gmra.mrb[0].mxu0 %v1293
        %v1438 = vpop.f32.mrb[0].mxu0
        %v1439 = vadd.f32 0.0, %v1438
        %v1440 = vpop.f32.mrb[0].mxu0
        %v1441 = vpop.f32.mrb[0].mxu0
        %v1442 = vadd.f32 0.0, %v1441
        %v1443 = vpop.f32.mrb[0].mxu0
        %1444 = vmatprep.mubr.bf16.mxu0 0
        %1445 = vmatmul.mubr.bf16.gmra.mrb[0].mxu0 %v1294
        %v1446 = vpop.f32.mrb[0].mxu0
        %v1447 = vadd.f32 0.0, %v1446
        %v1448 = vpop.f32.mrb[0].mxu0
        %v1449 = vpop.f32.mrb[0].mxu0
        %v1450 = vadd.f32 0.0, %v1449
        %v1451 = vpop.f32.mrb[0].mxu0
        %1452 = vmatprep.mubr.bf16.mxu0 0
        %1453 = vmatmul.mubr.bf16.gmra.mrb[0].mxu0 %v1295
        %v1454 = vpop.f32.mrb[0].mxu0
        %v1455 = vadd.f32 0.0, %v1454
        %v1456 = vpop.f32.mrb[0].mxu0
        %v1457 = vpop.f32.mrb[0].mxu0
        %v1458 = vadd.f32 0.0, %v1457
        %v1459 = vpop.f32.mrb[0].mxu0
        %1460 = vmatprep.mubr.bf16.mxu0 0
        %1461 = vmatmul.mubr.bf16.gmra.mrb[0].mxu0 %v1296
        %v1462 = vpop.f32.mrb[0].mxu0
        %v1463 = vadd.f32 0.0, %v1462
        %v1464 = vpop.f32.mrb[0].mxu0
        %v1465 = vpop.f32.mrb[0].mxu0
        %v1466 = vadd.f32 0.0, %v1465
        %v1467 = vpop.f32.mrb[0].mxu0
        %1468 = vmatprep.mubr.bf16.mxu0 0
        %1469 = vmatmul.mubr.bf16.gmra.mrb[0].mxu0 %v1297
        %v1470 = vpop.f32.mrb[0].mxu0
        %v1471 = vadd.f32 0.0, %v1470
        %v1472 = vpop.f32.mrb[0].mxu0
        %v1473 = vpop.f32.mrb[0].mxu0
        %v1474 = vadd.f32 0.0, %v1473
        %v1475 = vpop.f32.mrb[0].mxu0
        %1476 = vmatprep.mubr.bf16.mxu0 0
        %1477 = vmatmul.mubr.bf16.gmra.mrb[0].mxu0 %v1298
        %v1478 = vpop.f32.mrb[0].mxu0
        %v1479 = vadd.f32 0.0, %v1478
        %v1480 = vpop.f32.mrb[0].mxu0
        %v1481 = vpop.f32.mrb[0].mxu0
        %v1482 = vadd.f32 0.0, %v1481
        %v1483 = vpop.f32.mrb[0].mxu0
        %1484 = vmatprep.mubr.bf16.mxu0 0
        %1485 = vmatmul.mubr.bf16.gmra.mrb[0].mxu0 %v1299
        %v1486 = vpop.f32.mrb[0].mxu0
        %v1487 = vadd.f32 0.0, %v1486
        %v1488 = vpop.f32.mrb[0].mxu0
        %v1489 = vpop.f32.mrb[0].mxu0
        %v1490 = vadd.f32 0.0, %v1489
        %v1491 = vpop.f32.mrb[0].mxu0
        %1492 = vmatprep.mubr.bf16.mxu0 0
        %1493 = vmatmul.mubr.bf16.gmra.mrb[0].mxu0 %v1300
        %v1494 = vpop.f32.mrb[0].mxu0
        %v1495 = vadd.f32 0.0, %v1494
        %v1496 = vpop.f32.mrb[0].mxu0
        %v1497 = vpop.f32.mrb[0].mxu0
        %v1498 = vadd.f32 0.0, %v1497
        %v1499 = vpop.f32.mrb[0].mxu0
        %1500 = vmatprep.mubr.bf16.mxu0 0
        %1501 = vmatmul.mubr.bf16.gmra.mrb[0].mxu0 %v1301
        %v1502 = vpop.f32.mrb[0].mxu0
        %v1503 = vadd.f32 0.0, %v1502
        %v1504 = vpop.f32.mrb[0].mxu0
        %v1505 = vpop.f32.mrb[0].mxu0
        %v1506 = vadd.f32 0.0, %v1505
        %v1507 = vpop.f32.mrb[0].mxu0
        %1508 = vmatprep.mubr.bf16.mxu0 0
        %1509 = vmatmul.mubr.bf16.gmra.mrb[0].mxu0 %v1302
        %v1510 = vpop.f32.mrb[0].mxu0
        %v1511 = vadd.f32 0.0, %v1510
        %v1512 = vpop.f32.mrb[0].mxu0
        %v1513 = vpop.f32.mrb[0].mxu0
        %v1514 = vadd.f32 0.0, %v1513
        %v1515 = vpop.f32.mrb[0].mxu0
        %1516 = vmatprep.mubr.bf16.mxu0 0
        %1517 = vmatmul.mubr.bf16.gmra.mrb[0].mxu0 %v1303
        %v1518 = vpop.f32.mrb[0].mxu0
        %v1519 = vadd.f32 0.0, %v1518
        %v1520 = vpop.f32.mrb[0].mxu0
        %v1521 = vpop.f32.mrb[0].mxu0
        %v1522 = vadd.f32 0.0, %v1521
        %v1523 = vpop.f32.mrb[0].mxu0
        %1524 = vmatprep.mubr.bf16.mxu0 0
        %1525 = vmatmul.mubr.bf16.gmra.mrb[0].mxu0 %v1304
        %v1526 = vpop.f32.mrb[0].mxu0
        %v1527 = vadd.f32 0.0, %v1526
        %v1528 = vpop.f32.mrb[0].mxu0
        %v1529 = vpop.f32.mrb[0].mxu0
        %v1530 = vadd.f32 0.0, %v1529
        %v1531 = vpop.f32.mrb[0].mxu0
        %1532 = vmatprep.mubr.bf16.mxu0 0
        %1533 = vmatmul.mubr.bf16.gmra.mrb[0].mxu0 %v1305
        %v1534 = vpop.f32.mrb[0].mxu0
        %v1535 = vadd.f32 0.0, %v1534
        %v1536 = vpop.f32.mrb[0].mxu0
        %v1537 = vpop.f32.mrb[0].mxu0
        %v1538 = vadd.f32 0.0, %v1537
        %v1539 = vpop.f32.mrb[0].mxu0
        %1540 = vmatprep.mubr.bf16.mxu0 0
        %1541 = vmatmul.mubr.bf16.gmra.mrb[0].mxu0 %v1306
        %v1542 = vpop.f32.mrb[0].mxu0
        %v1543 = vadd.f32 0.0, %v1542
        %v1544 = vpop.f32.mrb[0].mxu0
        %v1545 = vpop.f32.mrb[0].mxu0
        %v1546 = vadd.f32 0.0, %v1545
        %v1547 = vpop.f32.mrb[0].mxu0
        %1548 = vmatprep.mubr.bf16.mxu0 0
        %1549 = vmatmul.mubr.bf16.gmra.mrb[0].mxu0 %v1307
        %v1550 = vpop.f32.mrb[0].mxu0
        %v1551 = vadd.f32 0.0, %v1550
        %v1552 = vpop.f32.mrb[0].mxu0
        %v1553 = vpop.f32.mrb[0].mxu0
        %v1554 = vadd.f32 0.0, %v1553
        %v1555 = vpop.f32.mrb[0].mxu0
        %1556 = vmatprep.mubr.bf16.mxu0 0
        %1557 = vmatmul.mubr.bf16.gmra.mrb[0].mxu0 %v1308
        %v1558 = vpop.f32.mrb[0].mxu0
        %v1559 = vadd.f32 0.0, %v1558
        %v1560 = vpop.f32.mrb[0].mxu0
        %v1561 = vpop.f32.mrb[0].mxu0
        %v1562 = vadd.f32 0.0, %v1561
        %v1563 = vpop.f32.mrb[0].mxu0
        %1564 = vmatprep.mubr.bf16.mxu0 0
        %1565 = vmatmul.mubr.bf16.gmra.mrb[0].mxu0 %v1309
        %v1566 = vpop.f32.mrb[0].mxu0
        %v1567 = vadd.f32 0.0, %v1566
        %v1568 = vpop.f32.mrb[0].mxu0
        %v1569 = vpop.f32.mrb[0].mxu0
        %v1570 = vadd.f32 0.0, %v1569
        %v1571 = vpop.f32.mrb[0].mxu0
        %1572 = vmatprep.mubr.bf16.mxu0 0
        %1573 = vmatmul.mubr.bf16.gmra.mrb[0].mxu0 %v1310
        %v1574 = vpop.f32.mrb[0].mxu0
        %v1575 = vadd.f32 0.0, %v1574
        %v1576 = vpop.f32.mrb[0].mxu0
        %v1577 = vpop.f32.mrb[0].mxu0
        %v1578 = vadd.f32 0.0, %v1577
        %v1579 = vpop.f32.mrb[0].mxu0
        %1580 = vmatprep.mubr.bf16.mxu0 0
        %1581 = vmatmul.mubr.bf16.gmra.mrb[0].mxu0 %v1311
        %v1582 = vpop.f32.mrb[0].mxu0
        %v1583 = vadd.f32 0.0, %v1582
        %v1584 = vpop.f32.mrb[0].mxu0
        %v1585 = vpop.f32.mrb[0].mxu0
        %v1586 = vadd.f32 0.0, %v1585
        %v1587 = vpop.f32.mrb[0].mxu0
        %1588 = vmatprep.mubr.bf16.mxu0 0
        %1589 = vmatmul.mubr.bf16.gmra.mrb[0].mxu0 %v1312
        %v1590 = vpop.f32.mrb[0].mxu0
        %v1591 = vadd.f32 0.0, %v1590
        %v1592 = vpop.f32.mrb[0].mxu0
        %v1593 = vpop.f32.mrb[0].mxu0
        %v1594 = vadd.f32 0.0, %v1593
        %v1595 = vpop.f32.mrb[0].mxu0
        %1596 = vmatprep.mubr.bf16.mxu0 0
        %1597 = vmatmul.mubr.bf16.gmra.mrb[0].mxu0 %v1313
        %v1598 = vpop.f32.mrb[0].mxu0
        %v1599 = vadd.f32 0.0, %v1598
        %v1600 = vpop.f32.mrb[0].mxu0
        %v1601 = vpop.f32.mrb[0].mxu0
        %v1602 = vadd.f32 0.0, %v1601
        %v1603 = vpop.f32.mrb[0].mxu0
        %1604 = vmatprep.mubr.bf16.mxu0 0
        %1605 = vmatmul.mubr.bf16.gmra.mrb[0].mxu0 %v1314
        %v1606 = vpop.f32.mrb[0].mxu0
        %v1607 = vadd.f32 0.0, %v1606
        %v1608 = vpop.f32.mrb[0].mxu0
        %v1609 = vpop.f32.mrb[0].mxu0
        %v1610 = vadd.f32 0.0, %v1609
        %v1611 = vpop.f32.mrb[0].mxu0
        %1612 = vmatprep.mubr.bf16.mxu0 0
        %1613 = vmatmul.mubr.bf16.gmra.mrb[0].mxu0 %v1315
        %v1614 = vpop.f32.mrb[0].mxu0
        %v1615 = vadd.f32 0.0, %v1614
        %v1616 = vpop.f32.mrb[0].mxu0
        %v1617 = vpop.f32.mrb[0].mxu0
        %v1618 = vadd.f32 0.0, %v1617
        %v1619 = vpop.f32.mrb[0].mxu0
        %1620 = vmatprep.mubr.bf16.mxu0 0
        %1621 = vmatmul.mubr.bf16.gmra.mrb[0].mxu0 %v1316
        %v1622 = vpop.f32.mrb[0].mxu0
        %v1623 = vadd.f32 0.0, %v1622
        %v1624 = vpop.f32.mrb[0].mxu0
        %v1625 = vpop.f32.mrb[0].mxu0
        %v1626 = vadd.f32 0.0, %v1625
        %v1627 = vpop.f32.mrb[0].mxu0
        %1628 = vmatprep.mubr.bf16.mxu0 0
        %1629 = vmatmul.mubr.bf16.gmra.mrb[0].mxu0 %v1317
        %v1630 = vpop.f32.mrb[0].mxu0
        %v1631 = vadd.f32 0.0, %v1630
        %v1632 = vpop.f32.mrb[0].mxu0
        %v1633 = vpop.f32.mrb[0].mxu0
        %v1634 = vadd.f32 0.0, %v1633
        %v1635 = vpop.f32.mrb[0].mxu0
        %1636 = vmatprep.mubr.bf16.mxu0 0
        %1637 = vmatmul.mubr.bf16.gmra.mrb[0].mxu0 %v1318
        %v1638 = vpop.f32.mrb[0].mxu0
        %v1639 = vadd.f32 0.0, %v1638
        %v1640 = vpop.f32.mrb[0].mxu0
        %v1641 = vpop.f32.mrb[0].mxu0
        %v1642 = vadd.f32 0.0, %v1641
        %v1643 = vpop.f32.mrb[0].mxu0
        %1644 = vmatprep.mubr.bf16.mxu0 0
        %1645 = vmatmul.mubr.bf16.gmra.mrb[0].mxu0 %v1319
        %v1646 = vpop.f32.mrb[0].mxu0
        %v1647 = vadd.f32 0.0, %v1646
        %v1648 = vpop.f32.mrb[0].mxu0
        %v1649 = vpop.f32.mrb[0].mxu0
        %v1650 = vadd.f32 0.0, %v1649
        %v1651 = vpop.f32.mrb[0].mxu0
        %1652 = vmatprep.mubr.bf16.mxu0 0
        %1653 = vmatmul.mubr.bf16.gmra.mrb[0].mxu0 %v1320
        %v1654 = vpop.f32.mrb[0].mxu0
        %v1655 = vadd.f32 0.0, %v1654
        %v1656 = vpop.f32.mrb[0].mxu0
        %v1657 = vpop.f32.mrb[0].mxu0
        %v1658 = vadd.f32 0.0, %v1657
        %v1659 = vpop.f32.mrb[0].mxu0
        %1660 = vmatprep.mubr.bf16.mxu0 0
        %1661 = vmatmul.mubr.bf16.gmra.mrb[0].mxu0 %v1321
        %v1662 = vpop.f32.mrb[0].mxu0
        %v1663 = vadd.f32 0.0, %v1662
        %v1664 = vpop.f32.mrb[0].mxu0
        %v1665 = vpop.f32.mrb[0].mxu0
        %v1666 = vadd.f32 0.0, %v1665
        %v1667 = vpop.f32.mrb[0].mxu0
        %1668 = vmatprep.mubr.bf16.mxu0 0
        %1669 = vmatmul.mubr.bf16.gmra.mrb[0].mxu0 %v1322
        %v1670 = vpop.f32.mrb[0].mxu0
        %v1671 = vadd.f32 0.0, %v1670
        %v1672 = vpop.f32.mrb[0].mxu0
        %v1673 = vpop.f32.mrb[0].mxu0
        %v1674 = vadd.f32 0.0, %v1673
        %v1675 = vpop.f32.mrb[0].mxu0
        %1676 = vdwg.mxu0
        %v1677 = vld [vmem:[#allocation3] sm:$0xff]
        %v1678 = vld [vmem:[#allocation3 + $0x8] sm:$0xff]
        %v1679 = vld [vmem:[#allocation3 + $0x10] sm:$0xff]
        %v1680 = vld [vmem:[#allocation3 + $0x18] sm:$0xff]
        %v1681 = vld [vmem:[#allocation3 + $0x20] sm:$0xff]
        %v1682 = vld [vmem:[#allocation3 + $0x28] sm:$0xff]
        %v1683 = vld [vmem:[#allocation3 + $0x30] sm:$0xff]
        %v1684 = vld [vmem:[#allocation3 + $0x38] sm:$0xff]
        %v1685 = vld [vmem:[#allocation3 + $0x40] sm:$0xff]
        %v1686 = vld [vmem:[#allocation3 + $0x48] sm:$0xff]
        %v1687 = vld [vmem:[#allocation3 + $0x50] sm:$0xff]
        %v1688 = vld [vmem:[#allocation3 + $0x58] sm:$0xff]
        %v1689 = vld [vmem:[#allocation3 + $0x60] sm:$0xff]
        %v1690 = vld [vmem:[#allocation3 + $0x68] sm:$0xff]
        %v1691 = vld [vmem:[#allocation3 + $0x70] sm:$0xff]
        %v1692 = vld [vmem:[#allocation3 + $0x78] sm:$0xff]
        %v1693 = vld [vmem:[#allocation3 + $0x80] sm:$0xff]
        %v1694 = vld [vmem:[#allocation3 + $0x88] sm:$0xff]
        %v1695 = vld [vmem:[#allocation3 + $0x90] sm:$0xff]
        %v1696 = vld [vmem:[#allocation3 + $0x98] sm:$0xff]
        %v1697 = vld [vmem:[#allocation3 + $0xa0] sm:$0xff]
        %v1698 = vld [vmem:[#allocation3 + $0xa8] sm:$0xff]
        %v1699 = vld [vmem:[#allocation3 + $0xb0] sm:$0xff]
        %v1700 = vld [vmem:[#allocation3 + $0xb8] sm:$0xff]
        %v1701 = vld [vmem:[#allocation3 + $0xc0] sm:$0xff]
        %v1702 = vld [vmem:[#allocation3 + $0xc8] sm:$0xff]
        %v1703 = vld [vmem:[#allocation3 + $0xd0] sm:$0xff]
        %v1704 = vld [vmem:[#allocation3 + $0xd8] sm:$0xff]
        %v1705 = vld [vmem:[#allocation3 + $0xe0] sm:$0xff]
        %v1706 = vld [vmem:[#allocation3 + $0xe8] sm:$0xff]
        %v1707 = vld [vmem:[#allocation3 + $0xf0] sm:$0xff]
        %v1708 = vld [vmem:[#allocation3 + $0xf8] sm:$0xff]
        %v1709 = vld [vmem:[#allocation3 + $0x100] sm:$0xff]
        %v1710 = vld [vmem:[#allocation3 + $0x108] sm:$0xff]
        %v1711 = vld [vmem:[#allocation3 + $0x110] sm:$0xff]
        %v1712 = vld [vmem:[#allocation3 + $0x118] sm:$0xff]
        %v1713 = vld [vmem:[#allocation3 + $0x120] sm:$0xff]
        %v1714 = vld [vmem:[#allocation3 + $0x128] sm:$0xff]
        %v1715 = vld [vmem:[#allocation3 + $0x130] sm:$0xff]
        %v1716 = vld [vmem:[#allocation3 + $0x138] sm:$0xff]
        %v1717 = vld [vmem:[#allocation3 + $0x140] sm:$0xff]
        %v1718 = vld [vmem:[#allocation3 + $0x148] sm:$0xff]
        %v1719 = vld [vmem:[#allocation3 + $0x150] sm:$0xff]
        %v1720 = vld [vmem:[#allocation3 + $0x158] sm:$0xff]
        %v1721 = vld [vmem:[#allocation3 + $0x160] sm:$0xff]
        %v1722 = vld [vmem:[#allocation3 + $0x168] sm:$0xff]
        %v1723 = vld [vmem:[#allocation3 + $0x170] sm:$0xff]
        %v1724 = vld [vmem:[#allocation3 + $0x178] sm:$0xff]
        %v1725 = vld [vmem:[#allocation3 + $0x180] sm:$0xff]
        %v1726 = vld [vmem:[#allocation3 + $0x188] sm:$0xff]
        %v1727 = vld [vmem:[#allocation3 + $0x190] sm:$0xff]
        %v1728 = vld [vmem:[#allocation3 + $0x198] sm:$0xff]
        %v1729 = vld [vmem:[#allocation3 + $0x1a0] sm:$0xff]
        %v1730 = vld [vmem:[#allocation3 + $0x1a8] sm:$0xff]
        %v1731 = vld [vmem:[#allocation3 + $0x1b0] sm:$0xff]
        %v1732 = vld [vmem:[#allocation3 + $0x1b8] sm:$0xff]
        %v1733 = vld [vmem:[#allocation3 + $0x1c0] sm:$0xff]
        %v1734 = vld [vmem:[#allocation3 + $0x1c8] sm:$0xff]
        %v1735 = vld [vmem:[#allocation3 + $0x1d0] sm:$0xff]
        %v1736 = vld [vmem:[#allocation3 + $0x1d8] sm:$0xff]
        %v1737 = vld [vmem:[#allocation3 + $0x1e0] sm:$0xff]
        %v1738 = vld [vmem:[#allocation3 + $0x1e8] sm:$0xff]
        %v1739 = vld [vmem:[#allocation3 + $0x1f0] sm:$0xff]
        %v1740 = vld [vmem:[#allocation3 + $0x1f8] sm:$0xff]
        %v1741 = vadd.f32 %v1677, %v1423
        %v1742 = vadd.f32 %v1678, %v1426
        %v1743 = vadd.f32 %v1679, %v1431
        %v1744 = vadd.f32 %v1680, %v1434
        %v1745 = vadd.f32 %v1681, %v1439
        %v1746 = vadd.f32 %v1682, %v1442
        %v1747 = vadd.f32 %v1683, %v1447
        %v1748 = vadd.f32 %v1684, %v1450
        %v1749 = vadd.f32 %v1685, %v1455
        %v1750 = vadd.f32 %v1686, %v1458
        %v1751 = vadd.f32 %v1687, %v1463
        %v1752 = vadd.f32 %v1688, %v1466
        %v1753 = vadd.f32 %v1689, %v1471
        %v1754 = vadd.f32 %v1690, %v1474
        %v1755 = vadd.f32 %v1691, %v1479
        %v1756 = vadd.f32 %v1692, %v1482
        %v1757 = vadd.f32 %v1693, %v1487
        %v1758 = vadd.f32 %v1694, %v1490
        %v1759 = vadd.f32 %v1695, %v1495
        %v1760 = vadd.f32 %v1696, %v1498
        %v1761 = vadd.f32 %v1697, %v1503
        %v1762 = vadd.f32 %v1698, %v1506
        %v1763 = vadd.f32 %v1699, %v1511
        %v1764 = vadd.f32 %v1700, %v1514
        %v1765 = vadd.f32 %v1701, %v1519
        %v1766 = vadd.f32 %v1702, %v1522
        %v1767 = vadd.f32 %v1703, %v1527
        %v1768 = vadd.f32 %v1704, %v1530
        %v1769 = vadd.f32 %v1705, %v1535
        %v1770 = vadd.f32 %v1706, %v1538
        %v1771 = vadd.f32 %v1707, %v1543
        %v1772 = vadd.f32 %v1708, %v1546
        %v1773 = vadd.f32 %v1709, %v1551
        %v1774 = vadd.f32 %v1710, %v1554
        %v1775 = vadd.f32 %v1711, %v1559
        %v1776 = vadd.f32 %v1712, %v1562
        %v1777 = vadd.f32 %v1713, %v1567
        %v1778 = vadd.f32 %v1714, %v1570
        %v1779 = vadd.f32 %v1715, %v1575
        %v1780 = vadd.f32 %v1716, %v1578
        %v1781 = vadd.f32 %v1717, %v1583
        %v1782 = vadd.f32 %v1718, %v1586
        %v1783 = vadd.f32 %v1719, %v1591
        %v1784 = vadd.f32 %v1720, %v1594
        %v1785 = vadd.f32 %v1721, %v1599
        %v1786 = vadd.f32 %v1722, %v1602
        %v1787 = vadd.f32 %v1723, %v1607
        %v1788 = vadd.f32 %v1724, %v1610
        %v1789 = vadd.f32 %v1725, %v1615
        %v1790 = vadd.f32 %v1726, %v1618
        %v1791 = vadd.f32 %v1727, %v1623
        %v1792 = vadd.f32 %v1728, %v1626
        %v1793 = vadd.f32 %v1729, %v1631
        %v1794 = vadd.f32 %v1730, %v1634
        %v1795 = vadd.f32 %v1731, %v1639
        %v1796 = vadd.f32 %v1732, %v1642
        %v1797 = vadd.f32 %v1733, %v1647
        %v1798 = vadd.f32 %v1734, %v1650
        %v1799 = vadd.f32 %v1735, %v1655
        %v1800 = vadd.f32 %v1736, %v1658
        %v1801 = vadd.f32 %v1737, %v1663
        %v1802 = vadd.f32 %v1738, %v1666
        %v1803 = vadd.f32 %v1739, %v1671
        %v1804 = vadd.f32 %v1740, %v1674
        %1805 = vst [vmem:[#allocation3] sm:$0xff] %v1741
        %1806 = vst [vmem:[#allocation3 + $0x8] sm:$0xff] %v1742
        %1807 = vst [vmem:[#allocation3 + $0x10] sm:$0xff] %v1743
        %1808 = vst [vmem:[#allocation3 + $0x18] sm:$0xff] %v1744
        %1809 = vst [vmem:[#allocation3 + $0x20] sm:$0xff] %v1745
        %1810 = vst [vmem:[#allocation3 + $0x28] sm:$0xff] %v1746
        %1811 = vst [vmem:[#allocation3 + $0x30] sm:$0xff] %v1747
        %1812 = vst [vmem:[#allocation3 + $0x38] sm:$0xff] %v1748
        %1813 = vst [vmem:[#allocation3 + $0x40] sm:$0xff] %v1749
        %1814 = vst [vmem:[#allocation3 + $0x48] sm:$0xff] %v1750
        %1815 = vst [vmem:[#allocation3 + $0x50] sm:$0xff] %v1751
        %1816 = vst [vmem:[#allocation3 + $0x58] sm:$0xff] %v1752
        %1817 = vst [vmem:[#allocation3 + $0x60] sm:$0xff] %v1753
        %1818 = vst [vmem:[#allocation3 + $0x68] sm:$0xff] %v1754
        %1819 = vst [vmem:[#allocation3 + $0x70] sm:$0xff] %v1755
        %1820 = vst [vmem:[#allocation3 + $0x78] sm:$0xff] %v1756
        %1821 = vst [vmem:[#allocation3 + $0x80] sm:$0xff] %v1757
        %1822 = vst [vmem:[#allocation3 + $0x88] sm:$0xff] %v1758
        %1823 = vst [vmem:[#allocation3 + $0x90] sm:$0xff] %v1759
        %1824 = vst [vmem:[#allocation3 + $0x98] sm:$0xff] %v1760
        %1825 = vst [vmem:[#allocation3 + $0xa0] sm:$0xff] %v1761
        %1826 = vst [vmem:[#allocation3 + $0xa8] sm:$0xff] %v1762
        %1827 = vst [vmem:[#allocation3 + $0xb0] sm:$0xff] %v1763
        %1828 = vst [vmem:[#allocation3 + $0xb8] sm:$0xff] %v1764
        %1829 = vst [vmem:[#allocation3 + $0xc0] sm:$0xff] %v1765
        %1830 = vst [vmem:[#allocation3 + $0xc8] sm:$0xff] %v1766
        %1831 = vst [vmem:[#allocation3 + $0xd0] sm:$0xff] %v1767
        %1832 = vst [vmem:[#allocation3 + $0xd8] sm:$0xff] %v1768
        %1833 = vst [vmem:[#allocation3 + $0xe0] sm:$0xff] %v1769
        %1834 = vst [vmem:[#allocation3 + $0xe8] sm:$0xff] %v1770
        %1835 = vst [vmem:[#allocation3 + $0xf0] sm:$0xff] %v1771
        %1836 = vst [vmem:[#allocation3 + $0xf8] sm:$0xff] %v1772
        %1837 = vst [vmem:[#allocation3 + $0x100] sm:$0xff] %v1773
        %1838 = vst [vmem:[#allocation3 + $0x108] sm:$0xff] %v1774
        %1839 = vst [vmem:[#allocation3 + $0x110] sm:$0xff] %v1775
        %1840 = vst [vmem:[#allocation3 + $0x118] sm:$0xff] %v1776
        %1841 = vst [vmem:[#allocation3 + $0x120] sm:$0xff] %v1777
        %1842 = vst [vmem:[#allocation3 + $0x128] sm:$0xff] %v1778
        %1843 = vst [vmem:[#allocation3 + $0x130] sm:$0xff] %v1779
        %1844 = vst [vmem:[#allocation3 + $0x138] sm:$0xff] %v1780
        %1845 = vst [vmem:[#allocation3 + $0x140] sm:$0xff] %v1781
        %1846 = vst [vmem:[#allocation3 + $0x148] sm:$0xff] %v1782
        %1847 = vst [vmem:[#allocation3 + $0x150] sm:$0xff] %v1783
        %1848 = vst [vmem:[#allocation3 + $0x158] sm:$0xff] %v1784
        %1849 = vst [vmem:[#allocation3 + $0x160] sm:$0xff] %v1785
        %1850 = vst [vmem:[#allocation3 + $0x168] sm:$0xff] %v1786
        %1851 = vst [vmem:[#allocation3 + $0x170] sm:$0xff] %v1787
        %1852 = vst [vmem:[#allocation3 + $0x178] sm:$0xff] %v1788
        %1853 = vst [vmem:[#allocation3 + $0x180] sm:$0xff] %v1789
        %1854 = vst [vmem:[#allocation3 + $0x188] sm:$0xff] %v1790
        %1855 = vst [vmem:[#allocation3 + $0x190] sm:$0xff] %v1791
        %1856 = vst [vmem:[#allocation3 + $0x198] sm:$0xff] %v1792
        %1857 = vst [vmem:[#allocation3 + $0x1a0] sm:$0xff] %v1793
        %1858 = vst [vmem:[#allocation3 + $0x1a8] sm:$0xff] %v1794
        %1859 = vst [vmem:[#allocation3 + $0x1b0] sm:$0xff] %v1795
        %1860 = vst [vmem:[#allocation3 + $0x1b8] sm:$0xff] %v1796
        %1861 = vst [vmem:[#allocation3 + $0x1c0] sm:$0xff] %v1797
        %1862 = vst [vmem:[#allocation3 + $0x1c8] sm:$0xff] %v1798
        %1863 = vst [vmem:[#allocation3 + $0x1d0] sm:$0xff] %v1799
        %1864 = vst [vmem:[#allocation3 + $0x1d8] sm:$0xff] %v1800
        %1865 = vst [vmem:[#allocation3 + $0x1e0] sm:$0xff] %v1801
        %1866 = vst [vmem:[#allocation3 + $0x1e8] sm:$0xff] %v1802
        %1867 = vst [vmem:[#allocation3 + $0x1f0] sm:$0xff] %v1803
        %1868 = vst [vmem:[#allocation3 + $0x1f8] sm:$0xff] %v1804
        %v1869 = vrot.slane %v552, 1
        %v1870 = vrot.slane %v556, 1
        %v1871 = vrot.slane %v560, 1
        %v1872 = vrot.slane %v564, 1
        %v1873 = vrot.slane %v568, 1
        %v1874 = vrot.slane %v572, 1
        %v1875 = vrot.slane %v576, 1
        %v1876 = vrot.slane %v580, 1
        %v1877 = vrot.slane %v584, 1
        %v1878 = vrot.slane %v588, 1
        %v1879 = vrot.slane %v592, 1
        %v1880 = vrot.slane %v596, 1
        %v1881 = vrot.slane %v600, 1
        %v1882 = vrot.slane %v604, 1
        %v1883 = vrot.slane %v608, 1
        %v1884 = vrot.slane %v612, 1
        %v1885 = vrot.slane %v616, 1
        %v1886 = vrot.slane %v620, 1
        %v1887 = vrot.slane %v624, 1
        %v1888 = vrot.slane %v628, 1
        %v1889 = vrot.slane %v632, 1
        %v1890 = vrot.slane %v636, 1
        %v1891 = vrot.slane %v640, 1
        %v1892 = vrot.slane %v644, 1
        %v1893 = vrot.slane %v648, 1
        %v1894 = vrot.slane %v652, 1
        %v1895 = vrot.slane %v656, 1
        %v1896 = vrot.slane %v660, 1
        %v1897 = vrot.slane %v664, 1
        %v1898 = vrot.slane %v668, 1
        %v1899 = vrot.slane %v672, 1
        %v1900 = vrot.slane %v676, 1
        %v1901 = vrot.slane %v553, 1
        %v1902 = vrot.slane %v557, 1
        %v1903 = vrot.slane %v561, 1
        %v1904 = vrot.slane %v565, 1
        %v1905 = vrot.slane %v569, 1
        %v1906 = vrot.slane %v573, 1
        %v1907 = vrot.slane %v577, 1
        %v1908 = vrot.slane %v581, 1
        %v1909 = vrot.slane %v585, 1
        %v1910 = vrot.slane %v589, 1
        %v1911 = vrot.slane %v593, 1
        %v1912 = vrot.slane %v597, 1
        %v1913 = vrot.slane %v601, 1
        %v1914 = vrot.slane %v605, 1
        %v1915 = vrot.slane %v609, 1
        %v1916 = vrot.slane %v613, 1
        %v1917 = vrot.slane %v617, 1
        %v1918 = vrot.slane %v621, 1
        %v1919 = vrot.slane %v625, 1
        %v1920 = vrot.slane %v629, 1
        %v1921 = vrot.slane %v633, 1
        %v1922 = vrot.slane %v637, 1
        %v1923 = vrot.slane %v641, 1
        %v1924 = vrot.slane %v645, 1
        %v1925 = vrot.slane %v649, 1
        %v1926 = vrot.slane %v653, 1
        %v1927 = vrot.slane %v657, 1
        %v1928 = vrot.slane %v661, 1
        %v1929 = vrot.slane %v665, 1
        %v1930 = vrot.slane %v669, 1
        %v1931 = vrot.slane %v673, 1
        %v1932 = vrot.slane %v677, 1
        %v1933 = vrot.slane %v554, 1
        %v1934 = vrot.slane %v558, 1
        %v1935 = vrot.slane %v562, 1
        %v1936 = vrot.slane %v566, 1
        %v1937 = vrot.slane %v570, 1
        %v1938 = vrot.slane %v574, 1
        %v1939 = vrot.slane %v578, 1
        %v1940 = vrot.slane %v582, 1
        %v1941 = vrot.slane %v586, 1
        %v1942 = vrot.slane %v590, 1
        %v1943 = vrot.slane %v594, 1
        %v1944 = vrot.slane %v598, 1
        %v1945 = vrot.slane %v602, 1
        %v1946 = vrot.slane %v606, 1
        %v1947 = vrot.slane %v610, 1
        %v1948 = vrot.slane %v614, 1
        %v1949 = vrot.slane %v618, 1
        %v1950 = vrot.slane %v622, 1
        %v1951 = vrot.slane %v626, 1
        %v1952 = vrot.slane %v630, 1
        %v1953 = vrot.slane %v634, 1
        %v1954 = vrot.slane %v638, 1
        %v1955 = vrot.slane %v642, 1
        %v1956 = vrot.slane %v646, 1
        %v1957 = vrot.slane %v650, 1
        %v1958 = vrot.slane %v654, 1
        %v1959 = vrot.slane %v658, 1
        %v1960 = vrot.slane %v662, 1
        %v1961 = vrot.slane %v666, 1
        %v1962 = vrot.slane %v670, 1
        %v1963 = vrot.slane %v674, 1
        %v1964 = vrot.slane %v678, 1
        %vm1965 = vcmp.lt.s32.totalorder %v776, 7
        %v1966 = vsel %vm1965, %v1901, %v1933
        %v1967 = vsel %vm1965, %v1902, %v1934
        %v1968 = vsel %vm1965, %v1903, %v1935
        %v1969 = vsel %vm1965, %v1904, %v1936
        %v1970 = vsel %vm1965, %v1905, %v1937
        %v1971 = vsel %vm1965, %v1906, %v1938
        %v1972 = vsel %vm1965, %v1907, %v1939
        %v1973 = vsel %vm1965, %v1908, %v1940
        %v1974 = vsel %vm1965, %v1909, %v1941
        %v1975 = vsel %vm1965, %v1910, %v1942
        %v1976 = vsel %vm1965, %v1911, %v1943
        %v1977 = vsel %vm1965, %v1912, %v1944
        %v1978 = vsel %vm1965, %v1913, %v1945
        %v1979 = vsel %vm1965, %v1914, %v1946
        %v1980 = vsel %vm1965, %v1915, %v1947
        %v1981 = vsel %vm1965, %v1916, %v1948
        %v1982 = vsel %vm1965, %v1917, %v1949
        %v1983 = vsel %vm1965, %v1918, %v1950
        %v1984 = vsel %vm1965, %v1919, %v1951
        %v1985 = vsel %vm1965, %v1920, %v1952
        %v1986 = vsel %vm1965, %v1921, %v1953
        %v1987 = vsel %vm1965, %v1922, %v1954
        %v1988 = vsel %vm1965, %v1923, %v1955
        %v1989 = vsel %vm1965, %v1924, %v1956
        %v1990 = vsel %vm1965, %v1925, %v1957
        %v1991 = vsel %vm1965, %v1926, %v1958
        %v1992 = vsel %vm1965, %v1927, %v1959
        %v1993 = vsel %vm1965, %v1928, %v1960
        %v1994 = vsel %vm1965, %v1929, %v1961
        %v1995 = vsel %vm1965, %v1930, %v1962
        %v1996 = vsel %vm1965, %v1931, %v1963
        %v1997 = vsel %vm1965, %v1932, %v1964
        %v1998 = vsel %vm1965, %v1869, %v1901
        %v1999 = vsel %vm1965, %v1870, %v1902
        %v2000 = vsel %vm1965, %v1871, %v1903
        %v2001 = vsel %vm1965, %v1872, %v1904
        %v2002 = vsel %vm1965, %v1873, %v1905
        %v2003 = vsel %vm1965, %v1874, %v1906
        %v2004 = vsel %vm1965, %v1875, %v1907
        %v2005 = vsel %vm1965, %v1876, %v1908
        %v2006 = vsel %vm1965, %v1877, %v1909
        %v2007 = vsel %vm1965, %v1878, %v1910
        %v2008 = vsel %vm1965, %v1879, %v1911
        %v2009 = vsel %vm1965, %v1880, %v1912
        %v2010 = vsel %vm1965, %v1881, %v1913
        %v2011 = vsel %vm1965, %v1882, %v1914
        %v2012 = vsel %vm1965, %v1883, %v1915
        %v2013 = vsel %vm1965, %v1884, %v1916
        %v2014 = vsel %vm1965, %v1885, %v1917
        %v2015 = vsel %vm1965, %v1886, %v1918
        %v2016 = vsel %vm1965, %v1887, %v1919
        %v2017 = vsel %vm1965, %v1888, %v1920
        %v2018 = vsel %vm1965, %v1889, %v1921
        %v2019 = vsel %vm1965, %v1890, %v1922
        %v2020 = vsel %vm1965, %v1891, %v1923
        %v2021 = vsel %vm1965, %v1892, %v1924
        %v2022 = vsel %vm1965, %v1893, %v1925
        %v2023 = vsel %vm1965, %v1894, %v1926
        %v2024 = vsel %vm1965, %v1895, %v1927
        %v2025 = vsel %vm1965, %v1896, %v1928
        %v2026 = vsel %vm1965, %v1897, %v1929
        %v2027 = vsel %vm1965, %v1898, %v1930
        %v2028 = vsel %vm1965, %v1899, %v1931
        %v2029 = vsel %vm1965, %v1900, %v1932
        %v2030 = vpack.c.bf16 %v1966, %v1998
        %v2031 = vpack.c.bf16 %v1967, %v1999
        %v2032 = vpack.c.bf16 %v1968, %v2000
        %v2033 = vpack.c.bf16 %v1969, %v2001
        %v2034 = vpack.c.bf16 %v1970, %v2002
        %v2035 = vpack.c.bf16 %v1971, %v2003
        %v2036 = vpack.c.bf16 %v1972, %v2004
        %v2037 = vpack.c.bf16 %v1973, %v2005
        %v2038 = vpack.c.bf16 %v1974, %v2006
        %v2039 = vpack.c.bf16 %v1975, %v2007
        %v2040 = vpack.c.bf16 %v1976, %v2008
        %v2041 = vpack.c.bf16 %v1977, %v2009
        %v2042 = vpack.c.bf16 %v1978, %v2010
        %v2043 = vpack.c.bf16 %v1979, %v2011
        %v2044 = vpack.c.bf16 %v1980, %v2012
        %v2045 = vpack.c.bf16 %v1981, %v2013
        %v2046 = vpack.c.bf16 %v1982, %v2014
        %v2047 = vpack.c.bf16 %v1983, %v2015
        %v2048 = vpack.c.bf16 %v1984, %v2016
        %v2049 = vpack.c.bf16 %v1985, %v2017
        %v2050 = vpack.c.bf16 %v1986, %v2018
        %v2051 = vpack.c.bf16 %v1987, %v2019
        %v2052 = vpack.c.bf16 %v1988, %v2020
        %v2053 = vpack.c.bf16 %v1989, %v2021
        %v2054 = vpack.c.bf16 %v1990, %v2022
        %v2055 = vpack.c.bf16 %v1991, %v2023
        %v2056 = vpack.c.bf16 %v1992, %v2024
        %v2057 = vpack.c.bf16 %v1993, %v2025
        %v2058 = vpack.c.bf16 %v1994, %v2026
        %v2059 = vpack.c.bf16 %v1995, %v2027
        %v2060 = vpack.c.bf16 %v1996, %v2028
        %v2061 = vpack.c.bf16 %v1997, %v2029
        %s2062 = scalar_lea.vmem %s232, 128 [#allocation4]
        %v2063 = vld [vmem:[%s2062] sm:$0xf]
        %v2064 = vld [vmem:[%s2062 + $0x4] sm:$0xf]
        %v2065 = vld [vmem:[%s2062 + $0x8] sm:$0xf]
        %v2066 = vld [vmem:[%s2062 + $0xc] sm:$0xf]
        %v2067 = vld [vmem:[%s2062 + $0x10] sm:$0xf]
        %v2068 = vld [vmem:[%s2062 + $0x14] sm:$0xf]
        %v2069 = vld [vmem:[%s2062 + $0x18] sm:$0xf]
        %v2070 = vld [vmem:[%s2062 + $0x1c] sm:$0xf]
        %v2071 = vld [vmem:[%s2062 + $0x20] sm:$0xf]
        %v2072 = vld [vmem:[%s2062 + $0x24] sm:$0xf]
        %v2073 = vld [vmem:[%s2062 + $0x28] sm:$0xf]
        %v2074 = vld [vmem:[%s2062 + $0x2c] sm:$0xf]
        %v2075 = vld [vmem:[%s2062 + $0x30] sm:$0xf]
        %v2076 = vld [vmem:[%s2062 + $0x34] sm:$0xf]
        %v2077 = vld [vmem:[%s2062 + $0x38] sm:$0xf]
        %v2078 = vld [vmem:[%s2062 + $0x3c] sm:$0xf]
        %v2095 = vunpack.c.l.b16 %v2063
        %v2096 = vunpack.c.l.b16 %v2064
        %v2097 = vunpack.c.l.b16 %v2065
        %v2098 = vunpack.c.l.b16 %v2066
        %v2099 = vunpack.c.l.b16 %v2067
        %v2100 = vunpack.c.l.b16 %v2068
        %v2101 = vunpack.c.l.b16 %v2069
        %v2102 = vunpack.c.l.b16 %v2070
        %v2103 = vunpack.c.l.b16 %v2071
        %v2104 = vunpack.c.l.b16 %v2072
        %v2105 = vunpack.c.l.b16 %v2073
        %v2106 = vunpack.c.l.b16 %v2074
        %v2107 = vunpack.c.l.b16 %v2075
        %v2108 = vunpack.c.l.b16 %v2076
        %v2109 = vunpack.c.l.b16 %v2077
        %v2110 = vunpack.c.l.b16 %v2078
        %v2111 = vpack.c.b16 %v2096, %v2095
        %v2112 = vpack.c.b16 %v2098, %v2097
        %v2113 = vpack.c.b16 %v2100, %v2099
        %v2114 = vpack.c.b16 %v2102, %v2101
        %v2115 = vpack.c.b16 %v2104, %v2103
        %v2116 = vpack.c.b16 %v2106, %v2105
        %v2117 = vpack.c.b16 %v2108, %v2107
        %v2118 = vpack.c.b16 %v2110, %v2109
        %2127 = vmatprep.subr.bf16.mxu0 0
        %2128 = vmatpush1.bf16.msra.mxu0 %v2111
        %2129 = vmatprep.subr.bf16.mxu0 0
        %2130 = vmatpush1.bf16.msra.mxu0 %v2112
        %2131 = vmatprep.subr.bf16.mxu0 0
        %2132 = vmatpush1.bf16.msra.mxu0 %v2113
        %2133 = vmatprep.subr.bf16.mxu0 0
        %2134 = vmatpush1.bf16.msra.mxu0 %v2114
        %2135 = vmatprep.subr.bf16.mxu0 0
        %2136 = vmatpush1.bf16.msra.mxu0 %v2115
        %2137 = vmatprep.subr.bf16.mxu0 0
        %2138 = vmatpush1.bf16.msra.mxu0 %v2116
        %2139 = vmatprep.subr.bf16.mxu0 0
        %2140 = vmatpush1.bf16.msra.mxu0 %v2117
        %2141 = vmatprep.subr.bf16.mxu0 0
        %2142 = vmatpush1.bf16.msra.mxu0 %v2118
        %2143 = vmatprep.subr.bf16.mxu0 0
        %2144 = vmatpush1.bf16.msra.mxu0 0
        %2145 = vmatprep.subr.bf16.mxu0 0
        %2146 = vmatpush1.bf16.msra.mxu0 0
        %2147 = vmatprep.subr.bf16.mxu0 0
        %2148 = vmatpush1.bf16.msra.mxu0 0
        %2149 = vmatprep.subr.bf16.mxu0 0
        %2150 = vmatpush1.bf16.msra.mxu0 0
        %2151 = vmatprep.subr.bf16.mxu0 0
        %2152 = vmatpush1.bf16.msra.mxu0 0
        %2153 = vmatprep.subr.bf16.mxu0 0
        %2154 = vmatpush1.bf16.msra.mxu0 0
        %2155 = vmatprep.subr.bf16.mxu0 0
        %2156 = vmatpush1.bf16.msra.mxu0 0
        %2157 = vmatprep.subr.bf16.mxu0 0
        %2158 = vmatpush1.bf16.msra.mxu0 0
        %2159 = vmatprep.mubr.bf16.mxu0 0
        %2160 = vmatmul.mubr.bf16.gmra.mrb[0].mxu0 %v2030
        %v2161 = vpop.f32.mrb[0].mxu0
        %v2162 = vadd.f32 0.0, %v2161
        %v2163 = vpop.f32.mrb[0].mxu0
        %v2164 = vpop.f32.mrb[0].mxu0
        %v2165 = vadd.f32 0.0, %v2164
        %v2166 = vpop.f32.mrb[0].mxu0
        %2167 = vmatprep.mubr.bf16.mxu0 0
        %2168 = vmatmul.mubr.bf16.gmra.mrb[0].mxu0 %v2031
        %v2169 = vpop.f32.mrb[0].mxu0
        %v2170 = vadd.f32 0.0, %v2169
        %v2171 = vpop.f32.mrb[0].mxu0
        %v2172 = vpop.f32.mrb[0].mxu0
        %v2173 = vadd.f32 0.0, %v2172
        %v2174 = vpop.f32.mrb[0].mxu0
        %2175 = vmatprep.mubr.bf16.mxu0 0
        %2176 = vmatmul.mubr.bf16.gmra.mrb[0].mxu0 %v2032
        %v2177 = vpop.f32.mrb[0].mxu0
        %v2178 = vadd.f32 0.0, %v2177
        %v2179 = vpop.f32.mrb[0].mxu0
        %v2180 = vpop.f32.mrb[0].mxu0
        %v2181 = vadd.f32 0.0, %v2180
        %v2182 = vpop.f32.mrb[0].mxu0
        %2183 = vmatprep.mubr.bf16.mxu0 0
        %2184 = vmatmul.mubr.bf16.gmra.mrb[0].mxu0 %v2033
        %v2185 = vpop.f32.mrb[0].mxu0
        %v2186 = vadd.f32 0.0, %v2185
        %v2187 = vpop.f32.mrb[0].mxu0
        %v2188 = vpop.f32.mrb[0].mxu0
        %v2189 = vadd.f32 0.0, %v2188
        %v2190 = vpop.f32.mrb[0].mxu0
        %2191 = vmatprep.mubr.bf16.mxu0 0
        %2192 = vmatmul.mubr.bf16.gmra.mrb[0].mxu0 %v2034
        %v2193 = vpop.f32.mrb[0].mxu0
        %v2194 = vadd.f32 0.0, %v2193
        %v2195 = vpop.f32.mrb[0].mxu0
        %v2196 = vpop.f32.mrb[0].mxu0
        %v2197 = vadd.f32 0.0, %v2196
        %v2198 = vpop.f32.mrb[0].mxu0
        %2199 = vmatprep.mubr.bf16.mxu0 0
        %2200 = vmatmul.mubr.bf16.gmra.mrb[0].mxu0 %v2035
        %v2201 = vpop.f32.mrb[0].mxu0
        %v2202 = vadd.f32 0.0, %v2201
        %v2203 = vpop.f32.mrb[0].mxu0
        %v2204 = vpop.f32.mrb[0].mxu0
        %v2205 = vadd.f32 0.0, %v2204
        %v2206 = vpop.f32.mrb[0].mxu0
        %2207 = vmatprep.mubr.bf16.mxu0 0
        %2208 = vmatmul.mubr.bf16.gmra.mrb[0].mxu0 %v2036
        %v2209 = vpop.f32.mrb[0].mxu0
        %v2210 = vadd.f32 0.0, %v2209
        %v2211 = vpop.f32.mrb[0].mxu0
        %v2212 = vpop.f32.mrb[0].mxu0
        %v2213 = vadd.f32 0.0, %v2212
        %v2214 = vpop.f32.mrb[0].mxu0
        %2215 = vmatprep.mubr.bf16.mxu0 0
        %2216 = vmatmul.mubr.bf16.gmra.mrb[0].mxu0 %v2037
        %v2217 = vpop.f32.mrb[0].mxu0
        %v2218 = vadd.f32 0.0, %v2217
        %v2219 = vpop.f32.mrb[0].mxu0
        %v2220 = vpop.f32.mrb[0].mxu0
        %v2221 = vadd.f32 0.0, %v2220
        %v2222 = vpop.f32.mrb[0].mxu0
        %2223 = vmatprep.mubr.bf16.mxu0 0
        %2224 = vmatmul.mubr.bf16.gmra.mrb[0].mxu0 %v2038
        %v2225 = vpop.f32.mrb[0].mxu0
        %v2226 = vadd.f32 0.0, %v2225
        %v2227 = vpop.f32.mrb[0].mxu0
        %v2228 = vpop.f32.mrb[0].mxu0
        %v2229 = vadd.f32 0.0, %v2228
        %v2230 = vpop.f32.mrb[0].mxu0
        %2231 = vmatprep.mubr.bf16.mxu0 0
        %2232 = vmatmul.mubr.bf16.gmra.mrb[0].mxu0 %v2039
        %v2233 = vpop.f32.mrb[0].mxu0
        %v2234 = vadd.f32 0.0, %v2233
        %v2235 = vpop.f32.mrb[0].mxu0
        %v2236 = vpop.f32.mrb[0].mxu0
        %v2237 = vadd.f32 0.0, %v2236
        %v2238 = vpop.f32.mrb[0].mxu0
        %2239 = vmatprep.mubr.bf16.mxu0 0
        %2240 = vmatmul.mubr.bf16.gmra.mrb[0].mxu0 %v2040
        %v2241 = vpop.f32.mrb[0].mxu0
        %v2242 = vadd.f32 0.0, %v2241
        %v2243 = vpop.f32.mrb[0].mxu0
        %v2244 = vpop.f32.mrb[0].mxu0
        %v2245 = vadd.f32 0.0, %v2244
        %v2246 = vpop.f32.mrb[0].mxu0
        %2247 = vmatprep.mubr.bf16.mxu0 0
        %2248 = vmatmul.mubr.bf16.gmra.mrb[0].mxu0 %v2041
        %v2249 = vpop.f32.mrb[0].mxu0
        %v2250 = vadd.f32 0.0, %v2249
        %v2251 = vpop.f32.mrb[0].mxu0
        %v2252 = vpop.f32.mrb[0].mxu0
        %v2253 = vadd.f32 0.0, %v2252
        %v2254 = vpop.f32.mrb[0].mxu0
        %2255 = vmatprep.mubr.bf16.mxu0 0
        %2256 = vmatmul.mubr.bf16.gmra.mrb[0].mxu0 %v2042
        %v2257 = vpop.f32.mrb[0].mxu0
        %v2258 = vadd.f32 0.0, %v2257
        %v2259 = vpop.f32.mrb[0].mxu0
        %v2260 = vpop.f32.mrb[0].mxu0
        %v2261 = vadd.f32 0.0, %v2260
        %v2262 = vpop.f32.mrb[0].mxu0
        %2263 = vmatprep.mubr.bf16.mxu0 0
        %2264 = vmatmul.mubr.bf16.gmra.mrb[0].mxu0 %v2043
        %v2265 = vpop.f32.mrb[0].mxu0
        %v2266 = vadd.f32 0.0, %v2265
        %v2267 = vpop.f32.mrb[0].mxu0
        %v2268 = vpop.f32.mrb[0].mxu0
        %v2269 = vadd.f32 0.0, %v2268
        %v2270 = vpop.f32.mrb[0].mxu0
        %2271 = vmatprep.mubr.bf16.mxu0 0
        %2272 = vmatmul.mubr.bf16.gmra.mrb[0].mxu0 %v2044
        %v2273 = vpop.f32.mrb[0].mxu0
        %v2274 = vadd.f32 0.0, %v2273
        %v2275 = vpop.f32.mrb[0].mxu0
        %v2276 = vpop.f32.mrb[0].mxu0
        %v2277 = vadd.f32 0.0, %v2276
        %v2278 = vpop.f32.mrb[0].mxu0
        %2279 = vmatprep.mubr.bf16.mxu0 0
        %2280 = vmatmul.mubr.bf16.gmra.mrb[0].mxu0 %v2045
        %v2281 = vpop.f32.mrb[0].mxu0
        %v2282 = vadd.f32 0.0, %v2281
        %v2283 = vpop.f32.mrb[0].mxu0
        %v2284 = vpop.f32.mrb[0].mxu0
        %v2285 = vadd.f32 0.0, %v2284
        %v2286 = vpop.f32.mrb[0].mxu0
        %2287 = vmatprep.mubr.bf16.mxu0 0
        %2288 = vmatmul.mubr.bf16.gmra.mrb[0].mxu0 %v2046
        %v2289 = vpop.f32.mrb[0].mxu0
        %v2290 = vadd.f32 0.0, %v2289
        %v2291 = vpop.f32.mrb[0].mxu0
        %v2292 = vpop.f32.mrb[0].mxu0
        %v2293 = vadd.f32 0.0, %v2292
        %v2294 = vpop.f32.mrb[0].mxu0
        %2295 = vmatprep.mubr.bf16.mxu0 0
        %2296 = vmatmul.mubr.bf16.gmra.mrb[0].mxu0 %v2047
        %v2297 = vpop.f32.mrb[0].mxu0
        %v2298 = vadd.f32 0.0, %v2297
        %v2299 = vpop.f32.mrb[0].mxu0
        %v2300 = vpop.f32.mrb[0].mxu0
        %v2301 = vadd.f32 0.0, %v2300
        %v2302 = vpop.f32.mrb[0].mxu0
        %2303 = vmatprep.mubr.bf16.mxu0 0
        %2304 = vmatmul.mubr.bf16.gmra.mrb[0].mxu0 %v2048
        %v2305 = vpop.f32.mrb[0].mxu0
        %v2306 = vadd.f32 0.0, %v2305
        %v2307 = vpop.f32.mrb[0].mxu0
        %v2308 = vpop.f32.mrb[0].mxu0
        %v2309 = vadd.f32 0.0, %v2308
        %v2310 = vpop.f32.mrb[0].mxu0
        %2311 = vmatprep.mubr.bf16.mxu0 0
        %2312 = vmatmul.mubr.bf16.gmra.mrb[0].mxu0 %v2049
        %v2313 = vpop.f32.mrb[0].mxu0
        %v2314 = vadd.f32 0.0, %v2313
        %v2315 = vpop.f32.mrb[0].mxu0
        %v2316 = vpop.f32.mrb[0].mxu0
        %v2317 = vadd.f32 0.0, %v2316
        %v2318 = vpop.f32.mrb[0].mxu0
        %2319 = vmatprep.mubr.bf16.mxu0 0
        %2320 = vmatmul.mubr.bf16.gmra.mrb[0].mxu0 %v2050
        %v2321 = vpop.f32.mrb[0].mxu0
        %v2322 = vadd.f32 0.0, %v2321
        %v2323 = vpop.f32.mrb[0].mxu0
        %v2324 = vpop.f32.mrb[0].mxu0
        %v2325 = vadd.f32 0.0, %v2324
        %v2326 = vpop.f32.mrb[0].mxu0
        %2327 = vmatprep.mubr.bf16.mxu0 0
        %2328 = vmatmul.mubr.bf16.gmra.mrb[0].mxu0 %v2051
        %v2329 = vpop.f32.mrb[0].mxu0
        %v2330 = vadd.f32 0.0, %v2329
        %v2331 = vpop.f32.mrb[0].mxu0
        %v2332 = vpop.f32.mrb[0].mxu0
        %v2333 = vadd.f32 0.0, %v2332
        %v2334 = vpop.f32.mrb[0].mxu0
        %2335 = vmatprep.mubr.bf16.mxu0 0
        %2336 = vmatmul.mubr.bf16.gmra.mrb[0].mxu0 %v2052
        %v2337 = vpop.f32.mrb[0].mxu0
        %v2338 = vadd.f32 0.0, %v2337
        %v2339 = vpop.f32.mrb[0].mxu0
        %v2340 = vpop.f32.mrb[0].mxu0
        %v2341 = vadd.f32 0.0, %v2340
        %v2342 = vpop.f32.mrb[0].mxu0
        %2343 = vmatprep.mubr.bf16.mxu0 0
        %2344 = vmatmul.mubr.bf16.gmra.mrb[0].mxu0 %v2053
        %v2345 = vpop.f32.mrb[0].mxu0
        %v2346 = vadd.f32 0.0, %v2345
        %v2347 = vpop.f32.mrb[0].mxu0
        %v2348 = vpop.f32.mrb[0].mxu0
        %v2349 = vadd.f32 0.0, %v2348
        %v2350 = vpop.f32.mrb[0].mxu0
        %2351 = vmatprep.mubr.bf16.mxu0 0
        %2352 = vmatmul.mubr.bf16.gmra.mrb[0].mxu0 %v2054
        %v2353 = vpop.f32.mrb[0].mxu0
        %v2354 = vadd.f32 0.0, %v2353
        %v2355 = vpop.f32.mrb[0].mxu0
        %v2356 = vpop.f32.mrb[0].mxu0
        %v2357 = vadd.f32 0.0, %v2356
        %v2358 = vpop.f32.mrb[0].mxu0
        %2359 = vmatprep.mubr.bf16.mxu0 0
        %2360 = vmatmul.mubr.bf16.gmra.mrb[0].mxu0 %v2055
        %v2361 = vpop.f32.mrb[0].mxu0
        %v2362 = vadd.f32 0.0, %v2361
        %v2363 = vpop.f32.mrb[0].mxu0
        %v2364 = vpop.f32.mrb[0].mxu0
        %v2365 = vadd.f32 0.0, %v2364
        %v2366 = vpop.f32.mrb[0].mxu0
        %2367 = vmatprep.mubr.bf16.mxu0 0
        %2368 = vmatmul.mubr.bf16.gmra.mrb[0].mxu0 %v2056
        %v2369 = vpop.f32.mrb[0].mxu0
        %v2370 = vadd.f32 0.0, %v2369
        %v2371 = vpop.f32.mrb[0].mxu0
        %v2372 = vpop.f32.mrb[0].mxu0
        %v2373 = vadd.f32 0.0, %v2372
        %v2374 = vpop.f32.mrb[0].mxu0
        %2375 = vmatprep.mubr.bf16.mxu0 0
        %2376 = vmatmul.mubr.bf16.gmra.mrb[0].mxu0 %v2057
        %v2377 = vpop.f32.mrb[0].mxu0
        %v2378 = vadd.f32 0.0, %v2377
        %v2379 = vpop.f32.mrb[0].mxu0
        %v2380 = vpop.f32.mrb[0].mxu0
        %v2381 = vadd.f32 0.0, %v2380
        %v2382 = vpop.f32.mrb[0].mxu0
        %2383 = vmatprep.mubr.bf16.mxu0 0
        %2384 = vmatmul.mubr.bf16.gmra.mrb[0].mxu0 %v2058
        %v2385 = vpop.f32.mrb[0].mxu0
        %v2386 = vadd.f32 0.0, %v2385
        %v2387 = vpop.f32.mrb[0].mxu0
        %v2388 = vpop.f32.mrb[0].mxu0
        %v2389 = vadd.f32 0.0, %v2388
        %v2390 = vpop.f32.mrb[0].mxu0
        %2391 = vmatprep.mubr.bf16.mxu0 0
        %2392 = vmatmul.mubr.bf16.gmra.mrb[0].mxu0 %v2059
        %v2393 = vpop.f32.mrb[0].mxu0
        %v2394 = vadd.f32 0.0, %v2393
        %v2395 = vpop.f32.mrb[0].mxu0
        %v2396 = vpop.f32.mrb[0].mxu0
        %v2397 = vadd.f32 0.0, %v2396
        %v2398 = vpop.f32.mrb[0].mxu0
        %2399 = vmatprep.mubr.bf16.mxu0 0
        %2400 = vmatmul.mubr.bf16.gmra.mrb[0].mxu0 %v2060
        %v2401 = vpop.f32.mrb[0].mxu0
        %v2402 = vadd.f32 0.0, %v2401
        %v2403 = vpop.f32.mrb[0].mxu0
        %v2404 = vpop.f32.mrb[0].mxu0
        %v2405 = vadd.f32 0.0, %v2404
        %v2406 = vpop.f32.mrb[0].mxu0
        %2407 = vmatprep.mubr.bf16.mxu0 0
        %2408 = vmatmul.mubr.bf16.gmra.mrb[0].mxu0 %v2061
        %v2409 = vpop.f32.mrb[0].mxu0
        %v2410 = vadd.f32 0.0, %v2409
        %v2411 = vpop.f32.mrb[0].mxu0
        %v2412 = vpop.f32.mrb[0].mxu0
        %v2413 = vadd.f32 0.0, %v2412
        %v2414 = vpop.f32.mrb[0].mxu0
        %2415 = vdwg.mxu0
        %v2416 = vld [vmem:[#allocation3] sm:$0xff]
        %v2417 = vld [vmem:[#allocation3 + $0x8] sm:$0xff]
        %v2418 = vld [vmem:[#allocation3 + $0x10] sm:$0xff]
        %v2419 = vld [vmem:[#allocation3 + $0x18] sm:$0xff]
        %v2420 = vld [vmem:[#allocation3 + $0x20] sm:$0xff]
        %v2421 = vld [vmem:[#allocation3 + $0x28] sm:$0xff]
        %v2422 = vld [vmem:[#allocation3 + $0x30] sm:$0xff]
        %v2423 = vld [vmem:[#allocation3 + $0x38] sm:$0xff]
        %v2424 = vld [vmem:[#allocation3 + $0x40] sm:$0xff]
        %v2425 = vld [vmem:[#allocation3 + $0x48] sm:$0xff]
        %v2426 = vld [vmem:[#allocation3 + $0x50] sm:$0xff]
        %v2427 = vld [vmem:[#allocation3 + $0x58] sm:$0xff]
        %v2428 = vld [vmem:[#allocation3 + $0x60] sm:$0xff]
        %v2429 = vld [vmem:[#allocation3 + $0x68] sm:$0xff]
        %v2430 = vld [vmem:[#allocation3 + $0x70] sm:$0xff]
        %v2431 = vld [vmem:[#allocation3 + $0x78] sm:$0xff]
        %v2432 = vld [vmem:[#allocation3 + $0x80] sm:$0xff]
        %v2433 = vld [vmem:[#allocation3 + $0x88] sm:$0xff]
        %v2434 = vld [vmem:[#allocation3 + $0x90] sm:$0xff]
        %v2435 = vld [vmem:[#allocation3 + $0x98] sm:$0xff]
        %v2436 = vld [vmem:[#allocation3 + $0xa0] sm:$0xff]
        %v2437 = vld [vmem:[#allocation3 + $0xa8] sm:$0xff]
        %v2438 = vld [vmem:[#allocation3 + $0xb0] sm:$0xff]
        %v2439 = vld [vmem:[#allocation3 + $0xb8] sm:$0xff]
        %v2440 = vld [vmem:[#allocation3 + $0xc0] sm:$0xff]
        %v2441 = vld [vmem:[#allocation3 + $0xc8] sm:$0xff]
        %v2442 = vld [vmem:[#allocation3 + $0xd0] sm:$0xff]
        %v2443 = vld [vmem:[#allocation3 + $0xd8] sm:$0xff]
        %v2444 = vld [vmem:[#allocation3 + $0xe0] sm:$0xff]
        %v2445 = vld [vmem:[#allocation3 + $0xe8] sm:$0xff]
        %v2446 = vld [vmem:[#allocation3 + $0xf0] sm:$0xff]
        %v2447 = vld [vmem:[#allocation3 + $0xf8] sm:$0xff]
        %v2448 = vld [vmem:[#allocation3 + $0x100] sm:$0xff]
        %v2449 = vld [vmem:[#allocation3 + $0x108] sm:$0xff]
        %v2450 = vld [vmem:[#allocation3 + $0x110] sm:$0xff]
        %v2451 = vld [vmem:[#allocation3 + $0x118] sm:$0xff]
        %v2452 = vld [vmem:[#allocation3 + $0x120] sm:$0xff]
        %v2453 = vld [vmem:[#allocation3 + $0x128] sm:$0xff]
        %v2454 = vld [vmem:[#allocation3 + $0x130] sm:$0xff]
        %v2455 = vld [vmem:[#allocation3 + $0x138] sm:$0xff]
        %v2456 = vld [vmem:[#allocation3 + $0x140] sm:$0xff]
        %v2457 = vld [vmem:[#allocation3 + $0x148] sm:$0xff]
        %v2458 = vld [vmem:[#allocation3 + $0x150] sm:$0xff]
        %v2459 = vld [vmem:[#allocation3 + $0x158] sm:$0xff]
        %v2460 = vld [vmem:[#allocation3 + $0x160] sm:$0xff]
        %v2461 = vld [vmem:[#allocation3 + $0x168] sm:$0xff]
        %v2462 = vld [vmem:[#allocation3 + $0x170] sm:$0xff]
        %v2463 = vld [vmem:[#allocation3 + $0x178] sm:$0xff]
        %v2464 = vld [vmem:[#allocation3 + $0x180] sm:$0xff]
        %v2465 = vld [vmem:[#allocation3 + $0x188] sm:$0xff]
        %v2466 = vld [vmem:[#allocation3 + $0x190] sm:$0xff]
        %v2467 = vld [vmem:[#allocation3 + $0x198] sm:$0xff]
        %v2468 = vld [vmem:[#allocation3 + $0x1a0] sm:$0xff]
        %v2469 = vld [vmem:[#allocation3 + $0x1a8] sm:$0xff]
        %v2470 = vld [vmem:[#allocation3 + $0x1b0] sm:$0xff]
        %v2471 = vld [vmem:[#allocation3 + $0x1b8] sm:$0xff]
        %v2472 = vld [vmem:[#allocation3 + $0x1c0] sm:$0xff]
        %v2473 = vld [vmem:[#allocation3 + $0x1c8] sm:$0xff]
        %v2474 = vld [vmem:[#allocation3 + $0x1d0] sm:$0xff]
        %v2475 = vld [vmem:[#allocation3 + $0x1d8] sm:$0xff]
        %v2476 = vld [vmem:[#allocation3 + $0x1e0] sm:$0xff]
        %v2477 = vld [vmem:[#allocation3 + $0x1e8] sm:$0xff]
        %v2478 = vld [vmem:[#allocation3 + $0x1f0] sm:$0xff]
        %v2479 = vld [vmem:[#allocation3 + $0x1f8] sm:$0xff]
        %v2480 = vadd.f32 %v2416, %v2162
        %v2481 = vadd.f32 %v2417, %v2165
        %v2482 = vadd.f32 %v2418, %v2170
        %v2483 = vadd.f32 %v2419, %v2173
        %v2484 = vadd.f32 %v2420, %v2178
        %v2485 = vadd.f32 %v2421, %v2181
        %v2486 = vadd.f32 %v2422, %v2186
        %v2487 = vadd.f32 %v2423, %v2189
        %v2488 = vadd.f32 %v2424, %v2194
        %v2489 = vadd.f32 %v2425, %v2197
        %v2490 = vadd.f32 %v2426, %v2202
        %v2491 = vadd.f32 %v2427, %v2205
        %v2492 = vadd.f32 %v2428, %v2210
        %v2493 = vadd.f32 %v2429, %v2213
        %v2494 = vadd.f32 %v2430, %v2218
        %v2495 = vadd.f32 %v2431, %v2221
        %v2496 = vadd.f32 %v2432, %v2226
        %v2497 = vadd.f32 %v2433, %v2229
        %v2498 = vadd.f32 %v2434, %v2234
        %v2499 = vadd.f32 %v2435, %v2237
        %v2500 = vadd.f32 %v2436, %v2242
        %v2501 = vadd.f32 %v2437, %v2245
        %v2502 = vadd.f32 %v2438, %v2250
        %v2503 = vadd.f32 %v2439, %v2253
        %v2504 = vadd.f32 %v2440, %v2258
        %v2505 = vadd.f32 %v2441, %v2261
        %v2506 = vadd.f32 %v2442, %v2266
        %v2507 = vadd.f32 %v2443, %v2269
        %v2508 = vadd.f32 %v2444, %v2274
        %v2509 = vadd.f32 %v2445, %v2277
        %v2510 = vadd.f32 %v2446, %v2282
        %v2511 = vadd.f32 %v2447, %v2285
        %v2512 = vadd.f32 %v2448, %v2290
        %v2513 = vadd.f32 %v2449, %v2293
        %v2514 = vadd.f32 %v2450, %v2298
        %v2515 = vadd.f32 %v2451, %v2301
        %v2516 = vadd.f32 %v2452, %v2306
        %v2517 = vadd.f32 %v2453, %v2309
        %v2518 = vadd.f32 %v2454, %v2314
        %v2519 = vadd.f32 %v2455, %v2317
        %v2520 = vadd.f32 %v2456, %v2322
        %v2521 = vadd.f32 %v2457, %v2325
        %v2522 = vadd.f32 %v2458, %v2330
        %v2523 = vadd.f32 %v2459, %v2333
        %v2524 = vadd.f32 %v2460, %v2338
        %v2525 = vadd.f32 %v2461, %v2341
        %v2526 = vadd.f32 %v2462, %v2346
        %v2527 = vadd.f32 %v2463, %v2349
        %v2528 = vadd.f32 %v2464, %v2354
        %v2529 = vadd.f32 %v2465, %v2357
        %v2530 = vadd.f32 %v2466, %v2362
        %v2531 = vadd.f32 %v2467, %v2365
        %v2532 = vadd.f32 %v2468, %v2370
        %v2533 = vadd.f32 %v2469, %v2373
        %v2534 = vadd.f32 %v2470, %v2378
        %v2535 = vadd.f32 %v2471, %v2381
        %v2536 = vadd.f32 %v2472, %v2386
        %v2537 = vadd.f32 %v2473, %v2389
        %v2538 = vadd.f32 %v2474, %v2394
        %v2539 = vadd.f32 %v2475, %v2397
        %v2540 = vadd.f32 %v2476, %v2402
        %v2541 = vadd.f32 %v2477, %v2405
        %v2542 = vadd.f32 %v2478, %v2410
        %v2543 = vadd.f32 %v2479, %v2413
        %2544 = vst [vmem:[#allocation3] sm:$0xff] %v2480
        %2545 = vst [vmem:[#allocation3 + $0x8] sm:$0xff] %v2481
        %2546 = vst [vmem:[#allocation3 + $0x10] sm:$0xff] %v2482
        %2547 = vst [vmem:[#allocation3 + $0x18] sm:$0xff] %v2483
        %2548 = vst [vmem:[#allocation3 + $0x20] sm:$0xff] %v2484
        %2549 = vst [vmem:[#allocation3 + $0x28] sm:$0xff] %v2485
        %2550 = vst [vmem:[#allocation3 + $0x30] sm:$0xff] %v2486
        %2551 = vst [vmem:[#allocation3 + $0x38] sm:$0xff] %v2487
        %2552 = vst [vmem:[#allocation3 + $0x40] sm:$0xff] %v2488
        %2553 = vst [vmem:[#allocation3 + $0x48] sm:$0xff] %v2489
        %2554 = vst [vmem:[#allocation3 + $0x50] sm:$0xff] %v2490
        %2555 = vst [vmem:[#allocation3 + $0x58] sm:$0xff] %v2491
        %2556 = vst [vmem:[#allocation3 + $0x60] sm:$0xff] %v2492
        %2557 = vst [vmem:[#allocation3 + $0x68] sm:$0xff] %v2493
        %2558 = vst [vmem:[#allocation3 + $0x70] sm:$0xff] %v2494
        %2559 = vst [vmem:[#allocation3 + $0x78] sm:$0xff] %v2495
        %2560 = vst [vmem:[#allocation3 + $0x80] sm:$0xff] %v2496
        %2561 = vst [vmem:[#allocation3 + $0x88] sm:$0xff] %v2497
        %2562 = vst [vmem:[#allocation3 + $0x90] sm:$0xff] %v2498
        %2563 = vst [vmem:[#allocation3 + $0x98] sm:$0xff] %v2499
        %2564 = vst [vmem:[#allocation3 + $0xa0] sm:$0xff] %v2500
        %2565 = vst [vmem:[#allocation3 + $0xa8] sm:$0xff] %v2501
        %2566 = vst [vmem:[#allocation3 + $0xb0] sm:$0xff] %v2502
        %2567 = vst [vmem:[#allocation3 + $0xb8] sm:$0xff] %v2503
        %2568 = vst [vmem:[#allocation3 + $0xc0] sm:$0xff] %v2504
        %2569 = vst [vmem:[#allocation3 + $0xc8] sm:$0xff] %v2505
        %2570 = vst [vmem:[#allocation3 + $0xd0] sm:$0xff] %v2506
        %2571 = vst [vmem:[#allocation3 + $0xd8] sm:$0xff] %v2507
        %2572 = vst [vmem:[#allocation3 + $0xe0] sm:$0xff] %v2508
        %2573 = vst [vmem:[#allocation3 + $0xe8] sm:$0xff] %v2509
        %2574 = vst [vmem:[#allocation3 + $0xf0] sm:$0xff] %v2510
        %2575 = vst [vmem:[#allocation3 + $0xf8] sm:$0xff] %v2511
        %2576 = vst [vmem:[#allocation3 + $0x100] sm:$0xff] %v2512
        %2577 = vst [vmem:[#allocation3 + $0x108] sm:$0xff] %v2513
        %2578 = vst [vmem:[#allocation3 + $0x110] sm:$0xff] %v2514
        %2579 = vst [vmem:[#allocation3 + $0x118] sm:$0xff] %v2515
        %2580 = vst [vmem:[#allocation3 + $0x120] sm:$0xff] %v2516
        %2581 = vst [vmem:[#allocation3 + $0x128] sm:$0xff] %v2517
        %2582 = vst [vmem:[#allocation3 + $0x130] sm:$0xff] %v2518
        %2583 = vst [vmem:[#allocation3 + $0x138] sm:$0xff] %v2519
        %2584 = vst [vmem:[#allocation3 + $0x140] sm:$0xff] %v2520
        %2585 = vst [vmem:[#allocation3 + $0x148] sm:$0xff] %v2521
        %2586 = vst [vmem:[#allocation3 + $0x150] sm:$0xff] %v2522
        %2587 = vst [vmem:[#allocation3 + $0x158] sm:$0xff] %v2523
        %2588 = vst [vmem:[#allocation3 + $0x160] sm:$0xff] %v2524
        %2589 = vst [vmem:[#allocation3 + $0x168] sm:$0xff] %v2525
        %2590 = vst [vmem:[#allocation3 + $0x170] sm:$0xff] %v2526
        %2591 = vst [vmem:[#allocation3 + $0x178] sm:$0xff] %v2527
        %2592 = vst [vmem:[#allocation3 + $0x180] sm:$0xff] %v2528
        %2593 = vst [vmem:[#allocation3 + $0x188] sm:$0xff] %v2529
        %2594 = vst [vmem:[#allocation3 + $0x190] sm:$0xff] %v2530
        %2595 = vst [vmem:[#allocation3 + $0x198] sm:$0xff] %v2531
        %2596 = vst [vmem:[#allocation3 + $0x1a0] sm:$0xff] %v2532
        %2597 = vst [vmem:[#allocation3 + $0x1a8] sm:$0xff] %v2533
        %2598 = vst [vmem:[#allocation3 + $0x1b0] sm:$0xff] %v2534
        %2599 = vst [vmem:[#allocation3 + $0x1b8] sm:$0xff] %v2535
        %2600 = vst [vmem:[#allocation3 + $0x1c0] sm:$0xff] %v2536
        %2601 = vst [vmem:[#allocation3 + $0x1c8] sm:$0xff] %v2537
        %2602 = vst [vmem:[#allocation3 + $0x1d0] sm:$0xff] %v2538
        %2603 = vst [vmem:[#allocation3 + $0x1d8] sm:$0xff] %v2539
        %2604 = vst [vmem:[#allocation3 + $0x1e0] sm:$0xff] %v2540
        %2605 = vst [vmem:[#allocation3 + $0x1e8] sm:$0xff] %v2541
        %2606 = vst [vmem:[#allocation3 + $0x1f0] sm:$0xff] %v2542
        %2607 = vst [vmem:[#allocation3 + $0x1f8] sm:$0xff] %v2543
        %s2608 = scalar_lea.vmem [#allocation2], 32
        %v2609 = vld [vmem:[%s2608] sm:$0xff]
        %v2610 = vld [vmem:[%s2608 + $0x8] sm:$0xff]
        %v2611 = vld [vmem:[%s2608 + $0x10] sm:$0xff]
        %v2612 = vld [vmem:[%s2608 + $0x18] sm:$0xff]
        %v2613 = vld [vmem:[%s2608 + $0x20] sm:$0xff]
        %v2614 = vld [vmem:[%s2608 + $0x28] sm:$0xff]
        %v2615 = vld [vmem:[%s2608 + $0x30] sm:$0xff]
        %v2616 = vld [vmem:[%s2608 + $0x38] sm:$0xff]
        %v2617 = vld [vmem:[%s2608 + $0x40] sm:$0xff]
        %v2618 = vld [vmem:[%s2608 + $0x48] sm:$0xff]
        %v2619 = vld [vmem:[%s2608 + $0x50] sm:$0xff]
        %v2620 = vld [vmem:[%s2608 + $0x58] sm:$0xff]
        %v2621 = vld [vmem:[%s2608 + $0x60] sm:$0xff]
        %v2622 = vld [vmem:[%s2608 + $0x68] sm:$0xff]
        %v2623 = vld [vmem:[%s2608 + $0x70] sm:$0xff]
        %v2624 = vld [vmem:[%s2608 + $0x78] sm:$0xff]
        %v2625 = vld [vmem:[%s2608 + $0x80] sm:$0xff]
        %v2626 = vld [vmem:[%s2608 + $0x88] sm:$0xff]
        %v2627 = vld [vmem:[%s2608 + $0x90] sm:$0xff]
        %v2628 = vld [vmem:[%s2608 + $0x98] sm:$0xff]
        %v2629 = vld [vmem:[%s2608 + $0xa0] sm:$0xff]
        %v2630 = vld [vmem:[%s2608 + $0xa8] sm:$0xff]
        %v2631 = vld [vmem:[%s2608 + $0xb0] sm:$0xff]
        %v2632 = vld [vmem:[%s2608 + $0xb8] sm:$0xff]
        %v2633 = vld [vmem:[%s2608 + $0xc0] sm:$0xff]
        %v2634 = vld [vmem:[%s2608 + $0xc8] sm:$0xff]
        %v2635 = vld [vmem:[%s2608 + $0xd0] sm:$0xff]
        %v2636 = vld [vmem:[%s2608 + $0xd8] sm:$0xff]
        %v2637 = vld [vmem:[%s2608 + $0xe0] sm:$0xff]
        %v2638 = vld [vmem:[%s2608 + $0xe8] sm:$0xff]
        %v2639 = vld [vmem:[%s2608 + $0xf0] sm:$0xff]
        %v2640 = vld [vmem:[%s2608 + $0xf8] sm:$0xff]
        %v2641 = vld [vmem:[%s2608 + $0x100] sm:$0xff]
        %v2642 = vld [vmem:[%s2608 + $0x108] sm:$0xff]
        %v2643 = vld [vmem:[%s2608 + $0x110] sm:$0xff]
        %v2644 = vld [vmem:[%s2608 + $0x118] sm:$0xff]
        %v2645 = vld [vmem:[%s2608 + $0x120] sm:$0xff]
        %v2646 = vld [vmem:[%s2608 + $0x128] sm:$0xff]
        %v2647 = vld [vmem:[%s2608 + $0x130] sm:$0xff]
        %v2648 = vld [vmem:[%s2608 + $0x138] sm:$0xff]
        %v2649 = vld [vmem:[%s2608 + $0x140] sm:$0xff]
        %v2650 = vld [vmem:[%s2608 + $0x148] sm:$0xff]
        %v2651 = vld [vmem:[%s2608 + $0x150] sm:$0xff]
        %v2652 = vld [vmem:[%s2608 + $0x158] sm:$0xff]
        %v2653 = vld [vmem:[%s2608 + $0x160] sm:$0xff]
        %v2654 = vld [vmem:[%s2608 + $0x168] sm:$0xff]
        %v2655 = vld [vmem:[%s2608 + $0x170] sm:$0xff]
        %v2656 = vld [vmem:[%s2608 + $0x178] sm:$0xff]
        %v2657 = vld [vmem:[%s2608 + $0x180] sm:$0xff]
        %v2658 = vld [vmem:[%s2608 + $0x188] sm:$0xff]
        %v2659 = vld [vmem:[%s2608 + $0x190] sm:$0xff]
        %v2660 = vld [vmem:[%s2608 + $0x198] sm:$0xff]
        %v2661 = vld [vmem:[%s2608 + $0x1a0] sm:$0xff]
        %v2662 = vld [vmem:[%s2608 + $0x1a8] sm:$0xff]
        %v2663 = vld [vmem:[%s2608 + $0x1b0] sm:$0xff]
        %v2664 = vld [vmem:[%s2608 + $0x1b8] sm:$0xff]
        %v2665 = vld [vmem:[%s2608 + $0x1c0] sm:$0xff]
        %v2666 = vld [vmem:[%s2608 + $0x1c8] sm:$0xff]
        %v2667 = vld [vmem:[%s2608 + $0x1d0] sm:$0xff]
        %v2668 = vld [vmem:[%s2608 + $0x1d8] sm:$0xff]
        %v2669 = vld [vmem:[%s2608 + $0x1e0] sm:$0xff]
        %v2670 = vld [vmem:[%s2608 + $0x1e8] sm:$0xff]
        %v2671 = vld [vmem:[%s2608 + $0x1f0] sm:$0xff]
        %v2672 = vld [vmem:[%s2608 + $0x1f8] sm:$0xff]
        %v2673 = vld [vmem:[%s2608 + $0x240] sm:$0xff]
        %v2674 = vld [vmem:[%s2608 + $0x248] sm:$0xff]
        %v2675 = vld [vmem:[%s2608 + $0x250] sm:$0xff]
        %v2676 = vld [vmem:[%s2608 + $0x258] sm:$0xff]
        %v2677 = vld [vmem:[%s2608 + $0x260] sm:$0xff]
        %v2678 = vld [vmem:[%s2608 + $0x268] sm:$0xff]
        %v2679 = vld [vmem:[%s2608 + $0x270] sm:$0xff]
        %v2680 = vld [vmem:[%s2608 + $0x278] sm:$0xff]
        %v2681 = vld [vmem:[%s2608 + $0x280] sm:$0xff]
        %v2682 = vld [vmem:[%s2608 + $0x288] sm:$0xff]
        %v2683 = vld [vmem:[%s2608 + $0x290] sm:$0xff]
        %v2684 = vld [vmem:[%s2608 + $0x298] sm:$0xff]
        %v2685 = vld [vmem:[%s2608 + $0x2a0] sm:$0xff]
        %v2686 = vld [vmem:[%s2608 + $0x2a8] sm:$0xff]
        %v2687 = vld [vmem:[%s2608 + $0x2b0] sm:$0xff]
        %v2688 = vld [vmem:[%s2608 + $0x2b8] sm:$0xff]
        %v2689 = vld [vmem:[%s2608 + $0x2c0] sm:$0xff]
        %v2690 = vld [vmem:[%s2608 + $0x2c8] sm:$0xff]
        %v2691 = vld [vmem:[%s2608 + $0x2d0] sm:$0xff]
        %v2692 = vld [vmem:[%s2608 + $0x2d8] sm:$0xff]
        %v2693 = vld [vmem:[%s2608 + $0x2e0] sm:$0xff]
        %v2694 = vld [vmem:[%s2608 + $0x2e8] sm:$0xff]
        %v2695 = vld [vmem:[%s2608 + $0x2f0] sm:$0xff]
        %v2696 = vld [vmem:[%s2608 + $0x2f8] sm:$0xff]
        %v2697 = vld [vmem:[%s2608 + $0x300] sm:$0xff]
        %v2698 = vld [vmem:[%s2608 + $0x308] sm:$0xff]
        %v2699 = vld [vmem:[%s2608 + $0x310] sm:$0xff]
        %v2700 = vld [vmem:[%s2608 + $0x318] sm:$0xff]
        %v2701 = vld [vmem:[%s2608 + $0x320] sm:$0xff]
        %v2702 = vld [vmem:[%s2608 + $0x328] sm:$0xff]
        %v2703 = vld [vmem:[%s2608 + $0x330] sm:$0xff]
        %v2704 = vld [vmem:[%s2608 + $0x338] sm:$0xff]
        %v2705 = vld [vmem:[%s2608 + $0x340] sm:$0xff]
        %v2706 = vld [vmem:[%s2608 + $0x348] sm:$0xff]
        %v2707 = vld [vmem:[%s2608 + $0x350] sm:$0xff]
        %v2708 = vld [vmem:[%s2608 + $0x358] sm:$0xff]
        %v2709 = vld [vmem:[%s2608 + $0x360] sm:$0xff]
        %v2710 = vld [vmem:[%s2608 + $0x368] sm:$0xff]
        %v2711 = vld [vmem:[%s2608 + $0x370] sm:$0xff]
        %v2712 = vld [vmem:[%s2608 + $0x378] sm:$0xff]
        %v2713 = vld [vmem:[%s2608 + $0x380] sm:$0xff]
        %v2714 = vld [vmem:[%s2608 + $0x388] sm:$0xff]
        %v2715 = vld [vmem:[%s2608 + $0x390] sm:$0xff]
        %v2716 = vld [vmem:[%s2608 + $0x398] sm:$0xff]
        %v2717 = vld [vmem:[%s2608 + $0x3a0] sm:$0xff]
        %v2718 = vld [vmem:[%s2608 + $0x3a8] sm:$0xff]
        %v2719 = vld [vmem:[%s2608 + $0x3b0] sm:$0xff]
        %v2720 = vld [vmem:[%s2608 + $0x3b8] sm:$0xff]
        %v2721 = vld [vmem:[%s2608 + $0x3c0] sm:$0xff]
        %v2722 = vld [vmem:[%s2608 + $0x3c8] sm:$0xff]
        %v2723 = vld [vmem:[%s2608 + $0x3d0] sm:$0xff]
        %v2724 = vld [vmem:[%s2608 + $0x3d8] sm:$0xff]
        %v2725 = vld [vmem:[%s2608 + $0x3e0] sm:$0xff]
        %v2726 = vld [vmem:[%s2608 + $0x3e8] sm:$0xff]
        %v2727 = vld [vmem:[%s2608 + $0x3f0] sm:$0xff]
        %v2728 = vld [vmem:[%s2608 + $0x3f8] sm:$0xff]
        %v2729 = vld [vmem:[%s2608 + $0x400] sm:$0xff]
        %v2730 = vld [vmem:[%s2608 + $0x408] sm:$0xff]
        %v2731 = vld [vmem:[%s2608 + $0x410] sm:$0xff]
        %v2732 = vld [vmem:[%s2608 + $0x418] sm:$0xff]
        %v2733 = vld [vmem:[%s2608 + $0x420] sm:$0xff]
        %v2734 = vld [vmem:[%s2608 + $0x428] sm:$0xff]
        %v2735 = vld [vmem:[%s2608 + $0x430] sm:$0xff]
        %v2736 = vld [vmem:[%s2608 + $0x438] sm:$0xff]
        %v2737 = vrot.slane %v2609, 7
        %v2738 = vrot.slane %v2613, 7
        %v2739 = vrot.slane %v2617, 7
        %v2740 = vrot.slane %v2621, 7
        %v2741 = vrot.slane %v2625, 7
        %v2742 = vrot.slane %v2629, 7
        %v2743 = vrot.slane %v2633, 7
        %v2744 = vrot.slane %v2637, 7
        %v2745 = vrot.slane %v2641, 7
        %v2746 = vrot.slane %v2645, 7
        %v2747 = vrot.slane %v2649, 7
        %v2748 = vrot.slane %v2653, 7
        %v2749 = vrot.slane %v2657, 7
        %v2750 = vrot.slane %v2661, 7
        %v2751 = vrot.slane %v2665, 7
        %v2752 = vrot.slane %v2669, 7
        %v2753 = vrot.slane %v2673, 7
        %v2754 = vrot.slane %v2677, 7
        %v2755 = vrot.slane %v2681, 7
        %v2756 = vrot.slane %v2685, 7
        %v2757 = vrot.slane %v2689, 7
        %v2758 = vrot.slane %v2693, 7
        %v2759 = vrot.slane %v2697, 7
        %v2760 = vrot.slane %v2701, 7
        %v2761 = vrot.slane %v2705, 7
        %v2762 = vrot.slane %v2709, 7
        %v2763 = vrot.slane %v2713, 7
        %v2764 = vrot.slane %v2717, 7
        %v2765 = vrot.slane %v2721, 7
        %v2766 = vrot.slane %v2725, 7
        %v2767 = vrot.slane %v2729, 7
        %v2768 = vrot.slane %v2733, 7
        %v2769 = vrot.slane %v2610, 7
        %v2770 = vrot.slane %v2614, 7
        %v2771 = vrot.slane %v2618, 7
        %v2772 = vrot.slane %v2622, 7
        %v2773 = vrot.slane %v2626, 7
        %v2774 = vrot.slane %v2630, 7
        %v2775 = vrot.slane %v2634, 7
        %v2776 = vrot.slane %v2638, 7
        %v2777 = vrot.slane %v2642, 7
        %v2778 = vrot.slane %v2646, 7
        %v2779 = vrot.slane %v2650, 7
        %v2780 = vrot.slane %v2654, 7
        %v2781 = vrot.slane %v2658, 7
        %v2782 = vrot.slane %v2662, 7
        %v2783 = vrot.slane %v2666, 7
        %v2784 = vrot.slane %v2670, 7
        %v2785 = vrot.slane %v2674, 7
        %v2786 = vrot.slane %v2678, 7
        %v2787 = vrot.slane %v2682, 7
        %v2788 = vrot.slane %v2686, 7
        %v2789 = vrot.slane %v2690, 7
        %v2790 = vrot.slane %v2694, 7
        %v2791 = vrot.slane %v2698, 7
        %v2792 = vrot.slane %v2702, 7
        %v2793 = vrot.slane %v2706, 7
        %v2794 = vrot.slane %v2710, 7
        %v2795 = vrot.slane %v2714, 7
        %v2796 = vrot.slane %v2718, 7
        %v2797 = vrot.slane %v2722, 7
        %v2798 = vrot.slane %v2726, 7
        %v2799 = vrot.slane %v2730, 7
        %v2800 = vrot.slane %v2734, 7
        %v2801 = vrot.slane %v2611, 7
        %v2802 = vrot.slane %v2615, 7
        %v2803 = vrot.slane %v2619, 7
        %v2804 = vrot.slane %v2623, 7
        %v2805 = vrot.slane %v2627, 7
        %v2806 = vrot.slane %v2631, 7
        %v2807 = vrot.slane %v2635, 7
        %v2808 = vrot.slane %v2639, 7
        %v2809 = vrot.slane %v2643, 7
        %v2810 = vrot.slane %v2647, 7
        %v2811 = vrot.slane %v2651, 7
        %v2812 = vrot.slane %v2655, 7
        %v2813 = vrot.slane %v2659, 7
        %v2814 = vrot.slane %v2663, 7
        %v2815 = vrot.slane %v2667, 7
        %v2816 = vrot.slane %v2671, 7
        %v2817 = vrot.slane %v2675, 7
        %v2818 = vrot.slane %v2679, 7
        %v2819 = vrot.slane %v2683, 7
        %v2820 = vrot.slane %v2687, 7
        %v2821 = vrot.slane %v2691, 7
        %v2822 = vrot.slane %v2695, 7
        %v2823 = vrot.slane %v2699, 7
        %v2824 = vrot.slane %v2703, 7
        %v2825 = vrot.slane %v2707, 7
        %v2826 = vrot.slane %v2711, 7
        %v2827 = vrot.slane %v2715, 7
        %v2828 = vrot.slane %v2719, 7
        %v2829 = vrot.slane %v2723, 7
        %v2830 = vrot.slane %v2727, 7
        %v2831 = vrot.slane %v2731, 7
        %v2832 = vrot.slane %v2735, 7
        %v2833 = vsel %vm777, %v2769, %v2801
        %v2834 = vsel %vm777, %v2770, %v2802
        %v2835 = vsel %vm777, %v2771, %v2803
        %v2836 = vsel %vm777, %v2772, %v2804
        %v2837 = vsel %vm777, %v2773, %v2805
        %v2838 = vsel %vm777, %v2774, %v2806
        %v2839 = vsel %vm777, %v2775, %v2807
        %v2840 = vsel %vm777, %v2776, %v2808
        %v2841 = vsel %vm777, %v2777, %v2809
        %v2842 = vsel %vm777, %v2778, %v2810
        %v2843 = vsel %vm777, %v2779, %v2811
        %v2844 = vsel %vm777, %v2780, %v2812
        %v2845 = vsel %vm777, %v2781, %v2813
        %v2846 = vsel %vm777, %v2782, %v2814
        %v2847 = vsel %vm777, %v2783, %v2815
        %v2848 = vsel %vm777, %v2784, %v2816
        %v2849 = vsel %vm777, %v2785, %v2817
        %v2850 = vsel %vm777, %v2786, %v2818
        %v2851 = vsel %vm777, %v2787, %v2819
        %v2852 = vsel %vm777, %v2788, %v2820
        %v2853 = vsel %vm777, %v2789, %v2821
        %v2854 = vsel %vm777, %v2790, %v2822
        %v2855 = vsel %vm777, %v2791, %v2823
        %v2856 = vsel %vm777, %v2792, %v2824
        %v2857 = vsel %vm777, %v2793, %v2825
        %v2858 = vsel %vm777, %v2794, %v2826
        %v2859 = vsel %vm777, %v2795, %v2827
        %v2860 = vsel %vm777, %v2796, %v2828
        %v2861 = vsel %vm777, %v2797, %v2829
        %v2862 = vsel %vm777, %v2798, %v2830
        %v2863 = vsel %vm777, %v2799, %v2831
        %v2864 = vsel %vm777, %v2800, %v2832
        %v2865 = vsel %vm777, %v2737, %v2769
        %v2866 = vsel %vm777, %v2738, %v2770
        %v2867 = vsel %vm777, %v2739, %v2771
        %v2868 = vsel %vm777, %v2740, %v2772
        %v2869 = vsel %vm777, %v2741, %v2773
        %v2870 = vsel %vm777, %v2742, %v2774
        %v2871 = vsel %vm777, %v2743, %v2775
        %v2872 = vsel %vm777, %v2744, %v2776
        %v2873 = vsel %vm777, %v2745, %v2777
        %v2874 = vsel %vm777, %v2746, %v2778
        %v2875 = vsel %vm777, %v2747, %v2779
        %v2876 = vsel %vm777, %v2748, %v2780
        %v2877 = vsel %vm777, %v2749, %v2781
        %v2878 = vsel %vm777, %v2750, %v2782
        %v2879 = vsel %vm777, %v2751, %v2783
        %v2880 = vsel %vm777, %v2752, %v2784
        %v2881 = vsel %vm777, %v2753, %v2785
        %v2882 = vsel %vm777, %v2754, %v2786
        %v2883 = vsel %vm777, %v2755, %v2787
        %v2884 = vsel %vm777, %v2756, %v2788
        %v2885 = vsel %vm777, %v2757, %v2789
        %v2886 = vsel %vm777, %v2758, %v2790
        %v2887 = vsel %vm777, %v2759, %v2791
        %v2888 = vsel %vm777, %v2760, %v2792
        %v2889 = vsel %vm777, %v2761, %v2793
        %v2890 = vsel %vm777, %v2762, %v2794
        %v2891 = vsel %vm777, %v2763, %v2795
        %v2892 = vsel %vm777, %v2764, %v2796
        %v2893 = vsel %vm777, %v2765, %v2797
        %v2894 = vsel %vm777, %v2766, %v2798
        %v2895 = vsel %vm777, %v2767, %v2799
        %v2896 = vsel %vm777, %v2768, %v2800
        %v2897 = vpack.c.bf16 %v2833, %v2865
        %v2898 = vpack.c.bf16 %v2834, %v2866
        %v2899 = vpack.c.bf16 %v2835, %v2867
        %v2900 = vpack.c.bf16 %v2836, %v2868
        %v2901 = vpack.c.bf16 %v2837, %v2869
        %v2902 = vpack.c.bf16 %v2838, %v2870
        %v2903 = vpack.c.bf16 %v2839, %v2871
        %v2904 = vpack.c.bf16 %v2840, %v2872
        %v2905 = vpack.c.bf16 %v2841, %v2873
        %v2906 = vpack.c.bf16 %v2842, %v2874
        %v2907 = vpack.c.bf16 %v2843, %v2875
        %v2908 = vpack.c.bf16 %v2844, %v2876
        %v2909 = vpack.c.bf16 %v2845, %v2877
        %v2910 = vpack.c.bf16 %v2846, %v2878
        %v2911 = vpack.c.bf16 %v2847, %v2879
        %v2912 = vpack.c.bf16 %v2848, %v2880
        %v2913 = vpack.c.bf16 %v2849, %v2881
        %v2914 = vpack.c.bf16 %v2850, %v2882
        %v2915 = vpack.c.bf16 %v2851, %v2883
        %v2916 = vpack.c.bf16 %v2852, %v2884
        %v2917 = vpack.c.bf16 %v2853, %v2885
        %v2918 = vpack.c.bf16 %v2854, %v2886
        %v2919 = vpack.c.bf16 %v2855, %v2887
        %v2920 = vpack.c.bf16 %v2856, %v2888
        %v2921 = vpack.c.bf16 %v2857, %v2889
        %v2922 = vpack.c.bf16 %v2858, %v2890
        %v2923 = vpack.c.bf16 %v2859, %v2891
        %v2924 = vpack.c.bf16 %v2860, %v2892
        %v2925 = vpack.c.bf16 %v2861, %v2893
        %v2926 = vpack.c.bf16 %v2862, %v2894
        %v2927 = vpack.c.bf16 %v2863, %v2895
        %v2928 = vpack.c.bf16 %v2864, %v2896
        %s2929 = scalar_lea.vmem %s232, 192 [#allocation4]
        %v2930 = vld [vmem:[%s2929] sm:$0xf]
        %v2931 = vld [vmem:[%s2929 + $0x4] sm:$0xf]
        %v2932 = vld [vmem:[%s2929 + $0x8] sm:$0xf]
        %v2933 = vld [vmem:[%s2929 + $0xc] sm:$0xf]
        %v2934 = vld [vmem:[%s2929 + $0x10] sm:$0xf]
        %v2935 = vld [vmem:[%s2929 + $0x14] sm:$0xf]
        %v2936 = vld [vmem:[%s2929 + $0x18] sm:$0xf]
        %v2937 = vld [vmem:[%s2929 + $0x1c] sm:$0xf]
        %v2938 = vld [vmem:[%s2929 + $0x20] sm:$0xf]
        %v2939 = vld [vmem:[%s2929 + $0x24] sm:$0xf]
        %v2940 = vld [vmem:[%s2929 + $0x28] sm:$0xf]
        %v2941 = vld [vmem:[%s2929 + $0x2c] sm:$0xf]
        %v2942 = vld [vmem:[%s2929 + $0x30] sm:$0xf]
        %v2943 = vld [vmem:[%s2929 + $0x34] sm:$0xf]
        %v2944 = vld [vmem:[%s2929 + $0x38] sm:$0xf]
        %v2945 = vld [vmem:[%s2929 + $0x3c] sm:$0xf]
        %v2962 = vunpack.c.l.b16 %v2930
        %v2963 = vunpack.c.l.b16 %v2931
        %v2964 = vunpack.c.l.b16 %v2932
        %v2965 = vunpack.c.l.b16 %v2933
        %v2966 = vunpack.c.l.b16 %v2934
        %v2967 = vunpack.c.l.b16 %v2935
        %v2968 = vunpack.c.l.b16 %v2936
        %v2969 = vunpack.c.l.b16 %v2937
        %v2970 = vunpack.c.l.b16 %v2938
        %v2971 = vunpack.c.l.b16 %v2939
        %v2972 = vunpack.c.l.b16 %v2940
        %v2973 = vunpack.c.l.b16 %v2941
        %v2974 = vunpack.c.l.b16 %v2942
        %v2975 = vunpack.c.l.b16 %v2943
        %v2976 = vunpack.c.l.b16 %v2944
        %v2977 = vunpack.c.l.b16 %v2945
        %v2978 = vpack.c.b16 %v2963, %v2962
        %v2979 = vpack.c.b16 %v2965, %v2964
        %v2980 = vpack.c.b16 %v2967, %v2966
        %v2981 = vpack.c.b16 %v2969, %v2968
        %v2982 = vpack.c.b16 %v2971, %v2970
        %v2983 = vpack.c.b16 %v2973, %v2972
        %v2984 = vpack.c.b16 %v2975, %v2974
        %v2985 = vpack.c.b16 %v2977, %v2976
        %2994 = vmatprep.subr.bf16.mxu0 0
        %2995 = vmatpush1.bf16.msra.mxu0 %v2978
        %2996 = vmatprep.subr.bf16.mxu0 0
        %2997 = vmatpush1.bf16.msra.mxu0 %v2979
        %2998 = vmatprep.subr.bf16.mxu0 0
        %2999 = vmatpush1.bf16.msra.mxu0 %v2980
        %3000 = vmatprep.subr.bf16.mxu0 0
        %3001 = vmatpush1.bf16.msra.mxu0 %v2981
        %3002 = vmatprep.subr.bf16.mxu0 0
        %3003 = vmatpush1.bf16.msra.mxu0 %v2982
        %3004 = vmatprep.subr.bf16.mxu0 0
        %3005 = vmatpush1.bf16.msra.mxu0 %v2983
        %3006 = vmatprep.subr.bf16.mxu0 0
        %3007 = vmatpush1.bf16.msra.mxu0 %v2984
        %3008 = vmatprep.subr.bf16.mxu0 0
        %3009 = vmatpush1.bf16.msra.mxu0 %v2985
        %3010 = vmatprep.subr.bf16.mxu0 0
        %3011 = vmatpush1.bf16.msra.mxu0 0
        %3012 = vmatprep.subr.bf16.mxu0 0
        %3013 = vmatpush1.bf16.msra.mxu0 0
        %3014 = vmatprep.subr.bf16.mxu0 0
        %3015 = vmatpush1.bf16.msra.mxu0 0
        %3016 = vmatprep.subr.bf16.mxu0 0
        %3017 = vmatpush1.bf16.msra.mxu0 0
        %3018 = vmatprep.subr.bf16.mxu0 0
        %3019 = vmatpush1.bf16.msra.mxu0 0
        %3020 = vmatprep.subr.bf16.mxu0 0
        %3021 = vmatpush1.bf16.msra.mxu0 0
        %3022 = vmatprep.subr.bf16.mxu0 0
        %3023 = vmatpush1.bf16.msra.mxu0 0
        %3024 = vmatprep.subr.bf16.mxu0 0
        %3025 = vmatpush1.bf16.msra.mxu0 0
        %3026 = vmatprep.mubr.bf16.mxu0 0
        %3027 = vmatmul.mubr.bf16.gmra.mrb[0].mxu0 %v2897
        %v3028 = vpop.f32.mrb[0].mxu0
        %v3029 = vadd.f32 0.0, %v3028
        %v3030 = vpop.f32.mrb[0].mxu0
        %v3031 = vpop.f32.mrb[0].mxu0
        %v3032 = vadd.f32 0.0, %v3031
        %v3033 = vpop.f32.mrb[0].mxu0
        %3034 = vmatprep.mubr.bf16.mxu0 0
        %3035 = vmatmul.mubr.bf16.gmra.mrb[0].mxu0 %v2898
        %v3036 = vpop.f32.mrb[0].mxu0
        %v3037 = vadd.f32 0.0, %v3036
        %v3038 = vpop.f32.mrb[0].mxu0
        %v3039 = vpop.f32.mrb[0].mxu0
        %v3040 = vadd.f32 0.0, %v3039
        %v3041 = vpop.f32.mrb[0].mxu0
        %3042 = vmatprep.mubr.bf16.mxu0 0
        %3043 = vmatmul.mubr.bf16.gmra.mrb[0].mxu0 %v2899
        %v3044 = vpop.f32.mrb[0].mxu0
        %v3045 = vadd.f32 0.0, %v3044
        %v3046 = vpop.f32.mrb[0].mxu0
        %v3047 = vpop.f32.mrb[0].mxu0
        %v3048 = vadd.f32 0.0, %v3047
        %v3049 = vpop.f32.mrb[0].mxu0
        %3050 = vmatprep.mubr.bf16.mxu0 0
        %3051 = vmatmul.mubr.bf16.gmra.mrb[0].mxu0 %v2900
        %v3052 = vpop.f32.mrb[0].mxu0
        %v3053 = vadd.f32 0.0, %v3052
        %v3054 = vpop.f32.mrb[0].mxu0
        %v3055 = vpop.f32.mrb[0].mxu0
        %v3056 = vadd.f32 0.0, %v3055
        %v3057 = vpop.f32.mrb[0].mxu0
        %3058 = vmatprep.mubr.bf16.mxu0 0
        %3059 = vmatmul.mubr.bf16.gmra.mrb[0].mxu0 %v2901
        %v3060 = vpop.f32.mrb[0].mxu0
        %v3061 = vadd.f32 0.0, %v3060
        %v3062 = vpop.f32.mrb[0].mxu0
        %v3063 = vpop.f32.mrb[0].mxu0
        %v3064 = vadd.f32 0.0, %v3063
        %v3065 = vpop.f32.mrb[0].mxu0
        %3066 = vmatprep.mubr.bf16.mxu0 0
        %3067 = vmatmul.mubr.bf16.gmra.mrb[0].mxu0 %v2902
        %v3068 = vpop.f32.mrb[0].mxu0
        %v3069 = vadd.f32 0.0, %v3068
        %v3070 = vpop.f32.mrb[0].mxu0
        %v3071 = vpop.f32.mrb[0].mxu0
        %v3072 = vadd.f32 0.0, %v3071
        %v3073 = vpop.f32.mrb[0].mxu0
        %3074 = vmatprep.mubr.bf16.mxu0 0
        %3075 = vmatmul.mubr.bf16.gmra.mrb[0].mxu0 %v2903
        %v3076 = vpop.f32.mrb[0].mxu0
        %v3077 = vadd.f32 0.0, %v3076
        %v3078 = vpop.f32.mrb[0].mxu0
        %v3079 = vpop.f32.mrb[0].mxu0
        %v3080 = vadd.f32 0.0, %v3079
        %v3081 = vpop.f32.mrb[0].mxu0
        %3082 = vmatprep.mubr.bf16.mxu0 0
        %3083 = vmatmul.mubr.bf16.gmra.mrb[0].mxu0 %v2904
        %v3084 = vpop.f32.mrb[0].mxu0
        %v3085 = vadd.f32 0.0, %v3084
        %v3086 = vpop.f32.mrb[0].mxu0
        %v3087 = vpop.f32.mrb[0].mxu0
        %v3088 = vadd.f32 0.0, %v3087
        %v3089 = vpop.f32.mrb[0].mxu0
        %3090 = vmatprep.mubr.bf16.mxu0 0
        %3091 = vmatmul.mubr.bf16.gmra.mrb[0].mxu0 %v2905
        %v3092 = vpop.f32.mrb[0].mxu0
        %v3093 = vadd.f32 0.0, %v3092
        %v3094 = vpop.f32.mrb[0].mxu0
        %v3095 = vpop.f32.mrb[0].mxu0
        %v3096 = vadd.f32 0.0, %v3095
        %v3097 = vpop.f32.mrb[0].mxu0
        %3098 = vmatprep.mubr.bf16.mxu0 0
        %3099 = vmatmul.mubr.bf16.gmra.mrb[0].mxu0 %v2906
        %v3100 = vpop.f32.mrb[0].mxu0
        %v3101 = vadd.f32 0.0, %v3100
        %v3102 = vpop.f32.mrb[0].mxu0
        %v3103 = vpop.f32.mrb[0].mxu0
        %v3104 = vadd.f32 0.0, %v3103
        %v3105 = vpop.f32.mrb[0].mxu0
        %3106 = vmatprep.mubr.bf16.mxu0 0
        %3107 = vmatmul.mubr.bf16.gmra.mrb[0].mxu0 %v2907
        %v3108 = vpop.f32.mrb[0].mxu0
        %v3109 = vadd.f32 0.0, %v3108
        %v3110 = vpop.f32.mrb[0].mxu0
        %v3111 = vpop.f32.mrb[0].mxu0
        %v3112 = vadd.f32 0.0, %v3111
        %v3113 = vpop.f32.mrb[0].mxu0
        %3114 = vmatprep.mubr.bf16.mxu0 0
        %3115 = vmatmul.mubr.bf16.gmra.mrb[0].mxu0 %v2908
        %v3116 = vpop.f32.mrb[0].mxu0
        %v3117 = vadd.f32 0.0, %v3116
        %v3118 = vpop.f32.mrb[0].mxu0
        %v3119 = vpop.f32.mrb[0].mxu0
        %v3120 = vadd.f32 0.0, %v3119
        %v3121 = vpop.f32.mrb[0].mxu0
        %3122 = vmatprep.mubr.bf16.mxu0 0
        %3123 = vmatmul.mubr.bf16.gmra.mrb[0].mxu0 %v2909
        %v3124 = vpop.f32.mrb[0].mxu0
        %v3125 = vadd.f32 0.0, %v3124
        %v3126 = vpop.f32.mrb[0].mxu0
        %v3127 = vpop.f32.mrb[0].mxu0
        %v3128 = vadd.f32 0.0, %v3127
        %v3129 = vpop.f32.mrb[0].mxu0
        %3130 = vmatprep.mubr.bf16.mxu0 0
        %3131 = vmatmul.mubr.bf16.gmra.mrb[0].mxu0 %v2910
        %v3132 = vpop.f32.mrb[0].mxu0
        %v3133 = vadd.f32 0.0, %v3132
        %v3134 = vpop.f32.mrb[0].mxu0
        %v3135 = vpop.f32.mrb[0].mxu0
        %v3136 = vadd.f32 0.0, %v3135
        %v3137 = vpop.f32.mrb[0].mxu0
        %3138 = vmatprep.mubr.bf16.mxu0 0
        %3139 = vmatmul.mubr.bf16.gmra.mrb[0].mxu0 %v2911
        %v3140 = vpop.f32.mrb[0].mxu0
        %v3141 = vadd.f32 0.0, %v3140
        %v3142 = vpop.f32.mrb[0].mxu0
        %v3143 = vpop.f32.mrb[0].mxu0
        %v3144 = vadd.f32 0.0, %v3143
        %v3145 = vpop.f32.mrb[0].mxu0
        %3146 = vmatprep.mubr.bf16.mxu0 0
        %3147 = vmatmul.mubr.bf16.gmra.mrb[0].mxu0 %v2912
        %v3148 = vpop.f32.mrb[0].mxu0
        %v3149 = vadd.f32 0.0, %v3148
        %v3150 = vpop.f32.mrb[0].mxu0
        %v3151 = vpop.f32.mrb[0].mxu0
        %v3152 = vadd.f32 0.0, %v3151
        %v3153 = vpop.f32.mrb[0].mxu0
        %3154 = vmatprep.mubr.bf16.mxu0 0
        %3155 = vmatmul.mubr.bf16.gmra.mrb[0].mxu0 %v2913
        %v3156 = vpop.f32.mrb[0].mxu0
        %v3157 = vadd.f32 0.0, %v3156
        %v3158 = vpop.f32.mrb[0].mxu0
        %v3159 = vpop.f32.mrb[0].mxu0
        %v3160 = vadd.f32 0.0, %v3159
        %v3161 = vpop.f32.mrb[0].mxu0
        %3162 = vmatprep.mubr.bf16.mxu0 0
        %3163 = vmatmul.mubr.bf16.gmra.mrb[0].mxu0 %v2914
        %v3164 = vpop.f32.mrb[0].mxu0
        %v3165 = vadd.f32 0.0, %v3164
        %v3166 = vpop.f32.mrb[0].mxu0
        %v3167 = vpop.f32.mrb[0].mxu0
        %v3168 = vadd.f32 0.0, %v3167
        %v3169 = vpop.f32.mrb[0].mxu0
        %3170 = vmatprep.mubr.bf16.mxu0 0
        %3171 = vmatmul.mubr.bf16.gmra.mrb[0].mxu0 %v2915
        %v3172 = vpop.f32.mrb[0].mxu0
        %v3173 = vadd.f32 0.0, %v3172
        %v3174 = vpop.f32.mrb[0].mxu0
        %v3175 = vpop.f32.mrb[0].mxu0
        %v3176 = vadd.f32 0.0, %v3175
        %v3177 = vpop.f32.mrb[0].mxu0
        %3178 = vmatprep.mubr.bf16.mxu0 0
        %3179 = vmatmul.mubr.bf16.gmra.mrb[0].mxu0 %v2916
        %v3180 = vpop.f32.mrb[0].mxu0
        %v3181 = vadd.f32 0.0, %v3180
        %v3182 = vpop.f32.mrb[0].mxu0
        %v3183 = vpop.f32.mrb[0].mxu0
        %v3184 = vadd.f32 0.0, %v3183
        %v3185 = vpop.f32.mrb[0].mxu0
        %3186 = vmatprep.mubr.bf16.mxu0 0
        %3187 = vmatmul.mubr.bf16.gmra.mrb[0].mxu0 %v2917
        %v3188 = vpop.f32.mrb[0].mxu0
        %v3189 = vadd.f32 0.0, %v3188
        %v3190 = vpop.f32.mrb[0].mxu0
        %v3191 = vpop.f32.mrb[0].mxu0
        %v3192 = vadd.f32 0.0, %v3191
        %v3193 = vpop.f32.mrb[0].mxu0
        %3194 = vmatprep.mubr.bf16.mxu0 0
        %3195 = vmatmul.mubr.bf16.gmra.mrb[0].mxu0 %v2918
        %v3196 = vpop.f32.mrb[0].mxu0
        %v3197 = vadd.f32 0.0, %v3196
        %v3198 = vpop.f32.mrb[0].mxu0
        %v3199 = vpop.f32.mrb[0].mxu0
        %v3200 = vadd.f32 0.0, %v3199
        %v3201 = vpop.f32.mrb[0].mxu0
        %3202 = vmatprep.mubr.bf16.mxu0 0
        %3203 = vmatmul.mubr.bf16.gmra.mrb[0].mxu0 %v2919
        %v3204 = vpop.f32.mrb[0].mxu0
        %v3205 = vadd.f32 0.0, %v3204
        %v3206 = vpop.f32.mrb[0].mxu0
        %v3207 = vpop.f32.mrb[0].mxu0
        %v3208 = vadd.f32 0.0, %v3207
        %v3209 = vpop.f32.mrb[0].mxu0
        %3210 = vmatprep.mubr.bf16.mxu0 0
        %3211 = vmatmul.mubr.bf16.gmra.mrb[0].mxu0 %v2920
        %v3212 = vpop.f32.mrb[0].mxu0
        %v3213 = vadd.f32 0.0, %v3212
        %v3214 = vpop.f32.mrb[0].mxu0
        %v3215 = vpop.f32.mrb[0].mxu0
        %v3216 = vadd.f32 0.0, %v3215
        %v3217 = vpop.f32.mrb[0].mxu0
        %3218 = vmatprep.mubr.bf16.mxu0 0
        %3219 = vmatmul.mubr.bf16.gmra.mrb[0].mxu0 %v2921
        %v3220 = vpop.f32.mrb[0].mxu0
        %v3221 = vadd.f32 0.0, %v3220
        %v3222 = vpop.f32.mrb[0].mxu0
        %v3223 = vpop.f32.mrb[0].mxu0
        %v3224 = vadd.f32 0.0, %v3223
        %v3225 = vpop.f32.mrb[0].mxu0
        %3226 = vmatprep.mubr.bf16.mxu0 0
        %3227 = vmatmul.mubr.bf16.gmra.mrb[0].mxu0 %v2922
        %v3228 = vpop.f32.mrb[0].mxu0
        %v3229 = vadd.f32 0.0, %v3228
        %v3230 = vpop.f32.mrb[0].mxu0
        %v3231 = vpop.f32.mrb[0].mxu0
        %v3232 = vadd.f32 0.0, %v3231
        %v3233 = vpop.f32.mrb[0].mxu0
        %3234 = vmatprep.mubr.bf16.mxu0 0
        %3235 = vmatmul.mubr.bf16.gmra.mrb[0].mxu0 %v2923
        %v3236 = vpop.f32.mrb[0].mxu0
        %v3237 = vadd.f32 0.0, %v3236
        %v3238 = vpop.f32.mrb[0].mxu0
        %v3239 = vpop.f32.mrb[0].mxu0
        %v3240 = vadd.f32 0.0, %v3239
        %v3241 = vpop.f32.mrb[0].mxu0
        %3242 = vmatprep.mubr.bf16.mxu0 0
        %3243 = vmatmul.mubr.bf16.gmra.mrb[0].mxu0 %v2924
        %v3244 = vpop.f32.mrb[0].mxu0
        %v3245 = vadd.f32 0.0, %v3244
        %v3246 = vpop.f32.mrb[0].mxu0
        %v3247 = vpop.f32.mrb[0].mxu0
        %v3248 = vadd.f32 0.0, %v3247
        %v3249 = vpop.f32.mrb[0].mxu0
        %3250 = vmatprep.mubr.bf16.mxu0 0
        %3251 = vmatmul.mubr.bf16.gmra.mrb[0].mxu0 %v2925
        %v3252 = vpop.f32.mrb[0].mxu0
        %v3253 = vadd.f32 0.0, %v3252
        %v3254 = vpop.f32.mrb[0].mxu0
        %v3255 = vpop.f32.mrb[0].mxu0
        %v3256 = vadd.f32 0.0, %v3255
        %v3257 = vpop.f32.mrb[0].mxu0
        %3258 = vmatprep.mubr.bf16.mxu0 0
        %3259 = vmatmul.mubr.bf16.gmra.mrb[0].mxu0 %v2926
        %v3260 = vpop.f32.mrb[0].mxu0
        %v3261 = vadd.f32 0.0, %v3260
        %v3262 = vpop.f32.mrb[0].mxu0
        %v3263 = vpop.f32.mrb[0].mxu0
        %v3264 = vadd.f32 0.0, %v3263
        %v3265 = vpop.f32.mrb[0].mxu0
        %3266 = vmatprep.mubr.bf16.mxu0 0
        %3267 = vmatmul.mubr.bf16.gmra.mrb[0].mxu0 %v2927
        %v3268 = vpop.f32.mrb[0].mxu0
        %v3269 = vadd.f32 0.0, %v3268
        %v3270 = vpop.f32.mrb[0].mxu0
        %v3271 = vpop.f32.mrb[0].mxu0
        %v3272 = vadd.f32 0.0, %v3271
        %v3273 = vpop.f32.mrb[0].mxu0
        %3274 = vmatprep.mubr.bf16.mxu0 0
        %3275 = vmatmul.mubr.bf16.gmra.mrb[0].mxu0 %v2928
        %v3276 = vpop.f32.mrb[0].mxu0
        %v3277 = vadd.f32 0.0, %v3276
        %v3278 = vpop.f32.mrb[0].mxu0
        %v3279 = vpop.f32.mrb[0].mxu0
        %v3280 = vadd.f32 0.0, %v3279
        %v3281 = vpop.f32.mrb[0].mxu0
        %3282 = vdwg.mxu0
        %v3283 = vld [vmem:[#allocation3] sm:$0xff]
        %v3284 = vld [vmem:[#allocation3 + $0x8] sm:$0xff]
        %v3285 = vld [vmem:[#allocation3 + $0x10] sm:$0xff]
        %v3286 = vld [vmem:[#allocation3 + $0x18] sm:$0xff]
        %v3287 = vld [vmem:[#allocation3 + $0x20] sm:$0xff]
        %v3288 = vld [vmem:[#allocation3 + $0x28] sm:$0xff]
        %v3289 = vld [vmem:[#allocation3 + $0x30] sm:$0xff]
        %v3290 = vld [vmem:[#allocation3 + $0x38] sm:$0xff]
        %v3291 = vld [vmem:[#allocation3 + $0x40] sm:$0xff]
        %v3292 = vld [vmem:[#allocation3 + $0x48] sm:$0xff]
        %v3293 = vld [vmem:[#allocation3 + $0x50] sm:$0xff]
        %v3294 = vld [vmem:[#allocation3 + $0x58] sm:$0xff]
        %v3295 = vld [vmem:[#allocation3 + $0x60] sm:$0xff]
        %v3296 = vld [vmem:[#allocation3 + $0x68] sm:$0xff]
        %v3297 = vld [vmem:[#allocation3 + $0x70] sm:$0xff]
        %v3298 = vld [vmem:[#allocation3 + $0x78] sm:$0xff]
        %v3299 = vld [vmem:[#allocation3 + $0x80] sm:$0xff]
        %v3300 = vld [vmem:[#allocation3 + $0x88] sm:$0xff]
        %v3301 = vld [vmem:[#allocation3 + $0x90] sm:$0xff]
        %v3302 = vld [vmem:[#allocation3 + $0x98] sm:$0xff]
        %v3303 = vld [vmem:[#allocation3 + $0xa0] sm:$0xff]
        %v3304 = vld [vmem:[#allocation3 + $0xa8] sm:$0xff]
        %v3305 = vld [vmem:[#allocation3 + $0xb0] sm:$0xff]
        %v3306 = vld [vmem:[#allocation3 + $0xb8] sm:$0xff]
        %v3307 = vld [vmem:[#allocation3 + $0xc0] sm:$0xff]
        %v3308 = vld [vmem:[#allocation3 + $0xc8] sm:$0xff]
        %v3309 = vld [vmem:[#allocation3 + $0xd0] sm:$0xff]
        %v3310 = vld [vmem:[#allocation3 + $0xd8] sm:$0xff]
        %v3311 = vld [vmem:[#allocation3 + $0xe0] sm:$0xff]
        %v3312 = vld [vmem:[#allocation3 + $0xe8] sm:$0xff]
        %v3313 = vld [vmem:[#allocation3 + $0xf0] sm:$0xff]
        %v3314 = vld [vmem:[#allocation3 + $0xf8] sm:$0xff]
        %v3315 = vld [vmem:[#allocation3 + $0x100] sm:$0xff]
        %v3316 = vld [vmem:[#allocation3 + $0x108] sm:$0xff]
        %v3317 = vld [vmem:[#allocation3 + $0x110] sm:$0xff]
        %v3318 = vld [vmem:[#allocation3 + $0x118] sm:$0xff]
        %v3319 = vld [vmem:[#allocation3 + $0x120] sm:$0xff]
        %v3320 = vld [vmem:[#allocation3 + $0x128] sm:$0xff]
        %v3321 = vld [vmem:[#allocation3 + $0x130] sm:$0xff]
        %v3322 = vld [vmem:[#allocation3 + $0x138] sm:$0xff]
        %v3323 = vld [vmem:[#allocation3 + $0x140] sm:$0xff]
        %v3324 = vld [vmem:[#allocation3 + $0x148] sm:$0xff]
        %v3325 = vld [vmem:[#allocation3 + $0x150] sm:$0xff]
        %v3326 = vld [vmem:[#allocation3 + $0x158] sm:$0xff]
        %v3327 = vld [vmem:[#allocation3 + $0x160] sm:$0xff]
        %v3328 = vld [vmem:[#allocation3 + $0x168] sm:$0xff]
        %v3329 = vld [vmem:[#allocation3 + $0x170] sm:$0xff]
        %v3330 = vld [vmem:[#allocation3 + $0x178] sm:$0xff]
        %v3331 = vld [vmem:[#allocation3 + $0x180] sm:$0xff]
        %v3332 = vld [vmem:[#allocation3 + $0x188] sm:$0xff]
        %v3333 = vld [vmem:[#allocation3 + $0x190] sm:$0xff]
        %v3334 = vld [vmem:[#allocation3 + $0x198] sm:$0xff]
        %v3335 = vld [vmem:[#allocation3 + $0x1a0] sm:$0xff]
        %v3336 = vld [vmem:[#allocation3 + $0x1a8] sm:$0xff]
        %v3337 = vld [vmem:[#allocation3 + $0x1b0] sm:$0xff]
        %v3338 = vld [vmem:[#allocation3 + $0x1b8] sm:$0xff]
        %v3339 = vld [vmem:[#allocation3 + $0x1c0] sm:$0xff]
        %v3340 = vld [vmem:[#allocation3 + $0x1c8] sm:$0xff]
        %v3341 = vld [vmem:[#allocation3 + $0x1d0] sm:$0xff]
        %v3342 = vld [vmem:[#allocation3 + $0x1d8] sm:$0xff]
        %v3343 = vld [vmem:[#allocation3 + $0x1e0] sm:$0xff]
        %v3344 = vld [vmem:[#allocation3 + $0x1e8] sm:$0xff]
        %v3345 = vld [vmem:[#allocation3 + $0x1f0] sm:$0xff]
        %v3346 = vld [vmem:[#allocation3 + $0x1f8] sm:$0xff]
        %v3347 = vadd.f32 %v3283, %v3029
        %v3348 = vadd.f32 %v3284, %v3032
        %v3349 = vadd.f32 %v3285, %v3037
        %v3350 = vadd.f32 %v3286, %v3040
        %v3351 = vadd.f32 %v3287, %v3045
        %v3352 = vadd.f32 %v3288, %v3048
        %v3353 = vadd.f32 %v3289, %v3053
        %v3354 = vadd.f32 %v3290, %v3056
        %v3355 = vadd.f32 %v3291, %v3061
        %v3356 = vadd.f32 %v3292, %v3064
        %v3357 = vadd.f32 %v3293, %v3069
        %v3358 = vadd.f32 %v3294, %v3072
        %v3359 = vadd.f32 %v3295, %v3077
        %v3360 = vadd.f32 %v3296, %v3080
        %v3361 = vadd.f32 %v3297, %v3085
        %v3362 = vadd.f32 %v3298, %v3088
        %v3363 = vadd.f32 %v3299, %v3093
        %v3364 = vadd.f32 %v3300, %v3096
        %v3365 = vadd.f32 %v3301, %v3101
        %v3366 = vadd.f32 %v3302, %v3104
        %v3367 = vadd.f32 %v3303, %v3109
        %v3368 = vadd.f32 %v3304, %v3112
        %v3369 = vadd.f32 %v3305, %v3117
        %v3370 = vadd.f32 %v3306, %v3120
        %v3371 = vadd.f32 %v3307, %v3125
        %v3372 = vadd.f32 %v3308, %v3128
        %v3373 = vadd.f32 %v3309, %v3133
        %v3374 = vadd.f32 %v3310, %v3136
        %v3375 = vadd.f32 %v3311, %v3141
        %v3376 = vadd.f32 %v3312, %v3144
        %v3377 = vadd.f32 %v3313, %v3149
        %v3378 = vadd.f32 %v3314, %v3152
        %v3379 = vadd.f32 %v3315, %v3157
        %v3380 = vadd.f32 %v3316, %v3160
        %v3381 = vadd.f32 %v3317, %v3165
        %v3382 = vadd.f32 %v3318, %v3168
        %v3383 = vadd.f32 %v3319, %v3173
        %v3384 = vadd.f32 %v3320, %v3176
        %v3385 = vadd.f32 %v3321, %v3181
        %v3386 = vadd.f32 %v3322, %v3184
        %v3387 = vadd.f32 %v3323, %v3189
        %v3388 = vadd.f32 %v3324, %v3192
        %v3389 = vadd.f32 %v3325, %v3197
        %v3390 = vadd.f32 %v3326, %v3200
        %v3391 = vadd.f32 %v3327, %v3205
        %v3392 = vadd.f32 %v3328, %v3208
        %v3393 = vadd.f32 %v3329, %v3213
        %v3394 = vadd.f32 %v3330, %v3216
        %v3395 = vadd.f32 %v3331, %v3221
        %v3396 = vadd.f32 %v3332, %v3224
        %v3397 = vadd.f32 %v3333, %v3229
        %v3398 = vadd.f32 %v3334, %v3232
        %v3399 = vadd.f32 %v3335, %v3237
        %v3400 = vadd.f32 %v3336, %v3240
        %v3401 = vadd.f32 %v3337, %v3245
        %v3402 = vadd.f32 %v3338, %v3248
        %v3403 = vadd.f32 %v3339, %v3253
        %v3404 = vadd.f32 %v3340, %v3256
        %v3405 = vadd.f32 %v3341, %v3261
        %v3406 = vadd.f32 %v3342, %v3264
        %v3407 = vadd.f32 %v3343, %v3269
        %v3408 = vadd.f32 %v3344, %v3272
        %v3409 = vadd.f32 %v3345, %v3277
        %v3410 = vadd.f32 %v3346, %v3280
        %3411 = vst [vmem:[#allocation3] sm:$0xff] %v3347
        %3412 = vst [vmem:[#allocation3 + $0x8] sm:$0xff] %v3348
        %3413 = vst [vmem:[#allocation3 + $0x10] sm:$0xff] %v3349
        %3414 = vst [vmem:[#allocation3 + $0x18] sm:$0xff] %v3350
        %3415 = vst [vmem:[#allocation3 + $0x20] sm:$0xff] %v3351
        %3416 = vst [vmem:[#allocation3 + $0x28] sm:$0xff] %v3352
        %3417 = vst [vmem:[#allocation3 + $0x30] sm:$0xff] %v3353
        %3418 = vst [vmem:[#allocation3 + $0x38] sm:$0xff] %v3354
        %3419 = vst [vmem:[#allocation3 + $0x40] sm:$0xff] %v3355
        %3420 = vst [vmem:[#allocation3 + $0x48] sm:$0xff] %v3356
        %3421 = vst [vmem:[#allocation3 + $0x50] sm:$0xff] %v3357
        %3422 = vst [vmem:[#allocation3 + $0x58] sm:$0xff] %v3358
        %3423 = vst [vmem:[#allocation3 + $0x60] sm:$0xff] %v3359
        %3424 = vst [vmem:[#allocation3 + $0x68] sm:$0xff] %v3360
        %3425 = vst [vmem:[#allocation3 + $0x70] sm:$0xff] %v3361
        %3426 = vst [vmem:[#allocation3 + $0x78] sm:$0xff] %v3362
        %3427 = vst [vmem:[#allocation3 + $0x80] sm:$0xff] %v3363
        %3428 = vst [vmem:[#allocation3 + $0x88] sm:$0xff] %v3364
        %3429 = vst [vmem:[#allocation3 + $0x90] sm:$0xff] %v3365
        %3430 = vst [vmem:[#allocation3 + $0x98] sm:$0xff] %v3366
        %3431 = vst [vmem:[#allocation3 + $0xa0] sm:$0xff] %v3367
        %3432 = vst [vmem:[#allocation3 + $0xa8] sm:$0xff] %v3368
        %3433 = vst [vmem:[#allocation3 + $0xb0] sm:$0xff] %v3369
        %3434 = vst [vmem:[#allocation3 + $0xb8] sm:$0xff] %v3370
        %3435 = vst [vmem:[#allocation3 + $0xc0] sm:$0xff] %v3371
        %3436 = vst [vmem:[#allocation3 + $0xc8] sm:$0xff] %v3372
        %3437 = vst [vmem:[#allocation3 + $0xd0] sm:$0xff] %v3373
        %3438 = vst [vmem:[#allocation3 + $0xd8] sm:$0xff] %v3374
        %3439 = vst [vmem:[#allocation3 + $0xe0] sm:$0xff] %v3375
        %3440 = vst [vmem:[#allocation3 + $0xe8] sm:$0xff] %v3376
        %3441 = vst [vmem:[#allocation3 + $0xf0] sm:$0xff] %v3377
        %3442 = vst [vmem:[#allocation3 + $0xf8] sm:$0xff] %v3378
        %3443 = vst [vmem:[#allocation3 + $0x100] sm:$0xff] %v3379
        %3444 = vst [vmem:[#allocation3 + $0x108] sm:$0xff] %v3380
        %3445 = vst [vmem:[#allocation3 + $0x110] sm:$0xff] %v3381
        %3446 = vst [vmem:[#allocation3 + $0x118] sm:$0xff] %v3382
        %3447 = vst [vmem:[#allocation3 + $0x120] sm:$0xff] %v3383
        %3448 = vst [vmem:[#allocation3 + $0x128] sm:$0xff] %v3384
        %3449 = vst [vmem:[#allocation3 + $0x130] sm:$0xff] %v3385
        %3450 = vst [vmem:[#allocation3 + $0x138] sm:$0xff] %v3386
        %3451 = vst [vmem:[#allocation3 + $0x140] sm:$0xff] %v3387
        %3452 = vst [vmem:[#allocation3 + $0x148] sm:$0xff] %v3388
        %3453 = vst [vmem:[#allocation3 + $0x150] sm:$0xff] %v3389
        %3454 = vst [vmem:[#allocation3 + $0x158] sm:$0xff] %v3390
        %3455 = vst [vmem:[#allocation3 + $0x160] sm:$0xff] %v3391
        %3456 = vst [vmem:[#allocation3 + $0x168] sm:$0xff] %v3392
        %3457 = vst [vmem:[#allocation3 + $0x170] sm:$0xff] %v3393
        %3458 = vst [vmem:[#allocation3 + $0x178] sm:$0xff] %v3394
        %3459 = vst [vmem:[#allocation3 + $0x180] sm:$0xff] %v3395
        %3460 = vst [vmem:[#allocation3 + $0x188] sm:$0xff] %v3396
        %3461 = vst [vmem:[#allocation3 + $0x190] sm:$0xff] %v3397
        %3462 = vst [vmem:[#allocation3 + $0x198] sm:$0xff] %v3398
        %3463 = vst [vmem:[#allocation3 + $0x1a0] sm:$0xff] %v3399
        %3464 = vst [vmem:[#allocation3 + $0x1a8] sm:$0xff] %v3400
        %3465 = vst [vmem:[#allocation3 + $0x1b0] sm:$0xff] %v3401
        %3466 = vst [vmem:[#allocation3 + $0x1b8] sm:$0xff] %v3402
        %3467 = vst [vmem:[#allocation3 + $0x1c0] sm:$0xff] %v3403
        %3468 = vst [vmem:[#allocation3 + $0x1c8] sm:$0xff] %v3404
        %3469 = vst [vmem:[#allocation3 + $0x1d0] sm:$0xff] %v3405
        %3470 = vst [vmem:[#allocation3 + $0x1d8] sm:$0xff] %v3406
        %3471 = vst [vmem:[#allocation3 + $0x1e0] sm:$0xff] %v3407
        %3472 = vst [vmem:[#allocation3 + $0x1e8] sm:$0xff] %v3408
        %3473 = vst [vmem:[#allocation3 + $0x1f0] sm:$0xff] %v3409
        %3474 = vst [vmem:[#allocation3 + $0x1f8] sm:$0xff] %v3410
        %v3475 = vpack.c.bf16 %v2611, %v2610
        %v3476 = vpack.c.bf16 %v2615, %v2614
        %v3477 = vpack.c.bf16 %v2619, %v2618
        %v3478 = vpack.c.bf16 %v2623, %v2622
        %v3479 = vpack.c.bf16 %v2627, %v2626
        %v3480 = vpack.c.bf16 %v2631, %v2630
        %v3481 = vpack.c.bf16 %v2635, %v2634
        %v3482 = vpack.c.bf16 %v2639, %v2638
        %v3483 = vpack.c.bf16 %v2643, %v2642
        %v3484 = vpack.c.bf16 %v2647, %v2646
        %v3485 = vpack.c.bf16 %v2651, %v2650
        %v3486 = vpack.c.bf16 %v2655, %v2654
        %v3487 = vpack.c.bf16 %v2659, %v2658
        %v3488 = vpack.c.bf16 %v2663, %v2662
        %v3489 = vpack.c.bf16 %v2667, %v2666
        %v3490 = vpack.c.bf16 %v2671, %v2670
        %v3491 = vpack.c.bf16 %v2675, %v2674
        %v3492 = vpack.c.bf16 %v2679, %v2678
        %v3493 = vpack.c.bf16 %v2683, %v2682
        %v3494 = vpack.c.bf16 %v2687, %v2686
        %v3495 = vpack.c.bf16 %v2691, %v2690
        %v3496 = vpack.c.bf16 %v2695, %v2694
        %v3497 = vpack.c.bf16 %v2699, %v2698
        %v3498 = vpack.c.bf16 %v2703, %v2702
        %v3499 = vpack.c.bf16 %v2707, %v2706
        %v3500 = vpack.c.bf16 %v2711, %v2710
        %v3501 = vpack.c.bf16 %v2715, %v2714
        %v3502 = vpack.c.bf16 %v2719, %v2718
        %v3503 = vpack.c.bf16 %v2723, %v2722
        %v3504 = vpack.c.bf16 %v2727, %v2726
        %v3505 = vpack.c.bf16 %v2731, %v2730
        %v3506 = vpack.c.bf16 %v2735, %v2734
        %s3507 = scalar_lea.vmem %s232, 256 [#allocation4]
        %v3508 = vld [vmem:[%s3507] sm:$0xf]
        %v3509 = vld [vmem:[%s3507 + $0x4] sm:$0xf]
        %v3510 = vld [vmem:[%s3507 + $0x8] sm:$0xf]
        %v3511 = vld [vmem:[%s3507 + $0xc] sm:$0xf]
        %v3512 = vld [vmem:[%s3507 + $0x10] sm:$0xf]
        %v3513 = vld [vmem:[%s3507 + $0x14] sm:$0xf]
        %v3514 = vld [vmem:[%s3507 + $0x18] sm:$0xf]
        %v3515 = vld [vmem:[%s3507 + $0x1c] sm:$0xf]
        %v3516 = vld [vmem:[%s3507 + $0x20] sm:$0xf]
        %v3517 = vld [vmem:[%s3507 + $0x24] sm:$0xf]
        %v3518 = vld [vmem:[%s3507 + $0x28] sm:$0xf]
        %v3519 = vld [vmem:[%s3507 + $0x2c] sm:$0xf]
        %v3520 = vld [vmem:[%s3507 + $0x30] sm:$0xf]
        %v3521 = vld [vmem:[%s3507 + $0x34] sm:$0xf]
        %v3522 = vld [vmem:[%s3507 + $0x38] sm:$0xf]
        %v3523 = vld [vmem:[%s3507 + $0x3c] sm:$0xf]
        %v3540 = vunpack.c.l.b16 %v3508
        %v3541 = vunpack.c.l.b16 %v3509
        %v3542 = vunpack.c.l.b16 %v3510
        %v3543 = vunpack.c.l.b16 %v3511
        %v3544 = vunpack.c.l.b16 %v3512
        %v3545 = vunpack.c.l.b16 %v3513
        %v3546 = vunpack.c.l.b16 %v3514
        %v3547 = vunpack.c.l.b16 %v3515
        %v3548 = vunpack.c.l.b16 %v3516
        %v3549 = vunpack.c.l.b16 %v3517
        %v3550 = vunpack.c.l.b16 %v3518
        %v3551 = vunpack.c.l.b16 %v3519
        %v3552 = vunpack.c.l.b16 %v3520
        %v3553 = vunpack.c.l.b16 %v3521
        %v3554 = vunpack.c.l.b16 %v3522
        %v3555 = vunpack.c.l.b16 %v3523
        %v3556 = vpack.c.b16 %v3541, %v3540
        %v3557 = vpack.c.b16 %v3543, %v3542
        %v3558 = vpack.c.b16 %v3545, %v3544
        %v3559 = vpack.c.b16 %v3547, %v3546
        %v3560 = vpack.c.b16 %v3549, %v3548
        %v3561 = vpack.c.b16 %v3551, %v3550
        %v3562 = vpack.c.b16 %v3553, %v3552
        %v3563 = vpack.c.b16 %v3555, %v3554
        %3572 = vmatprep.subr.bf16.mxu0 0
        %3573 = vmatpush1.bf16.msra.mxu0 %v3556
        %3574 = vmatprep.subr.bf16.mxu0 0
        %3575 = vmatpush1.bf16.msra.mxu0 %v3557
        %3576 = vmatprep.subr.bf16.mxu0 0
        %3577 = vmatpush1.bf16.msra.mxu0 %v3558
        %3578 = vmatprep.subr.bf16.mxu0 0
        %3579 = vmatpush1.bf16.msra.mxu0 %v3559
        %3580 = vmatprep.subr.bf16.mxu0 0
        %3581 = vmatpush1.bf16.msra.mxu0 %v3560
        %3582 = vmatprep.subr.bf16.mxu0 0
        %3583 = vmatpush1.bf16.msra.mxu0 %v3561
        %3584 = vmatprep.subr.bf16.mxu0 0
        %3585 = vmatpush1.bf16.msra.mxu0 %v3562
        %3586 = vmatprep.subr.bf16.mxu0 0
        %3587 = vmatpush1.bf16.msra.mxu0 %v3563
        %3588 = vmatprep.subr.bf16.mxu0 0
        %3589 = vmatpush1.bf16.msra.mxu0 0
        %3590 = vmatprep.subr.bf16.mxu0 0
        %3591 = vmatpush1.bf16.msra.mxu0 0
        %3592 = vmatprep.subr.bf16.mxu0 0
        %3593 = vmatpush1.bf16.msra.mxu0 0
        %3594 = vmatprep.subr.bf16.mxu0 0
        %3595 = vmatpush1.bf16.msra.mxu0 0
        %3596 = vmatprep.subr.bf16.mxu0 0
        %3597 = vmatpush1.bf16.msra.mxu0 0
        %3598 = vmatprep.subr.bf16.mxu0 0
        %3599 = vmatpush1.bf16.msra.mxu0 0
        %3600 = vmatprep.subr.bf16.mxu0 0
        %3601 = vmatpush1.bf16.msra.mxu0 0
        %3602 = vmatprep.subr.bf16.mxu0 0
        %3603 = vmatpush1.bf16.msra.mxu0 0
        %3604 = vmatprep.mubr.bf16.mxu0 0
        %3605 = vmatmul.mubr.bf16.gmra.mrb[0].mxu0 %v3475
        %v3606 = vpop.f32.mrb[0].mxu0
        %v3607 = vadd.f32 0.0, %v3606
        %v3608 = vpop.f32.mrb[0].mxu0
        %v3609 = vpop.f32.mrb[0].mxu0
        %v3610 = vadd.f32 0.0, %v3609
        %v3611 = vpop.f32.mrb[0].mxu0
        %3612 = vmatprep.mubr.bf16.mxu0 0
        %3613 = vmatmul.mubr.bf16.gmra.mrb[0].mxu0 %v3476
        %v3614 = vpop.f32.mrb[0].mxu0
        %v3615 = vadd.f32 0.0, %v3614
        %v3616 = vpop.f32.mrb[0].mxu0
        %v3617 = vpop.f32.mrb[0].mxu0
        %v3618 = vadd.f32 0.0, %v3617
        %v3619 = vpop.f32.mrb[0].mxu0
        %3620 = vmatprep.mubr.bf16.mxu0 0
        %3621 = vmatmul.mubr.bf16.gmra.mrb[0].mxu0 %v3477
        %v3622 = vpop.f32.mrb[0].mxu0
        %v3623 = vadd.f32 0.0, %v3622
        %v3624 = vpop.f32.mrb[0].mxu0
        %v3625 = vpop.f32.mrb[0].mxu0
        %v3626 = vadd.f32 0.0, %v3625
        %v3627 = vpop.f32.mrb[0].mxu0
        %3628 = vmatprep.mubr.bf16.mxu0 0
        %3629 = vmatmul.mubr.bf16.gmra.mrb[0].mxu0 %v3478
        %v3630 = vpop.f32.mrb[0].mxu0
        %v3631 = vadd.f32 0.0, %v3630
        %v3632 = vpop.f32.mrb[0].mxu0
        %v3633 = vpop.f32.mrb[0].mxu0
        %v3634 = vadd.f32 0.0, %v3633
        %v3635 = vpop.f32.mrb[0].mxu0
        %3636 = vmatprep.mubr.bf16.mxu0 0
        %3637 = vmatmul.mubr.bf16.gmra.mrb[0].mxu0 %v3479
        %v3638 = vpop.f32.mrb[0].mxu0
        %v3639 = vadd.f32 0.0, %v3638
        %v3640 = vpop.f32.mrb[0].mxu0
        %v3641 = vpop.f32.mrb[0].mxu0
        %v3642 = vadd.f32 0.0, %v3641
        %v3643 = vpop.f32.mrb[0].mxu0
        %3644 = vmatprep.mubr.bf16.mxu0 0
        %3645 = vmatmul.mubr.bf16.gmra.mrb[0].mxu0 %v3480
        %v3646 = vpop.f32.mrb[0].mxu0
        %v3647 = vadd.f32 0.0, %v3646
        %v3648 = vpop.f32.mrb[0].mxu0
        %v3649 = vpop.f32.mrb[0].mxu0
        %v3650 = vadd.f32 0.0, %v3649
        %v3651 = vpop.f32.mrb[0].mxu0
        %3652 = vmatprep.mubr.bf16.mxu0 0
        %3653 = vmatmul.mubr.bf16.gmra.mrb[0].mxu0 %v3481
        %v3654 = vpop.f32.mrb[0].mxu0
        %v3655 = vadd.f32 0.0, %v3654
        %v3656 = vpop.f32.mrb[0].mxu0
        %v3657 = vpop.f32.mrb[0].mxu0
        %v3658 = vadd.f32 0.0, %v3657
        %v3659 = vpop.f32.mrb[0].mxu0
        %3660 = vmatprep.mubr.bf16.mxu0 0
        %3661 = vmatmul.mubr.bf16.gmra.mrb[0].mxu0 %v3482
        %v3662 = vpop.f32.mrb[0].mxu0
        %v3663 = vadd.f32 0.0, %v3662
        %v3664 = vpop.f32.mrb[0].mxu0
        %v3665 = vpop.f32.mrb[0].mxu0
        %v3666 = vadd.f32 0.0, %v3665
        %v3667 = vpop.f32.mrb[0].mxu0
        %3668 = vmatprep.mubr.bf16.mxu0 0
        %3669 = vmatmul.mubr.bf16.gmra.mrb[0].mxu0 %v3483
        %v3670 = vpop.f32.mrb[0].mxu0
        %v3671 = vadd.f32 0.0, %v3670
        %v3672 = vpop.f32.mrb[0].mxu0
        %v3673 = vpop.f32.mrb[0].mxu0
        %v3674 = vadd.f32 0.0, %v3673
        %v3675 = vpop.f32.mrb[0].mxu0
        %3676 = vmatprep.mubr.bf16.mxu0 0
        %3677 = vmatmul.mubr.bf16.gmra.mrb[0].mxu0 %v3484
        %v3678 = vpop.f32.mrb[0].mxu0
        %v3679 = vadd.f32 0.0, %v3678
        %v3680 = vpop.f32.mrb[0].mxu0
        %v3681 = vpop.f32.mrb[0].mxu0
        %v3682 = vadd.f32 0.0, %v3681
        %v3683 = vpop.f32.mrb[0].mxu0
        %3684 = vmatprep.mubr.bf16.mxu0 0
        %3685 = vmatmul.mubr.bf16.gmra.mrb[0].mxu0 %v3485
        %v3686 = vpop.f32.mrb[0].mxu0
        %v3687 = vadd.f32 0.0, %v3686
        %v3688 = vpop.f32.mrb[0].mxu0
        %v3689 = vpop.f32.mrb[0].mxu0
        %v3690 = vadd.f32 0.0, %v3689
        %v3691 = vpop.f32.mrb[0].mxu0
        %3692 = vmatprep.mubr.bf16.mxu0 0
        %3693 = vmatmul.mubr.bf16.gmra.mrb[0].mxu0 %v3486
        %v3694 = vpop.f32.mrb[0].mxu0
        %v3695 = vadd.f32 0.0, %v3694
        %v3696 = vpop.f32.mrb[0].mxu0
        %v3697 = vpop.f32.mrb[0].mxu0
        %v3698 = vadd.f32 0.0, %v3697
        %v3699 = vpop.f32.mrb[0].mxu0
        %3700 = vmatprep.mubr.bf16.mxu0 0
        %3701 = vmatmul.mubr.bf16.gmra.mrb[0].mxu0 %v3487
        %v3702 = vpop.f32.mrb[0].mxu0
        %v3703 = vadd.f32 0.0, %v3702
        %v3704 = vpop.f32.mrb[0].mxu0
        %v3705 = vpop.f32.mrb[0].mxu0
        %v3706 = vadd.f32 0.0, %v3705
        %v3707 = vpop.f32.mrb[0].mxu0
        %3708 = vmatprep.mubr.bf16.mxu0 0
        %3709 = vmatmul.mubr.bf16.gmra.mrb[0].mxu0 %v3488
        %v3710 = vpop.f32.mrb[0].mxu0
        %v3711 = vadd.f32 0.0, %v3710
        %v3712 = vpop.f32.mrb[0].mxu0
        %v3713 = vpop.f32.mrb[0].mxu0
        %v3714 = vadd.f32 0.0, %v3713
        %v3715 = vpop.f32.mrb[0].mxu0
        %3716 = vmatprep.mubr.bf16.mxu0 0
        %3717 = vmatmul.mubr.bf16.gmra.mrb[0].mxu0 %v3489
        %v3718 = vpop.f32.mrb[0].mxu0
        %v3719 = vadd.f32 0.0, %v3718
        %v3720 = vpop.f32.mrb[0].mxu0
        %v3721 = vpop.f32.mrb[0].mxu0
        %v3722 = vadd.f32 0.0, %v3721
        %v3723 = vpop.f32.mrb[0].mxu0
        %3724 = vmatprep.mubr.bf16.mxu0 0
        %3725 = vmatmul.mubr.bf16.gmra.mrb[0].mxu0 %v3490
        %v3726 = vpop.f32.mrb[0].mxu0
        %v3727 = vadd.f32 0.0, %v3726
        %v3728 = vpop.f32.mrb[0].mxu0
        %v3729 = vpop.f32.mrb[0].mxu0
        %v3730 = vadd.f32 0.0, %v3729
        %v3731 = vpop.f32.mrb[0].mxu0
        %3732 = vmatprep.mubr.bf16.mxu0 0
        %3733 = vmatmul.mubr.bf16.gmra.mrb[0].mxu0 %v3491
        %v3734 = vpop.f32.mrb[0].mxu0
        %v3735 = vadd.f32 0.0, %v3734
        %v3736 = vpop.f32.mrb[0].mxu0
        %v3737 = vpop.f32.mrb[0].mxu0
        %v3738 = vadd.f32 0.0, %v3737
        %v3739 = vpop.f32.mrb[0].mxu0
        %3740 = vmatprep.mubr.bf16.mxu0 0
        %3741 = vmatmul.mubr.bf16.gmra.mrb[0].mxu0 %v3492
        %v3742 = vpop.f32.mrb[0].mxu0
        %v3743 = vadd.f32 0.0, %v3742
        %v3744 = vpop.f32.mrb[0].mxu0
        %v3745 = vpop.f32.mrb[0].mxu0
        %v3746 = vadd.f32 0.0, %v3745
        %v3747 = vpop.f32.mrb[0].mxu0
        %3748 = vmatprep.mubr.bf16.mxu0 0
        %3749 = vmatmul.mubr.bf16.gmra.mrb[0].mxu0 %v3493
        %v3750 = vpop.f32.mrb[0].mxu0
        %v3751 = vadd.f32 0.0, %v3750
        %v3752 = vpop.f32.mrb[0].mxu0
        %v3753 = vpop.f32.mrb[0].mxu0
        %v3754 = vadd.f32 0.0, %v3753
        %v3755 = vpop.f32.mrb[0].mxu0
        %3756 = vmatprep.mubr.bf16.mxu0 0
        %3757 = vmatmul.mubr.bf16.gmra.mrb[0].mxu0 %v3494
        %v3758 = vpop.f32.mrb[0].mxu0
        %v3759 = vadd.f32 0.0, %v3758
        %v3760 = vpop.f32.mrb[0].mxu0
        %v3761 = vpop.f32.mrb[0].mxu0
        %v3762 = vadd.f32 0.0, %v3761
        %v3763 = vpop.f32.mrb[0].mxu0
        %3764 = vmatprep.mubr.bf16.mxu0 0
        %3765 = vmatmul.mubr.bf16.gmra.mrb[0].mxu0 %v3495
        %v3766 = vpop.f32.mrb[0].mxu0
        %v3767 = vadd.f32 0.0, %v3766
        %v3768 = vpop.f32.mrb[0].mxu0
        %v3769 = vpop.f32.mrb[0].mxu0
        %v3770 = vadd.f32 0.0, %v3769
        %v3771 = vpop.f32.mrb[0].mxu0
        %3772 = vmatprep.mubr.bf16.mxu0 0
        %3773 = vmatmul.mubr.bf16.gmra.mrb[0].mxu0 %v3496
        %v3774 = vpop.f32.mrb[0].mxu0
        %v3775 = vadd.f32 0.0, %v3774
        %v3776 = vpop.f32.mrb[0].mxu0
        %v3777 = vpop.f32.mrb[0].mxu0
        %v3778 = vadd.f32 0.0, %v3777
        %v3779 = vpop.f32.mrb[0].mxu0
        %3780 = vmatprep.mubr.bf16.mxu0 0
        %3781 = vmatmul.mubr.bf16.gmra.mrb[0].mxu0 %v3497
        %v3782 = vpop.f32.mrb[0].mxu0
        %v3783 = vadd.f32 0.0, %v3782
        %v3784 = vpop.f32.mrb[0].mxu0
        %v3785 = vpop.f32.mrb[0].mxu0
        %v3786 = vadd.f32 0.0, %v3785
        %v3787 = vpop.f32.mrb[0].mxu0
        %3788 = vmatprep.mubr.bf16.mxu0 0
        %3789 = vmatmul.mubr.bf16.gmra.mrb[0].mxu0 %v3498
        %v3790 = vpop.f32.mrb[0].mxu0
        %v3791 = vadd.f32 0.0, %v3790
        %v3792 = vpop.f32.mrb[0].mxu0
        %v3793 = vpop.f32.mrb[0].mxu0
        %v3794 = vadd.f32 0.0, %v3793
        %v3795 = vpop.f32.mrb[0].mxu0
        %3796 = vmatprep.mubr.bf16.mxu0 0
        %3797 = vmatmul.mubr.bf16.gmra.mrb[0].mxu0 %v3499
        %v3798 = vpop.f32.mrb[0].mxu0
        %v3799 = vadd.f32 0.0, %v3798
        %v3800 = vpop.f32.mrb[0].mxu0
        %v3801 = vpop.f32.mrb[0].mxu0
        %v3802 = vadd.f32 0.0, %v3801
        %v3803 = vpop.f32.mrb[0].mxu0
        %3804 = vmatprep.mubr.bf16.mxu0 0
        %3805 = vmatmul.mubr.bf16.gmra.mrb[0].mxu0 %v3500
        %v3806 = vpop.f32.mrb[0].mxu0
        %v3807 = vadd.f32 0.0, %v3806
        %v3808 = vpop.f32.mrb[0].mxu0
        %v3809 = vpop.f32.mrb[0].mxu0
        %v3810 = vadd.f32 0.0, %v3809
        %v3811 = vpop.f32.mrb[0].mxu0
        %3812 = vmatprep.mubr.bf16.mxu0 0
        %3813 = vmatmul.mubr.bf16.gmra.mrb[0].mxu0 %v3501
        %v3814 = vpop.f32.mrb[0].mxu0
        %v3815 = vadd.f32 0.0, %v3814
        %v3816 = vpop.f32.mrb[0].mxu0
        %v3817 = vpop.f32.mrb[0].mxu0
        %v3818 = vadd.f32 0.0, %v3817
        %v3819 = vpop.f32.mrb[0].mxu0
        %3820 = vmatprep.mubr.bf16.mxu0 0
        %3821 = vmatmul.mubr.bf16.gmra.mrb[0].mxu0 %v3502
        %v3822 = vpop.f32.mrb[0].mxu0
        %v3823 = vadd.f32 0.0, %v3822
        %v3824 = vpop.f32.mrb[0].mxu0
        %v3825 = vpop.f32.mrb[0].mxu0
        %v3826 = vadd.f32 0.0, %v3825
        %v3827 = vpop.f32.mrb[0].mxu0
        %3828 = vmatprep.mubr.bf16.mxu0 0
        %3829 = vmatmul.mubr.bf16.gmra.mrb[0].mxu0 %v3503
        %v3830 = vpop.f32.mrb[0].mxu0
        %v3831 = vadd.f32 0.0, %v3830
        %v3832 = vpop.f32.mrb[0].mxu0
        %v3833 = vpop.f32.mrb[0].mxu0
        %v3834 = vadd.f32 0.0, %v3833
        %v3835 = vpop.f32.mrb[0].mxu0
        %3836 = vmatprep.mubr.bf16.mxu0 0
        %3837 = vmatmul.mubr.bf16.gmra.mrb[0].mxu0 %v3504
        %v3838 = vpop.f32.mrb[0].mxu0
        %v3839 = vadd.f32 0.0, %v3838
        %v3840 = vpop.f32.mrb[0].mxu0
        %v3841 = vpop.f32.mrb[0].mxu0
        %v3842 = vadd.f32 0.0, %v3841
        %v3843 = vpop.f32.mrb[0].mxu0
        %3844 = vmatprep.mubr.bf16.mxu0 0
        %3845 = vmatmul.mubr.bf16.gmra.mrb[0].mxu0 %v3505
        %v3846 = vpop.f32.mrb[0].mxu0
        %v3847 = vadd.f32 0.0, %v3846
        %v3848 = vpop.f32.mrb[0].mxu0
        %v3849 = vpop.f32.mrb[0].mxu0
        %v3850 = vadd.f32 0.0, %v3849
        %v3851 = vpop.f32.mrb[0].mxu0
        %3852 = vmatprep.mubr.bf16.mxu0 0
        %3853 = vmatmul.mubr.bf16.gmra.mrb[0].mxu0 %v3506
        %v3854 = vpop.f32.mrb[0].mxu0
        %v3855 = vadd.f32 0.0, %v3854
        %v3856 = vpop.f32.mrb[0].mxu0
        %v3857 = vpop.f32.mrb[0].mxu0
        %v3858 = vadd.f32 0.0, %v3857
        %v3859 = vpop.f32.mrb[0].mxu0
        %3860 = vdwg.mxu0
        %v3861 = vld [vmem:[#allocation3] sm:$0xff]
        %v3862 = vld [vmem:[#allocation3 + $0x8] sm:$0xff]
        %v3863 = vld [vmem:[#allocation3 + $0x10] sm:$0xff]
        %v3864 = vld [vmem:[#allocation3 + $0x18] sm:$0xff]
        %v3865 = vld [vmem:[#allocation3 + $0x20] sm:$0xff]
        %v3866 = vld [vmem:[#allocation3 + $0x28] sm:$0xff]
        %v3867 = vld [vmem:[#allocation3 + $0x30] sm:$0xff]
        %v3868 = vld [vmem:[#allocation3 + $0x38] sm:$0xff]
        %v3869 = vld [vmem:[#allocation3 + $0x40] sm:$0xff]
        %v3870 = vld [vmem:[#allocation3 + $0x48] sm:$0xff]
        %v3871 = vld [vmem:[#allocation3 + $0x50] sm:$0xff]
        %v3872 = vld [vmem:[#allocation3 + $0x58] sm:$0xff]
        %v3873 = vld [vmem:[#allocation3 + $0x60] sm:$0xff]
        %v3874 = vld [vmem:[#allocation3 + $0x68] sm:$0xff]
        %v3875 = vld [vmem:[#allocation3 + $0x70] sm:$0xff]
        %v3876 = vld [vmem:[#allocation3 + $0x78] sm:$0xff]
        %v3877 = vld [vmem:[#allocation3 + $0x80] sm:$0xff]
        %v3878 = vld [vmem:[#allocation3 + $0x88] sm:$0xff]
        %v3879 = vld [vmem:[#allocation3 + $0x90] sm:$0xff]
        %v3880 = vld [vmem:[#allocation3 + $0x98] sm:$0xff]
        %v3881 = vld [vmem:[#allocation3 + $0xa0] sm:$0xff]
        %v3882 = vld [vmem:[#allocation3 + $0xa8] sm:$0xff]
        %v3883 = vld [vmem:[#allocation3 + $0xb0] sm:$0xff]
        %v3884 = vld [vmem:[#allocation3 + $0xb8] sm:$0xff]
        %v3885 = vld [vmem:[#allocation3 + $0xc0] sm:$0xff]
        %v3886 = vld [vmem:[#allocation3 + $0xc8] sm:$0xff]
        %v3887 = vld [vmem:[#allocation3 + $0xd0] sm:$0xff]
        %v3888 = vld [vmem:[#allocation3 + $0xd8] sm:$0xff]
        %v3889 = vld [vmem:[#allocation3 + $0xe0] sm:$0xff]
        %v3890 = vld [vmem:[#allocation3 + $0xe8] sm:$0xff]
        %v3891 = vld [vmem:[#allocation3 + $0xf0] sm:$0xff]
        %v3892 = vld [vmem:[#allocation3 + $0xf8] sm:$0xff]
        %v3893 = vld [vmem:[#allocation3 + $0x100] sm:$0xff]
        %v3894 = vld [vmem:[#allocation3 + $0x108] sm:$0xff]
        %v3895 = vld [vmem:[#allocation3 + $0x110] sm:$0xff]
        %v3896 = vld [vmem:[#allocation3 + $0x118] sm:$0xff]
        %v3897 = vld [vmem:[#allocation3 + $0x120] sm:$0xff]
        %v3898 = vld [vmem:[#allocation3 + $0x128] sm:$0xff]
        %v3899 = vld [vmem:[#allocation3 + $0x130] sm:$0xff]
        %v3900 = vld [vmem:[#allocation3 + $0x138] sm:$0xff]
        %v3901 = vld [vmem:[#allocation3 + $0x140] sm:$0xff]
        %v3902 = vld [vmem:[#allocation3 + $0x148] sm:$0xff]
        %v3903 = vld [vmem:[#allocation3 + $0x150] sm:$0xff]
        %v3904 = vld [vmem:[#allocation3 + $0x158] sm:$0xff]
        %v3905 = vld [vmem:[#allocation3 + $0x160] sm:$0xff]
        %v3906 = vld [vmem:[#allocation3 + $0x168] sm:$0xff]
        %v3907 = vld [vmem:[#allocation3 + $0x170] sm:$0xff]
        %v3908 = vld [vmem:[#allocation3 + $0x178] sm:$0xff]
        %v3909 = vld [vmem:[#allocation3 + $0x180] sm:$0xff]
        %v3910 = vld [vmem:[#allocation3 + $0x188] sm:$0xff]
        %v3911 = vld [vmem:[#allocation3 + $0x190] sm:$0xff]
        %v3912 = vld [vmem:[#allocation3 + $0x198] sm:$0xff]
        %v3913 = vld [vmem:[#allocation3 + $0x1a0] sm:$0xff]
        %v3914 = vld [vmem:[#allocation3 + $0x1a8] sm:$0xff]
        %v3915 = vld [vmem:[#allocation3 + $0x1b0] sm:$0xff]
        %v3916 = vld [vmem:[#allocation3 + $0x1b8] sm:$0xff]
        %v3917 = vld [vmem:[#allocation3 + $0x1c0] sm:$0xff]
        %v3918 = vld [vmem:[#allocation3 + $0x1c8] sm:$0xff]
        %v3919 = vld [vmem:[#allocation3 + $0x1d0] sm:$0xff]
        %v3920 = vld [vmem:[#allocation3 + $0x1d8] sm:$0xff]
        %v3921 = vld [vmem:[#allocation3 + $0x1e0] sm:$0xff]
        %v3922 = vld [vmem:[#allocation3 + $0x1e8] sm:$0xff]
        %v3923 = vld [vmem:[#allocation3 + $0x1f0] sm:$0xff]
        %v3924 = vld [vmem:[#allocation3 + $0x1f8] sm:$0xff]
        %v3925 = vadd.f32 %v3861, %v3607
        %v3926 = vadd.f32 %v3862, %v3610
        %v3927 = vadd.f32 %v3863, %v3615
        %v3928 = vadd.f32 %v3864, %v3618
        %v3929 = vadd.f32 %v3865, %v3623
        %v3930 = vadd.f32 %v3866, %v3626
        %v3931 = vadd.f32 %v3867, %v3631
        %v3932 = vadd.f32 %v3868, %v3634
        %v3933 = vadd.f32 %v3869, %v3639
        %v3934 = vadd.f32 %v3870, %v3642
        %v3935 = vadd.f32 %v3871, %v3647
        %v3936 = vadd.f32 %v3872, %v3650
        %v3937 = vadd.f32 %v3873, %v3655
        %v3938 = vadd.f32 %v3874, %v3658
        %v3939 = vadd.f32 %v3875, %v3663
        %v3940 = vadd.f32 %v3876, %v3666
        %v3941 = vadd.f32 %v3877, %v3671
        %v3942 = vadd.f32 %v3878, %v3674
        %v3943 = vadd.f32 %v3879, %v3679
        %v3944 = vadd.f32 %v3880, %v3682
        %v3945 = vadd.f32 %v3881, %v3687
        %v3946 = vadd.f32 %v3882, %v3690
        %v3947 = vadd.f32 %v3883, %v3695
        %v3948 = vadd.f32 %v3884, %v3698
        %v3949 = vadd.f32 %v3885, %v3703
        %v3950 = vadd.f32 %v3886, %v3706
        %v3951 = vadd.f32 %v3887, %v3711
        %v3952 = vadd.f32 %v3888, %v3714
        %v3953 = vadd.f32 %v3889, %v3719
        %v3954 = vadd.f32 %v3890, %v3722
        %v3955 = vadd.f32 %v3891, %v3727
        %v3956 = vadd.f32 %v3892, %v3730
        %v3957 = vadd.f32 %v3893, %v3735
        %v3958 = vadd.f32 %v3894, %v3738
        %v3959 = vadd.f32 %v3895, %v3743
        %v3960 = vadd.f32 %v3896, %v3746
        %v3961 = vadd.f32 %v3897, %v3751
        %v3962 = vadd.f32 %v3898, %v3754
        %v3963 = vadd.f32 %v3899, %v3759
        %v3964 = vadd.f32 %v3900, %v3762
        %v3965 = vadd.f32 %v3901, %v3767
        %v3966 = vadd.f32 %v3902, %v3770
        %v3967 = vadd.f32 %v3903, %v3775
        %v3968 = vadd.f32 %v3904, %v3778
        %v3969 = vadd.f32 %v3905, %v3783
        %v3970 = vadd.f32 %v3906, %v3786
        %v3971 = vadd.f32 %v3907, %v3791
        %v3972 = vadd.f32 %v3908, %v3794
        %v3973 = vadd.f32 %v3909, %v3799
        %v3974 = vadd.f32 %v3910, %v3802
        %v3975 = vadd.f32 %v3911, %v3807
        %v3976 = vadd.f32 %v3912, %v3810
        %v3977 = vadd.f32 %v3913, %v3815
        %v3978 = vadd.f32 %v3914, %v3818
        %v3979 = vadd.f32 %v3915, %v3823
        %v3980 = vadd.f32 %v3916, %v3826
        %v3981 = vadd.f32 %v3917, %v3831
        %v3982 = vadd.f32 %v3918, %v3834
        %v3983 = vadd.f32 %v3919, %v3839
        %v3984 = vadd.f32 %v3920, %v3842
        %v3985 = vadd.f32 %v3921, %v3847
        %v3986 = vadd.f32 %v3922, %v3850
        %v3987 = vadd.f32 %v3923, %v3855
        %v3988 = vadd.f32 %v3924, %v3858
        %3989 = vst [vmem:[#allocation3] sm:$0xff] %v3925
        %3990 = vst [vmem:[#allocation3 + $0x8] sm:$0xff] %v3926
        %3991 = vst [vmem:[#allocation3 + $0x10] sm:$0xff] %v3927
        %3992 = vst [vmem:[#allocation3 + $0x18] sm:$0xff] %v3928
        %3993 = vst [vmem:[#allocation3 + $0x20] sm:$0xff] %v3929
        %3994 = vst [vmem:[#allocation3 + $0x28] sm:$0xff] %v3930
        %3995 = vst [vmem:[#allocation3 + $0x30] sm:$0xff] %v3931
        %3996 = vst [vmem:[#allocation3 + $0x38] sm:$0xff] %v3932
        %3997 = vst [vmem:[#allocation3 + $0x40] sm:$0xff] %v3933
        %3998 = vst [vmem:[#allocation3 + $0x48] sm:$0xff] %v3934
        %3999 = vst [vmem:[#allocation3 + $0x50] sm:$0xff] %v3935
        %4000 = vst [vmem:[#allocation3 + $0x58] sm:$0xff] %v3936
        %4001 = vst [vmem:[#allocation3 + $0x60] sm:$0xff] %v3937
        %4002 = vst [vmem:[#allocation3 + $0x68] sm:$0xff] %v3938
        %4003 = vst [vmem:[#allocation3 + $0x70] sm:$0xff] %v3939
        %4004 = vst [vmem:[#allocation3 + $0x78] sm:$0xff] %v3940
        %4005 = vst [vmem:[#allocation3 + $0x80] sm:$0xff] %v3941
        %4006 = vst [vmem:[#allocation3 + $0x88] sm:$0xff] %v3942
        %4007 = vst [vmem:[#allocation3 + $0x90] sm:$0xff] %v3943
        %4008 = vst [vmem:[#allocation3 + $0x98] sm:$0xff] %v3944
        %4009 = vst [vmem:[#allocation3 + $0xa0] sm:$0xff] %v3945
        %4010 = vst [vmem:[#allocation3 + $0xa8] sm:$0xff] %v3946
        %4011 = vst [vmem:[#allocation3 + $0xb0] sm:$0xff] %v3947
        %4012 = vst [vmem:[#allocation3 + $0xb8] sm:$0xff] %v3948
        %4013 = vst [vmem:[#allocation3 + $0xc0] sm:$0xff] %v3949
        %4014 = vst [vmem:[#allocation3 + $0xc8] sm:$0xff] %v3950
        %4015 = vst [vmem:[#allocation3 + $0xd0] sm:$0xff] %v3951
        %4016 = vst [vmem:[#allocation3 + $0xd8] sm:$0xff] %v3952
        %4017 = vst [vmem:[#allocation3 + $0xe0] sm:$0xff] %v3953
        %4018 = vst [vmem:[#allocation3 + $0xe8] sm:$0xff] %v3954
        %4019 = vst [vmem:[#allocation3 + $0xf0] sm:$0xff] %v3955
        %4020 = vst [vmem:[#allocation3 + $0xf8] sm:$0xff] %v3956
        %4021 = vst [vmem:[#allocation3 + $0x100] sm:$0xff] %v3957
        %4022 = vst [vmem:[#allocation3 + $0x108] sm:$0xff] %v3958
        %4023 = vst [vmem:[#allocation3 + $0x110] sm:$0xff] %v3959
        %4024 = vst [vmem:[#allocation3 + $0x118] sm:$0xff] %v3960
        %4025 = vst [vmem:[#allocation3 + $0x120] sm:$0xff] %v3961
        %4026 = vst [vmem:[#allocation3 + $0x128] sm:$0xff] %v3962
        %4027 = vst [vmem:[#allocation3 + $0x130] sm:$0xff] %v3963
        %4028 = vst [vmem:[#allocation3 + $0x138] sm:$0xff] %v3964
        %4029 = vst [vmem:[#allocation3 + $0x140] sm:$0xff] %v3965
        %4030 = vst [vmem:[#allocation3 + $0x148] sm:$0xff] %v3966
        %4031 = vst [vmem:[#allocation3 + $0x150] sm:$0xff] %v3967
        %4032 = vst [vmem:[#allocation3 + $0x158] sm:$0xff] %v3968
        %4033 = vst [vmem:[#allocation3 + $0x160] sm:$0xff] %v3969
        %4034 = vst [vmem:[#allocation3 + $0x168] sm:$0xff] %v3970
        %4035 = vst [vmem:[#allocation3 + $0x170] sm:$0xff] %v3971
        %4036 = vst [vmem:[#allocation3 + $0x178] sm:$0xff] %v3972
        %4037 = vst [vmem:[#allocation3 + $0x180] sm:$0xff] %v3973
        %4038 = vst [vmem:[#allocation3 + $0x188] sm:$0xff] %v3974
        %4039 = vst [vmem:[#allocation3 + $0x190] sm:$0xff] %v3975
        %4040 = vst [vmem:[#allocation3 + $0x198] sm:$0xff] %v3976
        %4041 = vst [vmem:[#allocation3 + $0x1a0] sm:$0xff] %v3977
        %4042 = vst [vmem:[#allocation3 + $0x1a8] sm:$0xff] %v3978
        %4043 = vst [vmem:[#allocation3 + $0x1b0] sm:$0xff] %v3979
        %4044 = vst [vmem:[#allocation3 + $0x1b8] sm:$0xff] %v3980
        %4045 = vst [vmem:[#allocation3 + $0x1c0] sm:$0xff] %v3981
        %4046 = vst [vmem:[#allocation3 + $0x1c8] sm:$0xff] %v3982
        %4047 = vst [vmem:[#allocation3 + $0x1d0] sm:$0xff] %v3983
        %4048 = vst [vmem:[#allocation3 + $0x1d8] sm:$0xff] %v3984
        %4049 = vst [vmem:[#allocation3 + $0x1e0] sm:$0xff] %v3985
        %4050 = vst [vmem:[#allocation3 + $0x1e8] sm:$0xff] %v3986
        %4051 = vst [vmem:[#allocation3 + $0x1f0] sm:$0xff] %v3987
        %4052 = vst [vmem:[#allocation3 + $0x1f8] sm:$0xff] %v3988
        %v4053 = vrot.slane %v2610, 1
        %v4054 = vrot.slane %v2614, 1
        %v4055 = vrot.slane %v2618, 1
        %v4056 = vrot.slane %v2622, 1
        %v4057 = vrot.slane %v2626, 1
        %v4058 = vrot.slane %v2630, 1
        %v4059 = vrot.slane %v2634, 1
        %v4060 = vrot.slane %v2638, 1
        %v4061 = vrot.slane %v2642, 1
        %v4062 = vrot.slane %v2646, 1
        %v4063 = vrot.slane %v2650, 1
        %v4064 = vrot.slane %v2654, 1
        %v4065 = vrot.slane %v2658, 1
        %v4066 = vrot.slane %v2662, 1
        %v4067 = vrot.slane %v2666, 1
        %v4068 = vrot.slane %v2670, 1
        %v4069 = vrot.slane %v2674, 1
        %v4070 = vrot.slane %v2678, 1
        %v4071 = vrot.slane %v2682, 1
        %v4072 = vrot.slane %v2686, 1
        %v4073 = vrot.slane %v2690, 1
        %v4074 = vrot.slane %v2694, 1
        %v4075 = vrot.slane %v2698, 1
        %v4076 = vrot.slane %v2702, 1
        %v4077 = vrot.slane %v2706, 1
        %v4078 = vrot.slane %v2710, 1
        %v4079 = vrot.slane %v2714, 1
        %v4080 = vrot.slane %v2718, 1
        %v4081 = vrot.slane %v2722, 1
        %v4082 = vrot.slane %v2726, 1
        %v4083 = vrot.slane %v2730, 1
        %v4084 = vrot.slane %v2734, 1
        %v4085 = vrot.slane %v2611, 1
        %v4086 = vrot.slane %v2615, 1
        %v4087 = vrot.slane %v2619, 1
        %v4088 = vrot.slane %v2623, 1
        %v4089 = vrot.slane %v2627, 1
        %v4090 = vrot.slane %v2631, 1
        %v4091 = vrot.slane %v2635, 1
        %v4092 = vrot.slane %v2639, 1
        %v4093 = vrot.slane %v2643, 1
        %v4094 = vrot.slane %v2647, 1
        %v4095 = vrot.slane %v2651, 1
        %v4096 = vrot.slane %v2655, 1
        %v4097 = vrot.slane %v2659, 1
        %v4098 = vrot.slane %v2663, 1
        %v4099 = vrot.slane %v2667, 1
        %v4100 = vrot.slane %v2671, 1
        %v4101 = vrot.slane %v2675, 1
        %v4102 = vrot.slane %v2679, 1
        %v4103 = vrot.slane %v2683, 1
        %v4104 = vrot.slane %v2687, 1
        %v4105 = vrot.slane %v2691, 1
        %v4106 = vrot.slane %v2695, 1
        %v4107 = vrot.slane %v2699, 1
        %v4108 = vrot.slane %v2703, 1
        %v4109 = vrot.slane %v2707, 1
        %v4110 = vrot.slane %v2711, 1
        %v4111 = vrot.slane %v2715, 1
        %v4112 = vrot.slane %v2719, 1
        %v4113 = vrot.slane %v2723, 1
        %v4114 = vrot.slane %v2727, 1
        %v4115 = vrot.slane %v2731, 1
        %v4116 = vrot.slane %v2735, 1
        %v4117 = vrot.slane %v2612, 1
        %v4118 = vrot.slane %v2616, 1
        %v4119 = vrot.slane %v2620, 1
        %v4120 = vrot.slane %v2624, 1
        %v4121 = vrot.slane %v2628, 1
        %v4122 = vrot.slane %v2632, 1
        %v4123 = vrot.slane %v2636, 1
        %v4124 = vrot.slane %v2640, 1
        %v4125 = vrot.slane %v2644, 1
        %v4126 = vrot.slane %v2648, 1
        %v4127 = vrot.slane %v2652, 1
        %v4128 = vrot.slane %v2656, 1
        %v4129 = vrot.slane %v2660, 1
        %v4130 = vrot.slane %v2664, 1
        %v4131 = vrot.slane %v2668, 1
        %v4132 = vrot.slane %v2672, 1
        %v4133 = vrot.slane %v2676, 1
        %v4134 = vrot.slane %v2680, 1
        %v4135 = vrot.slane %v2684, 1
        %v4136 = vrot.slane %v2688, 1
        %v4137 = vrot.slane %v2692, 1
        %v4138 = vrot.slane %v2696, 1
        %v4139 = vrot.slane %v2700, 1
        %v4140 = vrot.slane %v2704, 1
        %v4141 = vrot.slane %v2708, 1
        %v4142 = vrot.slane %v2712, 1
        %v4143 = vrot.slane %v2716, 1
        %v4144 = vrot.slane %v2720, 1
        %v4145 = vrot.slane %v2724, 1
        %v4146 = vrot.slane %v2728, 1
        %v4147 = vrot.slane %v2732, 1
        %v4148 = vrot.slane %v2736, 1
        %v4149 = vsel %vm1965, %v4085, %v4117
        %v4150 = vsel %vm1965, %v4086, %v4118
        %v4151 = vsel %vm1965, %v4087, %v4119
        %v4152 = vsel %vm1965, %v4088, %v4120
        %v4153 = vsel %vm1965, %v4089, %v4121
        %v4154 = vsel %vm1965, %v4090, %v4122
        %v4155 = vsel %vm1965, %v4091, %v4123
        %v4156 = vsel %vm1965, %v4092, %v4124
        %v4157 = vsel %vm1965, %v4093, %v4125
        %v4158 = vsel %vm1965, %v4094, %v4126
        %v4159 = vsel %vm1965, %v4095, %v4127
        %v4160 = vsel %vm1965, %v4096, %v4128
        %v4161 = vsel %vm1965, %v4097, %v4129
        %v4162 = vsel %vm1965, %v4098, %v4130
        %v4163 = vsel %vm1965, %v4099, %v4131
        %v4164 = vsel %vm1965, %v4100, %v4132
        %v4165 = vsel %vm1965, %v4101, %v4133
        %v4166 = vsel %vm1965, %v4102, %v4134
        %v4167 = vsel %vm1965, %v4103, %v4135
        %v4168 = vsel %vm1965, %v4104, %v4136
        %v4169 = vsel %vm1965, %v4105, %v4137
        %v4170 = vsel %vm1965, %v4106, %v4138
        %v4171 = vsel %vm1965, %v4107, %v4139
        %v4172 = vsel %vm1965, %v4108, %v4140
        %v4173 = vsel %vm1965, %v4109, %v4141
        %v4174 = vsel %vm1965, %v4110, %v4142
        %v4175 = vsel %vm1965, %v4111, %v4143
        %v4176 = vsel %vm1965, %v4112, %v4144
        %v4177 = vsel %vm1965, %v4113, %v4145
        %v4178 = vsel %vm1965, %v4114, %v4146
        %v4179 = vsel %vm1965, %v4115, %v4147
        %v4180 = vsel %vm1965, %v4116, %v4148
        %v4181 = vsel %vm1965, %v4053, %v4085
        %v4182 = vsel %vm1965, %v4054, %v4086
        %v4183 = vsel %vm1965, %v4055, %v4087
        %v4184 = vsel %vm1965, %v4056, %v4088
        %v4185 = vsel %vm1965, %v4057, %v4089
        %v4186 = vsel %vm1965, %v4058, %v4090
        %v4187 = vsel %vm1965, %v4059, %v4091
        %v4188 = vsel %vm1965, %v4060, %v4092
        %v4189 = vsel %vm1965, %v4061, %v4093
        %v4190 = vsel %vm1965, %v4062, %v4094
        %v4191 = vsel %vm1965, %v4063, %v4095
        %v4192 = vsel %vm1965, %v4064, %v4096
        %v4193 = vsel %vm1965, %v4065, %v4097
        %v4194 = vsel %vm1965, %v4066, %v4098
        %v4195 = vsel %vm1965, %v4067, %v4099
        %v4196 = vsel %vm1965, %v4068, %v4100
        %v4197 = vsel %vm1965, %v4069, %v4101
        %v4198 = vsel %vm1965, %v4070, %v4102
        %v4199 = vsel %vm1965, %v4071, %v4103
        %v4200 = vsel %vm1965, %v4072, %v4104
        %v4201 = vsel %vm1965, %v4073, %v4105
        %v4202 = vsel %vm1965, %v4074, %v4106
        %v4203 = vsel %vm1965, %v4075, %v4107
        %v4204 = vsel %vm1965, %v4076, %v4108
        %v4205 = vsel %vm1965, %v4077, %v4109
        %v4206 = vsel %vm1965, %v4078, %v4110
        %v4207 = vsel %vm1965, %v4079, %v4111
        %v4208 = vsel %vm1965, %v4080, %v4112
        %v4209 = vsel %vm1965, %v4081, %v4113
        %v4210 = vsel %vm1965, %v4082, %v4114
        %v4211 = vsel %vm1965, %v4083, %v4115
        %v4212 = vsel %vm1965, %v4084, %v4116
        %v4213 = vpack.c.bf16 %v4149, %v4181
        %v4214 = vpack.c.bf16 %v4150, %v4182
        %v4215 = vpack.c.bf16 %v4151, %v4183
        %v4216 = vpack.c.bf16 %v4152, %v4184
        %v4217 = vpack.c.bf16 %v4153, %v4185
        %v4218 = vpack.c.bf16 %v4154, %v4186
        %v4219 = vpack.c.bf16 %v4155, %v4187
        %v4220 = vpack.c.bf16 %v4156, %v4188
        %v4221 = vpack.c.bf16 %v4157, %v4189
        %v4222 = vpack.c.bf16 %v4158, %v4190
        %v4223 = vpack.c.bf16 %v4159, %v4191
        %v4224 = vpack.c.bf16 %v4160, %v4192
        %v4225 = vpack.c.bf16 %v4161, %v4193
        %v4226 = vpack.c.bf16 %v4162, %v4194
        %v4227 = vpack.c.bf16 %v4163, %v4195
        %v4228 = vpack.c.bf16 %v4164, %v4196
        %v4229 = vpack.c.bf16 %v4165, %v4197
        %v4230 = vpack.c.bf16 %v4166, %v4198
        %v4231 = vpack.c.bf16 %v4167, %v4199
        %v4232 = vpack.c.bf16 %v4168, %v4200
        %v4233 = vpack.c.bf16 %v4169, %v4201
        %v4234 = vpack.c.bf16 %v4170, %v4202
        %v4235 = vpack.c.bf16 %v4171, %v4203
        %v4236 = vpack.c.bf16 %v4172, %v4204
        %v4237 = vpack.c.bf16 %v4173, %v4205
        %v4238 = vpack.c.bf16 %v4174, %v4206
        %v4239 = vpack.c.bf16 %v4175, %v4207
        %v4240 = vpack.c.bf16 %v4176, %v4208
        %v4241 = vpack.c.bf16 %v4177, %v4209
        %v4242 = vpack.c.bf16 %v4178, %v4210
        %v4243 = vpack.c.bf16 %v4179, %v4211
        %v4244 = vpack.c.bf16 %v4180, %v4212
        %s4245 = scalar_lea.vmem %s232, 320 [#allocation4]
        %v4246 = vld [vmem:[%s4245] sm:$0xf]
        %v4247 = vld [vmem:[%s4245 + $0x4] sm:$0xf]
        %v4248 = vld [vmem:[%s4245 + $0x8] sm:$0xf]
        %v4249 = vld [vmem:[%s4245 + $0xc] sm:$0xf]
        %v4250 = vld [vmem:[%s4245 + $0x10] sm:$0xf]
        %v4251 = vld [vmem:[%s4245 + $0x14] sm:$0xf]
        %v4252 = vld [vmem:[%s4245 + $0x18] sm:$0xf]
        %v4253 = vld [vmem:[%s4245 + $0x1c] sm:$0xf]
        %v4254 = vld [vmem:[%s4245 + $0x20] sm:$0xf]
        %v4255 = vld [vmem:[%s4245 + $0x24] sm:$0xf]
        %v4256 = vld [vmem:[%s4245 + $0x28] sm:$0xf]
        %v4257 = vld [vmem:[%s4245 + $0x2c] sm:$0xf]
        %v4258 = vld [vmem:[%s4245 + $0x30] sm:$0xf]
        %v4259 = vld [vmem:[%s4245 + $0x34] sm:$0xf]
        %v4260 = vld [vmem:[%s4245 + $0x38] sm:$0xf]
        %v4261 = vld [vmem:[%s4245 + $0x3c] sm:$0xf]
        %v4278 = vunpack.c.l.b16 %v4246
        %v4279 = vunpack.c.l.b16 %v4247
        %v4280 = vunpack.c.l.b16 %v4248
        %v4281 = vunpack.c.l.b16 %v4249
        %v4282 = vunpack.c.l.b16 %v4250
        %v4283 = vunpack.c.l.b16 %v4251
        %v4284 = vunpack.c.l.b16 %v4252
        %v4285 = vunpack.c.l.b16 %v4253
        %v4286 = vunpack.c.l.b16 %v4254
        %v4287 = vunpack.c.l.b16 %v4255
        %v4288 = vunpack.c.l.b16 %v4256
        %v4289 = vunpack.c.l.b16 %v4257
        %v4290 = vunpack.c.l.b16 %v4258
        %v4291 = vunpack.c.l.b16 %v4259
        %v4292 = vunpack.c.l.b16 %v4260
        %v4293 = vunpack.c.l.b16 %v4261
        %v4294 = vpack.c.b16 %v4279, %v4278
        %v4295 = vpack.c.b16 %v4281, %v4280
        %v4296 = vpack.c.b16 %v4283, %v4282
        %v4297 = vpack.c.b16 %v4285, %v4284
        %v4298 = vpack.c.b16 %v4287, %v4286
        %v4299 = vpack.c.b16 %v4289, %v4288
        %v4300 = vpack.c.b16 %v4291, %v4290
        %v4301 = vpack.c.b16 %v4293, %v4292
        %4310 = vmatprep.subr.bf16.mxu0 0
        %4311 = vmatpush1.bf16.msra.mxu0 %v4294
        %4312 = vmatprep.subr.bf16.mxu0 0
        %4313 = vmatpush1.bf16.msra.mxu0 %v4295
        %4314 = vmatprep.subr.bf16.mxu0 0
        %4315 = vmatpush1.bf16.msra.mxu0 %v4296
        %4316 = vmatprep.subr.bf16.mxu0 0
        %4317 = vmatpush1.bf16.msra.mxu0 %v4297
        %4318 = vmatprep.subr.bf16.mxu0 0
        %4319 = vmatpush1.bf16.msra.mxu0 %v4298
        %4320 = vmatprep.subr.bf16.mxu0 0
        %4321 = vmatpush1.bf16.msra.mxu0 %v4299
        %4322 = vmatprep.subr.bf16.mxu0 0
        %4323 = vmatpush1.bf16.msra.mxu0 %v4300
        %4324 = vmatprep.subr.bf16.mxu0 0
        %4325 = vmatpush1.bf16.msra.mxu0 %v4301
        %4326 = vmatprep.subr.bf16.mxu0 0
        %4327 = vmatpush1.bf16.msra.mxu0 0
        %4328 = vmatprep.subr.bf16.mxu0 0
        %4329 = vmatpush1.bf16.msra.mxu0 0
        %4330 = vmatprep.subr.bf16.mxu0 0
        %4331 = vmatpush1.bf16.msra.mxu0 0
        %4332 = vmatprep.subr.bf16.mxu0 0
        %4333 = vmatpush1.bf16.msra.mxu0 0
        %4334 = vmatprep.subr.bf16.mxu0 0
        %4335 = vmatpush1.bf16.msra.mxu0 0
        %4336 = vmatprep.subr.bf16.mxu0 0
        %4337 = vmatpush1.bf16.msra.mxu0 0
        %4338 = vmatprep.subr.bf16.mxu0 0
        %4339 = vmatpush1.bf16.msra.mxu0 0
        %4340 = vmatprep.subr.bf16.mxu0 0
        %4341 = vmatpush1.bf16.msra.mxu0 0
        %4342 = vmatprep.mubr.bf16.mxu0 0
        %4343 = vmatmul.mubr.bf16.gmra.mrb[0].mxu0 %v4213
        %v4344 = vpop.f32.mrb[0].mxu0
        %v4345 = vadd.f32 0.0, %v4344
        %v4346 = vpop.f32.mrb[0].mxu0
        %v4347 = vpop.f32.mrb[0].mxu0
        %v4348 = vadd.f32 0.0, %v4347
        %v4349 = vpop.f32.mrb[0].mxu0
        %4350 = vmatprep.mubr.bf16.mxu0 0
        %4351 = vmatmul.mubr.bf16.gmra.mrb[0].mxu0 %v4214
        %v4352 = vpop.f32.mrb[0].mxu0
        %v4353 = vadd.f32 0.0, %v4352
        %v4354 = vpop.f32.mrb[0].mxu0
        %v4355 = vpop.f32.mrb[0].mxu0
        %v4356 = vadd.f32 0.0, %v4355
        %v4357 = vpop.f32.mrb[0].mxu0
        %4358 = vmatprep.mubr.bf16.mxu0 0
        %4359 = vmatmul.mubr.bf16.gmra.mrb[0].mxu0 %v4215
        %v4360 = vpop.f32.mrb[0].mxu0
        %v4361 = vadd.f32 0.0, %v4360
        %v4362 = vpop.f32.mrb[0].mxu0
        %v4363 = vpop.f32.mrb[0].mxu0
        %v4364 = vadd.f32 0.0, %v4363
        %v4365 = vpop.f32.mrb[0].mxu0
        %4366 = vmatprep.mubr.bf16.mxu0 0
        %4367 = vmatmul.mubr.bf16.gmra.mrb[0].mxu0 %v4216
        %v4368 = vpop.f32.mrb[0].mxu0
        %v4369 = vadd.f32 0.0, %v4368
        %v4370 = vpop.f32.mrb[0].mxu0
        %v4371 = vpop.f32.mrb[0].mxu0
        %v4372 = vadd.f32 0.0, %v4371
        %v4373 = vpop.f32.mrb[0].mxu0
        %4374 = vmatprep.mubr.bf16.mxu0 0
        %4375 = vmatmul.mubr.bf16.gmra.mrb[0].mxu0 %v4217
        %v4376 = vpop.f32.mrb[0].mxu0
        %v4377 = vadd.f32 0.0, %v4376
        %v4378 = vpop.f32.mrb[0].mxu0
        %v4379 = vpop.f32.mrb[0].mxu0
        %v4380 = vadd.f32 0.0, %v4379
        %v4381 = vpop.f32.mrb[0].mxu0
        %4382 = vmatprep.mubr.bf16.mxu0 0
        %4383 = vmatmul.mubr.bf16.gmra.mrb[0].mxu0 %v4218
        %v4384 = vpop.f32.mrb[0].mxu0
        %v4385 = vadd.f32 0.0, %v4384
        %v4386 = vpop.f32.mrb[0].mxu0
        %v4387 = vpop.f32.mrb[0].mxu0
        %v4388 = vadd.f32 0.0, %v4387
        %v4389 = vpop.f32.mrb[0].mxu0
        %4390 = vmatprep.mubr.bf16.mxu0 0
        %4391 = vmatmul.mubr.bf16.gmra.mrb[0].mxu0 %v4219
        %v4392 = vpop.f32.mrb[0].mxu0
        %v4393 = vadd.f32 0.0, %v4392
        %v4394 = vpop.f32.mrb[0].mxu0
        %v4395 = vpop.f32.mrb[0].mxu0
        %v4396 = vadd.f32 0.0, %v4395
        %v4397 = vpop.f32.mrb[0].mxu0
        %4398 = vmatprep.mubr.bf16.mxu0 0
        %4399 = vmatmul.mubr.bf16.gmra.mrb[0].mxu0 %v4220
        %v4400 = vpop.f32.mrb[0].mxu0
        %v4401 = vadd.f32 0.0, %v4400
        %v4402 = vpop.f32.mrb[0].mxu0
        %v4403 = vpop.f32.mrb[0].mxu0
        %v4404 = vadd.f32 0.0, %v4403
        %v4405 = vpop.f32.mrb[0].mxu0
        %4406 = vmatprep.mubr.bf16.mxu0 0
        %4407 = vmatmul.mubr.bf16.gmra.mrb[0].mxu0 %v4221
        %v4408 = vpop.f32.mrb[0].mxu0
        %v4409 = vadd.f32 0.0, %v4408
        %v4410 = vpop.f32.mrb[0].mxu0
        %v4411 = vpop.f32.mrb[0].mxu0
        %v4412 = vadd.f32 0.0, %v4411
        %v4413 = vpop.f32.mrb[0].mxu0
        %4414 = vmatprep.mubr.bf16.mxu0 0
        %4415 = vmatmul.mubr.bf16.gmra.mrb[0].mxu0 %v4222
        %v4416 = vpop.f32.mrb[0].mxu0
        %v4417 = vadd.f32 0.0, %v4416
        %v4418 = vpop.f32.mrb[0].mxu0
        %v4419 = vpop.f32.mrb[0].mxu0
        %v4420 = vadd.f32 0.0, %v4419
        %v4421 = vpop.f32.mrb[0].mxu0
        %4422 = vmatprep.mubr.bf16.mxu0 0
        %4423 = vmatmul.mubr.bf16.gmra.mrb[0].mxu0 %v4223
        %v4424 = vpop.f32.mrb[0].mxu0
        %v4425 = vadd.f32 0.0, %v4424
        %v4426 = vpop.f32.mrb[0].mxu0
        %v4427 = vpop.f32.mrb[0].mxu0
        %v4428 = vadd.f32 0.0, %v4427
        %v4429 = vpop.f32.mrb[0].mxu0
        %4430 = vmatprep.mubr.bf16.mxu0 0
        %4431 = vmatmul.mubr.bf16.gmra.mrb[0].mxu0 %v4224
        %v4432 = vpop.f32.mrb[0].mxu0
        %v4433 = vadd.f32 0.0, %v4432
        %v4434 = vpop.f32.mrb[0].mxu0
        %v4435 = vpop.f32.mrb[0].mxu0
        %v4436 = vadd.f32 0.0, %v4435
        %v4437 = vpop.f32.mrb[0].mxu0
        %4438 = vmatprep.mubr.bf16.mxu0 0
        %4439 = vmatmul.mubr.bf16.gmra.mrb[0].mxu0 %v4225
        %v4440 = vpop.f32.mrb[0].mxu0
        %v4441 = vadd.f32 0.0, %v4440
        %v4442 = vpop.f32.mrb[0].mxu0
        %v4443 = vpop.f32.mrb[0].mxu0
        %v4444 = vadd.f32 0.0, %v4443
        %v4445 = vpop.f32.mrb[0].mxu0
        %4446 = vmatprep.mubr.bf16.mxu0 0
        %4447 = vmatmul.mubr.bf16.gmra.mrb[0].mxu0 %v4226
        %v4448 = vpop.f32.mrb[0].mxu0
        %v4449 = vadd.f32 0.0, %v4448
        %v4450 = vpop.f32.mrb[0].mxu0
        %v4451 = vpop.f32.mrb[0].mxu0
        %v4452 = vadd.f32 0.0, %v4451
        %v4453 = vpop.f32.mrb[0].mxu0
        %4454 = vmatprep.mubr.bf16.mxu0 0
        %4455 = vmatmul.mubr.bf16.gmra.mrb[0].mxu0 %v4227
        %v4456 = vpop.f32.mrb[0].mxu0
        %v4457 = vadd.f32 0.0, %v4456
        %v4458 = vpop.f32.mrb[0].mxu0
        %v4459 = vpop.f32.mrb[0].mxu0
        %v4460 = vadd.f32 0.0, %v4459
        %v4461 = vpop.f32.mrb[0].mxu0
        %4462 = vmatprep.mubr.bf16.mxu0 0
        %4463 = vmatmul.mubr.bf16.gmra.mrb[0].mxu0 %v4228
        %v4464 = vpop.f32.mrb[0].mxu0
        %v4465 = vadd.f32 0.0, %v4464
        %v4466 = vpop.f32.mrb[0].mxu0
        %v4467 = vpop.f32.mrb[0].mxu0
        %v4468 = vadd.f32 0.0, %v4467
        %v4469 = vpop.f32.mrb[0].mxu0
        %4470 = vmatprep.mubr.bf16.mxu0 0
        %4471 = vmatmul.mubr.bf16.gmra.mrb[0].mxu0 %v4229
        %v4472 = vpop.f32.mrb[0].mxu0
        %v4473 = vadd.f32 0.0, %v4472
        %v4474 = vpop.f32.mrb[0].mxu0
        %v4475 = vpop.f32.mrb[0].mxu0
        %v4476 = vadd.f32 0.0, %v4475
        %v4477 = vpop.f32.mrb[0].mxu0
        %4478 = vmatprep.mubr.bf16.mxu0 0
        %4479 = vmatmul.mubr.bf16.gmra.mrb[0].mxu0 %v4230
        %v4480 = vpop.f32.mrb[0].mxu0
        %v4481 = vadd.f32 0.0, %v4480
        %v4482 = vpop.f32.mrb[0].mxu0
        %v4483 = vpop.f32.mrb[0].mxu0
        %v4484 = vadd.f32 0.0, %v4483
        %v4485 = vpop.f32.mrb[0].mxu0
        %4486 = vmatprep.mubr.bf16.mxu0 0
        %4487 = vmatmul.mubr.bf16.gmra.mrb[0].mxu0 %v4231
        %v4488 = vpop.f32.mrb[0].mxu0
        %v4489 = vadd.f32 0.0, %v4488
        %v4490 = vpop.f32.mrb[0].mxu0
        %v4491 = vpop.f32.mrb[0].mxu0
        %v4492 = vadd.f32 0.0, %v4491
        %v4493 = vpop.f32.mrb[0].mxu0
        %4494 = vmatprep.mubr.bf16.mxu0 0
        %4495 = vmatmul.mubr.bf16.gmra.mrb[0].mxu0 %v4232
        %v4496 = vpop.f32.mrb[0].mxu0
        %v4497 = vadd.f32 0.0, %v4496
        %v4498 = vpop.f32.mrb[0].mxu0
        %v4499 = vpop.f32.mrb[0].mxu0
        %v4500 = vadd.f32 0.0, %v4499
        %v4501 = vpop.f32.mrb[0].mxu0
        %4502 = vmatprep.mubr.bf16.mxu0 0
        %4503 = vmatmul.mubr.bf16.gmra.mrb[0].mxu0 %v4233
        %v4504 = vpop.f32.mrb[0].mxu0
        %v4505 = vadd.f32 0.0, %v4504
        %v4506 = vpop.f32.mrb[0].mxu0
        %v4507 = vpop.f32.mrb[0].mxu0
        %v4508 = vadd.f32 0.0, %v4507
        %v4509 = vpop.f32.mrb[0].mxu0
        %4510 = vmatprep.mubr.bf16.mxu0 0
        %4511 = vmatmul.mubr.bf16.gmra.mrb[0].mxu0 %v4234
        %v4512 = vpop.f32.mrb[0].mxu0
        %v4513 = vadd.f32 0.0, %v4512
        %v4514 = vpop.f32.mrb[0].mxu0
        %v4515 = vpop.f32.mrb[0].mxu0
        %v4516 = vadd.f32 0.0, %v4515
        %v4517 = vpop.f32.mrb[0].mxu0
        %4518 = vmatprep.mubr.bf16.mxu0 0
        %4519 = vmatmul.mubr.bf16.gmra.mrb[0].mxu0 %v4235
        %v4520 = vpop.f32.mrb[0].mxu0
        %v4521 = vadd.f32 0.0, %v4520
        %v4522 = vpop.f32.mrb[0].mxu0
        %v4523 = vpop.f32.mrb[0].mxu0
        %v4524 = vadd.f32 0.0, %v4523
        %v4525 = vpop.f32.mrb[0].mxu0
        %4526 = vmatprep.mubr.bf16.mxu0 0
        %4527 = vmatmul.mubr.bf16.gmra.mrb[0].mxu0 %v4236
        %v4528 = vpop.f32.mrb[0].mxu0
        %v4529 = vadd.f32 0.0, %v4528
        %v4530 = vpop.f32.mrb[0].mxu0
        %v4531 = vpop.f32.mrb[0].mxu0
        %v4532 = vadd.f32 0.0, %v4531
        %v4533 = vpop.f32.mrb[0].mxu0
        %4534 = vmatprep.mubr.bf16.mxu0 0
        %4535 = vmatmul.mubr.bf16.gmra.mrb[0].mxu0 %v4237
        %v4536 = vpop.f32.mrb[0].mxu0
        %v4537 = vadd.f32 0.0, %v4536
        %v4538 = vpop.f32.mrb[0].mxu0
        %v4539 = vpop.f32.mrb[0].mxu0
        %v4540 = vadd.f32 0.0, %v4539
        %v4541 = vpop.f32.mrb[0].mxu0
        %4542 = vmatprep.mubr.bf16.mxu0 0
        %4543 = vmatmul.mubr.bf16.gmra.mrb[0].mxu0 %v4238
        %v4544 = vpop.f32.mrb[0].mxu0
        %v4545 = vadd.f32 0.0, %v4544
        %v4546 = vpop.f32.mrb[0].mxu0
        %v4547 = vpop.f32.mrb[0].mxu0
        %v4548 = vadd.f32 0.0, %v4547
        %v4549 = vpop.f32.mrb[0].mxu0
        %4550 = vmatprep.mubr.bf16.mxu0 0
        %4551 = vmatmul.mubr.bf16.gmra.mrb[0].mxu0 %v4239
        %v4552 = vpop.f32.mrb[0].mxu0
        %v4553 = vadd.f32 0.0, %v4552
        %v4554 = vpop.f32.mrb[0].mxu0
        %v4555 = vpop.f32.mrb[0].mxu0
        %v4556 = vadd.f32 0.0, %v4555
        %v4557 = vpop.f32.mrb[0].mxu0
        %4558 = vmatprep.mubr.bf16.mxu0 0
        %4559 = vmatmul.mubr.bf16.gmra.mrb[0].mxu0 %v4240
        %v4560 = vpop.f32.mrb[0].mxu0
        %v4561 = vadd.f32 0.0, %v4560
        %v4562 = vpop.f32.mrb[0].mxu0
        %v4563 = vpop.f32.mrb[0].mxu0
        %v4564 = vadd.f32 0.0, %v4563
        %v4565 = vpop.f32.mrb[0].mxu0
        %4566 = vmatprep.mubr.bf16.mxu0 0
        %4567 = vmatmul.mubr.bf16.gmra.mrb[0].mxu0 %v4241
        %v4568 = vpop.f32.mrb[0].mxu0
        %v4569 = vadd.f32 0.0, %v4568
        %v4570 = vpop.f32.mrb[0].mxu0
        %v4571 = vpop.f32.mrb[0].mxu0
        %v4572 = vadd.f32 0.0, %v4571
        %v4573 = vpop.f32.mrb[0].mxu0
        %4574 = vmatprep.mubr.bf16.mxu0 0
        %4575 = vmatmul.mubr.bf16.gmra.mrb[0].mxu0 %v4242
        %v4576 = vpop.f32.mrb[0].mxu0
        %v4577 = vadd.f32 0.0, %v4576
        %v4578 = vpop.f32.mrb[0].mxu0
        %v4579 = vpop.f32.mrb[0].mxu0
        %v4580 = vadd.f32 0.0, %v4579
        %v4581 = vpop.f32.mrb[0].mxu0
        %4582 = vmatprep.mubr.bf16.mxu0 0
        %4583 = vmatmul.mubr.bf16.gmra.mrb[0].mxu0 %v4243
        %v4584 = vpop.f32.mrb[0].mxu0
        %v4585 = vadd.f32 0.0, %v4584
        %v4586 = vpop.f32.mrb[0].mxu0
        %v4587 = vpop.f32.mrb[0].mxu0
        %v4588 = vadd.f32 0.0, %v4587
        %v4589 = vpop.f32.mrb[0].mxu0
        %4590 = vmatprep.mubr.bf16.mxu0 0
        %4591 = vmatmul.mubr.bf16.gmra.mrb[0].mxu0 %v4244
        %v4592 = vpop.f32.mrb[0].mxu0
        %v4593 = vadd.f32 0.0, %v4592
        %v4594 = vpop.f32.mrb[0].mxu0
        %v4595 = vpop.f32.mrb[0].mxu0
        %v4596 = vadd.f32 0.0, %v4595
        %v4597 = vpop.f32.mrb[0].mxu0
        %4598 = vdwg.mxu0
        %v4599 = vld [vmem:[#allocation3] sm:$0xff]
        %v4600 = vld [vmem:[#allocation3 + $0x8] sm:$0xff]
        %v4601 = vld [vmem:[#allocation3 + $0x10] sm:$0xff]
        %v4602 = vld [vmem:[#allocation3 + $0x18] sm:$0xff]
        %v4603 = vld [vmem:[#allocation3 + $0x20] sm:$0xff]
        %v4604 = vld [vmem:[#allocation3 + $0x28] sm:$0xff]
        %v4605 = vld [vmem:[#allocation3 + $0x30] sm:$0xff]
        %v4606 = vld [vmem:[#allocation3 + $0x38] sm:$0xff]
        %v4607 = vld [vmem:[#allocation3 + $0x40] sm:$0xff]
        %v4608 = vld [vmem:[#allocation3 + $0x48] sm:$0xff]
        %v4609 = vld [vmem:[#allocation3 + $0x50] sm:$0xff]
        %v4610 = vld [vmem:[#allocation3 + $0x58] sm:$0xff]
        %v4611 = vld [vmem:[#allocation3 + $0x60] sm:$0xff]
        %v4612 = vld [vmem:[#allocation3 + $0x68] sm:$0xff]
        %v4613 = vld [vmem:[#allocation3 + $0x70] sm:$0xff]
        %v4614 = vld [vmem:[#allocation3 + $0x78] sm:$0xff]
        %v4615 = vld [vmem:[#allocation3 + $0x80] sm:$0xff]
        %v4616 = vld [vmem:[#allocation3 + $0x88] sm:$0xff]
        %v4617 = vld [vmem:[#allocation3 + $0x90] sm:$0xff]
        %v4618 = vld [vmem:[#allocation3 + $0x98] sm:$0xff]
        %v4619 = vld [vmem:[#allocation3 + $0xa0] sm:$0xff]
        %v4620 = vld [vmem:[#allocation3 + $0xa8] sm:$0xff]
        %v4621 = vld [vmem:[#allocation3 + $0xb0] sm:$0xff]
        %v4622 = vld [vmem:[#allocation3 + $0xb8] sm:$0xff]
        %v4623 = vld [vmem:[#allocation3 + $0xc0] sm:$0xff]
        %v4624 = vld [vmem:[#allocation3 + $0xc8] sm:$0xff]
        %v4625 = vld [vmem:[#allocation3 + $0xd0] sm:$0xff]
        %v4626 = vld [vmem:[#allocation3 + $0xd8] sm:$0xff]
        %v4627 = vld [vmem:[#allocation3 + $0xe0] sm:$0xff]
        %v4628 = vld [vmem:[#allocation3 + $0xe8] sm:$0xff]
        %v4629 = vld [vmem:[#allocation3 + $0xf0] sm:$0xff]
        %v4630 = vld [vmem:[#allocation3 + $0xf8] sm:$0xff]
        %v4631 = vld [vmem:[#allocation3 + $0x100] sm:$0xff]
        %v4632 = vld [vmem:[#allocation3 + $0x108] sm:$0xff]
        %v4633 = vld [vmem:[#allocation3 + $0x110] sm:$0xff]
        %v4634 = vld [vmem:[#allocation3 + $0x118] sm:$0xff]
        %v4635 = vld [vmem:[#allocation3 + $0x120] sm:$0xff]
        %v4636 = vld [vmem:[#allocation3 + $0x128] sm:$0xff]
        %v4637 = vld [vmem:[#allocation3 + $0x130] sm:$0xff]
        %v4638 = vld [vmem:[#allocation3 + $0x138] sm:$0xff]
        %v4639 = vld [vmem:[#allocation3 + $0x140] sm:$0xff]
        %v4640 = vld [vmem:[#allocation3 + $0x148] sm:$0xff]
        %v4641 = vld [vmem:[#allocation3 + $0x150] sm:$0xff]
        %v4642 = vld [vmem:[#allocation3 + $0x158] sm:$0xff]
        %v4643 = vld [vmem:[#allocation3 + $0x160] sm:$0xff]
        %v4644 = vld [vmem:[#allocation3 + $0x168] sm:$0xff]
        %v4645 = vld [vmem:[#allocation3 + $0x170] sm:$0xff]
        %v4646 = vld [vmem:[#allocation3 + $0x178] sm:$0xff]
        %v4647 = vld [vmem:[#allocation3 + $0x180] sm:$0xff]
        %v4648 = vld [vmem:[#allocation3 + $0x188] sm:$0xff]
        %v4649 = vld [vmem:[#allocation3 + $0x190] sm:$0xff]
        %v4650 = vld [vmem:[#allocation3 + $0x198] sm:$0xff]
        %v4651 = vld [vmem:[#allocation3 + $0x1a0] sm:$0xff]
        %v4652 = vld [vmem:[#allocation3 + $0x1a8] sm:$0xff]
        %v4653 = vld [vmem:[#allocation3 + $0x1b0] sm:$0xff]
        %v4654 = vld [vmem:[#allocation3 + $0x1b8] sm:$0xff]
        %v4655 = vld [vmem:[#allocation3 + $0x1c0] sm:$0xff]
        %v4656 = vld [vmem:[#allocation3 + $0x1c8] sm:$0xff]
        %v4657 = vld [vmem:[#allocation3 + $0x1d0] sm:$0xff]
        %v4658 = vld [vmem:[#allocation3 + $0x1d8] sm:$0xff]
        %v4659 = vld [vmem:[#allocation3 + $0x1e0] sm:$0xff]
        %v4660 = vld [vmem:[#allocation3 + $0x1e8] sm:$0xff]
        %v4661 = vld [vmem:[#allocation3 + $0x1f0] sm:$0xff]
        %v4662 = vld [vmem:[#allocation3 + $0x1f8] sm:$0xff]
        %v4663 = vadd.f32 %v4599, %v4345
        %v4664 = vadd.f32 %v4600, %v4348
        %v4665 = vadd.f32 %v4601, %v4353
        %v4666 = vadd.f32 %v4602, %v4356
        %v4667 = vadd.f32 %v4603, %v4361
        %v4668 = vadd.f32 %v4604, %v4364
        %v4669 = vadd.f32 %v4605, %v4369
        %v4670 = vadd.f32 %v4606, %v4372
        %v4671 = vadd.f32 %v4607, %v4377
        %v4672 = vadd.f32 %v4608, %v4380
        %v4673 = vadd.f32 %v4609, %v4385
        %v4674 = vadd.f32 %v4610, %v4388
        %v4675 = vadd.f32 %v4611, %v4393
        %v4676 = vadd.f32 %v4612, %v4396
        %v4677 = vadd.f32 %v4613, %v4401
        %v4678 = vadd.f32 %v4614, %v4404
        %v4679 = vadd.f32 %v4615, %v4409
        %v4680 = vadd.f32 %v4616, %v4412
        %v4681 = vadd.f32 %v4617, %v4417
        %v4682 = vadd.f32 %v4618, %v4420
        %v4683 = vadd.f32 %v4619, %v4425
        %v4684 = vadd.f32 %v4620, %v4428
        %v4685 = vadd.f32 %v4621, %v4433
        %v4686 = vadd.f32 %v4622, %v4436
        %v4687 = vadd.f32 %v4623, %v4441
        %v4688 = vadd.f32 %v4624, %v4444
        %v4689 = vadd.f32 %v4625, %v4449
        %v4690 = vadd.f32 %v4626, %v4452
        %v4691 = vadd.f32 %v4627, %v4457
        %v4692 = vadd.f32 %v4628, %v4460
        %v4693 = vadd.f32 %v4629, %v4465
        %v4694 = vadd.f32 %v4630, %v4468
        %v4695 = vadd.f32 %v4631, %v4473
        %v4696 = vadd.f32 %v4632, %v4476
        %v4697 = vadd.f32 %v4633, %v4481
        %v4698 = vadd.f32 %v4634, %v4484
        %v4699 = vadd.f32 %v4635, %v4489
        %v4700 = vadd.f32 %v4636, %v4492
        %v4701 = vadd.f32 %v4637, %v4497
        %v4702 = vadd.f32 %v4638, %v4500
        %v4703 = vadd.f32 %v4639, %v4505
        %v4704 = vadd.f32 %v4640, %v4508
        %v4705 = vadd.f32 %v4641, %v4513
        %v4706 = vadd.f32 %v4642, %v4516
        %v4707 = vadd.f32 %v4643, %v4521
        %v4708 = vadd.f32 %v4644, %v4524
        %v4709 = vadd.f32 %v4645, %v4529
        %v4710 = vadd.f32 %v4646, %v4532
        %v4711 = vadd.f32 %v4647, %v4537
        %v4712 = vadd.f32 %v4648, %v4540
        %v4713 = vadd.f32 %v4649, %v4545
        %v4714 = vadd.f32 %v4650, %v4548
        %v4715 = vadd.f32 %v4651, %v4553
        %v4716 = vadd.f32 %v4652, %v4556
        %v4717 = vadd.f32 %v4653, %v4561
        %v4718 = vadd.f32 %v4654, %v4564
        %v4719 = vadd.f32 %v4655, %v4569
        %v4720 = vadd.f32 %v4656, %v4572
        %v4721 = vadd.f32 %v4657, %v4577
        %v4722 = vadd.f32 %v4658, %v4580
        %v4723 = vadd.f32 %v4659, %v4585
        %v4724 = vadd.f32 %v4660, %v4588
        %v4725 = vadd.f32 %v4661, %v4593
        %v4726 = vadd.f32 %v4662, %v4596
        %4727 = vst [vmem:[#allocation3] sm:$0xff] %v4663
        %4728 = vst [vmem:[#allocation3 + $0x8] sm:$0xff] %v4664
        %4729 = vst [vmem:[#allocation3 + $0x10] sm:$0xff] %v4665
        %4730 = vst [vmem:[#allocation3 + $0x18] sm:$0xff] %v4666
        %4731 = vst [vmem:[#allocation3 + $0x20] sm:$0xff] %v4667
        %4732 = vst [vmem:[#allocation3 + $0x28] sm:$0xff] %v4668
        %4733 = vst [vmem:[#allocation3 + $0x30] sm:$0xff] %v4669
        %4734 = vst [vmem:[#allocation3 + $0x38] sm:$0xff] %v4670
        %4735 = vst [vmem:[#allocation3 + $0x40] sm:$0xff] %v4671
        %4736 = vst [vmem:[#allocation3 + $0x48] sm:$0xff] %v4672
        %4737 = vst [vmem:[#allocation3 + $0x50] sm:$0xff] %v4673
        %4738 = vst [vmem:[#allocation3 + $0x58] sm:$0xff] %v4674
        %4739 = vst [vmem:[#allocation3 + $0x60] sm:$0xff] %v4675
        %4740 = vst [vmem:[#allocation3 + $0x68] sm:$0xff] %v4676
        %4741 = vst [vmem:[#allocation3 + $0x70] sm:$0xff] %v4677
        %4742 = vst [vmem:[#allocation3 + $0x78] sm:$0xff] %v4678
        %4743 = vst [vmem:[#allocation3 + $0x80] sm:$0xff] %v4679
        %4744 = vst [vmem:[#allocation3 + $0x88] sm:$0xff] %v4680
        %4745 = vst [vmem:[#allocation3 + $0x90] sm:$0xff] %v4681
        %4746 = vst [vmem:[#allocation3 + $0x98] sm:$0xff] %v4682
        %4747 = vst [vmem:[#allocation3 + $0xa0] sm:$0xff] %v4683
        %4748 = vst [vmem:[#allocation3 + $0xa8] sm:$0xff] %v4684
        %4749 = vst [vmem:[#allocation3 + $0xb0] sm:$0xff] %v4685
        %4750 = vst [vmem:[#allocation3 + $0xb8] sm:$0xff] %v4686
        %4751 = vst [vmem:[#allocation3 + $0xc0] sm:$0xff] %v4687
        %4752 = vst [vmem:[#allocation3 + $0xc8] sm:$0xff] %v4688
        %4753 = vst [vmem:[#allocation3 + $0xd0] sm:$0xff] %v4689
        %4754 = vst [vmem:[#allocation3 + $0xd8] sm:$0xff] %v4690
        %4755 = vst [vmem:[#allocation3 + $0xe0] sm:$0xff] %v4691
        %4756 = vst [vmem:[#allocation3 + $0xe8] sm:$0xff] %v4692
        %4757 = vst [vmem:[#allocation3 + $0xf0] sm:$0xff] %v4693
        %4758 = vst [vmem:[#allocation3 + $0xf8] sm:$0xff] %v4694
        %4759 = vst [vmem:[#allocation3 + $0x100] sm:$0xff] %v4695
        %4760 = vst [vmem:[#allocation3 + $0x108] sm:$0xff] %v4696
        %4761 = vst [vmem:[#allocation3 + $0x110] sm:$0xff] %v4697
        %4762 = vst [vmem:[#allocation3 + $0x118] sm:$0xff] %v4698
        %4763 = vst [vmem:[#allocation3 + $0x120] sm:$0xff] %v4699
        %4764 = vst [vmem:[#allocation3 + $0x128] sm:$0xff] %v4700
        %4765 = vst [vmem:[#allocation3 + $0x130] sm:$0xff] %v4701
        %4766 = vst [vmem:[#allocation3 + $0x138] sm:$0xff] %v4702
        %4767 = vst [vmem:[#allocation3 + $0x140] sm:$0xff] %v4703
        %4768 = vst [vmem:[#allocation3 + $0x148] sm:$0xff] %v4704
        %4769 = vst [vmem:[#allocation3 + $0x150] sm:$0xff] %v4705
        %4770 = vst [vmem:[#allocation3 + $0x158] sm:$0xff] %v4706
        %4771 = vst [vmem:[#allocation3 + $0x160] sm:$0xff] %v4707
        %4772 = vst [vmem:[#allocation3 + $0x168] sm:$0xff] %v4708
        %4773 = vst [vmem:[#allocation3 + $0x170] sm:$0xff] %v4709
        %4774 = vst [vmem:[#allocation3 + $0x178] sm:$0xff] %v4710
        %4775 = vst [vmem:[#allocation3 + $0x180] sm:$0xff] %v4711
        %4776 = vst [vmem:[#allocation3 + $0x188] sm:$0xff] %v4712
        %4777 = vst [vmem:[#allocation3 + $0x190] sm:$0xff] %v4713
        %4778 = vst [vmem:[#allocation3 + $0x198] sm:$0xff] %v4714
        %4779 = vst [vmem:[#allocation3 + $0x1a0] sm:$0xff] %v4715
        %4780 = vst [vmem:[#allocation3 + $0x1a8] sm:$0xff] %v4716
        %4781 = vst [vmem:[#allocation3 + $0x1b0] sm:$0xff] %v4717
        %4782 = vst [vmem:[#allocation3 + $0x1b8] sm:$0xff] %v4718
        %4783 = vst [vmem:[#allocation3 + $0x1c0] sm:$0xff] %v4719
        %4784 = vst [vmem:[#allocation3 + $0x1c8] sm:$0xff] %v4720
        %4785 = vst [vmem:[#allocation3 + $0x1d0] sm:$0xff] %v4721
        %4786 = vst [vmem:[#allocation3 + $0x1d8] sm:$0xff] %v4722
        %4787 = vst [vmem:[#allocation3 + $0x1e0] sm:$0xff] %v4723
        %4788 = vst [vmem:[#allocation3 + $0x1e8] sm:$0xff] %v4724
        %4789 = vst [vmem:[#allocation3 + $0x1f0] sm:$0xff] %v4725
        %4790 = vst [vmem:[#allocation3 + $0x1f8] sm:$0xff] %v4726
        %s4791 = scalar_lea.vmem [#allocation2], 64
        %v4792 = vld [vmem:[%s4791] sm:$0xff]
        %v4793 = vld [vmem:[%s4791 + $0x8] sm:$0xff]
        %v4794 = vld [vmem:[%s4791 + $0x10] sm:$0xff]
        %v4795 = vld [vmem:[%s4791 + $0x18] sm:$0xff]
        %v4796 = vld [vmem:[%s4791 + $0x20] sm:$0xff]
        %v4797 = vld [vmem:[%s4791 + $0x28] sm:$0xff]
        %v4798 = vld [vmem:[%s4791 + $0x30] sm:$0xff]
        %v4799 = vld [vmem:[%s4791 + $0x38] sm:$0xff]
        %v4800 = vld [vmem:[%s4791 + $0x40] sm:$0xff]
        %v4801 = vld [vmem:[%s4791 + $0x48] sm:$0xff]
        %v4802 = vld [vmem:[%s4791 + $0x50] sm:$0xff]
        %v4803 = vld [vmem:[%s4791 + $0x58] sm:$0xff]
        %v4804 = vld [vmem:[%s4791 + $0x60] sm:$0xff]
        %v4805 = vld [vmem:[%s4791 + $0x68] sm:$0xff]
        %v4806 = vld [vmem:[%s4791 + $0x70] sm:$0xff]
        %v4807 = vld [vmem:[%s4791 + $0x78] sm:$0xff]
        %v4808 = vld [vmem:[%s4791 + $0x80] sm:$0xff]
        %v4809 = vld [vmem:[%s4791 + $0x88] sm:$0xff]
        %v4810 = vld [vmem:[%s4791 + $0x90] sm:$0xff]
        %v4811 = vld [vmem:[%s4791 + $0x98] sm:$0xff]
        %v4812 = vld [vmem:[%s4791 + $0xa0] sm:$0xff]
        %v4813 = vld [vmem:[%s4791 + $0xa8] sm:$0xff]
        %v4814 = vld [vmem:[%s4791 + $0xb0] sm:$0xff]
        %v4815 = vld [vmem:[%s4791 + $0xb8] sm:$0xff]
        %v4816 = vld [vmem:[%s4791 + $0xc0] sm:$0xff]
        %v4817 = vld [vmem:[%s4791 + $0xc8] sm:$0xff]
        %v4818 = vld [vmem:[%s4791 + $0xd0] sm:$0xff]
        %v4819 = vld [vmem:[%s4791 + $0xd8] sm:$0xff]
        %v4820 = vld [vmem:[%s4791 + $0xe0] sm:$0xff]
        %v4821 = vld [vmem:[%s4791 + $0xe8] sm:$0xff]
        %v4822 = vld [vmem:[%s4791 + $0xf0] sm:$0xff]
        %v4823 = vld [vmem:[%s4791 + $0xf8] sm:$0xff]
        %v4824 = vld [vmem:[%s4791 + $0x100] sm:$0xff]
        %v4825 = vld [vmem:[%s4791 + $0x108] sm:$0xff]
        %v4826 = vld [vmem:[%s4791 + $0x110] sm:$0xff]
        %v4827 = vld [vmem:[%s4791 + $0x118] sm:$0xff]
        %v4828 = vld [vmem:[%s4791 + $0x120] sm:$0xff]
        %v4829 = vld [vmem:[%s4791 + $0x128] sm:$0xff]
        %v4830 = vld [vmem:[%s4791 + $0x130] sm:$0xff]
        %v4831 = vld [vmem:[%s4791 + $0x138] sm:$0xff]
        %v4832 = vld [vmem:[%s4791 + $0x140] sm:$0xff]
        %v4833 = vld [vmem:[%s4791 + $0x148] sm:$0xff]
        %v4834 = vld [vmem:[%s4791 + $0x150] sm:$0xff]
        %v4835 = vld [vmem:[%s4791 + $0x158] sm:$0xff]
        %v4836 = vld [vmem:[%s4791 + $0x160] sm:$0xff]
        %v4837 = vld [vmem:[%s4791 + $0x168] sm:$0xff]
        %v4838 = vld [vmem:[%s4791 + $0x170] sm:$0xff]
        %v4839 = vld [vmem:[%s4791 + $0x178] sm:$0xff]
        %v4840 = vld [vmem:[%s4791 + $0x180] sm:$0xff]
        %v4841 = vld [vmem:[%s4791 + $0x188] sm:$0xff]
        %v4842 = vld [vmem:[%s4791 + $0x190] sm:$0xff]
        %v4843 = vld [vmem:[%s4791 + $0x198] sm:$0xff]
        %v4844 = vld [vmem:[%s4791 + $0x1a0] sm:$0xff]
        %v4845 = vld [vmem:[%s4791 + $0x1a8] sm:$0xff]
        %v4846 = vld [vmem:[%s4791 + $0x1b0] sm:$0xff]
        %v4847 = vld [vmem:[%s4791 + $0x1b8] sm:$0xff]
        %v4848 = vld [vmem:[%s4791 + $0x1c0] sm:$0xff]
        %v4849 = vld [vmem:[%s4791 + $0x1c8] sm:$0xff]
        %v4850 = vld [vmem:[%s4791 + $0x1d0] sm:$0xff]
        %v4851 = vld [vmem:[%s4791 + $0x1d8] sm:$0xff]
        %v4852 = vld [vmem:[%s4791 + $0x1e0] sm:$0xff]
        %v4853 = vld [vmem:[%s4791 + $0x1e8] sm:$0xff]
        %v4854 = vld [vmem:[%s4791 + $0x1f0] sm:$0xff]
        %v4855 = vld [vmem:[%s4791 + $0x1f8] sm:$0xff]
        %v4856 = vld [vmem:[%s4791 + $0x240] sm:$0xff]
        %v4857 = vld [vmem:[%s4791 + $0x248] sm:$0xff]
        %v4858 = vld [vmem:[%s4791 + $0x250] sm:$0xff]
        %v4859 = vld [vmem:[%s4791 + $0x258] sm:$0xff]
        %v4860 = vld [vmem:[%s4791 + $0x260] sm:$0xff]
        %v4861 = vld [vmem:[%s4791 + $0x268] sm:$0xff]
        %v4862 = vld [vmem:[%s4791 + $0x270] sm:$0xff]
        %v4863 = vld [vmem:[%s4791 + $0x278] sm:$0xff]
        %v4864 = vld [vmem:[%s4791 + $0x280] sm:$0xff]
        %v4865 = vld [vmem:[%s4791 + $0x288] sm:$0xff]
        %v4866 = vld [vmem:[%s4791 + $0x290] sm:$0xff]
        %v4867 = vld [vmem:[%s4791 + $0x298] sm:$0xff]
        %v4868 = vld [vmem:[%s4791 + $0x2a0] sm:$0xff]
        %v4869 = vld [vmem:[%s4791 + $0x2a8] sm:$0xff]
        %v4870 = vld [vmem:[%s4791 + $0x2b0] sm:$0xff]
        %v4871 = vld [vmem:[%s4791 + $0x2b8] sm:$0xff]
        %v4872 = vld [vmem:[%s4791 + $0x2c0] sm:$0xff]
        %v4873 = vld [vmem:[%s4791 + $0x2c8] sm:$0xff]
        %v4874 = vld [vmem:[%s4791 + $0x2d0] sm:$0xff]
        %v4875 = vld [vmem:[%s4791 + $0x2d8] sm:$0xff]
        %v4876 = vld [vmem:[%s4791 + $0x2e0] sm:$0xff]
        %v4877 = vld [vmem:[%s4791 + $0x2e8] sm:$0xff]
        %v4878 = vld [vmem:[%s4791 + $0x2f0] sm:$0xff]
        %v4879 = vld [vmem:[%s4791 + $0x2f8] sm:$0xff]
        %v4880 = vld [vmem:[%s4791 + $0x300] sm:$0xff]
        %v4881 = vld [vmem:[%s4791 + $0x308] sm:$0xff]
        %v4882 = vld [vmem:[%s4791 + $0x310] sm:$0xff]
        %v4883 = vld [vmem:[%s4791 + $0x318] sm:$0xff]
        %v4884 = vld [vmem:[%s4791 + $0x320] sm:$0xff]
        %v4885 = vld [vmem:[%s4791 + $0x328] sm:$0xff]
        %v4886 = vld [vmem:[%s4791 + $0x330] sm:$0xff]
        %v4887 = vld [vmem:[%s4791 + $0x338] sm:$0xff]
        %v4888 = vld [vmem:[%s4791 + $0x340] sm:$0xff]
        %v4889 = vld [vmem:[%s4791 + $0x348] sm:$0xff]
        %v4890 = vld [vmem:[%s4791 + $0x350] sm:$0xff]
        %v4891 = vld [vmem:[%s4791 + $0x358] sm:$0xff]
        %v4892 = vld [vmem:[%s4791 + $0x360] sm:$0xff]
        %v4893 = vld [vmem:[%s4791 + $0x368] sm:$0xff]
        %v4894 = vld [vmem:[%s4791 + $0x370] sm:$0xff]
        %v4895 = vld [vmem:[%s4791 + $0x378] sm:$0xff]
        %v4896 = vld [vmem:[%s4791 + $0x380] sm:$0xff]
        %v4897 = vld [vmem:[%s4791 + $0x388] sm:$0xff]
        %v4898 = vld [vmem:[%s4791 + $0x390] sm:$0xff]
        %v4899 = vld [vmem:[%s4791 + $0x398] sm:$0xff]
        %v4900 = vld [vmem:[%s4791 + $0x3a0] sm:$0xff]
        %v4901 = vld [vmem:[%s4791 + $0x3a8] sm:$0xff]
        %v4902 = vld [vmem:[%s4791 + $0x3b0] sm:$0xff]
        %v4903 = vld [vmem:[%s4791 + $0x3b8] sm:$0xff]
        %v4904 = vld [vmem:[%s4791 + $0x3c0] sm:$0xff]
        %v4905 = vld [vmem:[%s4791 + $0x3c8] sm:$0xff]
        %v4906 = vld [vmem:[%s4791 + $0x3d0] sm:$0xff]
        %v4907 = vld [vmem:[%s4791 + $0x3d8] sm:$0xff]
        %v4908 = vld [vmem:[%s4791 + $0x3e0] sm:$0xff]
        %v4909 = vld [vmem:[%s4791 + $0x3e8] sm:$0xff]
        %v4910 = vld [vmem:[%s4791 + $0x3f0] sm:$0xff]
        %v4911 = vld [vmem:[%s4791 + $0x3f8] sm:$0xff]
        %v4912 = vld [vmem:[%s4791 + $0x400] sm:$0xff]
        %v4913 = vld [vmem:[%s4791 + $0x408] sm:$0xff]
        %v4914 = vld [vmem:[%s4791 + $0x410] sm:$0xff]
        %v4915 = vld [vmem:[%s4791 + $0x418] sm:$0xff]
        %v4916 = vld [vmem:[%s4791 + $0x420] sm:$0xff]
        %v4917 = vld [vmem:[%s4791 + $0x428] sm:$0xff]
        %v4918 = vld [vmem:[%s4791 + $0x430] sm:$0xff]
        %v4919 = vld [vmem:[%s4791 + $0x438] sm:$0xff]
        %v4920 = vrot.slane %v4792, 7
        %v4921 = vrot.slane %v4796, 7
        %v4922 = vrot.slane %v4800, 7
        %v4923 = vrot.slane %v4804, 7
        %v4924 = vrot.slane %v4808, 7
        %v4925 = vrot.slane %v4812, 7
        %v4926 = vrot.slane %v4816, 7
        %v4927 = vrot.slane %v4820, 7
        %v4928 = vrot.slane %v4824, 7
        %v4929 = vrot.slane %v4828, 7
        %v4930 = vrot.slane %v4832, 7
        %v4931 = vrot.slane %v4836, 7
        %v4932 = vrot.slane %v4840, 7
        %v4933 = vrot.slane %v4844, 7
        %v4934 = vrot.slane %v4848, 7
        %v4935 = vrot.slane %v4852, 7
        %v4936 = vrot.slane %v4856, 7
        %v4937 = vrot.slane %v4860, 7
        %v4938 = vrot.slane %v4864, 7
        %v4939 = vrot.slane %v4868, 7
        %v4940 = vrot.slane %v4872, 7
        %v4941 = vrot.slane %v4876, 7
        %v4942 = vrot.slane %v4880, 7
        %v4943 = vrot.slane %v4884, 7
        %v4944 = vrot.slane %v4888, 7
        %v4945 = vrot.slane %v4892, 7
        %v4946 = vrot.slane %v4896, 7
        %v4947 = vrot.slane %v4900, 7
        %v4948 = vrot.slane %v4904, 7
        %v4949 = vrot.slane %v4908, 7
        %v4950 = vrot.slane %v4912, 7
        %v4951 = vrot.slane %v4916, 7
        %v4952 = vrot.slane %v4793, 7
        %v4953 = vrot.slane %v4797, 7
        %v4954 = vrot.slane %v4801, 7
        %v4955 = vrot.slane %v4805, 7
        %v4956 = vrot.slane %v4809, 7
        %v4957 = vrot.slane %v4813, 7
        %v4958 = vrot.slane %v4817, 7
        %v4959 = vrot.slane %v4821, 7
        %v4960 = vrot.slane %v4825, 7
        %v4961 = vrot.slane %v4829, 7
        %v4962 = vrot.slane %v4833, 7
        %v4963 = vrot.slane %v4837, 7
        %v4964 = vrot.slane %v4841, 7
        %v4965 = vrot.slane %v4845, 7
        %v4966 = vrot.slane %v4849, 7
        %v4967 = vrot.slane %v4853, 7
        %v4968 = vrot.slane %v4857, 7
        %v4969 = vrot.slane %v4861, 7
        %v4970 = vrot.slane %v4865, 7
        %v4971 = vrot.slane %v4869, 7
        %v4972 = vrot.slane %v4873, 7
        %v4973 = vrot.slane %v4877, 7
        %v4974 = vrot.slane %v4881, 7
        %v4975 = vrot.slane %v4885, 7
        %v4976 = vrot.slane %v4889, 7
        %v4977 = vrot.slane %v4893, 7
        %v4978 = vrot.slane %v4897, 7
        %v4979 = vrot.slane %v4901, 7
        %v4980 = vrot.slane %v4905, 7
        %v4981 = vrot.slane %v4909, 7
        %v4982 = vrot.slane %v4913, 7
        %v4983 = vrot.slane %v4917, 7
        %v4984 = vrot.slane %v4794, 7
        %v4985 = vrot.slane %v4798, 7
        %v4986 = vrot.slane %v4802, 7
        %v4987 = vrot.slane %v4806, 7
        %v4988 = vrot.slane %v4810, 7
        %v4989 = vrot.slane %v4814, 7
        %v4990 = vrot.slane %v4818, 7
        %v4991 = vrot.slane %v4822, 7
        %v4992 = vrot.slane %v4826, 7
        %v4993 = vrot.slane %v4830, 7
        %v4994 = vrot.slane %v4834, 7
        %v4995 = vrot.slane %v4838, 7
        %v4996 = vrot.slane %v4842, 7
        %v4997 = vrot.slane %v4846, 7
        %v4998 = vrot.slane %v4850, 7
        %v4999 = vrot.slane %v4854, 7
        %v5000 = vrot.slane %v4858, 7
        %v5001 = vrot.slane %v4862, 7
        %v5002 = vrot.slane %v4866, 7
        %v5003 = vrot.slane %v4870, 7
        %v5004 = vrot.slane %v4874, 7
        %v5005 = vrot.slane %v4878, 7
        %v5006 = vrot.slane %v4882, 7
        %v5007 = vrot.slane %v4886, 7
        %v5008 = vrot.slane %v4890, 7
        %v5009 = vrot.slane %v4894, 7
        %v5010 = vrot.slane %v4898, 7
        %v5011 = vrot.slane %v4902, 7
        %v5012 = vrot.slane %v4906, 7
        %v5013 = vrot.slane %v4910, 7
        %v5014 = vrot.slane %v4914, 7
        %v5015 = vrot.slane %v4918, 7
        %v5016 = vsel %vm777, %v4952, %v4984
        %v5017 = vsel %vm777, %v4953, %v4985
        %v5018 = vsel %vm777, %v4954, %v4986
        %v5019 = vsel %vm777, %v4955, %v4987
        %v5020 = vsel %vm777, %v4956, %v4988
        %v5021 = vsel %vm777, %v4957, %v4989
        %v5022 = vsel %vm777, %v4958, %v4990
        %v5023 = vsel %vm777, %v4959, %v4991
        %v5024 = vsel %vm777, %v4960, %v4992
        %v5025 = vsel %vm777, %v4961, %v4993
        %v5026 = vsel %vm777, %v4962, %v4994
        %v5027 = vsel %vm777, %v4963, %v4995
        %v5028 = vsel %vm777, %v4964, %v4996
        %v5029 = vsel %vm777, %v4965, %v4997
        %v5030 = vsel %vm777, %v4966, %v4998
        %v5031 = vsel %vm777, %v4967, %v4999
        %v5032 = vsel %vm777, %v4968, %v5000
        %v5033 = vsel %vm777, %v4969, %v5001
        %v5034 = vsel %vm777, %v4970, %v5002
        %v5035 = vsel %vm777, %v4971, %v5003
        %v5036 = vsel %vm777, %v4972, %v5004
        %v5037 = vsel %vm777, %v4973, %v5005
        %v5038 = vsel %vm777, %v4974, %v5006
        %v5039 = vsel %vm777, %v4975, %v5007
        %v5040 = vsel %vm777, %v4976, %v5008
        %v5041 = vsel %vm777, %v4977, %v5009
        %v5042 = vsel %vm777, %v4978, %v5010
        %v5043 = vsel %vm777, %v4979, %v5011
        %v5044 = vsel %vm777, %v4980, %v5012
        %v5045 = vsel %vm777, %v4981, %v5013
        %v5046 = vsel %vm777, %v4982, %v5014
        %v5047 = vsel %vm777, %v4983, %v5015
        %v5048 = vsel %vm777, %v4920, %v4952
        %v5049 = vsel %vm777, %v4921, %v4953
        %v5050 = vsel %vm777, %v4922, %v4954
        %v5051 = vsel %vm777, %v4923, %v4955
        %v5052 = vsel %vm777, %v4924, %v4956
        %v5053 = vsel %vm777, %v4925, %v4957
        %v5054 = vsel %vm777, %v4926, %v4958
        %v5055 = vsel %vm777, %v4927, %v4959
        %v5056 = vsel %vm777, %v4928, %v4960
        %v5057 = vsel %vm777, %v4929, %v4961
        %v5058 = vsel %vm777, %v4930, %v4962
        %v5059 = vsel %vm777, %v4931, %v4963
        %v5060 = vsel %vm777, %v4932, %v4964
        %v5061 = vsel %vm777, %v4933, %v4965
        %v5062 = vsel %vm777, %v4934, %v4966
        %v5063 = vsel %vm777, %v4935, %v4967
        %v5064 = vsel %vm777, %v4936, %v4968
        %v5065 = vsel %vm777, %v4937, %v4969
        %v5066 = vsel %vm777, %v4938, %v4970
        %v5067 = vsel %vm777, %v4939, %v4971
        %v5068 = vsel %vm777, %v4940, %v4972
        %v5069 = vsel %vm777, %v4941, %v4973
        %v5070 = vsel %vm777, %v4942, %v4974
        %v5071 = vsel %vm777, %v4943, %v4975
        %v5072 = vsel %vm777, %v4944, %v4976
        %v5073 = vsel %vm777, %v4945, %v4977
        %v5074 = vsel %vm777, %v4946, %v4978
        %v5075 = vsel %vm777, %v4947, %v4979
        %v5076 = vsel %vm777, %v4948, %v4980
        %v5077 = vsel %vm777, %v4949, %v4981
        %v5078 = vsel %vm777, %v4950, %v4982
        %v5079 = vsel %vm777, %v4951, %v4983
        %v5080 = vpack.c.bf16 %v5016, %v5048
        %v5081 = vpack.c.bf16 %v5017, %v5049
        %v5082 = vpack.c.bf16 %v5018, %v5050
        %v5083 = vpack.c.bf16 %v5019, %v5051
        %v5084 = vpack.c.bf16 %v5020, %v5052
        %v5085 = vpack.c.bf16 %v5021, %v5053
        %v5086 = vpack.c.bf16 %v5022, %v5054
        %v5087 = vpack.c.bf16 %v5023, %v5055
        %v5088 = vpack.c.bf16 %v5024, %v5056
        %v5089 = vpack.c.bf16 %v5025, %v5057
        %v5090 = vpack.c.bf16 %v5026, %v5058
        %v5091 = vpack.c.bf16 %v5027, %v5059
        %v5092 = vpack.c.bf16 %v5028, %v5060
        %v5093 = vpack.c.bf16 %v5029, %v5061
        %v5094 = vpack.c.bf16 %v5030, %v5062
        %v5095 = vpack.c.bf16 %v5031, %v5063
        %v5096 = vpack.c.bf16 %v5032, %v5064
        %v5097 = vpack.c.bf16 %v5033, %v5065
        %v5098 = vpack.c.bf16 %v5034, %v5066
        %v5099 = vpack.c.bf16 %v5035, %v5067
        %v5100 = vpack.c.bf16 %v5036, %v5068
        %v5101 = vpack.c.bf16 %v5037, %v5069
        %v5102 = vpack.c.bf16 %v5038, %v5070
        %v5103 = vpack.c.bf16 %v5039, %v5071
        %v5104 = vpack.c.bf16 %v5040, %v5072
        %v5105 = vpack.c.bf16 %v5041, %v5073
        %v5106 = vpack.c.bf16 %v5042, %v5074
        %v5107 = vpack.c.bf16 %v5043, %v5075
        %v5108 = vpack.c.bf16 %v5044, %v5076
        %v5109 = vpack.c.bf16 %v5045, %v5077
        %v5110 = vpack.c.bf16 %v5046, %v5078
        %v5111 = vpack.c.bf16 %v5047, %v5079
        %s5112 = scalar_lea.vmem %s232, 384 [#allocation4]
        %v5113 = vld [vmem:[%s5112] sm:$0xf]
        %v5114 = vld [vmem:[%s5112 + $0x4] sm:$0xf]
        %v5115 = vld [vmem:[%s5112 + $0x8] sm:$0xf]
        %v5116 = vld [vmem:[%s5112 + $0xc] sm:$0xf]
        %v5117 = vld [vmem:[%s5112 + $0x10] sm:$0xf]
        %v5118 = vld [vmem:[%s5112 + $0x14] sm:$0xf]
        %v5119 = vld [vmem:[%s5112 + $0x18] sm:$0xf]
        %v5120 = vld [vmem:[%s5112 + $0x1c] sm:$0xf]
        %v5121 = vld [vmem:[%s5112 + $0x20] sm:$0xf]
        %v5122 = vld [vmem:[%s5112 + $0x24] sm:$0xf]
        %v5123 = vld [vmem:[%s5112 + $0x28] sm:$0xf]
        %v5124 = vld [vmem:[%s5112 + $0x2c] sm:$0xf]
        %v5125 = vld [vmem:[%s5112 + $0x30] sm:$0xf]
        %v5126 = vld [vmem:[%s5112 + $0x34] sm:$0xf]
        %v5127 = vld [vmem:[%s5112 + $0x38] sm:$0xf]
        %v5128 = vld [vmem:[%s5112 + $0x3c] sm:$0xf]
        %v5145 = vunpack.c.l.b16 %v5113
        %v5146 = vunpack.c.l.b16 %v5114
        %v5147 = vunpack.c.l.b16 %v5115
        %v5148 = vunpack.c.l.b16 %v5116
        %v5149 = vunpack.c.l.b16 %v5117
        %v5150 = vunpack.c.l.b16 %v5118
        %v5151 = vunpack.c.l.b16 %v5119
        %v5152 = vunpack.c.l.b16 %v5120
        %v5153 = vunpack.c.l.b16 %v5121
        %v5154 = vunpack.c.l.b16 %v5122
        %v5155 = vunpack.c.l.b16 %v5123
        %v5156 = vunpack.c.l.b16 %v5124
        %v5157 = vunpack.c.l.b16 %v5125
        %v5158 = vunpack.c.l.b16 %v5126
        %v5159 = vunpack.c.l.b16 %v5127
        %v5160 = vunpack.c.l.b16 %v5128
        %v5161 = vpack.c.b16 %v5146, %v5145
        %v5162 = vpack.c.b16 %v5148, %v5147
        %v5163 = vpack.c.b16 %v5150, %v5149
        %v5164 = vpack.c.b16 %v5152, %v5151
        %v5165 = vpack.c.b16 %v5154, %v5153
        %v5166 = vpack.c.b16 %v5156, %v5155
        %v5167 = vpack.c.b16 %v5158, %v5157
        %v5168 = vpack.c.b16 %v5160, %v5159
        %5177 = vmatprep.subr.bf16.mxu0 0
        %5178 = vmatpush1.bf16.msra.mxu0 %v5161
        %5179 = vmatprep.subr.bf16.mxu0 0
        %5180 = vmatpush1.bf16.msra.mxu0 %v5162
        %5181 = vmatprep.subr.bf16.mxu0 0
        %5182 = vmatpush1.bf16.msra.mxu0 %v5163
        %5183 = vmatprep.subr.bf16.mxu0 0
        %5184 = vmatpush1.bf16.msra.mxu0 %v5164
        %5185 = vmatprep.subr.bf16.mxu0 0
        %5186 = vmatpush1.bf16.msra.mxu0 %v5165
        %5187 = vmatprep.subr.bf16.mxu0 0
        %5188 = vmatpush1.bf16.msra.mxu0 %v5166
        %5189 = vmatprep.subr.bf16.mxu0 0
        %5190 = vmatpush1.bf16.msra.mxu0 %v5167
        %5191 = vmatprep.subr.bf16.mxu0 0
        %5192 = vmatpush1.bf16.msra.mxu0 %v5168
        %5193 = vmatprep.subr.bf16.mxu0 0
        %5194 = vmatpush1.bf16.msra.mxu0 0
        %5195 = vmatprep.subr.bf16.mxu0 0
        %5196 = vmatpush1.bf16.msra.mxu0 0
        %5197 = vmatprep.subr.bf16.mxu0 0
        %5198 = vmatpush1.bf16.msra.mxu0 0
        %5199 = vmatprep.subr.bf16.mxu0 0
        %5200 = vmatpush1.bf16.msra.mxu0 0
        %5201 = vmatprep.subr.bf16.mxu0 0
        %5202 = vmatpush1.bf16.msra.mxu0 0
        %5203 = vmatprep.subr.bf16.mxu0 0
        %5204 = vmatpush1.bf16.msra.mxu0 0
        %5205 = vmatprep.subr.bf16.mxu0 0
        %5206 = vmatpush1.bf16.msra.mxu0 0
        %5207 = vmatprep.subr.bf16.mxu0 0
        %5208 = vmatpush1.bf16.msra.mxu0 0
        %5209 = vmatprep.mubr.bf16.mxu0 0
        %5210 = vmatmul.mubr.bf16.gmra.mrb[0].mxu0 %v5080
        %v5211 = vpop.f32.mrb[0].mxu0
        %v5212 = vadd.f32 0.0, %v5211
        %v5213 = vpop.f32.mrb[0].mxu0
        %v5214 = vpop.f32.mrb[0].mxu0
        %v5215 = vadd.f32 0.0, %v5214
        %v5216 = vpop.f32.mrb[0].mxu0
        %5217 = vmatprep.mubr.bf16.mxu0 0
        %5218 = vmatmul.mubr.bf16.gmra.mrb[0].mxu0 %v5081
        %v5219 = vpop.f32.mrb[0].mxu0
        %v5220 = vadd.f32 0.0, %v5219
        %v5221 = vpop.f32.mrb[0].mxu0
        %v5222 = vpop.f32.mrb[0].mxu0
        %v5223 = vadd.f32 0.0, %v5222
        %v5224 = vpop.f32.mrb[0].mxu0
        %5225 = vmatprep.mubr.bf16.mxu0 0
        %5226 = vmatmul.mubr.bf16.gmra.mrb[0].mxu0 %v5082
        %v5227 = vpop.f32.mrb[0].mxu0
        %v5228 = vadd.f32 0.0, %v5227
        %v5229 = vpop.f32.mrb[0].mxu0
        %v5230 = vpop.f32.mrb[0].mxu0
        %v5231 = vadd.f32 0.0, %v5230
        %v5232 = vpop.f32.mrb[0].mxu0
        %5233 = vmatprep.mubr.bf16.mxu0 0
        %5234 = vmatmul.mubr.bf16.gmra.mrb[0].mxu0 %v5083
        %v5235 = vpop.f32.mrb[0].mxu0
        %v5236 = vadd.f32 0.0, %v5235
        %v5237 = vpop.f32.mrb[0].mxu0
        %v5238 = vpop.f32.mrb[0].mxu0
        %v5239 = vadd.f32 0.0, %v5238
        %v5240 = vpop.f32.mrb[0].mxu0
        %5241 = vmatprep.mubr.bf16.mxu0 0
        %5242 = vmatmul.mubr.bf16.gmra.mrb[0].mxu0 %v5084
        %v5243 = vpop.f32.mrb[0].mxu0
        %v5244 = vadd.f32 0.0, %v5243
        %v5245 = vpop.f32.mrb[0].mxu0
        %v5246 = vpop.f32.mrb[0].mxu0
        %v5247 = vadd.f32 0.0, %v5246
        %v5248 = vpop.f32.mrb[0].mxu0
        %5249 = vmatprep.mubr.bf16.mxu0 0
        %5250 = vmatmul.mubr.bf16.gmra.mrb[0].mxu0 %v5085
        %v5251 = vpop.f32.mrb[0].mxu0
        %v5252 = vadd.f32 0.0, %v5251
        %v5253 = vpop.f32.mrb[0].mxu0
        %v5254 = vpop.f32.mrb[0].mxu0
        %v5255 = vadd.f32 0.0, %v5254
        %v5256 = vpop.f32.mrb[0].mxu0
        %5257 = vmatprep.mubr.bf16.mxu0 0
        %5258 = vmatmul.mubr.bf16.gmra.mrb[0].mxu0 %v5086
        %v5259 = vpop.f32.mrb[0].mxu0
        %v5260 = vadd.f32 0.0, %v5259
        %v5261 = vpop.f32.mrb[0].mxu0
        %v5262 = vpop.f32.mrb[0].mxu0
        %v5263 = vadd.f32 0.0, %v5262
        %v5264 = vpop.f32.mrb[0].mxu0
        %5265 = vmatprep.mubr.bf16.mxu0 0
        %5266 = vmatmul.mubr.bf16.gmra.mrb[0].mxu0 %v5087
        %v5267 = vpop.f32.mrb[0].mxu0
        %v5268 = vadd.f32 0.0, %v5267
        %v5269 = vpop.f32.mrb[0].mxu0
        %v5270 = vpop.f32.mrb[0].mxu0
        %v5271 = vadd.f32 0.0, %v5270
        %v5272 = vpop.f32.mrb[0].mxu0
        %5273 = vmatprep.mubr.bf16.mxu0 0
        %5274 = vmatmul.mubr.bf16.gmra.mrb[0].mxu0 %v5088
        %v5275 = vpop.f32.mrb[0].mxu0
        %v5276 = vadd.f32 0.0, %v5275
        %v5277 = vpop.f32.mrb[0].mxu0
        %v5278 = vpop.f32.mrb[0].mxu0
        %v5279 = vadd.f32 0.0, %v5278
        %v5280 = vpop.f32.mrb[0].mxu0
        %5281 = vmatprep.mubr.bf16.mxu0 0
        %5282 = vmatmul.mubr.bf16.gmra.mrb[0].mxu0 %v5089
        %v5283 = vpop.f32.mrb[0].mxu0
        %v5284 = vadd.f32 0.0, %v5283
        %v5285 = vpop.f32.mrb[0].mxu0
        %v5286 = vpop.f32.mrb[0].mxu0
        %v5287 = vadd.f32 0.0, %v5286
        %v5288 = vpop.f32.mrb[0].mxu0
        %5289 = vmatprep.mubr.bf16.mxu0 0
        %5290 = vmatmul.mubr.bf16.gmra.mrb[0].mxu0 %v5090
        %v5291 = vpop.f32.mrb[0].mxu0
        %v5292 = vadd.f32 0.0, %v5291
        %v5293 = vpop.f32.mrb[0].mxu0
        %v5294 = vpop.f32.mrb[0].mxu0
        %v5295 = vadd.f32 0.0, %v5294
        %v5296 = vpop.f32.mrb[0].mxu0
        %5297 = vmatprep.mubr.bf16.mxu0 0
        %5298 = vmatmul.mubr.bf16.gmra.mrb[0].mxu0 %v5091
        %v5299 = vpop.f32.mrb[0].mxu0
        %v5300 = vadd.f32 0.0, %v5299
        %v5301 = vpop.f32.mrb[0].mxu0
        %v5302 = vpop.f32.mrb[0].mxu0
        %v5303 = vadd.f32 0.0, %v5302
        %v5304 = vpop.f32.mrb[0].mxu0
        %5305 = vmatprep.mubr.bf16.mxu0 0
        %5306 = vmatmul.mubr.bf16.gmra.mrb[0].mxu0 %v5092
        %v5307 = vpop.f32.mrb[0].mxu0
        %v5308 = vadd.f32 0.0, %v5307
        %v5309 = vpop.f32.mrb[0].mxu0
        %v5310 = vpop.f32.mrb[0].mxu0
        %v5311 = vadd.f32 0.0, %v5310
        %v5312 = vpop.f32.mrb[0].mxu0
        %5313 = vmatprep.mubr.bf16.mxu0 0
        %5314 = vmatmul.mubr.bf16.gmra.mrb[0].mxu0 %v5093
        %v5315 = vpop.f32.mrb[0].mxu0
        %v5316 = vadd.f32 0.0, %v5315
        %v5317 = vpop.f32.mrb[0].mxu0
        %v5318 = vpop.f32.mrb[0].mxu0
        %v5319 = vadd.f32 0.0, %v5318
        %v5320 = vpop.f32.mrb[0].mxu0
        %5321 = vmatprep.mubr.bf16.mxu0 0
        %5322 = vmatmul.mubr.bf16.gmra.mrb[0].mxu0 %v5094
        %v5323 = vpop.f32.mrb[0].mxu0
        %v5324 = vadd.f32 0.0, %v5323
        %v5325 = vpop.f32.mrb[0].mxu0
        %v5326 = vpop.f32.mrb[0].mxu0
        %v5327 = vadd.f32 0.0, %v5326
        %v5328 = vpop.f32.mrb[0].mxu0
        %5329 = vmatprep.mubr.bf16.mxu0 0
        %5330 = vmatmul.mubr.bf16.gmra.mrb[0].mxu0 %v5095
        %v5331 = vpop.f32.mrb[0].mxu0
        %v5332 = vadd.f32 0.0, %v5331
        %v5333 = vpop.f32.mrb[0].mxu0
        %v5334 = vpop.f32.mrb[0].mxu0
        %v5335 = vadd.f32 0.0, %v5334
        %v5336 = vpop.f32.mrb[0].mxu0
        %5337 = vmatprep.mubr.bf16.mxu0 0
        %5338 = vmatmul.mubr.bf16.gmra.mrb[0].mxu0 %v5096
        %v5339 = vpop.f32.mrb[0].mxu0
        %v5340 = vadd.f32 0.0, %v5339
        %v5341 = vpop.f32.mrb[0].mxu0
        %v5342 = vpop.f32.mrb[0].mxu0
        %v5343 = vadd.f32 0.0, %v5342
        %v5344 = vpop.f32.mrb[0].mxu0
        %5345 = vmatprep.mubr.bf16.mxu0 0
        %5346 = vmatmul.mubr.bf16.gmra.mrb[0].mxu0 %v5097
        %v5347 = vpop.f32.mrb[0].mxu0
        %v5348 = vadd.f32 0.0, %v5347
        %v5349 = vpop.f32.mrb[0].mxu0
        %v5350 = vpop.f32.mrb[0].mxu0
        %v5351 = vadd.f32 0.0, %v5350
        %v5352 = vpop.f32.mrb[0].mxu0
        %5353 = vmatprep.mubr.bf16.mxu0 0
        %5354 = vmatmul.mubr.bf16.gmra.mrb[0].mxu0 %v5098
        %v5355 = vpop.f32.mrb[0].mxu0
        %v5356 = vadd.f32 0.0, %v5355
        %v5357 = vpop.f32.mrb[0].mxu0
        %v5358 = vpop.f32.mrb[0].mxu0
        %v5359 = vadd.f32 0.0, %v5358
        %v5360 = vpop.f32.mrb[0].mxu0
        %5361 = vmatprep.mubr.bf16.mxu0 0
        %5362 = vmatmul.mubr.bf16.gmra.mrb[0].mxu0 %v5099
        %v5363 = vpop.f32.mrb[0].mxu0
        %v5364 = vadd.f32 0.0, %v5363
        %v5365 = vpop.f32.mrb[0].mxu0
        %v5366 = vpop.f32.mrb[0].mxu0
        %v5367 = vadd.f32 0.0, %v5366
        %v5368 = vpop.f32.mrb[0].mxu0
        %5369 = vmatprep.mubr.bf16.mxu0 0
        %5370 = vmatmul.mubr.bf16.gmra.mrb[0].mxu0 %v5100
        %v5371 = vpop.f32.mrb[0].mxu0
        %v5372 = vadd.f32 0.0, %v5371
        %v5373 = vpop.f32.mrb[0].mxu0
        %v5374 = vpop.f32.mrb[0].mxu0
        %v5375 = vadd.f32 0.0, %v5374
        %v5376 = vpop.f32.mrb[0].mxu0
        %5377 = vmatprep.mubr.bf16.mxu0 0
        %5378 = vmatmul.mubr.bf16.gmra.mrb[0].mxu0 %v5101
        %v5379 = vpop.f32.mrb[0].mxu0
        %v5380 = vadd.f32 0.0, %v5379
        %v5381 = vpop.f32.mrb[0].mxu0
        %v5382 = vpop.f32.mrb[0].mxu0
        %v5383 = vadd.f32 0.0, %v5382
        %v5384 = vpop.f32.mrb[0].mxu0
        %5385 = vmatprep.mubr.bf16.mxu0 0
        %5386 = vmatmul.mubr.bf16.gmra.mrb[0].mxu0 %v5102
        %v5387 = vpop.f32.mrb[0].mxu0
        %v5388 = vadd.f32 0.0, %v5387
        %v5389 = vpop.f32.mrb[0].mxu0
        %v5390 = vpop.f32.mrb[0].mxu0
        %v5391 = vadd.f32 0.0, %v5390
        %v5392 = vpop.f32.mrb[0].mxu0
        %5393 = vmatprep.mubr.bf16.mxu0 0
        %5394 = vmatmul.mubr.bf16.gmra.mrb[0].mxu0 %v5103
        %v5395 = vpop.f32.mrb[0].mxu0
        %v5396 = vadd.f32 0.0, %v5395
        %v5397 = vpop.f32.mrb[0].mxu0
        %v5398 = vpop.f32.mrb[0].mxu0
        %v5399 = vadd.f32 0.0, %v5398
        %v5400 = vpop.f32.mrb[0].mxu0
        %5401 = vmatprep.mubr.bf16.mxu0 0
        %5402 = vmatmul.mubr.bf16.gmra.mrb[0].mxu0 %v5104
        %v5403 = vpop.f32.mrb[0].mxu0
        %v5404 = vadd.f32 0.0, %v5403
        %v5405 = vpop.f32.mrb[0].mxu0
        %v5406 = vpop.f32.mrb[0].mxu0
        %v5407 = vadd.f32 0.0, %v5406
        %v5408 = vpop.f32.mrb[0].mxu0
        %5409 = vmatprep.mubr.bf16.mxu0 0
        %5410 = vmatmul.mubr.bf16.gmra.mrb[0].mxu0 %v5105
        %v5411 = vpop.f32.mrb[0].mxu0
        %v5412 = vadd.f32 0.0, %v5411
        %v5413 = vpop.f32.mrb[0].mxu0
        %v5414 = vpop.f32.mrb[0].mxu0
        %v5415 = vadd.f32 0.0, %v5414
        %v5416 = vpop.f32.mrb[0].mxu0
        %5417 = vmatprep.mubr.bf16.mxu0 0
        %5418 = vmatmul.mubr.bf16.gmra.mrb[0].mxu0 %v5106
        %v5419 = vpop.f32.mrb[0].mxu0
        %v5420 = vadd.f32 0.0, %v5419
        %v5421 = vpop.f32.mrb[0].mxu0
        %v5422 = vpop.f32.mrb[0].mxu0
        %v5423 = vadd.f32 0.0, %v5422
        %v5424 = vpop.f32.mrb[0].mxu0
        %5425 = vmatprep.mubr.bf16.mxu0 0
        %5426 = vmatmul.mubr.bf16.gmra.mrb[0].mxu0 %v5107
        %v5427 = vpop.f32.mrb[0].mxu0
        %v5428 = vadd.f32 0.0, %v5427
        %v5429 = vpop.f32.mrb[0].mxu0
        %v5430 = vpop.f32.mrb[0].mxu0
        %v5431 = vadd.f32 0.0, %v5430
        %v5432 = vpop.f32.mrb[0].mxu0
        %5433 = vmatprep.mubr.bf16.mxu0 0
        %5434 = vmatmul.mubr.bf16.gmra.mrb[0].mxu0 %v5108
        %v5435 = vpop.f32.mrb[0].mxu0
        %v5436 = vadd.f32 0.0, %v5435
        %v5437 = vpop.f32.mrb[0].mxu0
        %v5438 = vpop.f32.mrb[0].mxu0
        %v5439 = vadd.f32 0.0, %v5438
        %v5440 = vpop.f32.mrb[0].mxu0
        %5441 = vmatprep.mubr.bf16.mxu0 0
        %5442 = vmatmul.mubr.bf16.gmra.mrb[0].mxu0 %v5109
        %v5443 = vpop.f32.mrb[0].mxu0
        %v5444 = vadd.f32 0.0, %v5443
        %v5445 = vpop.f32.mrb[0].mxu0
        %v5446 = vpop.f32.mrb[0].mxu0
        %v5447 = vadd.f32 0.0, %v5446
        %v5448 = vpop.f32.mrb[0].mxu0
        %5449 = vmatprep.mubr.bf16.mxu0 0
        %5450 = vmatmul.mubr.bf16.gmra.mrb[0].mxu0 %v5110
        %v5451 = vpop.f32.mrb[0].mxu0
        %v5452 = vadd.f32 0.0, %v5451
        %v5453 = vpop.f32.mrb[0].mxu0
        %v5454 = vpop.f32.mrb[0].mxu0
        %v5455 = vadd.f32 0.0, %v5454
        %v5456 = vpop.f32.mrb[0].mxu0
        %5457 = vmatprep.mubr.bf16.mxu0 0
        %5458 = vmatmul.mubr.bf16.gmra.mrb[0].mxu0 %v5111
        %v5459 = vpop.f32.mrb[0].mxu0
        %v5460 = vadd.f32 0.0, %v5459
        %v5461 = vpop.f32.mrb[0].mxu0
        %v5462 = vpop.f32.mrb[0].mxu0
        %v5463 = vadd.f32 0.0, %v5462
        %v5464 = vpop.f32.mrb[0].mxu0
        %5465 = vdwg.mxu0
        %v5466 = vld [vmem:[#allocation3] sm:$0xff]
        %v5467 = vld [vmem:[#allocation3 + $0x8] sm:$0xff]
        %v5468 = vld [vmem:[#allocation3 + $0x10] sm:$0xff]
        %v5469 = vld [vmem:[#allocation3 + $0x18] sm:$0xff]
        %v5470 = vld [vmem:[#allocation3 + $0x20] sm:$0xff]
        %v5471 = vld [vmem:[#allocation3 + $0x28] sm:$0xff]
        %v5472 = vld [vmem:[#allocation3 + $0x30] sm:$0xff]
        %v5473 = vld [vmem:[#allocation3 + $0x38] sm:$0xff]
        %v5474 = vld [vmem:[#allocation3 + $0x40] sm:$0xff]
        %v5475 = vld [vmem:[#allocation3 + $0x48] sm:$0xff]
        %v5476 = vld [vmem:[#allocation3 + $0x50] sm:$0xff]
        %v5477 = vld [vmem:[#allocation3 + $0x58] sm:$0xff]
        %v5478 = vld [vmem:[#allocation3 + $0x60] sm:$0xff]
        %v5479 = vld [vmem:[#allocation3 + $0x68] sm:$0xff]
        %v5480 = vld [vmem:[#allocation3 + $0x70] sm:$0xff]
        %v5481 = vld [vmem:[#allocation3 + $0x78] sm:$0xff]
        %v5482 = vld [vmem:[#allocation3 + $0x80] sm:$0xff]
        %v5483 = vld [vmem:[#allocation3 + $0x88] sm:$0xff]
        %v5484 = vld [vmem:[#allocation3 + $0x90] sm:$0xff]
        %v5485 = vld [vmem:[#allocation3 + $0x98] sm:$0xff]
        %v5486 = vld [vmem:[#allocation3 + $0xa0] sm:$0xff]
        %v5487 = vld [vmem:[#allocation3 + $0xa8] sm:$0xff]
        %v5488 = vld [vmem:[#allocation3 + $0xb0] sm:$0xff]
        %v5489 = vld [vmem:[#allocation3 + $0xb8] sm:$0xff]
        %v5490 = vld [vmem:[#allocation3 + $0xc0] sm:$0xff]
        %v5491 = vld [vmem:[#allocation3 + $0xc8] sm:$0xff]
        %v5492 = vld [vmem:[#allocation3 + $0xd0] sm:$0xff]
        %v5493 = vld [vmem:[#allocation3 + $0xd8] sm:$0xff]
        %v5494 = vld [vmem:[#allocation3 + $0xe0] sm:$0xff]
        %v5495 = vld [vmem:[#allocation3 + $0xe8] sm:$0xff]
        %v5496 = vld [vmem:[#allocation3 + $0xf0] sm:$0xff]
        %v5497 = vld [vmem:[#allocation3 + $0xf8] sm:$0xff]
        %v5498 = vld [vmem:[#allocation3 + $0x100] sm:$0xff]
        %v5499 = vld [vmem:[#allocation3 + $0x108] sm:$0xff]
        %v5500 = vld [vmem:[#allocation3 + $0x110] sm:$0xff]
        %v5501 = vld [vmem:[#allocation3 + $0x118] sm:$0xff]
        %v5502 = vld [vmem:[#allocation3 + $0x120] sm:$0xff]
        %v5503 = vld [vmem:[#allocation3 + $0x128] sm:$0xff]
        %v5504 = vld [vmem:[#allocation3 + $0x130] sm:$0xff]
        %v5505 = vld [vmem:[#allocation3 + $0x138] sm:$0xff]
        %v5506 = vld [vmem:[#allocation3 + $0x140] sm:$0xff]
        %v5507 = vld [vmem:[#allocation3 + $0x148] sm:$0xff]
        %v5508 = vld [vmem:[#allocation3 + $0x150] sm:$0xff]
        %v5509 = vld [vmem:[#allocation3 + $0x158] sm:$0xff]
        %v5510 = vld [vmem:[#allocation3 + $0x160] sm:$0xff]
        %v5511 = vld [vmem:[#allocation3 + $0x168] sm:$0xff]
        %v5512 = vld [vmem:[#allocation3 + $0x170] sm:$0xff]
        %v5513 = vld [vmem:[#allocation3 + $0x178] sm:$0xff]
        %v5514 = vld [vmem:[#allocation3 + $0x180] sm:$0xff]
        %v5515 = vld [vmem:[#allocation3 + $0x188] sm:$0xff]
        %v5516 = vld [vmem:[#allocation3 + $0x190] sm:$0xff]
        %v5517 = vld [vmem:[#allocation3 + $0x198] sm:$0xff]
        %v5518 = vld [vmem:[#allocation3 + $0x1a0] sm:$0xff]
        %v5519 = vld [vmem:[#allocation3 + $0x1a8] sm:$0xff]
        %v5520 = vld [vmem:[#allocation3 + $0x1b0] sm:$0xff]
        %v5521 = vld [vmem:[#allocation3 + $0x1b8] sm:$0xff]
        %v5522 = vld [vmem:[#allocation3 + $0x1c0] sm:$0xff]
        %v5523 = vld [vmem:[#allocation3 + $0x1c8] sm:$0xff]
        %v5524 = vld [vmem:[#allocation3 + $0x1d0] sm:$0xff]
        %v5525 = vld [vmem:[#allocation3 + $0x1d8] sm:$0xff]
        %v5526 = vld [vmem:[#allocation3 + $0x1e0] sm:$0xff]
        %v5527 = vld [vmem:[#allocation3 + $0x1e8] sm:$0xff]
        %v5528 = vld [vmem:[#allocation3 + $0x1f0] sm:$0xff]
        %v5529 = vld [vmem:[#allocation3 + $0x1f8] sm:$0xff]
        %v5530 = vadd.f32 %v5466, %v5212
        %v5531 = vadd.f32 %v5467, %v5215
        %v5532 = vadd.f32 %v5468, %v5220
        %v5533 = vadd.f32 %v5469, %v5223
        %v5534 = vadd.f32 %v5470, %v5228
        %v5535 = vadd.f32 %v5471, %v5231
        %v5536 = vadd.f32 %v5472, %v5236
        %v5537 = vadd.f32 %v5473, %v5239
        %v5538 = vadd.f32 %v5474, %v5244
        %v5539 = vadd.f32 %v5475, %v5247
        %v5540 = vadd.f32 %v5476, %v5252
        %v5541 = vadd.f32 %v5477, %v5255
        %v5542 = vadd.f32 %v5478, %v5260
        %v5543 = vadd.f32 %v5479, %v5263
        %v5544 = vadd.f32 %v5480, %v5268
        %v5545 = vadd.f32 %v5481, %v5271
        %v5546 = vadd.f32 %v5482, %v5276
        %v5547 = vadd.f32 %v5483, %v5279
        %v5548 = vadd.f32 %v5484, %v5284
        %v5549 = vadd.f32 %v5485, %v5287
        %v5550 = vadd.f32 %v5486, %v5292
        %v5551 = vadd.f32 %v5487, %v5295
        %v5552 = vadd.f32 %v5488, %v5300
        %v5553 = vadd.f32 %v5489, %v5303
        %v5554 = vadd.f32 %v5490, %v5308
        %v5555 = vadd.f32 %v5491, %v5311
        %v5556 = vadd.f32 %v5492, %v5316
        %v5557 = vadd.f32 %v5493, %v5319
        %v5558 = vadd.f32 %v5494, %v5324
        %v5559 = vadd.f32 %v5495, %v5327
        %v5560 = vadd.f32 %v5496, %v5332
        %v5561 = vadd.f32 %v5497, %v5335
        %v5562 = vadd.f32 %v5498, %v5340
        %v5563 = vadd.f32 %v5499, %v5343
        %v5564 = vadd.f32 %v5500, %v5348
        %v5565 = vadd.f32 %v5501, %v5351
        %v5566 = vadd.f32 %v5502, %v5356
        %v5567 = vadd.f32 %v5503, %v5359
        %v5568 = vadd.f32 %v5504, %v5364
        %v5569 = vadd.f32 %v5505, %v5367
        %v5570 = vadd.f32 %v5506, %v5372
        %v5571 = vadd.f32 %v5507, %v5375
        %v5572 = vadd.f32 %v5508, %v5380
        %v5573 = vadd.f32 %v5509, %v5383
        %v5574 = vadd.f32 %v5510, %v5388
        %v5575 = vadd.f32 %v5511, %v5391
        %v5576 = vadd.f32 %v5512, %v5396
        %v5577 = vadd.f32 %v5513, %v5399
        %v5578 = vadd.f32 %v5514, %v5404
        %v5579 = vadd.f32 %v5515, %v5407
        %v5580 = vadd.f32 %v5516, %v5412
        %v5581 = vadd.f32 %v5517, %v5415
        %v5582 = vadd.f32 %v5518, %v5420
        %v5583 = vadd.f32 %v5519, %v5423
        %v5584 = vadd.f32 %v5520, %v5428
        %v5585 = vadd.f32 %v5521, %v5431
        %v5586 = vadd.f32 %v5522, %v5436
        %v5587 = vadd.f32 %v5523, %v5439
        %v5588 = vadd.f32 %v5524, %v5444
        %v5589 = vadd.f32 %v5525, %v5447
        %v5590 = vadd.f32 %v5526, %v5452
        %v5591 = vadd.f32 %v5527, %v5455
        %v5592 = vadd.f32 %v5528, %v5460
        %v5593 = vadd.f32 %v5529, %v5463
        %5594 = vst [vmem:[#allocation3] sm:$0xff] %v5530
        %5595 = vst [vmem:[#allocation3 + $0x8] sm:$0xff] %v5531
        %5596 = vst [vmem:[#allocation3 + $0x10] sm:$0xff] %v5532
        %5597 = vst [vmem:[#allocation3 + $0x18] sm:$0xff] %v5533
        %5598 = vst [vmem:[#allocation3 + $0x20] sm:$0xff] %v5534
        %5599 = vst [vmem:[#allocation3 + $0x28] sm:$0xff] %v5535
        %5600 = vst [vmem:[#allocation3 + $0x30] sm:$0xff] %v5536
        %5601 = vst [vmem:[#allocation3 + $0x38] sm:$0xff] %v5537
        %5602 = vst [vmem:[#allocation3 + $0x40] sm:$0xff] %v5538
        %5603 = vst [vmem:[#allocation3 + $0x48] sm:$0xff] %v5539
        %5604 = vst [vmem:[#allocation3 + $0x50] sm:$0xff] %v5540
        %5605 = vst [vmem:[#allocation3 + $0x58] sm:$0xff] %v5541
        %5606 = vst [vmem:[#allocation3 + $0x60] sm:$0xff] %v5542
        %5607 = vst [vmem:[#allocation3 + $0x68] sm:$0xff] %v5543
        %5608 = vst [vmem:[#allocation3 + $0x70] sm:$0xff] %v5544
        %5609 = vst [vmem:[#allocation3 + $0x78] sm:$0xff] %v5545
        %5610 = vst [vmem:[#allocation3 + $0x80] sm:$0xff] %v5546
        %5611 = vst [vmem:[#allocation3 + $0x88] sm:$0xff] %v5547
        %5612 = vst [vmem:[#allocation3 + $0x90] sm:$0xff] %v5548
        %5613 = vst [vmem:[#allocation3 + $0x98] sm:$0xff] %v5549
        %5614 = vst [vmem:[#allocation3 + $0xa0] sm:$0xff] %v5550
        %5615 = vst [vmem:[#allocation3 + $0xa8] sm:$0xff] %v5551
        %5616 = vst [vmem:[#allocation3 + $0xb0] sm:$0xff] %v5552
        %5617 = vst [vmem:[#allocation3 + $0xb8] sm:$0xff] %v5553
        %5618 = vst [vmem:[#allocation3 + $0xc0] sm:$0xff] %v5554
        %5619 = vst [vmem:[#allocation3 + $0xc8] sm:$0xff] %v5555
        %5620 = vst [vmem:[#allocation3 + $0xd0] sm:$0xff] %v5556
        %5621 = vst [vmem:[#allocation3 + $0xd8] sm:$0xff] %v5557
        %5622 = vst [vmem:[#allocation3 + $0xe0] sm:$0xff] %v5558
        %5623 = vst [vmem:[#allocation3 + $0xe8] sm:$0xff] %v5559
        %5624 = vst [vmem:[#allocation3 + $0xf0] sm:$0xff] %v5560
        %5625 = vst [vmem:[#allocation3 + $0xf8] sm:$0xff] %v5561
        %5626 = vst [vmem:[#allocation3 + $0x100] sm:$0xff] %v5562
        %5627 = vst [vmem:[#allocation3 + $0x108] sm:$0xff] %v5563
        %5628 = vst [vmem:[#allocation3 + $0x110] sm:$0xff] %v5564
        %5629 = vst [vmem:[#allocation3 + $0x118] sm:$0xff] %v5565
        %5630 = vst [vmem:[#allocation3 + $0x120] sm:$0xff] %v5566
        %5631 = vst [vmem:[#allocation3 + $0x128] sm:$0xff] %v5567
        %5632 = vst [vmem:[#allocation3 + $0x130] sm:$0xff] %v5568
        %5633 = vst [vmem:[#allocation3 + $0x138] sm:$0xff] %v5569
        %5634 = vst [vmem:[#allocation3 + $0x140] sm:$0xff] %v5570
        %5635 = vst [vmem:[#allocation3 + $0x148] sm:$0xff] %v5571
        %5636 = vst [vmem:[#allocation3 + $0x150] sm:$0xff] %v5572
        %5637 = vst [vmem:[#allocation3 + $0x158] sm:$0xff] %v5573
        %5638 = vst [vmem:[#allocation3 + $0x160] sm:$0xff] %v5574
        %5639 = vst [vmem:[#allocation3 + $0x168] sm:$0xff] %v5575
        %5640 = vst [vmem:[#allocation3 + $0x170] sm:$0xff] %v5576
        %5641 = vst [vmem:[#allocation3 + $0x178] sm:$0xff] %v5577
        %5642 = vst [vmem:[#allocation3 + $0x180] sm:$0xff] %v5578
        %5643 = vst [vmem:[#allocation3 + $0x188] sm:$0xff] %v5579
        %5644 = vst [vmem:[#allocation3 + $0x190] sm:$0xff] %v5580
        %5645 = vst [vmem:[#allocation3 + $0x198] sm:$0xff] %v5581
        %5646 = vst [vmem:[#allocation3 + $0x1a0] sm:$0xff] %v5582
        %5647 = vst [vmem:[#allocation3 + $0x1a8] sm:$0xff] %v5583
        %5648 = vst [vmem:[#allocation3 + $0x1b0] sm:$0xff] %v5584
        %5649 = vst [vmem:[#allocation3 + $0x1b8] sm:$0xff] %v5585
        %5650 = vst [vmem:[#allocation3 + $0x1c0] sm:$0xff] %v5586
        %5651 = vst [vmem:[#allocation3 + $0x1c8] sm:$0xff] %v5587
        %5652 = vst [vmem:[#allocation3 + $0x1d0] sm:$0xff] %v5588
        %5653 = vst [vmem:[#allocation3 + $0x1d8] sm:$0xff] %v5589
        %5654 = vst [vmem:[#allocation3 + $0x1e0] sm:$0xff] %v5590
        %5655 = vst [vmem:[#allocation3 + $0x1e8] sm:$0xff] %v5591
        %5656 = vst [vmem:[#allocation3 + $0x1f0] sm:$0xff] %v5592
        %5657 = vst [vmem:[#allocation3 + $0x1f8] sm:$0xff] %v5593
        %v5658 = vpack.c.bf16 %v4794, %v4793
        %v5659 = vpack.c.bf16 %v4798, %v4797
        %v5660 = vpack.c.bf16 %v4802, %v4801
        %v5661 = vpack.c.bf16 %v4806, %v4805
        %v5662 = vpack.c.bf16 %v4810, %v4809
        %v5663 = vpack.c.bf16 %v4814, %v4813
        %v5664 = vpack.c.bf16 %v4818, %v4817
        %v5665 = vpack.c.bf16 %v4822, %v4821
        %v5666 = vpack.c.bf16 %v4826, %v4825
        %v5667 = vpack.c.bf16 %v4830, %v4829
        %v5668 = vpack.c.bf16 %v4834, %v4833
        %v5669 = vpack.c.bf16 %v4838, %v4837
        %v5670 = vpack.c.bf16 %v4842, %v4841
        %v5671 = vpack.c.bf16 %v4846, %v4845
        %v5672 = vpack.c.bf16 %v4850, %v4849
        %v5673 = vpack.c.bf16 %v4854, %v4853
        %v5674 = vpack.c.bf16 %v4858, %v4857
        %v5675 = vpack.c.bf16 %v4862, %v4861
        %v5676 = vpack.c.bf16 %v4866, %v4865
        %v5677 = vpack.c.bf16 %v4870, %v4869
        %v5678 = vpack.c.bf16 %v4874, %v4873
        %v5679 = vpack.c.bf16 %v4878, %v4877
        %v5680 = vpack.c.bf16 %v4882, %v4881
        %v5681 = vpack.c.bf16 %v4886, %v4885
        %v5682 = vpack.c.bf16 %v4890, %v4889
        %v5683 = vpack.c.bf16 %v4894, %v4893
        %v5684 = vpack.c.bf16 %v4898, %v4897
        %v5685 = vpack.c.bf16 %v4902, %v4901
        %v5686 = vpack.c.bf16 %v4906, %v4905
        %v5687 = vpack.c.bf16 %v4910, %v4909
        %v5688 = vpack.c.bf16 %v4914, %v4913
        %v5689 = vpack.c.bf16 %v4918, %v4917
        %s5690 = scalar_lea.vmem %s232, 448 [#allocation4]
        %v5691 = vld [vmem:[%s5690] sm:$0xf]
        %v5692 = vld [vmem:[%s5690 + $0x4] sm:$0xf]
        %v5693 = vld [vmem:[%s5690 + $0x8] sm:$0xf]
        %v5694 = vld [vmem:[%s5690 + $0xc] sm:$0xf]
        %v5695 = vld [vmem:[%s5690 + $0x10] sm:$0xf]
        %v5696 = vld [vmem:[%s5690 + $0x14] sm:$0xf]
        %v5697 = vld [vmem:[%s5690 + $0x18] sm:$0xf]
        %v5698 = vld [vmem:[%s5690 + $0x1c] sm:$0xf]
        %v5699 = vld [vmem:[%s5690 + $0x20] sm:$0xf]
        %v5700 = vld [vmem:[%s5690 + $0x24] sm:$0xf]
        %v5701 = vld [vmem:[%s5690 + $0x28] sm:$0xf]
        %v5702 = vld [vmem:[%s5690 + $0x2c] sm:$0xf]
        %v5703 = vld [vmem:[%s5690 + $0x30] sm:$0xf]
        %v5704 = vld [vmem:[%s5690 + $0x34] sm:$0xf]
        %v5705 = vld [vmem:[%s5690 + $0x38] sm:$0xf]
        %v5706 = vld [vmem:[%s5690 + $0x3c] sm:$0xf]
        %v5723 = vunpack.c.l.b16 %v5691
        %v5724 = vunpack.c.l.b16 %v5692
        %v5725 = vunpack.c.l.b16 %v5693
        %v5726 = vunpack.c.l.b16 %v5694
        %v5727 = vunpack.c.l.b16 %v5695
        %v5728 = vunpack.c.l.b16 %v5696
        %v5729 = vunpack.c.l.b16 %v5697
        %v5730 = vunpack.c.l.b16 %v5698
        %v5731 = vunpack.c.l.b16 %v5699
        %v5732 = vunpack.c.l.b16 %v5700
        %v5733 = vunpack.c.l.b16 %v5701
        %v5734 = vunpack.c.l.b16 %v5702
        %v5735 = vunpack.c.l.b16 %v5703
        %v5736 = vunpack.c.l.b16 %v5704
        %v5737 = vunpack.c.l.b16 %v5705
        %v5738 = vunpack.c.l.b16 %v5706
        %v5739 = vpack.c.b16 %v5724, %v5723
        %v5740 = vpack.c.b16 %v5726, %v5725
        %v5741 = vpack.c.b16 %v5728, %v5727
        %v5742 = vpack.c.b16 %v5730, %v5729
        %v5743 = vpack.c.b16 %v5732, %v5731
        %v5744 = vpack.c.b16 %v5734, %v5733
        %v5745 = vpack.c.b16 %v5736, %v5735
        %v5746 = vpack.c.b16 %v5738, %v5737
        %5755 = vmatprep.subr.bf16.mxu0 0
        %5756 = vmatpush1.bf16.msra.mxu0 %v5739
        %5757 = vmatprep.subr.bf16.mxu0 0
        %5758 = vmatpush1.bf16.msra.mxu0 %v5740
        %5759 = vmatprep.subr.bf16.mxu0 0
        %5760 = vmatpush1.bf16.msra.mxu0 %v5741
        %5761 = vmatprep.subr.bf16.mxu0 0
        %5762 = vmatpush1.bf16.msra.mxu0 %v5742
        %5763 = vmatprep.subr.bf16.mxu0 0
        %5764 = vmatpush1.bf16.msra.mxu0 %v5743
        %5765 = vmatprep.subr.bf16.mxu0 0
        %5766 = vmatpush1.bf16.msra.mxu0 %v5744
        %5767 = vmatprep.subr.bf16.mxu0 0
        %5768 = vmatpush1.bf16.msra.mxu0 %v5745
        %5769 = vmatprep.subr.bf16.mxu0 0
        %5770 = vmatpush1.bf16.msra.mxu0 %v5746
        %5771 = vmatprep.subr.bf16.mxu0 0
        %5772 = vmatpush1.bf16.msra.mxu0 0
        %5773 = vmatprep.subr.bf16.mxu0 0
        %5774 = vmatpush1.bf16.msra.mxu0 0
        %5775 = vmatprep.subr.bf16.mxu0 0
        %5776 = vmatpush1.bf16.msra.mxu0 0
        %5777 = vmatprep.subr.bf16.mxu0 0
        %5778 = vmatpush1.bf16.msra.mxu0 0
        %5779 = vmatprep.subr.bf16.mxu0 0
        %5780 = vmatpush1.bf16.msra.mxu0 0
        %5781 = vmatprep.subr.bf16.mxu0 0
        %5782 = vmatpush1.bf16.msra.mxu0 0
        %5783 = vmatprep.subr.bf16.mxu0 0
        %5784 = vmatpush1.bf16.msra.mxu0 0
        %5785 = vmatprep.subr.bf16.mxu0 0
        %5786 = vmatpush1.bf16.msra.mxu0 0
        %5787 = vmatprep.mubr.bf16.mxu0 0
        %5788 = vmatmul.mubr.bf16.gmra.mrb[0].mxu0 %v5658
        %v5789 = vpop.f32.mrb[0].mxu0
        %v5790 = vadd.f32 0.0, %v5789
        %v5791 = vpop.f32.mrb[0].mxu0
        %v5792 = vpop.f32.mrb[0].mxu0
        %v5793 = vadd.f32 0.0, %v5792
        %v5794 = vpop.f32.mrb[0].mxu0
        %5795 = vmatprep.mubr.bf16.mxu0 0
        %5796 = vmatmul.mubr.bf16.gmra.mrb[0].mxu0 %v5659
        %v5797 = vpop.f32.mrb[0].mxu0
        %v5798 = vadd.f32 0.0, %v5797
        %v5799 = vpop.f32.mrb[0].mxu0
        %v5800 = vpop.f32.mrb[0].mxu0
        %v5801 = vadd.f32 0.0, %v5800
        %v5802 = vpop.f32.mrb[0].mxu0
        %5803 = vmatprep.mubr.bf16.mxu0 0
        %5804 = vmatmul.mubr.bf16.gmra.mrb[0].mxu0 %v5660
        %v5805 = vpop.f32.mrb[0].mxu0
        %v5806 = vadd.f32 0.0, %v5805
        %v5807 = vpop.f32.mrb[0].mxu0
        %v5808 = vpop.f32.mrb[0].mxu0
        %v5809 = vadd.f32 0.0, %v5808
        %v5810 = vpop.f32.mrb[0].mxu0
        %5811 = vmatprep.mubr.bf16.mxu0 0
        %5812 = vmatmul.mubr.bf16.gmra.mrb[0].mxu0 %v5661
        %v5813 = vpop.f32.mrb[0].mxu0
        %v5814 = vadd.f32 0.0, %v5813
        %v5815 = vpop.f32.mrb[0].mxu0
        %v5816 = vpop.f32.mrb[0].mxu0
        %v5817 = vadd.f32 0.0, %v5816
        %v5818 = vpop.f32.mrb[0].mxu0
        %5819 = vmatprep.mubr.bf16.mxu0 0
        %5820 = vmatmul.mubr.bf16.gmra.mrb[0].mxu0 %v5662
        %v5821 = vpop.f32.mrb[0].mxu0
        %v5822 = vadd.f32 0.0, %v5821
        %v5823 = vpop.f32.mrb[0].mxu0
        %v5824 = vpop.f32.mrb[0].mxu0
        %v5825 = vadd.f32 0.0, %v5824
        %v5826 = vpop.f32.mrb[0].mxu0
        %5827 = vmatprep.mubr.bf16.mxu0 0
        %5828 = vmatmul.mubr.bf16.gmra.mrb[0].mxu0 %v5663
        %v5829 = vpop.f32.mrb[0].mxu0
        %v5830 = vadd.f32 0.0, %v5829
        %v5831 = vpop.f32.mrb[0].mxu0
        %v5832 = vpop.f32.mrb[0].mxu0
        %v5833 = vadd.f32 0.0, %v5832
        %v5834 = vpop.f32.mrb[0].mxu0
        %5835 = vmatprep.mubr.bf16.mxu0 0
        %5836 = vmatmul.mubr.bf16.gmra.mrb[0].mxu0 %v5664
        %v5837 = vpop.f32.mrb[0].mxu0
        %v5838 = vadd.f32 0.0, %v5837
        %v5839 = vpop.f32.mrb[0].mxu0
        %v5840 = vpop.f32.mrb[0].mxu0
        %v5841 = vadd.f32 0.0, %v5840
        %v5842 = vpop.f32.mrb[0].mxu0
        %5843 = vmatprep.mubr.bf16.mxu0 0
        %5844 = vmatmul.mubr.bf16.gmra.mrb[0].mxu0 %v5665
        %v5845 = vpop.f32.mrb[0].mxu0
        %v5846 = vadd.f32 0.0, %v5845
        %v5847 = vpop.f32.mrb[0].mxu0
        %v5848 = vpop.f32.mrb[0].mxu0
        %v5849 = vadd.f32 0.0, %v5848
        %v5850 = vpop.f32.mrb[0].mxu0
        %5851 = vmatprep.mubr.bf16.mxu0 0
        %5852 = vmatmul.mubr.bf16.gmra.mrb[0].mxu0 %v5666
        %v5853 = vpop.f32.mrb[0].mxu0
        %v5854 = vadd.f32 0.0, %v5853
        %v5855 = vpop.f32.mrb[0].mxu0
        %v5856 = vpop.f32.mrb[0].mxu0
        %v5857 = vadd.f32 0.0, %v5856
        %v5858 = vpop.f32.mrb[0].mxu0
        %5859 = vmatprep.mubr.bf16.mxu0 0
        %5860 = vmatmul.mubr.bf16.gmra.mrb[0].mxu0 %v5667
        %v5861 = vpop.f32.mrb[0].mxu0
        %v5862 = vadd.f32 0.0, %v5861
        %v5863 = vpop.f32.mrb[0].mxu0
        %v5864 = vpop.f32.mrb[0].mxu0
        %v5865 = vadd.f32 0.0, %v5864
        %v5866 = vpop.f32.mrb[0].mxu0
        %5867 = vmatprep.mubr.bf16.mxu0 0
        %5868 = vmatmul.mubr.bf16.gmra.mrb[0].mxu0 %v5668
        %v5869 = vpop.f32.mrb[0].mxu0
        %v5870 = vadd.f32 0.0, %v5869
        %v5871 = vpop.f32.mrb[0].mxu0
        %v5872 = vpop.f32.mrb[0].mxu0
        %v5873 = vadd.f32 0.0, %v5872
        %v5874 = vpop.f32.mrb[0].mxu0
        %5875 = vmatprep.mubr.bf16.mxu0 0
        %5876 = vmatmul.mubr.bf16.gmra.mrb[0].mxu0 %v5669
        %v5877 = vpop.f32.mrb[0].mxu0
        %v5878 = vadd.f32 0.0, %v5877
        %v5879 = vpop.f32.mrb[0].mxu0
        %v5880 = vpop.f32.mrb[0].mxu0
        %v5881 = vadd.f32 0.0, %v5880
        %v5882 = vpop.f32.mrb[0].mxu0
        %5883 = vmatprep.mubr.bf16.mxu0 0
        %5884 = vmatmul.mubr.bf16.gmra.mrb[0].mxu0 %v5670
        %v5885 = vpop.f32.mrb[0].mxu0
        %v5886 = vadd.f32 0.0, %v5885
        %v5887 = vpop.f32.mrb[0].mxu0
        %v5888 = vpop.f32.mrb[0].mxu0
        %v5889 = vadd.f32 0.0, %v5888
        %v5890 = vpop.f32.mrb[0].mxu0
        %5891 = vmatprep.mubr.bf16.mxu0 0
        %5892 = vmatmul.mubr.bf16.gmra.mrb[0].mxu0 %v5671
        %v5893 = vpop.f32.mrb[0].mxu0
        %v5894 = vadd.f32 0.0, %v5893
        %v5895 = vpop.f32.mrb[0].mxu0
        %v5896 = vpop.f32.mrb[0].mxu0
        %v5897 = vadd.f32 0.0, %v5896
        %v5898 = vpop.f32.mrb[0].mxu0
        %5899 = vmatprep.mubr.bf16.mxu0 0
        %5900 = vmatmul.mubr.bf16.gmra.mrb[0].mxu0 %v5672
        %v5901 = vpop.f32.mrb[0].mxu0
        %v5902 = vadd.f32 0.0, %v5901
        %v5903 = vpop.f32.mrb[0].mxu0
        %v5904 = vpop.f32.mrb[0].mxu0
        %v5905 = vadd.f32 0.0, %v5904
        %v5906 = vpop.f32.mrb[0].mxu0
        %5907 = vmatprep.mubr.bf16.mxu0 0
        %5908 = vmatmul.mubr.bf16.gmra.mrb[0].mxu0 %v5673
        %v5909 = vpop.f32.mrb[0].mxu0
        %v5910 = vadd.f32 0.0, %v5909
        %v5911 = vpop.f32.mrb[0].mxu0
        %v5912 = vpop.f32.mrb[0].mxu0
        %v5913 = vadd.f32 0.0, %v5912
        %v5914 = vpop.f32.mrb[0].mxu0
        %5915 = vmatprep.mubr.bf16.mxu0 0
        %5916 = vmatmul.mubr.bf16.gmra.mrb[0].mxu0 %v5674
        %v5917 = vpop.f32.mrb[0].mxu0
        %v5918 = vadd.f32 0.0, %v5917
        %v5919 = vpop.f32.mrb[0].mxu0
        %v5920 = vpop.f32.mrb[0].mxu0
        %v5921 = vadd.f32 0.0, %v5920
        %v5922 = vpop.f32.mrb[0].mxu0
        %5923 = vmatprep.mubr.bf16.mxu0 0
        %5924 = vmatmul.mubr.bf16.gmra.mrb[0].mxu0 %v5675
        %v5925 = vpop.f32.mrb[0].mxu0
        %v5926 = vadd.f32 0.0, %v5925
        %v5927 = vpop.f32.mrb[0].mxu0
        %v5928 = vpop.f32.mrb[0].mxu0
        %v5929 = vadd.f32 0.0, %v5928
        %v5930 = vpop.f32.mrb[0].mxu0
        %5931 = vmatprep.mubr.bf16.mxu0 0
        %5932 = vmatmul.mubr.bf16.gmra.mrb[0].mxu0 %v5676
        %v5933 = vpop.f32.mrb[0].mxu0
        %v5934 = vadd.f32 0.0, %v5933
        %v5935 = vpop.f32.mrb[0].mxu0
        %v5936 = vpop.f32.mrb[0].mxu0
        %v5937 = vadd.f32 0.0, %v5936
        %v5938 = vpop.f32.mrb[0].mxu0
        %5939 = vmatprep.mubr.bf16.mxu0 0
        %5940 = vmatmul.mubr.bf16.gmra.mrb[0].mxu0 %v5677
        %v5941 = vpop.f32.mrb[0].mxu0
        %v5942 = vadd.f32 0.0, %v5941
        %v5943 = vpop.f32.mrb[0].mxu0
        %v5944 = vpop.f32.mrb[0].mxu0
        %v5945 = vadd.f32 0.0, %v5944
        %v5946 = vpop.f32.mrb[0].mxu0
        %5947 = vmatprep.mubr.bf16.mxu0 0
        %5948 = vmatmul.mubr.bf16.gmra.mrb[0].mxu0 %v5678
        %v5949 = vpop.f32.mrb[0].mxu0
        %v5950 = vadd.f32 0.0, %v5949
        %v5951 = vpop.f32.mrb[0].mxu0
        %v5952 = vpop.f32.mrb[0].mxu0
        %v5953 = vadd.f32 0.0, %v5952
        %v5954 = vpop.f32.mrb[0].mxu0
        %5955 = vmatprep.mubr.bf16.mxu0 0
        %5956 = vmatmul.mubr.bf16.gmra.mrb[0].mxu0 %v5679
        %v5957 = vpop.f32.mrb[0].mxu0
        %v5958 = vadd.f32 0.0, %v5957
        %v5959 = vpop.f32.mrb[0].mxu0
        %v5960 = vpop.f32.mrb[0].mxu0
        %v5961 = vadd.f32 0.0, %v5960
        %v5962 = vpop.f32.mrb[0].mxu0
        %5963 = vmatprep.mubr.bf16.mxu0 0
        %5964 = vmatmul.mubr.bf16.gmra.mrb[0].mxu0 %v5680
        %v5965 = vpop.f32.mrb[0].mxu0
        %v5966 = vadd.f32 0.0, %v5965
        %v5967 = vpop.f32.mrb[0].mxu0
        %v5968 = vpop.f32.mrb[0].mxu0
        %v5969 = vadd.f32 0.0, %v5968
        %v5970 = vpop.f32.mrb[0].mxu0
        %5971 = vmatprep.mubr.bf16.mxu0 0
        %5972 = vmatmul.mubr.bf16.gmra.mrb[0].mxu0 %v5681
        %v5973 = vpop.f32.mrb[0].mxu0
        %v5974 = vadd.f32 0.0, %v5973
        %v5975 = vpop.f32.mrb[0].mxu0
        %v5976 = vpop.f32.mrb[0].mxu0
        %v5977 = vadd.f32 0.0, %v5976
        %v5978 = vpop.f32.mrb[0].mxu0
        %5979 = vmatprep.mubr.bf16.mxu0 0
        %5980 = vmatmul.mubr.bf16.gmra.mrb[0].mxu0 %v5682
        %v5981 = vpop.f32.mrb[0].mxu0
        %v5982 = vadd.f32 0.0, %v5981
        %v5983 = vpop.f32.mrb[0].mxu0
        %v5984 = vpop.f32.mrb[0].mxu0
        %v5985 = vadd.f32 0.0, %v5984
        %v5986 = vpop.f32.mrb[0].mxu0
        %5987 = vmatprep.mubr.bf16.mxu0 0
        %5988 = vmatmul.mubr.bf16.gmra.mrb[0].mxu0 %v5683
        %v5989 = vpop.f32.mrb[0].mxu0
        %v5990 = vadd.f32 0.0, %v5989
        %v5991 = vpop.f32.mrb[0].mxu0
        %v5992 = vpop.f32.mrb[0].mxu0
        %v5993 = vadd.f32 0.0, %v5992
        %v5994 = vpop.f32.mrb[0].mxu0
        %5995 = vmatprep.mubr.bf16.mxu0 0
        %5996 = vmatmul.mubr.bf16.gmra.mrb[0].mxu0 %v5684
        %v5997 = vpop.f32.mrb[0].mxu0
        %v5998 = vadd.f32 0.0, %v5997
        %v5999 = vpop.f32.mrb[0].mxu0
        %v6000 = vpop.f32.mrb[0].mxu0
        %v6001 = vadd.f32 0.0, %v6000
        %v6002 = vpop.f32.mrb[0].mxu0
        %6003 = vmatprep.mubr.bf16.mxu0 0
        %6004 = vmatmul.mubr.bf16.gmra.mrb[0].mxu0 %v5685
        %v6005 = vpop.f32.mrb[0].mxu0
        %v6006 = vadd.f32 0.0, %v6005
        %v6007 = vpop.f32.mrb[0].mxu0
        %v6008 = vpop.f32.mrb[0].mxu0
        %v6009 = vadd.f32 0.0, %v6008
        %v6010 = vpop.f32.mrb[0].mxu0
        %6011 = vmatprep.mubr.bf16.mxu0 0
        %6012 = vmatmul.mubr.bf16.gmra.mrb[0].mxu0 %v5686
        %v6013 = vpop.f32.mrb[0].mxu0
        %v6014 = vadd.f32 0.0, %v6013
        %v6015 = vpop.f32.mrb[0].mxu0
        %v6016 = vpop.f32.mrb[0].mxu0
        %v6017 = vadd.f32 0.0, %v6016
        %v6018 = vpop.f32.mrb[0].mxu0
        %6019 = vmatprep.mubr.bf16.mxu0 0
        %6020 = vmatmul.mubr.bf16.gmra.mrb[0].mxu0 %v5687
        %v6021 = vpop.f32.mrb[0].mxu0
        %v6022 = vadd.f32 0.0, %v6021
        %v6023 = vpop.f32.mrb[0].mxu0
        %v6024 = vpop.f32.mrb[0].mxu0
        %v6025 = vadd.f32 0.0, %v6024
        %v6026 = vpop.f32.mrb[0].mxu0
        %6027 = vmatprep.mubr.bf16.mxu0 0
        %6028 = vmatmul.mubr.bf16.gmra.mrb[0].mxu0 %v5688
        %v6029 = vpop.f32.mrb[0].mxu0
        %v6030 = vadd.f32 0.0, %v6029
        %v6031 = vpop.f32.mrb[0].mxu0
        %v6032 = vpop.f32.mrb[0].mxu0
        %v6033 = vadd.f32 0.0, %v6032
        %v6034 = vpop.f32.mrb[0].mxu0
        %6035 = vmatprep.mubr.bf16.mxu0 0
        %6036 = vmatmul.mubr.bf16.gmra.mrb[0].mxu0 %v5689
        %v6037 = vpop.f32.mrb[0].mxu0
        %v6038 = vadd.f32 0.0, %v6037
        %v6039 = vpop.f32.mrb[0].mxu0
        %v6040 = vpop.f32.mrb[0].mxu0
        %v6041 = vadd.f32 0.0, %v6040
        %v6042 = vpop.f32.mrb[0].mxu0
        %6043 = vdwg.mxu0
        %v6044 = vld [vmem:[#allocation3] sm:$0xff]
        %v6045 = vld [vmem:[#allocation3 + $0x8] sm:$0xff]
        %v6046 = vld [vmem:[#allocation3 + $0x10] sm:$0xff]
        %v6047 = vld [vmem:[#allocation3 + $0x18] sm:$0xff]
        %v6048 = vld [vmem:[#allocation3 + $0x20] sm:$0xff]
        %v6049 = vld [vmem:[#allocation3 + $0x28] sm:$0xff]
        %v6050 = vld [vmem:[#allocation3 + $0x30] sm:$0xff]
        %v6051 = vld [vmem:[#allocation3 + $0x38] sm:$0xff]
        %v6052 = vld [vmem:[#allocation3 + $0x40] sm:$0xff]
        %v6053 = vld [vmem:[#allocation3 + $0x48] sm:$0xff]
        %v6054 = vld [vmem:[#allocation3 + $0x50] sm:$0xff]
        %v6055 = vld [vmem:[#allocation3 + $0x58] sm:$0xff]
        %v6056 = vld [vmem:[#allocation3 + $0x60] sm:$0xff]
        %v6057 = vld [vmem:[#allocation3 + $0x68] sm:$0xff]
        %v6058 = vld [vmem:[#allocation3 + $0x70] sm:$0xff]
        %v6059 = vld [vmem:[#allocation3 + $0x78] sm:$0xff]
        %v6060 = vld [vmem:[#allocation3 + $0x80] sm:$0xff]
        %v6061 = vld [vmem:[#allocation3 + $0x88] sm:$0xff]
        %v6062 = vld [vmem:[#allocation3 + $0x90] sm:$0xff]
        %v6063 = vld [vmem:[#allocation3 + $0x98] sm:$0xff]
        %v6064 = vld [vmem:[#allocation3 + $0xa0] sm:$0xff]
        %v6065 = vld [vmem:[#allocation3 + $0xa8] sm:$0xff]
        %v6066 = vld [vmem:[#allocation3 + $0xb0] sm:$0xff]
        %v6067 = vld [vmem:[#allocation3 + $0xb8] sm:$0xff]
        %v6068 = vld [vmem:[#allocation3 + $0xc0] sm:$0xff]
        %v6069 = vld [vmem:[#allocation3 + $0xc8] sm:$0xff]
        %v6070 = vld [vmem:[#allocation3 + $0xd0] sm:$0xff]
        %v6071 = vld [vmem:[#allocation3 + $0xd8] sm:$0xff]
        %v6072 = vld [vmem:[#allocation3 + $0xe0] sm:$0xff]
        %v6073 = vld [vmem:[#allocation3 + $0xe8] sm:$0xff]
        %v6074 = vld [vmem:[#allocation3 + $0xf0] sm:$0xff]
        %v6075 = vld [vmem:[#allocation3 + $0xf8] sm:$0xff]
        %v6076 = vld [vmem:[#allocation3 + $0x100] sm:$0xff]
        %v6077 = vld [vmem:[#allocation3 + $0x108] sm:$0xff]
        %v6078 = vld [vmem:[#allocation3 + $0x110] sm:$0xff]
        %v6079 = vld [vmem:[#allocation3 + $0x118] sm:$0xff]
        %v6080 = vld [vmem:[#allocation3 + $0x120] sm:$0xff]
        %v6081 = vld [vmem:[#allocation3 + $0x128] sm:$0xff]
        %v6082 = vld [vmem:[#allocation3 + $0x130] sm:$0xff]
        %v6083 = vld [vmem:[#allocation3 + $0x138] sm:$0xff]
        %v6084 = vld [vmem:[#allocation3 + $0x140] sm:$0xff]
        %v6085 = vld [vmem:[#allocation3 + $0x148] sm:$0xff]
        %v6086 = vld [vmem:[#allocation3 + $0x150] sm:$0xff]
        %v6087 = vld [vmem:[#allocation3 + $0x158] sm:$0xff]
        %v6088 = vld [vmem:[#allocation3 + $0x160] sm:$0xff]
        %v6089 = vld [vmem:[#allocation3 + $0x168] sm:$0xff]
        %v6090 = vld [vmem:[#allocation3 + $0x170] sm:$0xff]
        %v6091 = vld [vmem:[#allocation3 + $0x178] sm:$0xff]
        %v6092 = vld [vmem:[#allocation3 + $0x180] sm:$0xff]
        %v6093 = vld [vmem:[#allocation3 + $0x188] sm:$0xff]
        %v6094 = vld [vmem:[#allocation3 + $0x190] sm:$0xff]
        %v6095 = vld [vmem:[#allocation3 + $0x198] sm:$0xff]
        %v6096 = vld [vmem:[#allocation3 + $0x1a0] sm:$0xff]
        %v6097 = vld [vmem:[#allocation3 + $0x1a8] sm:$0xff]
        %v6098 = vld [vmem:[#allocation3 + $0x1b0] sm:$0xff]
        %v6099 = vld [vmem:[#allocation3 + $0x1b8] sm:$0xff]
        %v6100 = vld [vmem:[#allocation3 + $0x1c0] sm:$0xff]
        %v6101 = vld [vmem:[#allocation3 + $0x1c8] sm:$0xff]
        %v6102 = vld [vmem:[#allocation3 + $0x1d0] sm:$0xff]
        %v6103 = vld [vmem:[#allocation3 + $0x1d8] sm:$0xff]
        %v6104 = vld [vmem:[#allocation3 + $0x1e0] sm:$0xff]
        %v6105 = vld [vmem:[#allocation3 + $0x1e8] sm:$0xff]
        %v6106 = vld [vmem:[#allocation3 + $0x1f0] sm:$0xff]
        %v6107 = vld [vmem:[#allocation3 + $0x1f8] sm:$0xff]
        %v6108 = vadd.f32 %v6044, %v5790
        %v6109 = vadd.f32 %v6045, %v5793
        %v6110 = vadd.f32 %v6046, %v5798
        %v6111 = vadd.f32 %v6047, %v5801
        %v6112 = vadd.f32 %v6048, %v5806
        %v6113 = vadd.f32 %v6049, %v5809
        %v6114 = vadd.f32 %v6050, %v5814
        %v6115 = vadd.f32 %v6051, %v5817
        %v6116 = vadd.f32 %v6052, %v5822
        %v6117 = vadd.f32 %v6053, %v5825
        %v6118 = vadd.f32 %v6054, %v5830
        %v6119 = vadd.f32 %v6055, %v5833
        %v6120 = vadd.f32 %v6056, %v5838
        %v6121 = vadd.f32 %v6057, %v5841
        %v6122 = vadd.f32 %v6058, %v5846
        %v6123 = vadd.f32 %v6059, %v5849
        %v6124 = vadd.f32 %v6060, %v5854
        %v6125 = vadd.f32 %v6061, %v5857
        %v6126 = vadd.f32 %v6062, %v5862
        %v6127 = vadd.f32 %v6063, %v5865
        %v6128 = vadd.f32 %v6064, %v5870
        %v6129 = vadd.f32 %v6065, %v5873
        %v6130 = vadd.f32 %v6066, %v5878
        %v6131 = vadd.f32 %v6067, %v5881
        %v6132 = vadd.f32 %v6068, %v5886
        %v6133 = vadd.f32 %v6069, %v5889
        %v6134 = vadd.f32 %v6070, %v5894
        %v6135 = vadd.f32 %v6071, %v5897
        %v6136 = vadd.f32 %v6072, %v5902
        %v6137 = vadd.f32 %v6073, %v5905
        %v6138 = vadd.f32 %v6074, %v5910
        %v6139 = vadd.f32 %v6075, %v5913
        %v6140 = vadd.f32 %v6076, %v5918
        %v6141 = vadd.f32 %v6077, %v5921
        %v6142 = vadd.f32 %v6078, %v5926
        %v6143 = vadd.f32 %v6079, %v5929
        %v6144 = vadd.f32 %v6080, %v5934
        %v6145 = vadd.f32 %v6081, %v5937
        %v6146 = vadd.f32 %v6082, %v5942
        %v6147 = vadd.f32 %v6083, %v5945
        %v6148 = vadd.f32 %v6084, %v5950
        %v6149 = vadd.f32 %v6085, %v5953
        %v6150 = vadd.f32 %v6086, %v5958
        %v6151 = vadd.f32 %v6087, %v5961
        %v6152 = vadd.f32 %v6088, %v5966
        %v6153 = vadd.f32 %v6089, %v5969
        %v6154 = vadd.f32 %v6090, %v5974
        %v6155 = vadd.f32 %v6091, %v5977
        %v6156 = vadd.f32 %v6092, %v5982
        %v6157 = vadd.f32 %v6093, %v5985
        %v6158 = vadd.f32 %v6094, %v5990
        %v6159 = vadd.f32 %v6095, %v5993
        %v6160 = vadd.f32 %v6096, %v5998
        %v6161 = vadd.f32 %v6097, %v6001
        %v6162 = vadd.f32 %v6098, %v6006
        %v6163 = vadd.f32 %v6099, %v6009
        %v6164 = vadd.f32 %v6100, %v6014
        %v6165 = vadd.f32 %v6101, %v6017
        %v6166 = vadd.f32 %v6102, %v6022
        %v6167 = vadd.f32 %v6103, %v6025
        %v6168 = vadd.f32 %v6104, %v6030
        %v6169 = vadd.f32 %v6105, %v6033
        %v6170 = vadd.f32 %v6106, %v6038
        %v6171 = vadd.f32 %v6107, %v6041
        %6172 = vst [vmem:[#allocation3] sm:$0xff] %v6108
        %6173 = vst [vmem:[#allocation3 + $0x8] sm:$0xff] %v6109
        %6174 = vst [vmem:[#allocation3 + $0x10] sm:$0xff] %v6110
        %6175 = vst [vmem:[#allocation3 + $0x18] sm:$0xff] %v6111
        %6176 = vst [vmem:[#allocation3 + $0x20] sm:$0xff] %v6112
        %6177 = vst [vmem:[#allocation3 + $0x28] sm:$0xff] %v6113
        %6178 = vst [vmem:[#allocation3 + $0x30] sm:$0xff] %v6114
        %6179 = vst [vmem:[#allocation3 + $0x38] sm:$0xff] %v6115
        %6180 = vst [vmem:[#allocation3 + $0x40] sm:$0xff] %v6116
        %6181 = vst [vmem:[#allocation3 + $0x48] sm:$0xff] %v6117
        %6182 = vst [vmem:[#allocation3 + $0x50] sm:$0xff] %v6118
        %6183 = vst [vmem:[#allocation3 + $0x58] sm:$0xff] %v6119
        %6184 = vst [vmem:[#allocation3 + $0x60] sm:$0xff] %v6120
        %6185 = vst [vmem:[#allocation3 + $0x68] sm:$0xff] %v6121
        %6186 = vst [vmem:[#allocation3 + $0x70] sm:$0xff] %v6122
        %6187 = vst [vmem:[#allocation3 + $0x78] sm:$0xff] %v6123
        %6188 = vst [vmem:[#allocation3 + $0x80] sm:$0xff] %v6124
        %6189 = vst [vmem:[#allocation3 + $0x88] sm:$0xff] %v6125
        %6190 = vst [vmem:[#allocation3 + $0x90] sm:$0xff] %v6126
        %6191 = vst [vmem:[#allocation3 + $0x98] sm:$0xff] %v6127
        %6192 = vst [vmem:[#allocation3 + $0xa0] sm:$0xff] %v6128
        %6193 = vst [vmem:[#allocation3 + $0xa8] sm:$0xff] %v6129
        %6194 = vst [vmem:[#allocation3 + $0xb0] sm:$0xff] %v6130
        %6195 = vst [vmem:[#allocation3 + $0xb8] sm:$0xff] %v6131
        %6196 = vst [vmem:[#allocation3 + $0xc0] sm:$0xff] %v6132
        %6197 = vst [vmem:[#allocation3 + $0xc8] sm:$0xff] %v6133
        %6198 = vst [vmem:[#allocation3 + $0xd0] sm:$0xff] %v6134
        %6199 = vst [vmem:[#allocation3 + $0xd8] sm:$0xff] %v6135
        %6200 = vst [vmem:[#allocation3 + $0xe0] sm:$0xff] %v6136
        %6201 = vst [vmem:[#allocation3 + $0xe8] sm:$0xff] %v6137
        %6202 = vst [vmem:[#allocation3 + $0xf0] sm:$0xff] %v6138
        %6203 = vst [vmem:[#allocation3 + $0xf8] sm:$0xff] %v6139
        %6204 = vst [vmem:[#allocation3 + $0x100] sm:$0xff] %v6140
        %6205 = vst [vmem:[#allocation3 + $0x108] sm:$0xff] %v6141
        %6206 = vst [vmem:[#allocation3 + $0x110] sm:$0xff] %v6142
        %6207 = vst [vmem:[#allocation3 + $0x118] sm:$0xff] %v6143
        %6208 = vst [vmem:[#allocation3 + $0x120] sm:$0xff] %v6144
        %6209 = vst [vmem:[#allocation3 + $0x128] sm:$0xff] %v6145
        %6210 = vst [vmem:[#allocation3 + $0x130] sm:$0xff] %v6146
        %6211 = vst [vmem:[#allocation3 + $0x138] sm:$0xff] %v6147
        %6212 = vst [vmem:[#allocation3 + $0x140] sm:$0xff] %v6148
        %6213 = vst [vmem:[#allocation3 + $0x148] sm:$0xff] %v6149
        %6214 = vst [vmem:[#allocation3 + $0x150] sm:$0xff] %v6150
        %6215 = vst [vmem:[#allocation3 + $0x158] sm:$0xff] %v6151
        %6216 = vst [vmem:[#allocation3 + $0x160] sm:$0xff] %v6152
        %6217 = vst [vmem:[#allocation3 + $0x168] sm:$0xff] %v6153
        %6218 = vst [vmem:[#allocation3 + $0x170] sm:$0xff] %v6154
        %6219 = vst [vmem:[#allocation3 + $0x178] sm:$0xff] %v6155
        %6220 = vst [vmem:[#allocation3 + $0x180] sm:$0xff] %v6156
        %6221 = vst [vmem:[#allocation3 + $0x188] sm:$0xff] %v6157
        %6222 = vst [vmem:[#allocation3 + $0x190] sm:$0xff] %v6158
        %6223 = vst [vmem:[#allocation3 + $0x198] sm:$0xff] %v6159
        %6224 = vst [vmem:[#allocation3 + $0x1a0] sm:$0xff] %v6160
        %6225 = vst [vmem:[#allocation3 + $0x1a8] sm:$0xff] %v6161
        %6226 = vst [vmem:[#allocation3 + $0x1b0] sm:$0xff] %v6162
        %6227 = vst [vmem:[#allocation3 + $0x1b8] sm:$0xff] %v6163
        %6228 = vst [vmem:[#allocation3 + $0x1c0] sm:$0xff] %v6164
        %6229 = vst [vmem:[#allocation3 + $0x1c8] sm:$0xff] %v6165
        %6230 = vst [vmem:[#allocation3 + $0x1d0] sm:$0xff] %v6166
        %6231 = vst [vmem:[#allocation3 + $0x1d8] sm:$0xff] %v6167
        %6232 = vst [vmem:[#allocation3 + $0x1e0] sm:$0xff] %v6168
        %6233 = vst [vmem:[#allocation3 + $0x1e8] sm:$0xff] %v6169
        %6234 = vst [vmem:[#allocation3 + $0x1f0] sm:$0xff] %v6170
        %6235 = vst [vmem:[#allocation3 + $0x1f8] sm:$0xff] %v6171
        %v6236 = vrot.slane %v4793, 1
        %v6237 = vrot.slane %v4797, 1
        %v6238 = vrot.slane %v4801, 1
        %v6239 = vrot.slane %v4805, 1
        %v6240 = vrot.slane %v4809, 1
        %v6241 = vrot.slane %v4813, 1
        %v6242 = vrot.slane %v4817, 1
        %v6243 = vrot.slane %v4821, 1
        %v6244 = vrot.slane %v4825, 1
        %v6245 = vrot.slane %v4829, 1
        %v6246 = vrot.slane %v4833, 1
        %v6247 = vrot.slane %v4837, 1
        %v6248 = vrot.slane %v4841, 1
        %v6249 = vrot.slane %v4845, 1
        %v6250 = vrot.slane %v4849, 1
        %v6251 = vrot.slane %v4853, 1
        %v6252 = vrot.slane %v4857, 1
        %v6253 = vrot.slane %v4861, 1
        %v6254 = vrot.slane %v4865, 1
        %v6255 = vrot.slane %v4869, 1
        %v6256 = vrot.slane %v4873, 1
        %v6257 = vrot.slane %v4877, 1
        %v6258 = vrot.slane %v4881, 1
        %v6259 = vrot.slane %v4885, 1
        %v6260 = vrot.slane %v4889, 1
        %v6261 = vrot.slane %v4893, 1
        %v6262 = vrot.slane %v4897, 1
        %v6263 = vrot.slane %v4901, 1
        %v6264 = vrot.slane %v4905, 1
        %v6265 = vrot.slane %v4909, 1
        %v6266 = vrot.slane %v4913, 1
        %v6267 = vrot.slane %v4917, 1
        %v6268 = vrot.slane %v4794, 1
        %v6269 = vrot.slane %v4798, 1
        %v6270 = vrot.slane %v4802, 1
        %v6271 = vrot.slane %v4806, 1
        %v6272 = vrot.slane %v4810, 1
        %v6273 = vrot.slane %v4814, 1
        %v6274 = vrot.slane %v4818, 1
        %v6275 = vrot.slane %v4822, 1
        %v6276 = vrot.slane %v4826, 1
        %v6277 = vrot.slane %v4830, 1
        %v6278 = vrot.slane %v4834, 1
        %v6279 = vrot.slane %v4838, 1
        %v6280 = vrot.slane %v4842, 1
        %v6281 = vrot.slane %v4846, 1
        %v6282 = vrot.slane %v4850, 1
        %v6283 = vrot.slane %v4854, 1
        %v6284 = vrot.slane %v4858, 1
        %v6285 = vrot.slane %v4862, 1
        %v6286 = vrot.slane %v4866, 1
        %v6287 = vrot.slane %v4870, 1
        %v6288 = vrot.slane %v4874, 1
        %v6289 = vrot.slane %v4878, 1
        %v6290 = vrot.slane %v4882, 1
        %v6291 = vrot.slane %v4886, 1
        %v6292 = vrot.slane %v4890, 1
        %v6293 = vrot.slane %v4894, 1
        %v6294 = vrot.slane %v4898, 1
        %v6295 = vrot.slane %v4902, 1
        %v6296 = vrot.slane %v4906, 1
        %v6297 = vrot.slane %v4910, 1
        %v6298 = vrot.slane %v4914, 1
        %v6299 = vrot.slane %v4918, 1
        %v6300 = vrot.slane %v4795, 1
        %v6301 = vrot.slane %v4799, 1
        %v6302 = vrot.slane %v4803, 1
        %v6303 = vrot.slane %v4807, 1
        %v6304 = vrot.slane %v4811, 1
        %v6305 = vrot.slane %v4815, 1
        %v6306 = vrot.slane %v4819, 1
        %v6307 = vrot.slane %v4823, 1
        %v6308 = vrot.slane %v4827, 1
        %v6309 = vrot.slane %v4831, 1
        %v6310 = vrot.slane %v4835, 1
        %v6311 = vrot.slane %v4839, 1
        %v6312 = vrot.slane %v4843, 1
        %v6313 = vrot.slane %v4847, 1
        %v6314 = vrot.slane %v4851, 1
        %v6315 = vrot.slane %v4855, 1
        %v6316 = vrot.slane %v4859, 1
        %v6317 = vrot.slane %v4863, 1
        %v6318 = vrot.slane %v4867, 1
        %v6319 = vrot.slane %v4871, 1
        %v6320 = vrot.slane %v4875, 1
        %v6321 = vrot.slane %v4879, 1
        %v6322 = vrot.slane %v4883, 1
        %v6323 = vrot.slane %v4887, 1
        %v6324 = vrot.slane %v4891, 1
        %v6325 = vrot.slane %v4895, 1
        %v6326 = vrot.slane %v4899, 1
        %v6327 = vrot.slane %v4903, 1
        %v6328 = vrot.slane %v4907, 1
        %v6329 = vrot.slane %v4911, 1
        %v6330 = vrot.slane %v4915, 1
        %v6331 = vrot.slane %v4919, 1
        %v6332 = vsel %vm1965, %v6268, %v6300
        %v6333 = vsel %vm1965, %v6269, %v6301
        %v6334 = vsel %vm1965, %v6270, %v6302
        %v6335 = vsel %vm1965, %v6271, %v6303
        %v6336 = vsel %vm1965, %v6272, %v6304
        %v6337 = vsel %vm1965, %v6273, %v6305
        %v6338 = vsel %vm1965, %v6274, %v6306
        %v6339 = vsel %vm1965, %v6275, %v6307
        %v6340 = vsel %vm1965, %v6276, %v6308
        %v6341 = vsel %vm1965, %v6277, %v6309
        %v6342 = vsel %vm1965, %v6278, %v6310
        %v6343 = vsel %vm1965, %v6279, %v6311
        %v6344 = vsel %vm1965, %v6280, %v6312
        %v6345 = vsel %vm1965, %v6281, %v6313
        %v6346 = vsel %vm1965, %v6282, %v6314
        %v6347 = vsel %vm1965, %v6283, %v6315
        %v6348 = vsel %vm1965, %v6284, %v6316
        %v6349 = vsel %vm1965, %v6285, %v6317
        %v6350 = vsel %vm1965, %v6286, %v6318
        %v6351 = vsel %vm1965, %v6287, %v6319
        %v6352 = vsel %vm1965, %v6288, %v6320
        %v6353 = vsel %vm1965, %v6289, %v6321
        %v6354 = vsel %vm1965, %v6290, %v6322
        %v6355 = vsel %vm1965, %v6291, %v6323
        %v6356 = vsel %vm1965, %v6292, %v6324
        %v6357 = vsel %vm1965, %v6293, %v6325
        %v6358 = vsel %vm1965, %v6294, %v6326
        %v6359 = vsel %vm1965, %v6295, %v6327
        %v6360 = vsel %vm1965, %v6296, %v6328
        %v6361 = vsel %vm1965, %v6297, %v6329
        %v6362 = vsel %vm1965, %v6298, %v6330
        %v6363 = vsel %vm1965, %v6299, %v6331
        %v6364 = vsel %vm1965, %v6236, %v6268
        %v6365 = vsel %vm1965, %v6237, %v6269
        %v6366 = vsel %vm1965, %v6238, %v6270
        %v6367 = vsel %vm1965, %v6239, %v6271
        %v6368 = vsel %vm1965, %v6240, %v6272
        %v6369 = vsel %vm1965, %v6241, %v6273
        %v6370 = vsel %vm1965, %v6242, %v6274
        %v6371 = vsel %vm1965, %v6243, %v6275
        %v6372 = vsel %vm1965, %v6244, %v6276
        %v6373 = vsel %vm1965, %v6245, %v6277
        %v6374 = vsel %vm1965, %v6246, %v6278
        %v6375 = vsel %vm1965, %v6247, %v6279
        %v6376 = vsel %vm1965, %v6248, %v6280
        %v6377 = vsel %vm1965, %v6249, %v6281
        %v6378 = vsel %vm1965, %v6250, %v6282
        %v6379 = vsel %vm1965, %v6251, %v6283
        %v6380 = vsel %vm1965, %v6252, %v6284
        %v6381 = vsel %vm1965, %v6253, %v6285
        %v6382 = vsel %vm1965, %v6254, %v6286
        %v6383 = vsel %vm1965, %v6255, %v6287
        %v6384 = vsel %vm1965, %v6256, %v6288
        %v6385 = vsel %vm1965, %v6257, %v6289
        %v6386 = vsel %vm1965, %v6258, %v6290
        %v6387 = vsel %vm1965, %v6259, %v6291
        %v6388 = vsel %vm1965, %v6260, %v6292
        %v6389 = vsel %vm1965, %v6261, %v6293
        %v6390 = vsel %vm1965, %v6262, %v6294
        %v6391 = vsel %vm1965, %v6263, %v6295
        %v6392 = vsel %vm1965, %v6264, %v6296
        %v6393 = vsel %vm1965, %v6265, %v6297
        %v6394 = vsel %vm1965, %v6266, %v6298
        %v6395 = vsel %vm1965, %v6267, %v6299
        %v6396 = vpack.c.bf16 %v6332, %v6364
        %v6397 = vpack.c.bf16 %v6333, %v6365
        %v6398 = vpack.c.bf16 %v6334, %v6366
        %v6399 = vpack.c.bf16 %v6335, %v6367
        %v6400 = vpack.c.bf16 %v6336, %v6368
        %v6401 = vpack.c.bf16 %v6337, %v6369
        %v6402 = vpack.c.bf16 %v6338, %v6370
        %v6403 = vpack.c.bf16 %v6339, %v6371
        %v6404 = vpack.c.bf16 %v6340, %v6372
        %v6405 = vpack.c.bf16 %v6341, %v6373
        %v6406 = vpack.c.bf16 %v6342, %v6374
        %v6407 = vpack.c.bf16 %v6343, %v6375
        %v6408 = vpack.c.bf16 %v6344, %v6376
        %v6409 = vpack.c.bf16 %v6345, %v6377
        %v6410 = vpack.c.bf16 %v6346, %v6378
        %v6411 = vpack.c.bf16 %v6347, %v6379
        %v6412 = vpack.c.bf16 %v6348, %v6380
        %v6413 = vpack.c.bf16 %v6349, %v6381
        %v6414 = vpack.c.bf16 %v6350, %v6382
        %v6415 = vpack.c.bf16 %v6351, %v6383
        %v6416 = vpack.c.bf16 %v6352, %v6384
        %v6417 = vpack.c.bf16 %v6353, %v6385
        %v6418 = vpack.c.bf16 %v6354, %v6386
        %v6419 = vpack.c.bf16 %v6355, %v6387
        %v6420 = vpack.c.bf16 %v6356, %v6388
        %v6421 = vpack.c.bf16 %v6357, %v6389
        %v6422 = vpack.c.bf16 %v6358, %v6390
        %v6423 = vpack.c.bf16 %v6359, %v6391
        %v6424 = vpack.c.bf16 %v6360, %v6392
        %v6425 = vpack.c.bf16 %v6361, %v6393
        %v6426 = vpack.c.bf16 %v6362, %v6394
        %v6427 = vpack.c.bf16 %v6363, %v6395
        %s6428 = scalar_lea.vmem %s232, 512 [#allocation4]
        %v6429 = vld [vmem:[%s6428] sm:$0xf]
        %v6430 = vld [vmem:[%s6428 + $0x4] sm:$0xf]
        %v6431 = vld [vmem:[%s6428 + $0x8] sm:$0xf]
        %v6432 = vld [vmem:[%s6428 + $0xc] sm:$0xf]
        %v6433 = vld [vmem:[%s6428 + $0x10] sm:$0xf]
        %v6434 = vld [vmem:[%s6428 + $0x14] sm:$0xf]
        %v6435 = vld [vmem:[%s6428 + $0x18] sm:$0xf]
        %v6436 = vld [vmem:[%s6428 + $0x1c] sm:$0xf]
        %v6437 = vld [vmem:[%s6428 + $0x20] sm:$0xf]
        %v6438 = vld [vmem:[%s6428 + $0x24] sm:$0xf]
        %v6439 = vld [vmem:[%s6428 + $0x28] sm:$0xf]
        %v6440 = vld [vmem:[%s6428 + $0x2c] sm:$0xf]
        %v6441 = vld [vmem:[%s6428 + $0x30] sm:$0xf]
        %v6442 = vld [vmem:[%s6428 + $0x34] sm:$0xf]
        %v6443 = vld [vmem:[%s6428 + $0x38] sm:$0xf]
        %v6444 = vld [vmem:[%s6428 + $0x3c] sm:$0xf]
        %v6461 = vunpack.c.l.b16 %v6429
        %v6462 = vunpack.c.l.b16 %v6430
        %v6463 = vunpack.c.l.b16 %v6431
        %v6464 = vunpack.c.l.b16 %v6432
        %v6465 = vunpack.c.l.b16 %v6433
        %v6466 = vunpack.c.l.b16 %v6434
        %v6467 = vunpack.c.l.b16 %v6435
        %v6468 = vunpack.c.l.b16 %v6436
        %v6469 = vunpack.c.l.b16 %v6437
        %v6470 = vunpack.c.l.b16 %v6438
        %v6471 = vunpack.c.l.b16 %v6439
        %v6472 = vunpack.c.l.b16 %v6440
        %v6473 = vunpack.c.l.b16 %v6441
        %v6474 = vunpack.c.l.b16 %v6442
        %v6475 = vunpack.c.l.b16 %v6443
        %v6476 = vunpack.c.l.b16 %v6444
        %v6477 = vpack.c.b16 %v6462, %v6461
        %v6478 = vpack.c.b16 %v6464, %v6463
        %v6479 = vpack.c.b16 %v6466, %v6465
        %v6480 = vpack.c.b16 %v6468, %v6467
        %v6481 = vpack.c.b16 %v6470, %v6469
        %v6482 = vpack.c.b16 %v6472, %v6471
        %v6483 = vpack.c.b16 %v6474, %v6473
        %v6484 = vpack.c.b16 %v6476, %v6475
        %6493 = vmatprep.subr.bf16.mxu0 0
        %6494 = vmatpush1.bf16.msra.mxu0 %v6477
        %6495 = vmatprep.subr.bf16.mxu0 0
        %6496 = vmatpush1.bf16.msra.mxu0 %v6478
        %6497 = vmatprep.subr.bf16.mxu0 0
        %6498 = vmatpush1.bf16.msra.mxu0 %v6479
        %6499 = vmatprep.subr.bf16.mxu0 0
        %6500 = vmatpush1.bf16.msra.mxu0 %v6480
        %6501 = vmatprep.subr.bf16.mxu0 0
        %6502 = vmatpush1.bf16.msra.mxu0 %v6481
        %6503 = vmatprep.subr.bf16.mxu0 0
        %6504 = vmatpush1.bf16.msra.mxu0 %v6482
        %6505 = vmatprep.subr.bf16.mxu0 0
        %6506 = vmatpush1.bf16.msra.mxu0 %v6483
        %6507 = vmatprep.subr.bf16.mxu0 0
        %6508 = vmatpush1.bf16.msra.mxu0 %v6484
        %6509 = vmatprep.subr.bf16.mxu0 0
        %6510 = vmatpush1.bf16.msra.mxu0 0
        %6511 = vmatprep.subr.bf16.mxu0 0
        %6512 = vmatpush1.bf16.msra.mxu0 0
        %6513 = vmatprep.subr.bf16.mxu0 0
        %6514 = vmatpush1.bf16.msra.mxu0 0
        %6515 = vmatprep.subr.bf16.mxu0 0
        %6516 = vmatpush1.bf16.msra.mxu0 0
        %6517 = vmatprep.subr.bf16.mxu0 0
        %6518 = vmatpush1.bf16.msra.mxu0 0
        %6519 = vmatprep.subr.bf16.mxu0 0
        %6520 = vmatpush1.bf16.msra.mxu0 0
        %6521 = vmatprep.subr.bf16.mxu0 0
        %6522 = vmatpush1.bf16.msra.mxu0 0
        %6523 = vmatprep.subr.bf16.mxu0 0
        %6524 = vmatpush1.bf16.msra.mxu0 0
        %6525 = vmatprep.mubr.bf16.mxu0 0
        %6526 = vmatmul.mubr.bf16.gmra.mrb[0].mxu0 %v6396
        %v6527 = vpop.f32.mrb[0].mxu0
        %v6528 = vadd.f32 0.0, %v6527
        %v6529 = vpop.f32.mrb[0].mxu0
        %v6530 = vpop.f32.mrb[0].mxu0
        %v6531 = vadd.f32 0.0, %v6530
        %v6532 = vpop.f32.mrb[0].mxu0
        %6533 = vmatprep.mubr.bf16.mxu0 0
        %6534 = vmatmul.mubr.bf16.gmra.mrb[0].mxu0 %v6397
        %v6535 = vpop.f32.mrb[0].mxu0
        %v6536 = vadd.f32 0.0, %v6535
        %v6537 = vpop.f32.mrb[0].mxu0
        %v6538 = vpop.f32.mrb[0].mxu0
        %v6539 = vadd.f32 0.0, %v6538
        %v6540 = vpop.f32.mrb[0].mxu0
        %6541 = vmatprep.mubr.bf16.mxu0 0
        %6542 = vmatmul.mubr.bf16.gmra.mrb[0].mxu0 %v6398
        %v6543 = vpop.f32.mrb[0].mxu0
        %v6544 = vadd.f32 0.0, %v6543
        %v6545 = vpop.f32.mrb[0].mxu0
        %v6546 = vpop.f32.mrb[0].mxu0
        %v6547 = vadd.f32 0.0, %v6546
        %v6548 = vpop.f32.mrb[0].mxu0
        %6549 = vmatprep.mubr.bf16.mxu0 0
        %6550 = vmatmul.mubr.bf16.gmra.mrb[0].mxu0 %v6399
        %v6551 = vpop.f32.mrb[0].mxu0
        %v6552 = vadd.f32 0.0, %v6551
        %v6553 = vpop.f32.mrb[0].mxu0
        %v6554 = vpop.f32.mrb[0].mxu0
        %v6555 = vadd.f32 0.0, %v6554
        %v6556 = vpop.f32.mrb[0].mxu0
        %6557 = vmatprep.mubr.bf16.mxu0 0
        %6558 = vmatmul.mubr.bf16.gmra.mrb[0].mxu0 %v6400
        %v6559 = vpop.f32.mrb[0].mxu0
        %v6560 = vadd.f32 0.0, %v6559
        %v6561 = vpop.f32.mrb[0].mxu0
        %v6562 = vpop.f32.mrb[0].mxu0
        %v6563 = vadd.f32 0.0, %v6562
        %v6564 = vpop.f32.mrb[0].mxu0
        %6565 = vmatprep.mubr.bf16.mxu0 0
        %6566 = vmatmul.mubr.bf16.gmra.mrb[0].mxu0 %v6401
        %v6567 = vpop.f32.mrb[0].mxu0
        %v6568 = vadd.f32 0.0, %v6567
        %v6569 = vpop.f32.mrb[0].mxu0
        %v6570 = vpop.f32.mrb[0].mxu0
        %v6571 = vadd.f32 0.0, %v6570
        %v6572 = vpop.f32.mrb[0].mxu0
        %6573 = vmatprep.mubr.bf16.mxu0 0
        %6574 = vmatmul.mubr.bf16.gmra.mrb[0].mxu0 %v6402
        %v6575 = vpop.f32.mrb[0].mxu0
        %v6576 = vadd.f32 0.0, %v6575
        %v6577 = vpop.f32.mrb[0].mxu0
        %v6578 = vpop.f32.mrb[0].mxu0
        %v6579 = vadd.f32 0.0, %v6578
        %v6580 = vpop.f32.mrb[0].mxu0
        %6581 = vmatprep.mubr.bf16.mxu0 0
        %6582 = vmatmul.mubr.bf16.gmra.mrb[0].mxu0 %v6403
        %v6583 = vpop.f32.mrb[0].mxu0
        %v6584 = vadd.f32 0.0, %v6583
        %v6585 = vpop.f32.mrb[0].mxu0
        %v6586 = vpop.f32.mrb[0].mxu0
        %v6587 = vadd.f32 0.0, %v6586
        %v6588 = vpop.f32.mrb[0].mxu0
        %6589 = vmatprep.mubr.bf16.mxu0 0
        %6590 = vmatmul.mubr.bf16.gmra.mrb[0].mxu0 %v6404
        %v6591 = vpop.f32.mrb[0].mxu0
        %v6592 = vadd.f32 0.0, %v6591
        %v6593 = vpop.f32.mrb[0].mxu0
        %v6594 = vpop.f32.mrb[0].mxu0
        %v6595 = vadd.f32 0.0, %v6594
        %v6596 = vpop.f32.mrb[0].mxu0
        %6597 = vmatprep.mubr.bf16.mxu0 0
        %6598 = vmatmul.mubr.bf16.gmra.mrb[0].mxu0 %v6405
        %v6599 = vpop.f32.mrb[0].mxu0
        %v6600 = vadd.f32 0.0, %v6599
        %v6601 = vpop.f32.mrb[0].mxu0
        %v6602 = vpop.f32.mrb[0].mxu0
        %v6603 = vadd.f32 0.0, %v6602
        %v6604 = vpop.f32.mrb[0].mxu0
        %6605 = vmatprep.mubr.bf16.mxu0 0
        %6606 = vmatmul.mubr.bf16.gmra.mrb[0].mxu0 %v6406
        %v6607 = vpop.f32.mrb[0].mxu0
        %v6608 = vadd.f32 0.0, %v6607
        %v6609 = vpop.f32.mrb[0].mxu0
        %v6610 = vpop.f32.mrb[0].mxu0
        %v6611 = vadd.f32 0.0, %v6610
        %v6612 = vpop.f32.mrb[0].mxu0
        %6613 = vmatprep.mubr.bf16.mxu0 0
        %6614 = vmatmul.mubr.bf16.gmra.mrb[0].mxu0 %v6407
        %v6615 = vpop.f32.mrb[0].mxu0
        %v6616 = vadd.f32 0.0, %v6615
        %v6617 = vpop.f32.mrb[0].mxu0
        %v6618 = vpop.f32.mrb[0].mxu0
        %v6619 = vadd.f32 0.0, %v6618
        %v6620 = vpop.f32.mrb[0].mxu0
        %6621 = vmatprep.mubr.bf16.mxu0 0
        %6622 = vmatmul.mubr.bf16.gmra.mrb[0].mxu0 %v6408
        %v6623 = vpop.f32.mrb[0].mxu0
        %v6624 = vadd.f32 0.0, %v6623
        %v6625 = vpop.f32.mrb[0].mxu0
        %v6626 = vpop.f32.mrb[0].mxu0
        %v6627 = vadd.f32 0.0, %v6626
        %v6628 = vpop.f32.mrb[0].mxu0
        %6629 = vmatprep.mubr.bf16.mxu0 0
        %6630 = vmatmul.mubr.bf16.gmra.mrb[0].mxu0 %v6409
        %v6631 = vpop.f32.mrb[0].mxu0
        %v6632 = vadd.f32 0.0, %v6631
        %v6633 = vpop.f32.mrb[0].mxu0
        %v6634 = vpop.f32.mrb[0].mxu0
        %v6635 = vadd.f32 0.0, %v6634
        %v6636 = vpop.f32.mrb[0].mxu0
        %6637 = vmatprep.mubr.bf16.mxu0 0
        %6638 = vmatmul.mubr.bf16.gmra.mrb[0].mxu0 %v6410
        %v6639 = vpop.f32.mrb[0].mxu0
        %v6640 = vadd.f32 0.0, %v6639
        %v6641 = vpop.f32.mrb[0].mxu0
        %v6642 = vpop.f32.mrb[0].mxu0
        %v6643 = vadd.f32 0.0, %v6642
        %v6644 = vpop.f32.mrb[0].mxu0
        %6645 = vmatprep.mubr.bf16.mxu0 0
        %6646 = vmatmul.mubr.bf16.gmra.mrb[0].mxu0 %v6411
        %v6647 = vpop.f32.mrb[0].mxu0
        %v6648 = vadd.f32 0.0, %v6647
        %v6649 = vpop.f32.mrb[0].mxu0
        %v6650 = vpop.f32.mrb[0].mxu0
        %v6651 = vadd.f32 0.0, %v6650
        %v6652 = vpop.f32.mrb[0].mxu0
        %6653 = vmatprep.mubr.bf16.mxu0 0
        %6654 = vmatmul.mubr.bf16.gmra.mrb[0].mxu0 %v6412
        %v6655 = vpop.f32.mrb[0].mxu0
        %v6656 = vadd.f32 0.0, %v6655
        %v6657 = vpop.f32.mrb[0].mxu0
        %v6658 = vpop.f32.mrb[0].mxu0
        %v6659 = vadd.f32 0.0, %v6658
        %v6660 = vpop.f32.mrb[0].mxu0
        %6661 = vmatprep.mubr.bf16.mxu0 0
        %6662 = vmatmul.mubr.bf16.gmra.mrb[0].mxu0 %v6413
        %v6663 = vpop.f32.mrb[0].mxu0
        %v6664 = vadd.f32 0.0, %v6663
        %v6665 = vpop.f32.mrb[0].mxu0
        %v6666 = vpop.f32.mrb[0].mxu0
        %v6667 = vadd.f32 0.0, %v6666
        %v6668 = vpop.f32.mrb[0].mxu0
        %6669 = vmatprep.mubr.bf16.mxu0 0
        %6670 = vmatmul.mubr.bf16.gmra.mrb[0].mxu0 %v6414
        %v6671 = vpop.f32.mrb[0].mxu0
        %v6672 = vadd.f32 0.0, %v6671
        %v6673 = vpop.f32.mrb[0].mxu0
        %v6674 = vpop.f32.mrb[0].mxu0
        %v6675 = vadd.f32 0.0, %v6674
        %v6676 = vpop.f32.mrb[0].mxu0
        %6677 = vmatprep.mubr.bf16.mxu0 0
        %6678 = vmatmul.mubr.bf16.gmra.mrb[0].mxu0 %v6415
        %v6679 = vpop.f32.mrb[0].mxu0
        %v6680 = vadd.f32 0.0, %v6679
        %v6681 = vpop.f32.mrb[0].mxu0
        %v6682 = vpop.f32.mrb[0].mxu0
        %v6683 = vadd.f32 0.0, %v6682
        %v6684 = vpop.f32.mrb[0].mxu0
        %6685 = vmatprep.mubr.bf16.mxu0 0
        %6686 = vmatmul.mubr.bf16.gmra.mrb[0].mxu0 %v6416
        %v6687 = vpop.f32.mrb[0].mxu0
        %v6688 = vadd.f32 0.0, %v6687
        %v6689 = vpop.f32.mrb[0].mxu0
        %v6690 = vpop.f32.mrb[0].mxu0
        %v6691 = vadd.f32 0.0, %v6690
        %v6692 = vpop.f32.mrb[0].mxu0
        %6693 = vmatprep.mubr.bf16.mxu0 0
        %6694 = vmatmul.mubr.bf16.gmra.mrb[0].mxu0 %v6417
        %v6695 = vpop.f32.mrb[0].mxu0
        %v6696 = vadd.f32 0.0, %v6695
        %v6697 = vpop.f32.mrb[0].mxu0
        %v6698 = vpop.f32.mrb[0].mxu0
        %v6699 = vadd.f32 0.0, %v6698
        %v6700 = vpop.f32.mrb[0].mxu0
        %6701 = vmatprep.mubr.bf16.mxu0 0
        %6702 = vmatmul.mubr.bf16.gmra.mrb[0].mxu0 %v6418
        %v6703 = vpop.f32.mrb[0].mxu0
        %v6704 = vadd.f32 0.0, %v6703
        %v6705 = vpop.f32.mrb[0].mxu0
        %v6706 = vpop.f32.mrb[0].mxu0
        %v6707 = vadd.f32 0.0, %v6706
        %v6708 = vpop.f32.mrb[0].mxu0
        %6709 = vmatprep.mubr.bf16.mxu0 0
        %6710 = vmatmul.mubr.bf16.gmra.mrb[0].mxu0 %v6419
        %v6711 = vpop.f32.mrb[0].mxu0
        %v6712 = vadd.f32 0.0, %v6711
        %v6713 = vpop.f32.mrb[0].mxu0
        %v6714 = vpop.f32.mrb[0].mxu0
        %v6715 = vadd.f32 0.0, %v6714
        %v6716 = vpop.f32.mrb[0].mxu0
        %6717 = vmatprep.mubr.bf16.mxu0 0
        %6718 = vmatmul.mubr.bf16.gmra.mrb[0].mxu0 %v6420
        %v6719 = vpop.f32.mrb[0].mxu0
        %v6720 = vadd.f32 0.0, %v6719
        %v6721 = vpop.f32.mrb[0].mxu0
        %v6722 = vpop.f32.mrb[0].mxu0
        %v6723 = vadd.f32 0.0, %v6722
        %v6724 = vpop.f32.mrb[0].mxu0
        %6725 = vmatprep.mubr.bf16.mxu0 0
        %6726 = vmatmul.mubr.bf16.gmra.mrb[0].mxu0 %v6421
        %v6727 = vpop.f32.mrb[0].mxu0
        %v6728 = vadd.f32 0.0, %v6727
        %v6729 = vpop.f32.mrb[0].mxu0
        %v6730 = vpop.f32.mrb[0].mxu0
        %v6731 = vadd.f32 0.0, %v6730
        %v6732 = vpop.f32.mrb[0].mxu0
        %6733 = vmatprep.mubr.bf16.mxu0 0
        %6734 = vmatmul.mubr.bf16.gmra.mrb[0].mxu0 %v6422
        %v6735 = vpop.f32.mrb[0].mxu0
        %v6736 = vadd.f32 0.0, %v6735
        %v6737 = vpop.f32.mrb[0].mxu0
        %v6738 = vpop.f32.mrb[0].mxu0
        %v6739 = vadd.f32 0.0, %v6738
        %v6740 = vpop.f32.mrb[0].mxu0
        %6741 = vmatprep.mubr.bf16.mxu0 0
        %6742 = vmatmul.mubr.bf16.gmra.mrb[0].mxu0 %v6423
        %v6743 = vpop.f32.mrb[0].mxu0
        %v6744 = vadd.f32 0.0, %v6743
        %v6745 = vpop.f32.mrb[0].mxu0
        %v6746 = vpop.f32.mrb[0].mxu0
        %v6747 = vadd.f32 0.0, %v6746
        %v6748 = vpop.f32.mrb[0].mxu0
        %6749 = vmatprep.mubr.bf16.mxu0 0
        %6750 = vmatmul.mubr.bf16.gmra.mrb[0].mxu0 %v6424
        %v6751 = vpop.f32.mrb[0].mxu0
        %v6752 = vadd.f32 0.0, %v6751
        %v6753 = vpop.f32.mrb[0].mxu0
        %v6754 = vpop.f32.mrb[0].mxu0
        %v6755 = vadd.f32 0.0, %v6754
        %v6756 = vpop.f32.mrb[0].mxu0
        %6757 = vmatprep.mubr.bf16.mxu0 0
        %6758 = vmatmul.mubr.bf16.gmra.mrb[0].mxu0 %v6425
        %v6759 = vpop.f32.mrb[0].mxu0
        %v6760 = vadd.f32 0.0, %v6759
        %v6761 = vpop.f32.mrb[0].mxu0
        %v6762 = vpop.f32.mrb[0].mxu0
        %v6763 = vadd.f32 0.0, %v6762
        %v6764 = vpop.f32.mrb[0].mxu0
        %6765 = vmatprep.mubr.bf16.mxu0 0
        %6766 = vmatmul.mubr.bf16.gmra.mrb[0].mxu0 %v6426
        %v6767 = vpop.f32.mrb[0].mxu0
        %v6768 = vadd.f32 0.0, %v6767
        %v6769 = vpop.f32.mrb[0].mxu0
        %v6770 = vpop.f32.mrb[0].mxu0
        %v6771 = vadd.f32 0.0, %v6770
        %v6772 = vpop.f32.mrb[0].mxu0
        %6773 = vmatprep.mubr.bf16.mxu0 0
        %6774 = vmatmul.mubr.bf16.gmra.mrb[0].mxu0 %v6427
        %v6775 = vpop.f32.mrb[0].mxu0
        %v6776 = vadd.f32 0.0, %v6775
        %v6777 = vpop.f32.mrb[0].mxu0
        %v6778 = vpop.f32.mrb[0].mxu0
        %v6779 = vadd.f32 0.0, %v6778
        %v6780 = vpop.f32.mrb[0].mxu0
        %6781 = vdwg.mxu0
        %v6782 = vld [vmem:[#allocation3] sm:$0xff]
        %v6783 = vld [vmem:[#allocation3 + $0x8] sm:$0xff]
        %v6784 = vld [vmem:[#allocation3 + $0x10] sm:$0xff]
        %v6785 = vld [vmem:[#allocation3 + $0x18] sm:$0xff]
        %v6786 = vld [vmem:[#allocation3 + $0x20] sm:$0xff]
        %v6787 = vld [vmem:[#allocation3 + $0x28] sm:$0xff]
        %v6788 = vld [vmem:[#allocation3 + $0x30] sm:$0xff]
        %v6789 = vld [vmem:[#allocation3 + $0x38] sm:$0xff]
        %v6790 = vld [vmem:[#allocation3 + $0x40] sm:$0xff]
        %v6791 = vld [vmem:[#allocation3 + $0x48] sm:$0xff]
        %v6792 = vld [vmem:[#allocation3 + $0x50] sm:$0xff]
        %v6793 = vld [vmem:[#allocation3 + $0x58] sm:$0xff]
        %v6794 = vld [vmem:[#allocation3 + $0x60] sm:$0xff]
        %v6795 = vld [vmem:[#allocation3 + $0x68] sm:$0xff]
        %v6796 = vld [vmem:[#allocation3 + $0x70] sm:$0xff]
        %v6797 = vld [vmem:[#allocation3 + $0x78] sm:$0xff]
        %v6798 = vld [vmem:[#allocation3 + $0x80] sm:$0xff]
        %v6799 = vld [vmem:[#allocation3 + $0x88] sm:$0xff]
        %v6800 = vld [vmem:[#allocation3 + $0x90] sm:$0xff]
        %v6801 = vld [vmem:[#allocation3 + $0x98] sm:$0xff]
        %v6802 = vld [vmem:[#allocation3 + $0xa0] sm:$0xff]
        %v6803 = vld [vmem:[#allocation3 + $0xa8] sm:$0xff]
        %v6804 = vld [vmem:[#allocation3 + $0xb0] sm:$0xff]
        %v6805 = vld [vmem:[#allocation3 + $0xb8] sm:$0xff]
        %v6806 = vld [vmem:[#allocation3 + $0xc0] sm:$0xff]
        %v6807 = vld [vmem:[#allocation3 + $0xc8] sm:$0xff]
        %v6808 = vld [vmem:[#allocation3 + $0xd0] sm:$0xff]
        %v6809 = vld [vmem:[#allocation3 + $0xd8] sm:$0xff]
        %v6810 = vld [vmem:[#allocation3 + $0xe0] sm:$0xff]
        %v6811 = vld [vmem:[#allocation3 + $0xe8] sm:$0xff]
        %v6812 = vld [vmem:[#allocation3 + $0xf0] sm:$0xff]
        %v6813 = vld [vmem:[#allocation3 + $0xf8] sm:$0xff]
        %v6814 = vld [vmem:[#allocation3 + $0x100] sm:$0xff]
        %v6815 = vld [vmem:[#allocation3 + $0x108] sm:$0xff]
        %v6816 = vld [vmem:[#allocation3 + $0x110] sm:$0xff]
        %v6817 = vld [vmem:[#allocation3 + $0x118] sm:$0xff]
        %v6818 = vld [vmem:[#allocation3 + $0x120] sm:$0xff]
        %v6819 = vld [vmem:[#allocation3 + $0x128] sm:$0xff]
        %v6820 = vld [vmem:[#allocation3 + $0x130] sm:$0xff]
        %v6821 = vld [vmem:[#allocation3 + $0x138] sm:$0xff]
        %v6822 = vld [vmem:[#allocation3 + $0x140] sm:$0xff]
        %v6823 = vld [vmem:[#allocation3 + $0x148] sm:$0xff]
        %v6824 = vld [vmem:[#allocation3 + $0x150] sm:$0xff]
        %v6825 = vld [vmem:[#allocation3 + $0x158] sm:$0xff]
        %v6826 = vld [vmem:[#allocation3 + $0x160] sm:$0xff]
        %v6827 = vld [vmem:[#allocation3 + $0x168] sm:$0xff]
        %v6828 = vld [vmem:[#allocation3 + $0x170] sm:$0xff]
        %v6829 = vld [vmem:[#allocation3 + $0x178] sm:$0xff]
        %v6830 = vld [vmem:[#allocation3 + $0x180] sm:$0xff]
        %v6831 = vld [vmem:[#allocation3 + $0x188] sm:$0xff]
        %v6832 = vld [vmem:[#allocation3 + $0x190] sm:$0xff]
        %v6833 = vld [vmem:[#allocation3 + $0x198] sm:$0xff]
        %v6834 = vld [vmem:[#allocation3 + $0x1a0] sm:$0xff]
        %v6835 = vld [vmem:[#allocation3 + $0x1a8] sm:$0xff]
        %v6836 = vld [vmem:[#allocation3 + $0x1b0] sm:$0xff]
        %v6837 = vld [vmem:[#allocation3 + $0x1b8] sm:$0xff]
        %v6838 = vld [vmem:[#allocation3 + $0x1c0] sm:$0xff]
        %v6839 = vld [vmem:[#allocation3 + $0x1c8] sm:$0xff]
        %v6840 = vld [vmem:[#allocation3 + $0x1d0] sm:$0xff]
        %v6841 = vld [vmem:[#allocation3 + $0x1d8] sm:$0xff]
        %v6842 = vld [vmem:[#allocation3 + $0x1e0] sm:$0xff]
        %v6843 = vld [vmem:[#allocation3 + $0x1e8] sm:$0xff]
        %v6844 = vld [vmem:[#allocation3 + $0x1f0] sm:$0xff]
        %v6845 = vld [vmem:[#allocation3 + $0x1f8] sm:$0xff]
        %v6846 = vadd.f32 %v6782, %v6528
        %v6847 = vadd.f32 %v6783, %v6531
        %v6848 = vadd.f32 %v6784, %v6536
        %v6849 = vadd.f32 %v6785, %v6539
        %v6850 = vadd.f32 %v6786, %v6544
        %v6851 = vadd.f32 %v6787, %v6547
        %v6852 = vadd.f32 %v6788, %v6552
        %v6853 = vadd.f32 %v6789, %v6555
        %v6854 = vadd.f32 %v6790, %v6560
        %v6855 = vadd.f32 %v6791, %v6563
        %v6856 = vadd.f32 %v6792, %v6568
        %v6857 = vadd.f32 %v6793, %v6571
        %v6858 = vadd.f32 %v6794, %v6576
        %v6859 = vadd.f32 %v6795, %v6579
        %v6860 = vadd.f32 %v6796, %v6584
        %v6861 = vadd.f32 %v6797, %v6587
        %v6862 = vadd.f32 %v6798, %v6592
        %v6863 = vadd.f32 %v6799, %v6595
        %v6864 = vadd.f32 %v6800, %v6600
        %v6865 = vadd.f32 %v6801, %v6603
        %v6866 = vadd.f32 %v6802, %v6608
        %v6867 = vadd.f32 %v6803, %v6611
        %v6868 = vadd.f32 %v6804, %v6616
        %v6869 = vadd.f32 %v6805, %v6619
        %v6870 = vadd.f32 %v6806, %v6624
        %v6871 = vadd.f32 %v6807, %v6627
        %v6872 = vadd.f32 %v6808, %v6632
        %v6873 = vadd.f32 %v6809, %v6635
        %v6874 = vadd.f32 %v6810, %v6640
        %v6875 = vadd.f32 %v6811, %v6643
        %v6876 = vadd.f32 %v6812, %v6648
        %v6877 = vadd.f32 %v6813, %v6651
        %v6878 = vadd.f32 %v6814, %v6656
        %v6879 = vadd.f32 %v6815, %v6659
        %v6880 = vadd.f32 %v6816, %v6664
        %v6881 = vadd.f32 %v6817, %v6667
        %v6882 = vadd.f32 %v6818, %v6672
        %v6883 = vadd.f32 %v6819, %v6675
        %v6884 = vadd.f32 %v6820, %v6680
        %v6885 = vadd.f32 %v6821, %v6683
        %v6886 = vadd.f32 %v6822, %v6688
        %v6887 = vadd.f32 %v6823, %v6691
        %v6888 = vadd.f32 %v6824, %v6696
        %v6889 = vadd.f32 %v6825, %v6699
        %v6890 = vadd.f32 %v6826, %v6704
        %v6891 = vadd.f32 %v6827, %v6707
        %v6892 = vadd.f32 %v6828, %v6712
        %v6893 = vadd.f32 %v6829, %v6715
        %v6894 = vadd.f32 %v6830, %v6720
        %v6895 = vadd.f32 %v6831, %v6723
        %v6896 = vadd.f32 %v6832, %v6728
        %v6897 = vadd.f32 %v6833, %v6731
        %v6898 = vadd.f32 %v6834, %v6736
        %v6899 = vadd.f32 %v6835, %v6739
        %v6900 = vadd.f32 %v6836, %v6744
        %v6901 = vadd.f32 %v6837, %v6747
        %v6902 = vadd.f32 %v6838, %v6752
        %v6903 = vadd.f32 %v6839, %v6755
        %v6904 = vadd.f32 %v6840, %v6760
        %v6905 = vadd.f32 %v6841, %v6763
        %v6906 = vadd.f32 %v6842, %v6768
        %v6907 = vadd.f32 %v6843, %v6771
        %v6908 = vadd.f32 %v6844, %v6776
        %v6909 = vadd.f32 %v6845, %v6779
        %6910 = vst [vmem:[#allocation3] sm:$0xff] %v6846
        %6911 = vst [vmem:[#allocation3 + $0x8] sm:$0xff] %v6847
        %6912 = vst [vmem:[#allocation3 + $0x10] sm:$0xff] %v6848
        %6913 = vst [vmem:[#allocation3 + $0x18] sm:$0xff] %v6849
        %6914 = vst [vmem:[#allocation3 + $0x20] sm:$0xff] %v6850
        %6915 = vst [vmem:[#allocation3 + $0x28] sm:$0xff] %v6851
        %6916 = vst [vmem:[#allocation3 + $0x30] sm:$0xff] %v6852
        %6917 = vst [vmem:[#allocation3 + $0x38] sm:$0xff] %v6853
        %6918 = vst [vmem:[#allocation3 + $0x40] sm:$0xff] %v6854
        %6919 = vst [vmem:[#allocation3 + $0x48] sm:$0xff] %v6855
        %6920 = vst [vmem:[#allocation3 + $0x50] sm:$0xff] %v6856
        %6921 = vst [vmem:[#allocation3 + $0x58] sm:$0xff] %v6857
        %6922 = vst [vmem:[#allocation3 + $0x60] sm:$0xff] %v6858
        %6923 = vst [vmem:[#allocation3 + $0x68] sm:$0xff] %v6859
        %6924 = vst [vmem:[#allocation3 + $0x70] sm:$0xff] %v6860
        %6925 = vst [vmem:[#allocation3 + $0x78] sm:$0xff] %v6861
        %6926 = vst [vmem:[#allocation3 + $0x80] sm:$0xff] %v6862
        %6927 = vst [vmem:[#allocation3 + $0x88] sm:$0xff] %v6863
        %6928 = vst [vmem:[#allocation3 + $0x90] sm:$0xff] %v6864
        %6929 = vst [vmem:[#allocation3 + $0x98] sm:$0xff] %v6865
        %6930 = vst [vmem:[#allocation3 + $0xa0] sm:$0xff] %v6866
        %6931 = vst [vmem:[#allocation3 + $0xa8] sm:$0xff] %v6867
        %6932 = vst [vmem:[#allocation3 + $0xb0] sm:$0xff] %v6868
        %6933 = vst [vmem:[#allocation3 + $0xb8] sm:$0xff] %v6869
        %6934 = vst [vmem:[#allocation3 + $0xc0] sm:$0xff] %v6870
        %6935 = vst [vmem:[#allocation3 + $0xc8] sm:$0xff] %v6871
        %6936 = vst [vmem:[#allocation3 + $0xd0] sm:$0xff] %v6872
        %6937 = vst [vmem:[#allocation3 + $0xd8] sm:$0xff] %v6873
        %6938 = vst [vmem:[#allocation3 + $0xe0] sm:$0xff] %v6874
        %6939 = vst [vmem:[#allocation3 + $0xe8] sm:$0xff] %v6875
        %6940 = vst [vmem:[#allocation3 + $0xf0] sm:$0xff] %v6876
        %6941 = vst [vmem:[#allocation3 + $0xf8] sm:$0xff] %v6877
        %6942 = vst [vmem:[#allocation3 + $0x100] sm:$0xff] %v6878
        %6943 = vst [vmem:[#allocation3 + $0x108] sm:$0xff] %v6879
        %6944 = vst [vmem:[#allocation3 + $0x110] sm:$0xff] %v6880
        %6945 = vst [vmem:[#allocation3 + $0x118] sm:$0xff] %v6881
        %6946 = vst [vmem:[#allocation3 + $0x120] sm:$0xff] %v6882
        %6947 = vst [vmem:[#allocation3 + $0x128] sm:$0xff] %v6883
        %6948 = vst [vmem:[#allocation3 + $0x130] sm:$0xff] %v6884
        %6949 = vst [vmem:[#allocation3 + $0x138] sm:$0xff] %v6885
        %6950 = vst [vmem:[#allocation3 + $0x140] sm:$0xff] %v6886
        %6951 = vst [vmem:[#allocation3 + $0x148] sm:$0xff] %v6887
        %6952 = vst [vmem:[#allocation3 + $0x150] sm:$0xff] %v6888
        %6953 = vst [vmem:[#allocation3 + $0x158] sm:$0xff] %v6889
        %6954 = vst [vmem:[#allocation3 + $0x160] sm:$0xff] %v6890
        %6955 = vst [vmem:[#allocation3 + $0x168] sm:$0xff] %v6891
        %6956 = vst [vmem:[#allocation3 + $0x170] sm:$0xff] %v6892
        %6957 = vst [vmem:[#allocation3 + $0x178] sm:$0xff] %v6893
        %6958 = vst [vmem:[#allocation3 + $0x180] sm:$0xff] %v6894
        %6959 = vst [vmem:[#allocation3 + $0x188] sm:$0xff] %v6895
        %6960 = vst [vmem:[#allocation3 + $0x190] sm:$0xff] %v6896
        %6961 = vst [vmem:[#allocation3 + $0x198] sm:$0xff] %v6897
        %6962 = vst [vmem:[#allocation3 + $0x1a0] sm:$0xff] %v6898
        %6963 = vst [vmem:[#allocation3 + $0x1a8] sm:$0xff] %v6899
        %6964 = vst [vmem:[#allocation3 + $0x1b0] sm:$0xff] %v6900
        %6965 = vst [vmem:[#allocation3 + $0x1b8] sm:$0xff] %v6901
        %6966 = vst [vmem:[#allocation3 + $0x1c0] sm:$0xff] %v6902
        %6967 = vst [vmem:[#allocation3 + $0x1c8] sm:$0xff] %v6903
        %6968 = vst [vmem:[#allocation3 + $0x1d0] sm:$0xff] %v6904
        %6969 = vst [vmem:[#allocation3 + $0x1d8] sm:$0xff] %v6905
        %6970 = vst [vmem:[#allocation3 + $0x1e0] sm:$0xff] %v6906
        %6971 = vst [vmem:[#allocation3 + $0x1e8] sm:$0xff] %v6907
        %6972 = vst [vmem:[#allocation3 + $0x1f0] sm:$0xff] %v6908
        %6973 = vst [vmem:[#allocation3 + $0x1f8] sm:$0xff] %v6909
        %p6974 = scmp.lt.s32.totalorder %s19, 2
        // Predicated region
        $region49: #{tpu_custom_call.1} parent=39 // pred_check
          %p6975 = pneg %p6974
        $region50: #{tpu_custom_call.1} parent=39 // pred_check_branch
          %6977 = sbr.rel (%p6975) target = $region52
        $region51: #{tpu_custom_call.1} parent=39 // pred_region
          %v6978 = vld [vmem:[#allocation3] sm:$0xff]
          %v6979 = vld [vmem:[#allocation3 + $0x8] sm:$0xff]
          %v6980 = vld [vmem:[#allocation3 + $0x10] sm:$0xff]
          %v6981 = vld [vmem:[#allocation3 + $0x18] sm:$0xff]
          %v6982 = vld [vmem:[#allocation3 + $0x20] sm:$0xff]
          %v6983 = vld [vmem:[#allocation3 + $0x28] sm:$0xff]
          %v6984 = vld [vmem:[#allocation3 + $0x30] sm:$0xff]
          %v6985 = vld [vmem:[#allocation3 + $0x38] sm:$0xff]
          %v6986 = vld [vmem:[#allocation3 + $0x100] sm:$0xff]
          %v6987 = vld [vmem:[#allocation3 + $0x108] sm:$0xff]
          %v6988 = vld [vmem:[#allocation3 + $0x110] sm:$0xff]
          %v6989 = vld [vmem:[#allocation3 + $0x118] sm:$0xff]
          %v6990 = vld [vmem:[#allocation3 + $0x120] sm:$0xff]
          %v6991 = vld [vmem:[#allocation3 + $0x128] sm:$0xff]
          %v6992 = vld [vmem:[#allocation3 + $0x130] sm:$0xff]
          %v6993 = vld [vmem:[#allocation3 + $0x138] sm:$0xff]
          %v6994 = vadd.f32 %v6978, %v6979
          %v6995 = vadd.f32 %v6994, %v6980
          %v6996 = vadd.f32 %v6995, %v6981
          %v6997 = vadd.f32 %v6996, %v6982
          %v6998 = vadd.f32 %v6997, %v6983
          %v6999 = vadd.f32 %v6998, %v6984
          %v7000 = vadd.f32 %v6999, %v6985
          %v7001 = vadd.f32 %v7000, %v6986
          %v7002 = vadd.f32 %v7001, %v6987
          %v7003 = vadd.f32 %v7002, %v6988
          %v7004 = vadd.f32 %v7003, %v6989
          %v7005 = vadd.f32 %v7004, %v6990
          %v7006 = vadd.f32 %v7005, %v6991
          %v7007 = vadd.f32 %v7006, %v6992
          %v7008 = vadd.f32 %v7007, %v6993
          %v7009 = vrot.slane %v7008, 4
          %v7010 = vadd.f32 %v7008, %v7009
          %v7011 = vrot.slane %v7010, 2
          %v7012 = vadd.f32 %v7010, %v7011
          %v7013 = vrot.slane %v7012, 1
          %v7014 = vadd.f32 %v7012, %v7013
          %v7015 = vadd.f32 %v7014, 0.0
          %s7016 = scalar_lea.vmem [#allocation3], 64
          %v7017 = vld [vmem:[%s7016] sm:$0xff]
          %v7018 = vld [vmem:[%s7016 + $0x8] sm:$0xff]
          %v7019 = vld [vmem:[%s7016 + $0x10] sm:$0xff]
          %v7020 = vld [vmem:[%s7016 + $0x18] sm:$0xff]
          %v7021 = vld [vmem:[%s7016 + $0x20] sm:$0xff]
          %v7022 = vld [vmem:[%s7016 + $0x28] sm:$0xff]
          %v7023 = vld [vmem:[%s7016 + $0x30] sm:$0xff]
          %v7024 = vld [vmem:[%s7016 + $0x38] sm:$0xff]
          %v7025 = vld [vmem:[%s7016 + $0x100] sm:$0xff]
          %v7026 = vld [vmem:[%s7016 + $0x108] sm:$0xff]
          %v7027 = vld [vmem:[%s7016 + $0x110] sm:$0xff]
          %v7028 = vld [vmem:[%s7016 + $0x118] sm:$0xff]
          %v7029 = vld [vmem:[%s7016 + $0x120] sm:$0xff]
          %v7030 = vld [vmem:[%s7016 + $0x128] sm:$0xff]
          %v7031 = vld [vmem:[%s7016 + $0x130] sm:$0xff]
          %v7032 = vld [vmem:[%s7016 + $0x138] sm:$0xff]
          %v7033 = vadd.f32 %v7017, %v7018
          %v7034 = vadd.f32 %v7033, %v7019
          %v7035 = vadd.f32 %v7034, %v7020
          %v7036 = vadd.f32 %v7035, %v7021
          %v7037 = vadd.f32 %v7036, %v7022
          %v7038 = vadd.f32 %v7037, %v7023
          %v7039 = vadd.f32 %v7038, %v7024
          %v7040 = vadd.f32 %v7039, %v7025
          %v7041 = vadd.f32 %v7040, %v7026
          %v7042 = vadd.f32 %v7041, %v7027
          %v7043 = vadd.f32 %v7042, %v7028
          %v7044 = vadd.f32 %v7043, %v7029
          %v7045 = vadd.f32 %v7044, %v7030
          %v7046 = vadd.f32 %v7045, %v7031
          %v7047 = vadd.f32 %v7046, %v7032
          %v7048 = vrot.slane %v7047, 4
          %v7049 = vadd.f32 %v7047, %v7048
          %v7050 = vrot.slane %v7049, 2
          %v7051 = vadd.f32 %v7049, %v7050
          %v7052 = vrot.slane %v7051, 1
          %v7053 = vadd.f32 %v7051, %v7052
          %v7054 = vadd.f32 %v7015, %v7053
          %s7055 = scalar_lea.vmem [#allocation3], 128
          %v7056 = vld [vmem:[%s7055] sm:$0xff]
          %v7057 = vld [vmem:[%s7055 + $0x8] sm:$0xff]
          %v7058 = vld [vmem:[%s7055 + $0x10] sm:$0xff]
          %v7059 = vld [vmem:[%s7055 + $0x18] sm:$0xff]
          %v7060 = vld [vmem:[%s7055 + $0x20] sm:$0xff]
          %v7061 = vld [vmem:[%s7055 + $0x28] sm:$0xff]
          %v7062 = vld [vmem:[%s7055 + $0x30] sm:$0xff]
          %v7063 = vld [vmem:[%s7055 + $0x38] sm:$0xff]
          %v7064 = vld [vmem:[%s7055 + $0x100] sm:$0xff]
          %v7065 = vld [vmem:[%s7055 + $0x108] sm:$0xff]
          %v7066 = vld [vmem:[%s7055 + $0x110] sm:$0xff]
          %v7067 = vld [vmem:[%s7055 + $0x118] sm:$0xff]
          %v7068 = vld [vmem:[%s7055 + $0x120] sm:$0xff]
          %v7069 = vld [vmem:[%s7055 + $0x128] sm:$0xff]
          %v7070 = vld [vmem:[%s7055 + $0x130] sm:$0xff]
          %v7071 = vld [vmem:[%s7055 + $0x138] sm:$0xff]
          %v7072 = vadd.f32 %v7056, %v7057
          %v7073 = vadd.f32 %v7072, %v7058
          %v7074 = vadd.f32 %v7073, %v7059
          %v7075 = vadd.f32 %v7074, %v7060
          %v7076 = vadd.f32 %v7075, %v7061
          %v7077 = vadd.f32 %v7076, %v7062
          %v7078 = vadd.f32 %v7077, %v7063
          %v7079 = vadd.f32 %v7078, %v7064
          %v7080 = vadd.f32 %v7079, %v7065
          %v7081 = vadd.f32 %v7080, %v7066
          %v7082 = vadd.f32 %v7081, %v7067
          %v7083 = vadd.f32 %v7082, %v7068
          %v7084 = vadd.f32 %v7083, %v7069
          %v7085 = vadd.f32 %v7084, %v7070
          %v7086 = vadd.f32 %v7085, %v7071
          %v7087 = vrot.slane %v7086, 4
          %v7088 = vadd.f32 %v7086, %v7087
          %v7089 = vrot.slane %v7088, 2
          %v7090 = vadd.f32 %v7088, %v7089
          %v7091 = vrot.slane %v7090, 1
          %v7092 = vadd.f32 %v7090, %v7091
          %v7093 = vadd.f32 %v7054, %v7092
          %s7094 = scalar_lea.vmem [#allocation3], 192
          %v7095 = vld [vmem:[%s7094] sm:$0xff]
          %v7096 = vld [vmem:[%s7094 + $0x8] sm:$0xff]
          %v7097 = vld [vmem:[%s7094 + $0x10] sm:$0xff]
          %v7098 = vld [vmem:[%s7094 + $0x18] sm:$0xff]
          %v7099 = vld [vmem:[%s7094 + $0x20] sm:$0xff]
          %v7100 = vld [vmem:[%s7094 + $0x28] sm:$0xff]
          %v7101 = vld [vmem:[%s7094 + $0x30] sm:$0xff]
          %v7102 = vld [vmem:[%s7094 + $0x38] sm:$0xff]
          %v7103 = vld [vmem:[%s7094 + $0x100] sm:$0xff]
          %v7104 = vld [vmem:[%s7094 + $0x108] sm:$0xff]
          %v7105 = vld [vmem:[%s7094 + $0x110] sm:$0xff]
          %v7106 = vld [vmem:[%s7094 + $0x118] sm:$0xff]
          %v7107 = vld [vmem:[%s7094 + $0x120] sm:$0xff]
          %v7108 = vld [vmem:[%s7094 + $0x128] sm:$0xff]
          %v7109 = vld [vmem:[%s7094 + $0x130] sm:$0xff]
          %v7110 = vld [vmem:[%s7094 + $0x138] sm:$0xff]
          %v7111 = vadd.f32 %v7095, %v7096
          %v7112 = vadd.f32 %v7111, %v7097
          %v7113 = vadd.f32 %v7112, %v7098
          %v7114 = vadd.f32 %v7113, %v7099
          %v7115 = vadd.f32 %v7114, %v7100
          %v7116 = vadd.f32 %v7115, %v7101
          %v7117 = vadd.f32 %v7116, %v7102
          %v7118 = vadd.f32 %v7117, %v7103
          %v7119 = vadd.f32 %v7118, %v7104
          %v7120 = vadd.f32 %v7119, %v7105
          %v7121 = vadd.f32 %v7120, %v7106
          %v7122 = vadd.f32 %v7121, %v7107
          %v7123 = vadd.f32 %v7122, %v7108
          %v7124 = vadd.f32 %v7123, %v7109
          %v7125 = vadd.f32 %v7124, %v7110
          %v7126 = vrot.slane %v7125, 4
          %v7127 = vadd.f32 %v7125, %v7126
          %v7128 = vrot.slane %v7127, 2
          %v7129 = vadd.f32 %v7127, %v7128
          %v7130 = vrot.slane %v7129, 1
          %v7131 = vadd.f32 %v7129, %v7130
          %v7132 = vadd.f32 %v7093, %v7131
          %v7133 = vmul.f32 %v7132, 0.001953125
          %v7134 = vsub.f32 %v6978, %v7133
          %v7135 = vsub.f32 %v6979, %v7133
          %v7136 = vsub.f32 %v6980, %v7133
          %v7137 = vsub.f32 %v6981, %v7133
          %v7138 = vsub.f32 %v6982, %v7133
          %v7139 = vsub.f32 %v6983, %v7133
          %v7140 = vsub.f32 %v6984, %v7133
          %v7141 = vsub.f32 %v6985, %v7133
          %v7142 = vsub.f32 %v6986, %v7133
          %v7143 = vsub.f32 %v6987, %v7133
          %v7144 = vsub.f32 %v6988, %v7133
          %v7145 = vsub.f32 %v6989, %v7133
          %v7146 = vsub.f32 %v6990, %v7133
          %v7147 = vsub.f32 %v6991, %v7133
          %v7148 = vsub.f32 %v6992, %v7133
          %v7149 = vsub.f32 %v6993, %v7133
          %v7150 = vmul.f32 %v7134, %v7134
          %v7151 = vmul.f32 %v7135, %v7135
          %v7152 = vmul.f32 %v7136, %v7136
          %v7153 = vmul.f32 %v7137, %v7137
          %v7154 = vmul.f32 %v7138, %v7138
          %v7155 = vmul.f32 %v7139, %v7139
          %v7156 = vmul.f32 %v7140, %v7140
          %v7157 = vmul.f32 %v7141, %v7141
          %v7158 = vmul.f32 %v7142, %v7142
          %v7159 = vmul.f32 %v7143, %v7143
          %v7160 = vmul.f32 %v7144, %v7144
          %v7161 = vmul.f32 %v7145, %v7145
          %v7162 = vmul.f32 %v7146, %v7146
          %v7163 = vmul.f32 %v7147, %v7147
          %v7164 = vmul.f32 %v7148, %v7148
          %v7165 = vmul.f32 %v7149, %v7149
          %v7166 = vadd.f32 %v7150, %v7151
          %v7167 = vadd.f32 %v7166, %v7152
          %v7168 = vadd.f32 %v7167, %v7153
          %v7169 = vadd.f32 %v7168, %v7154
          %v7170 = vadd.f32 %v7169, %v7155
          %v7171 = vadd.f32 %v7170, %v7156
          %v7172 = vadd.f32 %v7171, %v7157
          %v7173 = vadd.f32 %v7172, %v7158
          %v7174 = vadd.f32 %v7173, %v7159
          %v7175 = vadd.f32 %v7174, %v7160
          %v7176 = vadd.f32 %v7175, %v7161
          %v7177 = vadd.f32 %v7176, %v7162
          %v7178 = vadd.f32 %v7177, %v7163
          %v7179 = vadd.f32 %v7178, %v7164
          %v7180 = vadd.f32 %v7179, %v7165
          %v7181 = vrot.slane %v7180, 4
          %v7182 = vadd.f32 %v7180, %v7181
          %v7183 = vrot.slane %v7182, 2
          %v7184 = vadd.f32 %v7182, %v7183
          %v7185 = vrot.slane %v7184, 1
          %v7186 = vadd.f32 %v7184, %v7185
          %v7187 = vadd.f32 %v7186, 0.0
          %v7188 = vsub.f32 %v7017, %v7133
          %v7189 = vsub.f32 %v7018, %v7133
          %v7190 = vsub.f32 %v7019, %v7133
          %v7191 = vsub.f32 %v7020, %v7133
          %v7192 = vsub.f32 %v7021, %v7133
          %v7193 = vsub.f32 %v7022, %v7133
          %v7194 = vsub.f32 %v7023, %v7133
          %v7195 = vsub.f32 %v7024, %v7133
          %v7196 = vsub.f32 %v7025, %v7133
          %v7197 = vsub.f32 %v7026, %v7133
          %v7198 = vsub.f32 %v7027, %v7133
          %v7199 = vsub.f32 %v7028, %v7133
          %v7200 = vsub.f32 %v7029, %v7133
          %v7201 = vsub.f32 %v7030, %v7133
          %v7202 = vsub.f32 %v7031, %v7133
          %v7203 = vsub.f32 %v7032, %v7133
          %v7204 = vmul.f32 %v7188, %v7188
          %v7205 = vmul.f32 %v7189, %v7189
          %v7206 = vmul.f32 %v7190, %v7190
          %v7207 = vmul.f32 %v7191, %v7191
          %v7208 = vmul.f32 %v7192, %v7192
          %v7209 = vmul.f32 %v7193, %v7193
          %v7210 = vmul.f32 %v7194, %v7194
          %v7211 = vmul.f32 %v7195, %v7195
          %v7212 = vmul.f32 %v7196, %v7196
          %v7213 = vmul.f32 %v7197, %v7197
          %v7214 = vmul.f32 %v7198, %v7198
          %v7215 = vmul.f32 %v7199, %v7199
          %v7216 = vmul.f32 %v7200, %v7200
          %v7217 = vmul.f32 %v7201, %v7201
          %v7218 = vmul.f32 %v7202, %v7202
          %v7219 = vmul.f32 %v7203, %v7203
          %v7220 = vadd.f32 %v7204, %v7205
          %v7221 = vadd.f32 %v7220, %v7206
          %v7222 = vadd.f32 %v7221, %v7207
          %v7223 = vadd.f32 %v7222, %v7208
          %v7224 = vadd.f32 %v7223, %v7209
          %v7225 = vadd.f32 %v7224, %v7210
          %v7226 = vadd.f32 %v7225, %v7211
          %v7227 = vadd.f32 %v7226, %v7212
          %v7228 = vadd.f32 %v7227, %v7213
          %v7229 = vadd.f32 %v7228, %v7214
          %v7230 = vadd.f32 %v7229, %v7215
          %v7231 = vadd.f32 %v7230, %v7216
          %v7232 = vadd.f32 %v7231, %v7217
          %v7233 = vadd.f32 %v7232, %v7218
          %v7234 = vadd.f32 %v7233, %v7219
          %v7235 = vrot.slane %v7234, 4
          %v7236 = vadd.f32 %v7234, %v7235
          %v7237 = vrot.slane %v7236, 2
          %v7238 = vadd.f32 %v7236, %v7237
          %v7239 = vrot.slane %v7238, 1
          %v7240 = vadd.f32 %v7238, %v7239
          %v7241 = vadd.f32 %v7187, %v7240
          %v7242 = vsub.f32 %v7056, %v7133
          %v7243 = vsub.f32 %v7057, %v7133
          %v7244 = vsub.f32 %v7058, %v7133
          %v7245 = vsub.f32 %v7059, %v7133
          %v7246 = vsub.f32 %v7060, %v7133
          %v7247 = vsub.f32 %v7061, %v7133
          %v7248 = vsub.f32 %v7062, %v7133
          %v7249 = vsub.f32 %v7063, %v7133
          %v7250 = vsub.f32 %v7064, %v7133
          %v7251 = vsub.f32 %v7065, %v7133
          %v7252 = vsub.f32 %v7066, %v7133
          %v7253 = vsub.f32 %v7067, %v7133
          %v7254 = vsub.f32 %v7068, %v7133
          %v7255 = vsub.f32 %v7069, %v7133
          %v7256 = vsub.f32 %v7070, %v7133
          %v7257 = vsub.f32 %v7071, %v7133
          %v7258 = vmul.f32 %v7242, %v7242
          %v7259 = vmul.f32 %v7243, %v7243
          %v7260 = vmul.f32 %v7244, %v7244
          %v7261 = vmul.f32 %v7245, %v7245
          %v7262 = vmul.f32 %v7246, %v7246
          %v7263 = vmul.f32 %v7247, %v7247
          %v7264 = vmul.f32 %v7248, %v7248
          %v7265 = vmul.f32 %v7249, %v7249
          %v7266 = vmul.f32 %v7250, %v7250
          %v7267 = vmul.f32 %v7251, %v7251
          %v7268 = vmul.f32 %v7252, %v7252
          %v7269 = vmul.f32 %v7253, %v7253
          %v7270 = vmul.f32 %v7254, %v7254
          %v7271 = vmul.f32 %v7255, %v7255
          %v7272 = vmul.f32 %v7256, %v7256
          %v7273 = vmul.f32 %v7257, %v7257
          %v7274 = vadd.f32 %v7258, %v7259
          %v7275 = vadd.f32 %v7274, %v7260
          %v7276 = vadd.f32 %v7275, %v7261
          %v7277 = vadd.f32 %v7276, %v7262
          %v7278 = vadd.f32 %v7277, %v7263
          %v7279 = vadd.f32 %v7278, %v7264
          %v7280 = vadd.f32 %v7279, %v7265
          %v7281 = vadd.f32 %v7280, %v7266
          %v7282 = vadd.f32 %v7281, %v7267
          %v7283 = vadd.f32 %v7282, %v7268
          %v7284 = vadd.f32 %v7283, %v7269
          %v7285 = vadd.f32 %v7284, %v7270
          %v7286 = vadd.f32 %v7285, %v7271
          %v7287 = vadd.f32 %v7286, %v7272
          %v7288 = vadd.f32 %v7287, %v7273
          %v7289 = vrot.slane %v7288, 4
          %v7290 = vadd.f32 %v7288, %v7289
          %v7291 = vrot.slane %v7290, 2
          %v7292 = vadd.f32 %v7290, %v7291
          %v7293 = vrot.slane %v7292, 1
          %v7294 = vadd.f32 %v7292, %v7293
          %v7295 = vadd.f32 %v7241, %v7294
          %v7296 = vsub.f32 %v7095, %v7133
          %v7297 = vsub.f32 %v7096, %v7133
          %v7298 = vsub.f32 %v7097, %v7133
          %v7299 = vsub.f32 %v7098, %v7133
          %v7300 = vsub.f32 %v7099, %v7133
          %v7301 = vsub.f32 %v7100, %v7133
          %v7302 = vsub.f32 %v7101, %v7133
          %v7303 = vsub.f32 %v7102, %v7133
          %v7304 = vsub.f32 %v7103, %v7133
          %v7305 = vsub.f32 %v7104, %v7133
          %v7306 = vsub.f32 %v7105, %v7133
          %v7307 = vsub.f32 %v7106, %v7133
          %v7308 = vsub.f32 %v7107, %v7133
          %v7309 = vsub.f32 %v7108, %v7133
          %v7310 = vsub.f32 %v7109, %v7133
          %v7311 = vsub.f32 %v7110, %v7133
          %v7312 = vmul.f32 %v7296, %v7296
          %v7313 = vmul.f32 %v7297, %v7297
          %v7314 = vmul.f32 %v7298, %v7298
          %v7315 = vmul.f32 %v7299, %v7299
          %v7316 = vmul.f32 %v7300, %v7300
          %v7317 = vmul.f32 %v7301, %v7301
          %v7318 = vmul.f32 %v7302, %v7302
          %v7319 = vmul.f32 %v7303, %v7303
          %v7320 = vmul.f32 %v7304, %v7304
          %v7321 = vmul.f32 %v7305, %v7305
          %v7322 = vmul.f32 %v7306, %v7306
          %v7323 = vmul.f32 %v7307, %v7307
          %v7324 = vmul.f32 %v7308, %v7308
          %v7325 = vmul.f32 %v7309, %v7309
          %v7326 = vmul.f32 %v7310, %v7310
          %v7327 = vmul.f32 %v7311, %v7311
          %v7328 = vadd.f32 %v7312, %v7313
          %v7329 = vadd.f32 %v7328, %v7314
          %v7330 = vadd.f32 %v7329, %v7315
          %v7331 = vadd.f32 %v7330, %v7316
          %v7332 = vadd.f32 %v7331, %v7317
          %v7333 = vadd.f32 %v7332, %v7318
          %v7334 = vadd.f32 %v7333, %v7319
          %v7335 = vadd.f32 %v7334, %v7320
          %v7336 = vadd.f32 %v7335, %v7321
          %v7337 = vadd.f32 %v7336, %v7322
          %v7338 = vadd.f32 %v7337, %v7323
          %v7339 = vadd.f32 %v7338, %v7324
          %v7340 = vadd.f32 %v7339, %v7325
          %v7341 = vadd.f32 %v7340, %v7326
          %v7342 = vadd.f32 %v7341, %v7327
          %v7343 = vrot.slane %v7342, 4
          %v7344 = vadd.f32 %v7342, %v7343
          %v7345 = vrot.slane %v7344, 2
          %v7346 = vadd.f32 %v7344, %v7345
          %v7347 = vrot.slane %v7346, 1
          %v7348 = vadd.f32 %v7346, %v7347
          %v7349 = vadd.f32 %v7295, %v7348
          %v7350 = vmul.f32 %v7349, 0.001953125
          %v7351 = vld [vmem:[%s268] sm:$0x1]
          %v7352 = vadd.f32 %v7350, 1e-05
          %v7353 = vrsqrt.pop %v7352
          %v7354 = vmul.f32 %v7351, %v7353
          %v7355 = vld [vmem:[%s271] sm:$0x1]
          %v7356 = vmul.f32 %v7133, %v7354
          %v7357 = vsub.f32 %v7355, %v7356
          %v7359 = vlaneseq
          %v7360 = vshrl.u32 %v7359, 7
          %v7361 = vsub.s32 0, %v7360
          %v7362 = vrot.slane %v7354, %v7361
          %v7364 = vmul.f32 %v6978, %v7362
          %v7365 = vmul.f32 %v6979, %v7362
          %v7366 = vmul.f32 %v6980, %v7362
          %v7367 = vmul.f32 %v6981, %v7362
          %v7368 = vmul.f32 %v6982, %v7362
          %v7369 = vmul.f32 %v6983, %v7362
          %v7370 = vmul.f32 %v6984, %v7362
          %v7371 = vmul.f32 %v6985, %v7362
          %v7372 = vmul.f32 %v6986, %v7362
          %v7373 = vmul.f32 %v6987, %v7362
          %v7374 = vmul.f32 %v6988, %v7362
          %v7375 = vmul.f32 %v6989, %v7362
          %v7376 = vmul.f32 %v6990, %v7362
          %v7377 = vmul.f32 %v6991, %v7362
          %v7378 = vmul.f32 %v6992, %v7362
          %v7379 = vmul.f32 %v6993, %v7362
          %v7381 = vlaneseq
          %v7382 = vshrl.u32 %v7381, 7
          %v7383 = vsub.s32 0, %v7382
          %v7384 = vrot.slane %v7357, %v7383
          %v7386 = vadd.f32 %v7364, %v7384
          %v7387 = vadd.f32 %v7365, %v7384
          %v7388 = vadd.f32 %v7366, %v7384
          %v7389 = vadd.f32 %v7367, %v7384
          %v7390 = vadd.f32 %v7368, %v7384
          %v7391 = vadd.f32 %v7369, %v7384
          %v7392 = vadd.f32 %v7370, %v7384
          %v7393 = vadd.f32 %v7371, %v7384
          %v7394 = vadd.f32 %v7372, %v7384
          %v7395 = vadd.f32 %v7373, %v7384
          %v7396 = vadd.f32 %v7374, %v7384
          %v7397 = vadd.f32 %v7375, %v7384
          %v7398 = vadd.f32 %v7376, %v7384
          %v7399 = vadd.f32 %v7377, %v7384
          %v7400 = vadd.f32 %v7378, %v7384
          %v7401 = vadd.f32 %v7379, %v7384
          %vm7402 = vcmp.ge.f32.partialorder %v7386, 0.0
          %vm7403 = vcmp.ge.f32.partialorder %v7387, 0.0
          %vm7404 = vcmp.ge.f32.partialorder %v7388, 0.0
          %vm7405 = vcmp.ge.f32.partialorder %v7389, 0.0
          %vm7406 = vcmp.ge.f32.partialorder %v7390, 0.0
          %vm7407 = vcmp.ge.f32.partialorder %v7391, 0.0
          %vm7408 = vcmp.ge.f32.partialorder %v7392, 0.0
          %vm7409 = vcmp.ge.f32.partialorder %v7393, 0.0
          %vm7410 = vcmp.ge.f32.partialorder %v7394, 0.0
          %vm7411 = vcmp.ge.f32.partialorder %v7395, 0.0
          %vm7412 = vcmp.ge.f32.partialorder %v7396, 0.0
          %vm7413 = vcmp.ge.f32.partialorder %v7397, 0.0
          %vm7414 = vcmp.ge.f32.partialorder %v7398, 0.0
          %vm7415 = vcmp.ge.f32.partialorder %v7399, 0.0
          %vm7416 = vcmp.ge.f32.partialorder %v7400, 0.0
          %vm7417 = vcmp.ge.f32.partialorder %v7401, 0.0
          %v7418 = vmul.f32 %v7386, 0.2
          %v7419 = vmul.f32 %v7387, 0.2
          %v7420 = vmul.f32 %v7388, 0.2
          %v7421 = vmul.f32 %v7389, 0.2
          %v7422 = vmul.f32 %v7390, 0.2
          %v7423 = vmul.f32 %v7391, 0.2
          %v7424 = vmul.f32 %v7392, 0.2
          %v7425 = vmul.f32 %v7393, 0.2
          %v7426 = vmul.f32 %v7394, 0.2
          %v7427 = vmul.f32 %v7395, 0.2
          %v7428 = vmul.f32 %v7396, 0.2
          %v7429 = vmul.f32 %v7397, 0.2
          %v7430 = vmul.f32 %v7398, 0.2
          %v7431 = vmul.f32 %v7399, 0.2
          %v7432 = vmul.f32 %v7400, 0.2
          %v7433 = vmul.f32 %v7401, 0.2
          %v7434 = vsel %vm7402, %v7386, %v7418
          %v7435 = vsel %vm7403, %v7387, %v7419
          %v7436 = vsel %vm7404, %v7388, %v7420
          %v7437 = vsel %vm7405, %v7389, %v7421
          %v7438 = vsel %vm7406, %v7390, %v7422
          %v7439 = vsel %vm7407, %v7391, %v7423
          %v7440 = vsel %vm7408, %v7392, %v7424
          %v7441 = vsel %vm7409, %v7393, %v7425
          %v7442 = vsel %vm7410, %v7394, %v7426
          %v7443 = vsel %vm7411, %v7395, %v7427
          %v7444 = vsel %vm7412, %v7396, %v7428
          %v7445 = vsel %vm7413, %v7397, %v7429
          %v7446 = vsel %vm7414, %v7398, %v7430
          %v7447 = vsel %vm7415, %v7399, %v7431
          %v7448 = vsel %vm7416, %v7400, %v7432
          %v7449 = vsel %vm7417, %v7401, %v7433
          %7450 = vst [vmem:[%s2608 + $0x8] sm:$0xff] %v7434
          %7451 = vst [vmem:[%s2608 + $0x10] sm:$0xff] %v7435
          %7452 = vst [vmem:[%s2608 + $0x28] sm:$0xff] %v7436
          %7453 = vst [vmem:[%s2608 + $0x30] sm:$0xff] %v7437
          %7454 = vst [vmem:[%s2608 + $0x48] sm:$0xff] %v7438
          %7455 = vst [vmem:[%s2608 + $0x50] sm:$0xff] %v7439
          %7456 = vst [vmem:[%s2608 + $0x68] sm:$0xff] %v7440
          %7457 = vst [vmem:[%s2608 + $0x70] sm:$0xff] %v7441
          %7458 = vst [vmem:[%s2608 + $0x248] sm:$0xff] %v7442
          %7459 = vst [vmem:[%s2608 + $0x250] sm:$0xff] %v7443
          %7460 = vst [vmem:[%s2608 + $0x268] sm:$0xff] %v7444
          %7461 = vst [vmem:[%s2608 + $0x270] sm:$0xff] %v7445
          %7462 = vst [vmem:[%s2608 + $0x288] sm:$0xff] %v7446
          %7463 = vst [vmem:[%s2608 + $0x290] sm:$0xff] %v7447
          %7464 = vst [vmem:[%s2608 + $0x2a8] sm:$0xff] %v7448
          %7465 = vst [vmem:[%s2608 + $0x2b0] sm:$0xff] %v7449
          %v7466 = vld [vmem:[%s7016] sm:$0xff]
          %v7467 = vld [vmem:[%s7016 + $0x8] sm:$0xff]
          %v7468 = vld [vmem:[%s7016 + $0x10] sm:$0xff]
          %v7469 = vld [vmem:[%s7016 + $0x18] sm:$0xff]
          %v7470 = vld [vmem:[%s7016 + $0x20] sm:$0xff]
          %v7471 = vld [vmem:[%s7016 + $0x28] sm:$0xff]
          %v7472 = vld [vmem:[%s7016 + $0x30] sm:$0xff]
          %v7473 = vld [vmem:[%s7016 + $0x38] sm:$0xff]
          %v7474 = vld [vmem:[%s7016 + $0x100] sm:$0xff]
          %v7475 = vld [vmem:[%s7016 + $0x108] sm:$0xff]
          %v7476 = vld [vmem:[%s7016 + $0x110] sm:$0xff]
          %v7477 = vld [vmem:[%s7016 + $0x118] sm:$0xff]
          %v7478 = vld [vmem:[%s7016 + $0x120] sm:$0xff]
          %v7479 = vld [vmem:[%s7016 + $0x128] sm:$0xff]
          %v7480 = vld [vmem:[%s7016 + $0x130] sm:$0xff]
          %v7481 = vld [vmem:[%s7016 + $0x138] sm:$0xff]
          %v7482 = vmul.f32 %v7466, %v7362
          %v7483 = vmul.f32 %v7467, %v7362
          %v7484 = vmul.f32 %v7468, %v7362
          %v7485 = vmul.f32 %v7469, %v7362
          %v7486 = vmul.f32 %v7470, %v7362
          %v7487 = vmul.f32 %v7471, %v7362
          %v7488 = vmul.f32 %v7472, %v7362
          %v7489 = vmul.f32 %v7473, %v7362
          %v7490 = vmul.f32 %v7474, %v7362
          %v7491 = vmul.f32 %v7475, %v7362
          %v7492 = vmul.f32 %v7476, %v7362
          %v7493 = vmul.f32 %v7477, %v7362
          %v7494 = vmul.f32 %v7478, %v7362
          %v7495 = vmul.f32 %v7479, %v7362
          %v7496 = vmul.f32 %v7480, %v7362
          %v7497 = vmul.f32 %v7481, %v7362
          %v7498 = vadd.f32 %v7482, %v7384
          %v7499 = vadd.f32 %v7483, %v7384
          %v7500 = vadd.f32 %v7484, %v7384
          %v7501 = vadd.f32 %v7485, %v7384
          %v7502 = vadd.f32 %v7486, %v7384
          %v7503 = vadd.f32 %v7487, %v7384
          %v7504 = vadd.f32 %v7488, %v7384
          %v7505 = vadd.f32 %v7489, %v7384
          %v7506 = vadd.f32 %v7490, %v7384
          %v7507 = vadd.f32 %v7491, %v7384
          %v7508 = vadd.f32 %v7492, %v7384
          %v7509 = vadd.f32 %v7493, %v7384
          %v7510 = vadd.f32 %v7494, %v7384
          %v7511 = vadd.f32 %v7495, %v7384
          %v7512 = vadd.f32 %v7496, %v7384
          %v7513 = vadd.f32 %v7497, %v7384
          %vm7514 = vcmp.ge.f32.partialorder %v7498, 0.0
          %vm7515 = vcmp.ge.f32.partialorder %v7499, 0.0
          %vm7516 = vcmp.ge.f32.partialorder %v7500, 0.0
          %vm7517 = vcmp.ge.f32.partialorder %v7501, 0.0
          %vm7518 = vcmp.ge.f32.partialorder %v7502, 0.0
          %vm7519 = vcmp.ge.f32.partialorder %v7503, 0.0
          %vm7520 = vcmp.ge.f32.partialorder %v7504, 0.0
          %vm7521 = vcmp.ge.f32.partialorder %v7505, 0.0
          %vm7522 = vcmp.ge.f32.partialorder %v7506, 0.0
          %vm7523 = vcmp.ge.f32.partialorder %v7507, 0.0
          %vm7524 = vcmp.ge.f32.partialorder %v7508, 0.0
          %vm7525 = vcmp.ge.f32.partialorder %v7509, 0.0
          %vm7526 = vcmp.ge.f32.partialorder %v7510, 0.0
          %vm7527 = vcmp.ge.f32.partialorder %v7511, 0.0
          %vm7528 = vcmp.ge.f32.partialorder %v7512, 0.0
          %vm7529 = vcmp.ge.f32.partialorder %v7513, 0.0
          %v7530 = vmul.f32 %v7498, 0.2
          %v7531 = vmul.f32 %v7499, 0.2
          %v7532 = vmul.f32 %v7500, 0.2
          %v7533 = vmul.f32 %v7501, 0.2
          %v7534 = vmul.f32 %v7502, 0.2
          %v7535 = vmul.f32 %v7503, 0.2
          %v7536 = vmul.f32 %v7504, 0.2
          %v7537 = vmul.f32 %v7505, 0.2
          %v7538 = vmul.f32 %v7506, 0.2
          %v7539 = vmul.f32 %v7507, 0.2
          %v7540 = vmul.f32 %v7508, 0.2
          %v7541 = vmul.f32 %v7509, 0.2
          %v7542 = vmul.f32 %v7510, 0.2
          %v7543 = vmul.f32 %v7511, 0.2
          %v7544 = vmul.f32 %v7512, 0.2
          %v7545 = vmul.f32 %v7513, 0.2
          %v7546 = vsel %vm7514, %v7498, %v7530
          %v7547 = vsel %vm7515, %v7499, %v7531
          %v7548 = vsel %vm7516, %v7500, %v7532
          %v7549 = vsel %vm7517, %v7501, %v7533
          %v7550 = vsel %vm7518, %v7502, %v7534
          %v7551 = vsel %vm7519, %v7503, %v7535
          %v7552 = vsel %vm7520, %v7504, %v7536
          %v7553 = vsel %vm7521, %v7505, %v7537
          %v7554 = vsel %vm7522, %v7506, %v7538
          %v7555 = vsel %vm7523, %v7507, %v7539
          %v7556 = vsel %vm7524, %v7508, %v7540
          %v7557 = vsel %vm7525, %v7509, %v7541
          %v7558 = vsel %vm7526, %v7510, %v7542
          %v7559 = vsel %vm7527, %v7511, %v7543
          %v7560 = vsel %vm7528, %v7512, %v7544
          %v7561 = vsel %vm7529, %v7513, %v7545
          %s7562 = scalar_lea.vmem [#allocation2], 160
          %7563 = vst [vmem:[%s7562 + $0x8] sm:$0xff] %v7546
          %7564 = vst [vmem:[%s7562 + $0x10] sm:$0xff] %v7547
          %7565 = vst [vmem:[%s7562 + $0x28] sm:$0xff] %v7548
          %7566 = vst [vmem:[%s7562 + $0x30] sm:$0xff] %v7549
          %7567 = vst [vmem:[%s7562 + $0x48] sm:$0xff] %v7550
          %7568 = vst [vmem:[%s7562 + $0x50] sm:$0xff] %v7551
          %7569 = vst [vmem:[%s7562 + $0x68] sm:$0xff] %v7552
          %7570 = vst [vmem:[%s7562 + $0x70] sm:$0xff] %v7553
          %7571 = vst [vmem:[%s7562 + $0x248] sm:$0xff] %v7554
          %7572 = vst [vmem:[%s7562 + $0x250] sm:$0xff] %v7555
          %7573 = vst [vmem:[%s7562 + $0x268] sm:$0xff] %v7556
          %7574 = vst [vmem:[%s7562 + $0x270] sm:$0xff] %v7557
          %7575 = vst [vmem:[%s7562 + $0x288] sm:$0xff] %v7558
          %7576 = vst [vmem:[%s7562 + $0x290] sm:$0xff] %v7559
          %7577 = vst [vmem:[%s7562 + $0x2a8] sm:$0xff] %v7560
          %7578 = vst [vmem:[%s7562 + $0x2b0] sm:$0xff] %v7561
          %v7579 = vld [vmem:[%s7055] sm:$0xff]
          %v7580 = vld [vmem:[%s7055 + $0x8] sm:$0xff]
          %v7581 = vld [vmem:[%s7055 + $0x10] sm:$0xff]
          %v7582 = vld [vmem:[%s7055 + $0x18] sm:$0xff]
          %v7583 = vld [vmem:[%s7055 + $0x20] sm:$0xff]
          %v7584 = vld [vmem:[%s7055 + $0x28] sm:$0xff]
          %v7585 = vld [vmem:[%s7055 + $0x30] sm:$0xff]
          %v7586 = vld [vmem:[%s7055 + $0x38] sm:$0xff]
          %v7587 = vld [vmem:[%s7055 + $0x100] sm:$0xff]
          %v7588 = vld [vmem:[%s7055 + $0x108] sm:$0xff]
          %v7589 = vld [vmem:[%s7055 + $0x110] sm:$0xff]
          %v7590 = vld [vmem:[%s7055 + $0x118] sm:$0xff]
          %v7591 = vld [vmem:[%s7055 + $0x120] sm:$0xff]
          %v7592 = vld [vmem:[%s7055 + $0x128] sm:$0xff]
          %v7593 = vld [vmem:[%s7055 + $0x130] sm:$0xff]
          %v7594 = vld [vmem:[%s7055 + $0x138] sm:$0xff]
          %v7595 = vmul.f32 %v7579, %v7362
          %v7596 = vmul.f32 %v7580, %v7362
          %v7597 = vmul.f32 %v7581, %v7362
          %v7598 = vmul.f32 %v7582, %v7362
          %v7599 = vmul.f32 %v7583, %v7362
          %v7600 = vmul.f32 %v7584, %v7362
          %v7601 = vmul.f32 %v7585, %v7362
          %v7602 = vmul.f32 %v7586, %v7362
          %v7603 = vmul.f32 %v7587, %v7362
          %v7604 = vmul.f32 %v7588, %v7362
          %v7605 = vmul.f32 %v7589, %v7362
          %v7606 = vmul.f32 %v7590, %v7362
          %v7607 = vmul.f32 %v7591, %v7362
          %v7608 = vmul.f32 %v7592, %v7362
          %v7609 = vmul.f32 %v7593, %v7362
          %v7610 = vmul.f32 %v7594, %v7362
          %v7611 = vadd.f32 %v7595, %v7384
          %v7612 = vadd.f32 %v7596, %v7384
          %v7613 = vadd.f32 %v7597, %v7384
          %v7614 = vadd.f32 %v7598, %v7384
          %v7615 = vadd.f32 %v7599, %v7384
          %v7616 = vadd.f32 %v7600, %v7384
          %v7617 = vadd.f32 %v7601, %v7384
          %v7618 = vadd.f32 %v7602, %v7384
          %v7619 = vadd.f32 %v7603, %v7384
          %v7620 = vadd.f32 %v7604, %v7384
          %v7621 = vadd.f32 %v7605, %v7384
          %v7622 = vadd.f32 %v7606, %v7384
          %v7623 = vadd.f32 %v7607, %v7384
          %v7624 = vadd.f32 %v7608, %v7384
          %v7625 = vadd.f32 %v7609, %v7384
          %v7626 = vadd.f32 %v7610, %v7384
          %vm7627 = vcmp.ge.f32.partialorder %v7611, 0.0
          %vm7628 = vcmp.ge.f32.partialorder %v7612, 0.0
          %vm7629 = vcmp.ge.f32.partialorder %v7613, 0.0
          %vm7630 = vcmp.ge.f32.partialorder %v7614, 0.0
          %vm7631 = vcmp.ge.f32.partialorder %v7615, 0.0
          %vm7632 = vcmp.ge.f32.partialorder %v7616, 0.0
          %vm7633 = vcmp.ge.f32.partialorder %v7617, 0.0
          %vm7634 = vcmp.ge.f32.partialorder %v7618, 0.0
          %vm7635 = vcmp.ge.f32.partialorder %v7619, 0.0
          %vm7636 = vcmp.ge.f32.partialorder %v7620, 0.0
          %vm7637 = vcmp.ge.f32.partialorder %v7621, 0.0
          %vm7638 = vcmp.ge.f32.partialorder %v7622, 0.0
          %vm7639 = vcmp.ge.f32.partialorder %v7623, 0.0
          %vm7640 = vcmp.ge.f32.partialorder %v7624, 0.0
          %vm7641 = vcmp.ge.f32.partialorder %v7625, 0.0
          %vm7642 = vcmp.ge.f32.partialorder %v7626, 0.0
          %v7643 = vmul.f32 %v7611, 0.2
          %v7644 = vmul.f32 %v7612, 0.2
          %v7645 = vmul.f32 %v7613, 0.2
          %v7646 = vmul.f32 %v7614, 0.2
          %v7647 = vmul.f32 %v7615, 0.2
          %v7648 = vmul.f32 %v7616, 0.2
          %v7649 = vmul.f32 %v7617, 0.2
          %v7650 = vmul.f32 %v7618, 0.2
          %v7651 = vmul.f32 %v7619, 0.2
          %v7652 = vmul.f32 %v7620, 0.2
          %v7653 = vmul.f32 %v7621, 0.2
          %v7654 = vmul.f32 %v7622, 0.2
          %v7655 = vmul.f32 %v7623, 0.2
          %v7656 = vmul.f32 %v7624, 0.2
          %v7657 = vmul.f32 %v7625, 0.2
          %v7658 = vmul.f32 %v7626, 0.2
          %v7659 = vsel %vm7627, %v7611, %v7643
          %v7660 = vsel %vm7628, %v7612, %v7644
          %v7661 = vsel %vm7629, %v7613, %v7645
          %v7662 = vsel %vm7630, %v7614, %v7646
          %v7663 = vsel %vm7631, %v7615, %v7647
          %v7664 = vsel %vm7632, %v7616, %v7648
          %v7665 = vsel %vm7633, %v7617, %v7649
          %v7666 = vsel %vm7634, %v7618, %v7650
          %v7667 = vsel %vm7635, %v7619, %v7651
          %v7668 = vsel %vm7636, %v7620, %v7652
          %v7669 = vsel %vm7637, %v7621, %v7653
          %v7670 = vsel %vm7638, %v7622, %v7654
          %v7671 = vsel %vm7639, %v7623, %v7655
          %v7672 = vsel %vm7640, %v7624, %v7656
          %v7673 = vsel %vm7641, %v7625, %v7657
          %v7674 = vsel %vm7642, %v7626, %v7658
          %s7675 = scalar_lea.vmem [#allocation2], 288
          %7676 = vst [vmem:[%s7675 + $0x8] sm:$0xff] %v7659
          %7677 = vst [vmem:[%s7675 + $0x10] sm:$0xff] %v7660
          %7678 = vst [vmem:[%s7675 + $0x28] sm:$0xff] %v7661
          %7679 = vst [vmem:[%s7675 + $0x30] sm:$0xff] %v7662
          %7680 = vst [vmem:[%s7675 + $0x48] sm:$0xff] %v7663
          %7681 = vst [vmem:[%s7675 + $0x50] sm:$0xff] %v7664
          %7682 = vst [vmem:[%s7675 + $0x68] sm:$0xff] %v7665
          %7683 = vst [vmem:[%s7675 + $0x70] sm:$0xff] %v7666
          %7684 = vst [vmem:[%s7675 + $0x248] sm:$0xff] %v7667
          %7685 = vst [vmem:[%s7675 + $0x250] sm:$0xff] %v7668
          %7686 = vst [vmem:[%s7675 + $0x268] sm:$0xff] %v7669
          %7687 = vst [vmem:[%s7675 + $0x270] sm:$0xff] %v7670
          %7688 = vst [vmem:[%s7675 + $0x288] sm:$0xff] %v7671
          %7689 = vst [vmem:[%s7675 + $0x290] sm:$0xff] %v7672
          %7690 = vst [vmem:[%s7675 + $0x2a8] sm:$0xff] %v7673
          %7691 = vst [vmem:[%s7675 + $0x2b0] sm:$0xff] %v7674
          %v7692 = vld [vmem:[%s7094] sm:$0xff]
          %v7693 = vld [vmem:[%s7094 + $0x8] sm:$0xff]
          %v7694 = vld [vmem:[%s7094 + $0x10] sm:$0xff]
          %v7695 = vld [vmem:[%s7094 + $0x18] sm:$0xff]
          %v7696 = vld [vmem:[%s7094 + $0x20] sm:$0xff]
          %v7697 = vld [vmem:[%s7094 + $0x28] sm:$0xff]
          %v7698 = vld [vmem:[%s7094 + $0x30] sm:$0xff]
          %v7699 = vld [vmem:[%s7094 + $0x38] sm:$0xff]
          %v7700 = vld [vmem:[%s7094 + $0x100] sm:$0xff]
          %v7701 = vld [vmem:[%s7094 + $0x108] sm:$0xff]
          %v7702 = vld [vmem:[%s7094 + $0x110] sm:$0xff]
          %v7703 = vld [vmem:[%s7094 + $0x118] sm:$0xff]
          %v7704 = vld [vmem:[%s7094 + $0x120] sm:$0xff]
          %v7705 = vld [vmem:[%s7094 + $0x128] sm:$0xff]
          %v7706 = vld [vmem:[%s7094 + $0x130] sm:$0xff]
          %v7707 = vld [vmem:[%s7094 + $0x138] sm:$0xff]
          %v7708 = vmul.f32 %v7692, %v7362
          %v7709 = vmul.f32 %v7693, %v7362
          %v7710 = vmul.f32 %v7694, %v7362
          %v7711 = vmul.f32 %v7695, %v7362
          %v7712 = vmul.f32 %v7696, %v7362
          %v7713 = vmul.f32 %v7697, %v7362
          %v7714 = vmul.f32 %v7698, %v7362
          %v7715 = vmul.f32 %v7699, %v7362
          %v7716 = vmul.f32 %v7700, %v7362
          %v7717 = vmul.f32 %v7701, %v7362
          %v7718 = vmul.f32 %v7702, %v7362
          %v7719 = vmul.f32 %v7703, %v7362
          %v7720 = vmul.f32 %v7704, %v7362
          %v7721 = vmul.f32 %v7705, %v7362
          %v7722 = vmul.f32 %v7706, %v7362
          %v7723 = vmul.f32 %v7707, %v7362
          %v7724 = vadd.f32 %v7708, %v7384
          %v7725 = vadd.f32 %v7709, %v7384
          %v7726 = vadd.f32 %v7710, %v7384
          %v7727 = vadd.f32 %v7711, %v7384
          %v7728 = vadd.f32 %v7712, %v7384
          %v7729 = vadd.f32 %v7713, %v7384
          %v7730 = vadd.f32 %v7714, %v7384
          %v7731 = vadd.f32 %v7715, %v7384
          %v7732 = vadd.f32 %v7716, %v7384
          %v7733 = vadd.f32 %v7717, %v7384
          %v7734 = vadd.f32 %v7718, %v7384
          %v7735 = vadd.f32 %v7719, %v7384
          %v7736 = vadd.f32 %v7720, %v7384
          %v7737 = vadd.f32 %v7721, %v7384
          %v7738 = vadd.f32 %v7722, %v7384
          %v7739 = vadd.f32 %v7723, %v7384
          %vm7740 = vcmp.ge.f32.partialorder %v7724, 0.0
          %vm7741 = vcmp.ge.f32.partialorder %v7725, 0.0
          %vm7742 = vcmp.ge.f32.partialorder %v7726, 0.0
          %vm7743 = vcmp.ge.f32.partialorder %v7727, 0.0
          %vm7744 = vcmp.ge.f32.partialorder %v7728, 0.0
          %vm7745 = vcmp.ge.f32.partialorder %v7729, 0.0
          %vm7746 = vcmp.ge.f32.partialorder %v7730, 0.0
          %vm7747 = vcmp.ge.f32.partialorder %v7731, 0.0
          %vm7748 = vcmp.ge.f32.partialorder %v7732, 0.0
          %vm7749 = vcmp.ge.f32.partialorder %v7733, 0.0
          %vm7750 = vcmp.ge.f32.partialorder %v7734, 0.0
          %vm7751 = vcmp.ge.f32.partialorder %v7735, 0.0
          %vm7752 = vcmp.ge.f32.partialorder %v7736, 0.0
          %vm7753 = vcmp.ge.f32.partialorder %v7737, 0.0
          %vm7754 = vcmp.ge.f32.partialorder %v7738, 0.0
          %vm7755 = vcmp.ge.f32.partialorder %v7739, 0.0
          %v7756 = vmul.f32 %v7724, 0.2
          %v7757 = vmul.f32 %v7725, 0.2
          %v7758 = vmul.f32 %v7726, 0.2
          %v7759 = vmul.f32 %v7727, 0.2
          %v7760 = vmul.f32 %v7728, 0.2
          %v7761 = vmul.f32 %v7729, 0.2
          %v7762 = vmul.f32 %v7730, 0.2
          %v7763 = vmul.f32 %v7731, 0.2
          %v7764 = vmul.f32 %v7732, 0.2
          %v7765 = vmul.f32 %v7733, 0.2
          %v7766 = vmul.f32 %v7734, 0.2
          %v7767 = vmul.f32 %v7735, 0.2
          %v7768 = vmul.f32 %v7736, 0.2
          %v7769 = vmul.f32 %v7737, 0.2
          %v7770 = vmul.f32 %v7738, 0.2
          %v7771 = vmul.f32 %v7739, 0.2
          %v7772 = vsel %vm7740, %v7724, %v7756
          %v7773 = vsel %vm7741, %v7725, %v7757
          %v7774 = vsel %vm7742, %v7726, %v7758
          %v7775 = vsel %vm7743, %v7727, %v7759
          %v7776 = vsel %vm7744, %v7728, %v7760
          %v7777 = vsel %vm7745, %v7729, %v7761
          %v7778 = vsel %vm7746, %v7730, %v7762
          %v7779 = vsel %vm7747, %v7731, %v7763
          %v7780 = vsel %vm7748, %v7732, %v7764
          %v7781 = vsel %vm7749, %v7733, %v7765
          %v7782 = vsel %vm7750, %v7734, %v7766
          %v7783 = vsel %vm7751, %v7735, %v7767
          %v7784 = vsel %vm7752, %v7736, %v7768
          %v7785 = vsel %vm7753, %v7737, %v7769
          %v7786 = vsel %vm7754, %v7738, %v7770
          %v7787 = vsel %vm7755, %v7739, %v7771
          %s7788 = scalar_lea.vmem [#allocation2], 416
          %7789 = vst [vmem:[%s7788 + $0x8] sm:$0xff] %v7772
          %7790 = vst [vmem:[%s7788 + $0x10] sm:$0xff] %v7773
          %7791 = vst [vmem:[%s7788 + $0x28] sm:$0xff] %v7774
          %7792 = vst [vmem:[%s7788 + $0x30] sm:$0xff] %v7775
          %7793 = vst [vmem:[%s7788 + $0x48] sm:$0xff] %v7776
          %7794 = vst [vmem:[%s7788 + $0x50] sm:$0xff] %v7777
          %7795 = vst [vmem:[%s7788 + $0x68] sm:$0xff] %v7778
          %7796 = vst [vmem:[%s7788 + $0x70] sm:$0xff] %v7779
          %7797 = vst [vmem:[%s7788 + $0x248] sm:$0xff] %v7780
          %7798 = vst [vmem:[%s7788 + $0x250] sm:$0xff] %v7781
          %7799 = vst [vmem:[%s7788 + $0x268] sm:$0xff] %v7782
          %7800 = vst [vmem:[%s7788 + $0x270] sm:$0xff] %v7783
          %7801 = vst [vmem:[%s7788 + $0x288] sm:$0xff] %v7784
          %7802 = vst [vmem:[%s7788 + $0x290] sm:$0xff] %v7785
          %7803 = vst [vmem:[%s7788 + $0x2a8] sm:$0xff] %v7786
          %7804 = vst [vmem:[%s7788 + $0x2b0] sm:$0xff] %v7787
        $region52: #{tpu_custom_call.1} parent=39 // pred_fallthru
          _
        %p7805 = scmp.eq.s32.totalorder %s19, 2
        // Predicated region
        $region53: #{tpu_custom_call.1} parent=39 // pred_check
          %p7806 = pneg %p7805
        $region54: #{tpu_custom_call.1} parent=39 // pred_check_branch
          %7808 = sbr.rel (%p7806) target = $region56
        $region55: #{tpu_custom_call.1} parent=39 // pred_region
          %v7809 = vld [vmem:[%s265] sm:$0x1]
          %v7810 = vld [vmem:[#allocation3] sm:$0xff]
          %v7811 = vld [vmem:[#allocation3 + $0x8] sm:$0xff]
          %v7812 = vld [vmem:[#allocation3 + $0x10] sm:$0xff]
          %v7813 = vld [vmem:[#allocation3 + $0x18] sm:$0xff]
          %v7814 = vld [vmem:[#allocation3 + $0x20] sm:$0xff]
          %v7815 = vld [vmem:[#allocation3 + $0x28] sm:$0xff]
          %v7816 = vld [vmem:[#allocation3 + $0x30] sm:$0xff]
          %v7817 = vld [vmem:[#allocation3 + $0x38] sm:$0xff]
          %v7818 = vld [vmem:[#allocation3 + $0x100] sm:$0xff]
          %v7819 = vld [vmem:[#allocation3 + $0x108] sm:$0xff]
          %v7820 = vld [vmem:[#allocation3 + $0x110] sm:$0xff]
          %v7821 = vld [vmem:[#allocation3 + $0x118] sm:$0xff]
          %v7822 = vld [vmem:[#allocation3 + $0x120] sm:$0xff]
          %v7823 = vld [vmem:[#allocation3 + $0x128] sm:$0xff]
          %v7824 = vld [vmem:[#allocation3 + $0x130] sm:$0xff]
          %v7825 = vld [vmem:[#allocation3 + $0x138] sm:$0xff]
          %v7827 = vlaneseq
          %v7828 = vshrl.u32 %v7827, 7
          %v7829 = vsub.s32 0, %v7828
          %v7830 = vrot.slane %v7809, %v7829
          %v7832 = vadd.f32 %v7810, %v7830
          %v7833 = vadd.f32 %v7811, %v7830
          %v7834 = vadd.f32 %v7812, %v7830
          %v7835 = vadd.f32 %v7813, %v7830
          %v7836 = vadd.f32 %v7814, %v7830
          %v7837 = vadd.f32 %v7815, %v7830
          %v7838 = vadd.f32 %v7816, %v7830
          %v7839 = vadd.f32 %v7817, %v7830
          %v7840 = vadd.f32 %v7818, %v7830
          %v7841 = vadd.f32 %v7819, %v7830
          %v7842 = vadd.f32 %v7820, %v7830
          %v7843 = vadd.f32 %v7821, %v7830
          %v7844 = vadd.f32 %v7822, %v7830
          %v7845 = vadd.f32 %v7823, %v7830
          %v7846 = vadd.f32 %v7824, %v7830
          %v7847 = vadd.f32 %v7825, %v7830
          %v7848 = vtanh.pop %v7832
          %v7849 = vtanh.pop %v7833
          %v7850 = vtanh.pop %v7834
          %v7851 = vtanh.pop %v7835
          %v7852 = vtanh.pop %v7836
          %v7853 = vtanh.pop %v7837
          %v7854 = vtanh.pop %v7838
          %v7855 = vtanh.pop %v7839
          %v7856 = vtanh.pop %v7840
          %v7857 = vtanh.pop %v7841
          %v7858 = vtanh.pop %v7842
          %v7859 = vtanh.pop %v7843
          %v7860 = vtanh.pop %v7844
          %v7861 = vtanh.pop %v7845
          %v7862 = vtanh.pop %v7846
          %v7863 = vtanh.pop %v7847
          %vm7864 = vcmask 64512
          %7865 = vst.msk [vmem:[%s5] sm:$0xff] %vm7864, %v7848
          %7866 = vst.msk [vmem:[%s5 + $0x8] sm:$0xff] %vm7864, %v7849
          %7867 = vst.msk [vmem:[%s5 + $0x10] sm:$0xff] %vm7864, %v7850
          %7868 = vst.msk [vmem:[%s5 + $0x18] sm:$0xff] %vm7864, %v7851
          %7869 = vst.msk [vmem:[%s5 + $0x20] sm:$0xff] %vm7864, %v7852
          %7870 = vst.msk [vmem:[%s5 + $0x28] sm:$0xff] %vm7864, %v7853
          %7871 = vst.msk [vmem:[%s5 + $0x30] sm:$0xff] %vm7864, %v7854
          %7872 = vst.msk [vmem:[%s5 + $0x38] sm:$0xff] %vm7864, %v7855
          %7873 = vst.msk [vmem:[%s5 + $0x100] sm:$0xff] %vm7864, %v7856
          %7874 = vst.msk [vmem:[%s5 + $0x108] sm:$0xff] %vm7864, %v7857
          %7875 = vst.msk [vmem:[%s5 + $0x110] sm:$0xff] %vm7864, %v7858
          %7876 = vst.msk [vmem:[%s5 + $0x118] sm:$0xff] %vm7864, %v7859
          %7877 = vst.msk [vmem:[%s5 + $0x120] sm:$0xff] %vm7864, %v7860
          %7878 = vst.msk [vmem:[%s5 + $0x128] sm:$0xff] %vm7864, %v7861
          %7879 = vst.msk [vmem:[%s5 + $0x130] sm:$0xff] %vm7864, %v7862
          %7880 = vst.msk [vmem:[%s5 + $0x138] sm:$0xff] %vm7864, %v7863
          %s7881 = scalar_lea.vmem [#allocation3], 64
          %v7882 = vld [vmem:[%s7881] sm:$0xff]
          %v7883 = vld [vmem:[%s7881 + $0x8] sm:$0xff]
          %v7884 = vld [vmem:[%s7881 + $0x10] sm:$0xff]
          %v7885 = vld [vmem:[%s7881 + $0x18] sm:$0xff]
          %v7886 = vld [vmem:[%s7881 + $0x20] sm:$0xff]
          %v7887 = vld [vmem:[%s7881 + $0x28] sm:$0xff]
          %v7888 = vld [vmem:[%s7881 + $0x30] sm:$0xff]
          %v7889 = vld [vmem:[%s7881 + $0x38] sm:$0xff]
          %v7890 = vld [vmem:[%s7881 + $0x100] sm:$0xff]
          %v7891 = vld [vmem:[%s7881 + $0x108] sm:$0xff]
          %v7892 = vld [vmem:[%s7881 + $0x110] sm:$0xff]
          %v7893 = vld [vmem:[%s7881 + $0x118] sm:$0xff]
          %v7894 = vld [vmem:[%s7881 + $0x120] sm:$0xff]
          %v7895 = vld [vmem:[%s7881 + $0x128] sm:$0xff]
          %v7896 = vld [vmem:[%s7881 + $0x130] sm:$0xff]
          %v7897 = vld [vmem:[%s7881 + $0x138] sm:$0xff]
          %v7898 = vadd.f32 %v7882, %v7830
          %v7899 = vadd.f32 %v7883, %v7830
          %v7900 = vadd.f32 %v7884, %v7830
          %v7901 = vadd.f32 %v7885, %v7830
          %v7902 = vadd.f32 %v7886, %v7830
          %v7903 = vadd.f32 %v7887, %v7830
          %v7904 = vadd.f32 %v7888, %v7830
          %v7905 = vadd.f32 %v7889, %v7830
          %v7906 = vadd.f32 %v7890, %v7830
          %v7907 = vadd.f32 %v7891, %v7830
          %v7908 = vadd.f32 %v7892, %v7830
          %v7909 = vadd.f32 %v7893, %v7830
          %v7910 = vadd.f32 %v7894, %v7830
          %v7911 = vadd.f32 %v7895, %v7830
          %v7912 = vadd.f32 %v7896, %v7830
          %v7913 = vadd.f32 %v7897, %v7830
          %v7914 = vtanh.pop %v7898
          %v7915 = vtanh.pop %v7899
          %v7916 = vtanh.pop %v7900
          %v7917 = vtanh.pop %v7901
          %v7918 = vtanh.pop %v7902
          %v7919 = vtanh.pop %v7903
          %v7920 = vtanh.pop %v7904
          %v7921 = vtanh.pop %v7905
          %v7922 = vtanh.pop %v7906
          %v7923 = vtanh.pop %v7907
          %v7924 = vtanh.pop %v7908
          %v7925 = vtanh.pop %v7909
          %v7926 = vtanh.pop %v7910
          %v7927 = vtanh.pop %v7911
          %v7928 = vtanh.pop %v7912
          %v7929 = vtanh.pop %v7913
          %s7930 = scalar_lea.vmem %s5, 64
          %7931 = vst.msk [vmem:[%s7930] sm:$0xff] %vm7864, %v7914
          %7932 = vst.msk [vmem:[%s7930 + $0x8] sm:$0xff] %vm7864, %v7915
          %7933 = vst.msk [vmem:[%s7930 + $0x10] sm:$0xff] %vm7864, %v7916
          %7934 = vst.msk [vmem:[%s7930 + $0x18] sm:$0xff] %vm7864, %v7917
          %7935 = vst.msk [vmem:[%s7930 + $0x20] sm:$0xff] %vm7864, %v7918
          %7936 = vst.msk [vmem:[%s7930 + $0x28] sm:$0xff] %vm7864, %v7919
          %7937 = vst.msk [vmem:[%s7930 + $0x30] sm:$0xff] %vm7864, %v7920
          %7938 = vst.msk [vmem:[%s7930 + $0x38] sm:$0xff] %vm7864, %v7921
          %7939 = vst.msk [vmem:[%s7930 + $0x100] sm:$0xff] %vm7864, %v7922
          %7940 = vst.msk [vmem:[%s7930 + $0x108] sm:$0xff] %vm7864, %v7923
          %7941 = vst.msk [vmem:[%s7930 + $0x110] sm:$0xff] %vm7864, %v7924
          %7942 = vst.msk [vmem:[%s7930 + $0x118] sm:$0xff] %vm7864, %v7925
          %7943 = vst.msk [vmem:[%s7930 + $0x120] sm:$0xff] %vm7864, %v7926
          %7944 = vst.msk [vmem:[%s7930 + $0x128] sm:$0xff] %vm7864, %v7927
          %7945 = vst.msk [vmem:[%s7930 + $0x130] sm:$0xff] %vm7864, %v7928
          %7946 = vst.msk [vmem:[%s7930 + $0x138] sm:$0xff] %vm7864, %v7929
          %s7947 = scalar_lea.vmem [#allocation3], 128
          %v7948 = vld [vmem:[%s7947] sm:$0xff]
          %v7949 = vld [vmem:[%s7947 + $0x8] sm:$0xff]
          %v7950 = vld [vmem:[%s7947 + $0x10] sm:$0xff]
          %v7951 = vld [vmem:[%s7947 + $0x18] sm:$0xff]
          %v7952 = vld [vmem:[%s7947 + $0x20] sm:$0xff]
          %v7953 = vld [vmem:[%s7947 + $0x28] sm:$0xff]
          %v7954 = vld [vmem:[%s7947 + $0x30] sm:$0xff]
          %v7955 = vld [vmem:[%s7947 + $0x38] sm:$0xff]
          %v7956 = vld [vmem:[%s7947 + $0x100] sm:$0xff]
          %v7957 = vld [vmem:[%s7947 + $0x108] sm:$0xff]
          %v7958 = vld [vmem:[%s7947 + $0x110] sm:$0xff]
          %v7959 = vld [vmem:[%s7947 + $0x118] sm:$0xff]
          %v7960 = vld [vmem:[%s7947 + $0x120] sm:$0xff]
          %v7961 = vld [vmem:[%s7947 + $0x128] sm:$0xff]
          %v7962 = vld [vmem:[%s7947 + $0x130] sm:$0xff]
          %v7963 = vld [vmem:[%s7947 + $0x138] sm:$0xff]
          %v7964 = vadd.f32 %v7948, %v7830
          %v7965 = vadd.f32 %v7949, %v7830
          %v7966 = vadd.f32 %v7950, %v7830
          %v7967 = vadd.f32 %v7951, %v7830
          %v7968 = vadd.f32 %v7952, %v7830
          %v7969 = vadd.f32 %v7953, %v7830
          %v7970 = vadd.f32 %v7954, %v7830
          %v7971 = vadd.f32 %v7955, %v7830
          %v7972 = vadd.f32 %v7956, %v7830
          %v7973 = vadd.f32 %v7957, %v7830
          %v7974 = vadd.f32 %v7958, %v7830
          %v7975 = vadd.f32 %v7959, %v7830
          %v7976 = vadd.f32 %v7960, %v7830
          %v7977 = vadd.f32 %v7961, %v7830
          %v7978 = vadd.f32 %v7962, %v7830
          %v7979 = vadd.f32 %v7963, %v7830
          %v7980 = vtanh.pop %v7964
          %v7981 = vtanh.pop %v7965
          %v7982 = vtanh.pop %v7966
          %v7983 = vtanh.pop %v7967
          %v7984 = vtanh.pop %v7968
          %v7985 = vtanh.pop %v7969
          %v7986 = vtanh.pop %v7970
          %v7987 = vtanh.pop %v7971
          %v7988 = vtanh.pop %v7972
          %v7989 = vtanh.pop %v7973
          %v7990 = vtanh.pop %v7974
          %v7991 = vtanh.pop %v7975
          %v7992 = vtanh.pop %v7976
          %v7993 = vtanh.pop %v7977
          %v7994 = vtanh.pop %v7978
          %v7995 = vtanh.pop %v7979
          %s7996 = scalar_lea.vmem %s5, 128
          %7997 = vst.msk [vmem:[%s7996] sm:$0xff] %vm7864, %v7980
          %7998 = vst.msk [vmem:[%s7996 + $0x8] sm:$0xff] %vm7864, %v7981
          %7999 = vst.msk [vmem:[%s7996 + $0x10] sm:$0xff] %vm7864, %v7982
          %8000 = vst.msk [vmem:[%s7996 + $0x18] sm:$0xff] %vm7864, %v7983
          %8001 = vst.msk [vmem:[%s7996 + $0x20] sm:$0xff] %vm7864, %v7984
          %8002 = vst.msk [vmem:[%s7996 + $0x28] sm:$0xff] %vm7864, %v7985
          %8003 = vst.msk [vmem:[%s7996 + $0x30] sm:$0xff] %vm7864, %v7986
          %8004 = vst.msk [vmem:[%s7996 + $0x38] sm:$0xff] %vm7864, %v7987
          %8005 = vst.msk [vmem:[%s7996 + $0x100] sm:$0xff] %vm7864, %v7988
          %8006 = vst.msk [vmem:[%s7996 + $0x108] sm:$0xff] %vm7864, %v7989
          %8007 = vst.msk [vmem:[%s7996 + $0x110] sm:$0xff] %vm7864, %v7990
          %8008 = vst.msk [vmem:[%s7996 + $0x118] sm:$0xff] %vm7864, %v7991
          %8009 = vst.msk [vmem:[%s7996 + $0x120] sm:$0xff] %vm7864, %v7992
          %8010 = vst.msk [vmem:[%s7996 + $0x128] sm:$0xff] %vm7864, %v7993
          %8011 = vst.msk [vmem:[%s7996 + $0x130] sm:$0xff] %vm7864, %v7994
          %8012 = vst.msk [vmem:[%s7996 + $0x138] sm:$0xff] %vm7864, %v7995
          %s8013 = scalar_lea.vmem [#allocation3], 192
          %v8014 = vld [vmem:[%s8013] sm:$0xff]
          %v8015 = vld [vmem:[%s8013 + $0x8] sm:$0xff]
          %v8016 = vld [vmem:[%s8013 + $0x10] sm:$0xff]
          %v8017 = vld [vmem:[%s8013 + $0x18] sm:$0xff]
          %v8018 = vld [vmem:[%s8013 + $0x20] sm:$0xff]
          %v8019 = vld [vmem:[%s8013 + $0x28] sm:$0xff]
          %v8020 = vld [vmem:[%s8013 + $0x30] sm:$0xff]
          %v8021 = vld [vmem:[%s8013 + $0x38] sm:$0xff]
          %v8022 = vld [vmem:[%s8013 + $0x100] sm:$0xff]
          %v8023 = vld [vmem:[%s8013 + $0x108] sm:$0xff]
          %v8024 = vld [vmem:[%s8013 + $0x110] sm:$0xff]
          %v8025 = vld [vmem:[%s8013 + $0x118] sm:$0xff]
          %v8026 = vld [vmem:[%s8013 + $0x120] sm:$0xff]
          %v8027 = vld [vmem:[%s8013 + $0x128] sm:$0xff]
          %v8028 = vld [vmem:[%s8013 + $0x130] sm:$0xff]
          %v8029 = vld [vmem:[%s8013 + $0x138] sm:$0xff]
          %v8030 = vadd.f32 %v8014, %v7830
          %v8031 = vadd.f32 %v8015, %v7830
          %v8032 = vadd.f32 %v8016, %v7830
          %v8033 = vadd.f32 %v8017, %v7830
          %v8034 = vadd.f32 %v8018, %v7830
          %v8035 = vadd.f32 %v8019, %v7830
          %v8036 = vadd.f32 %v8020, %v7830
          %v8037 = vadd.f32 %v8021, %v7830
          %v8038 = vadd.f32 %v8022, %v7830
          %v8039 = vadd.f32 %v8023, %v7830
          %v8040 = vadd.f32 %v8024, %v7830
          %v8041 = vadd.f32 %v8025, %v7830
          %v8042 = vadd.f32 %v8026, %v7830
          %v8043 = vadd.f32 %v8027, %v7830
          %v8044 = vadd.f32 %v8028, %v7830
          %v8045 = vadd.f32 %v8029, %v7830
          %v8046 = vtanh.pop %v8030
          %v8047 = vtanh.pop %v8031
          %v8048 = vtanh.pop %v8032
          %v8049 = vtanh.pop %v8033
          %v8050 = vtanh.pop %v8034
          %v8051 = vtanh.pop %v8035
          %v8052 = vtanh.pop %v8036
          %v8053 = vtanh.pop %v8037
          %v8054 = vtanh.pop %v8038
          %v8055 = vtanh.pop %v8039
          %v8056 = vtanh.pop %v8040
          %v8057 = vtanh.pop %v8041
          %v8058 = vtanh.pop %v8042
          %v8059 = vtanh.pop %v8043
          %v8060 = vtanh.pop %v8044
          %v8061 = vtanh.pop %v8045
          %s8062 = scalar_lea.vmem %s5, 192
          %8063 = vst.msk [vmem:[%s8062] sm:$0xff] %vm7864, %v8046
          %8064 = vst.msk [vmem:[%s8062 + $0x8] sm:$0xff] %vm7864, %v8047
          %8065 = vst.msk [vmem:[%s8062 + $0x10] sm:$0xff] %vm7864, %v8048
          %8066 = vst.msk [vmem:[%s8062 + $0x18] sm:$0xff] %vm7864, %v8049
          %8067 = vst.msk [vmem:[%s8062 + $0x20] sm:$0xff] %vm7864, %v8050
          %8068 = vst.msk [vmem:[%s8062 + $0x28] sm:$0xff] %vm7864, %v8051
          %8069 = vst.msk [vmem:[%s8062 + $0x30] sm:$0xff] %vm7864, %v8052
          %8070 = vst.msk [vmem:[%s8062 + $0x38] sm:$0xff] %vm7864, %v8053
          %8071 = vst.msk [vmem:[%s8062 + $0x100] sm:$0xff] %vm7864, %v8054
          %8072 = vst.msk [vmem:[%s8062 + $0x108] sm:$0xff] %vm7864, %v8055
          %8073 = vst.msk [vmem:[%s8062 + $0x110] sm:$0xff] %vm7864, %v8056
          %8074 = vst.msk [vmem:[%s8062 + $0x118] sm:$0xff] %vm7864, %v8057
          %8075 = vst.msk [vmem:[%s8062 + $0x120] sm:$0xff] %vm7864, %v8058
          %8076 = vst.msk [vmem:[%s8062 + $0x128] sm:$0xff] %vm7864, %v8059
          %8077 = vst.msk [vmem:[%s8062 + $0x130] sm:$0xff] %vm7864, %v8060
          %8078 = vst.msk [vmem:[%s8062 + $0x138] sm:$0xff] %vm7864, %v8061
        $region56: #{tpu_custom_call.1} parent=39 // pred_fallthru
          _
        // Predicated region
        $region57: #{tpu_custom_call.1} parent=39 // pred_check
          %p8079 = pneg %p157
        $region58: #{tpu_custom_call.1} parent=39 // pred_check_branch
          %8081 = sbr.rel (%p8079) target = $region60
        $region59: #{tpu_custom_call.1} parent=39 // pred_region
          _
        $region60: #{tpu_custom_call.1} parent=39 // pred_fallthru
          _
        // Predicated region
        $region61: #{tpu_custom_call.1} parent=39 // pred_check
          %p8082 = pneg %p157
        $region62: #{tpu_custom_call.1} parent=39 // pred_check_branch
          %8084 = sbr.rel (%p8082) target = $region64
        $region63: #{tpu_custom_call.1} parent=39 // pred_region
          _
        $region64: #{tpu_custom_call.1} parent=39 // pred_fallthru
          _
      $region40: #{tpu_custom_call.1} parent=5 // pred_fallthru
        _
      %p8085 = scmp.le.s32.totalorder 2, %s14
      // Predicated region
      $region65: #{tpu_custom_call.1} parent=5 // pred_check
        %p8086 = pneg %p8085
      $region66: #{tpu_custom_call.1} parent=5 // pred_check_branch
        %8088 = sbr.rel (%p8086) target = $region68
      $region67: #{tpu_custom_call.1} parent=5 // pred_region
        %s8089 = ssub.s32 %s14, 2
      $region68: #{tpu_custom_call.1} parent=5 // pred_fallthru
        _
    $region6: #{tpu_custom_call.1} parent=1 // loop_footer
      %s18 = sadd.s32 1, %s14
    $region7: #{tpu_custom_call.1} parent=1 // loop_footer_branch
      %13 = sbr.rel target = $region3
    $region8: #{tpu_custom_call.1} parent=1 // loop_exit
      _
    %8090 = vsyncpa [#allocation5], 1
    %s8091 = scalar_lea.sflag [#allocation5], 1
    %8092 = vsyncpa %s8091, 1

</llo_original>
